<compile_context>
chip_gen: v7x
topology: tpu7x:2x2x1
jax: 0.10.0
libtpu: 0.0.40
codegen_flags: <defaults>
</compile_context>

<pallas_src>
import functools
import math

import jax
import jax.numpy as jnp
import numpy as np
from jax.experimental import pallas as pl
from jax.experimental.pallas import tpu as pltpu


# ---------------------------------------------------------------------------
# In-kernel helpers (pure jnp/lax, traced into the Pallas kernel bodies)
# ---------------------------------------------------------------------------
def _layer_norm(x, w, b, eps):
    mu = jnp.mean(x, axis=-1, keepdims=True)
    var = jnp.mean((x - mu) ** 2, axis=-1, keepdims=True)
    return (x - mu) * jax.lax.rsqrt(var + eps) * w + b


def _softmax(s):
    m = jnp.max(s, axis=-1, keepdims=True)
    e = jnp.exp(s - m)
    return e * pl.reciprocal(jnp.sum(e, axis=-1, keepdims=True), approx=True)


def _gelu(x, tanh_approx):
    if tanh_approx:   # EUP tanh path (optional; PyTorch nn.GELU() default is erf)
        return 0.5 * x * (1.0 + jnp.tanh(0.7978845608028654
                                         * (x + 0.044715 * x * x * x)))
    return 0.5 * x * (1.0 + jax.lax.erf(x * 0.7071067811865476))


def _mm(a, w):  # [M,K] @ [K,N]; MXU operands in w.dtype, f32 accumulation
    return jax.lax.dot_general(a.astype(w.dtype), w, (((1,), (0,)), ((), ())),
                               preferred_element_type=jnp.float32)


# ---------------------------------------------------------------------------
# P0: encoder layernorm + cross K/V projections (tiled over encoder rows)
# ---------------------------------------------------------------------------
def _enc_kv_kernel(enc_ref, cnw_ref, cnb_ref, cwk_ref, cbk_ref, cwv_ref, cbv_ref,
                   ck_ref, cv_ref, *, eps):
    ne = _layer_norm(enc_ref[0].astype(jnp.float32), cnw_ref[...], cnb_ref[...], eps)
    ck_ref[0] = (_mm(ne, cwk_ref[...]) + cbk_ref[...]).astype(ck_ref.dtype)
    cv_ref[0] = (_mm(ne, cwv_ref[...]) + cbv_ref[...]).astype(cv_ref.dtype)


# ---------------------------------------------------------------------------
# P1: norm1*(1+scale_msa) + Q/K/V projections + RoPE(Q,K) + scale folded into Q
# ---------------------------------------------------------------------------
def _qkv_rope_kernel(x_ref, mod_ref, cos_ref, sin_ref, ln1w_ref, ln1b_ref,
                     wq_ref, bq_ref, wk_ref, bk_ref, wv_ref, bv_ref,
                     q_ref, k_ref, v_ref, *, eps, num_heads, q_scale):
    ts, d = x_ref.shape[1], x_ref.shape[2]
    hd = d // num_heads
    hd2 = hd // 2
    x = x_ref[0].astype(jnp.float32)
    sc_msa = mod_ref[0][0:1, :].astype(jnp.float32)            # 1 + scale_msa
    nh = _layer_norm(x, ln1w_ref[...], ln1b_ref[...], eps) * sc_msa

    q = _mm(nh, wq_ref[...]) + bq_ref[...]
    k = _mm(nh, wk_ref[...]) + bk_ref[...]
    v = _mm(nh, wv_ref[...]) + bv_ref[...]

    cos = cos_ref[...][:, None, :]                             # [ts, 1, hd2]
    sin = sin_ref[...][:, None, :]

    def rope(t2d):
        t3 = t2d.reshape(ts, num_heads, hd)
        t1, t2 = t3[..., :hd2], t3[..., hd2:]
        r = jnp.concatenate([t1 * cos - t2 * sin, t1 * sin + t2 * cos], axis=-1)
        return r.reshape(ts, d)

    q_ref[0] = (rope(q) * q_scale).astype(q_ref.dtype)
    k_ref[0] = rope(k).astype(k_ref.dtype)
    v_ref[0] = v.astype(v_ref.dtype)


# ---------------------------------------------------------------------------
# P2 / P4: head-group attention.  grid = (batch, head_group, q_tile)
# Q is pre-scaled; blocks are lane-aligned slices of the merged [B,S,D] tensors.
# ---------------------------------------------------------------------------
def _head_attn_kernel(q_ref, k_ref, v_ref, o_ref, *, hpb, mxu_dtype):
    tq, w = q_ref.shape[1], q_ref.shape[2]
    skv = k_ref.shape[1]
    hd = w // hpb
    q = q_ref[0].reshape(tq, hpb, hd)
    k = k_ref[0].reshape(skv, hpb, hd)
    v = v_ref[0].reshape(skv, hpb, hd)
    s = jnp.einsum("qhd,khd->hqk", q, k, preferred_element_type=jnp.float32)
    p = _softmax(s).astype(mxu_dtype)
    o = jnp.einsum("hqk,khd->qhd", p, v, preferred_element_type=jnp.float32)
    o_ref[0] = o.reshape(tq, w).astype(o_ref.dtype)


# ---------------------------------------------------------------------------
# P3: self-attn out proj + residual, then norm2*(1+scale_cross) + cross-Q proj
# ---------------------------------------------------------------------------
def _selfout_crossq_kernel(x_ref, attn_ref, mod_ref,
                           wo_ref, bo_ref, ln2w_ref, ln2b_ref, cwq_ref, cbq_ref,
                           x1_ref, cq_ref, *, eps, q_scale):
    x = x_ref[0].astype(jnp.float32)
    mod = mod_ref[0].astype(jnp.float32)
    g_msa = mod[1:2, :]
    sc_cross = mod[4:5, :]
    attn = _mm(attn_ref[0], wo_ref[...]) + bo_ref[...]
    x1 = x + g_msa * attn
    x1_ref[0] = x1.astype(x1_ref.dtype)
    nh = _layer_norm(x1, ln2w_ref[...], ln2b_ref[...], eps) * sc_cross
    cq = (_mm(nh, cwq_ref[...]) + cbq_ref[...]) * q_scale
    cq_ref[0] = cq.astype(cq_ref.dtype)


# ---------------------------------------------------------------------------
# P5a: cross out proj + residual, then norm3*(1+scale_mlp)
# ---------------------------------------------------------------------------
def _crossout_norm3_kernel(x1_ref, cross_ref, mod_ref,
                           cwo_ref, cbo_ref, ln3w_ref, ln3b_ref,
                           x2_ref, nh3_ref, *, eps):
    x1 = x1_ref[0].astype(jnp.float32)
    mod = mod_ref[0].astype(jnp.float32)
    sc_mlp = mod[2:3, :]
    g_cross = mod[5:6, :]
    cross = _mm(cross_ref[0], cwo_ref[...]) + cbo_ref[...]
    x2 = x1 + g_cross * cross
    x2_ref[0] = x2.astype(x2_ref.dtype)
    nh = _layer_norm(x2, ln3w_ref[...], ln3b_ref[...], eps) * sc_mlp
    nh3_ref[0] = nh.astype(nh3_ref.dtype)


# ---------------------------------------------------------------------------
# P5b: FFN with the 4*D hidden dim streamed on the grid (K-reduction accumulator)
# ---------------------------------------------------------------------------
def _ffn_kernel(x2_ref, nh3_ref, mod_ref, wf1_ref, bf1_ref, wf2_ref, bf2_ref,
                out_ref, acc_ref, *, gelu_tanh):
    h = pl.program_id(2)

    @pl.when(h == 0)
    def _():
        acc_ref[...] = jnp.zeros_like(acc_ref)

    h1 = _gelu(_mm(nh3_ref[0], wf1_ref[...]) + bf1_ref[...], gelu_tanh)
    acc_ref[...] += _mm(h1, wf2_ref[...])

    @pl.when(h == pl.num_programs(2) - 1)
    def _():
        g_mlp = mod_ref[0][3:4, :].astype(jnp.float32)
        ffn = acc_ref[...] + bf2_ref[...]
        out_ref[0] = (x2_ref[0].astype(jnp.float32) + g_mlp * ffn).astype(out_ref.dtype)


# ---------------------------------------------------------------------------
# Wrapper-side helpers
# ---------------------------------------------------------------------------
def _vmem_limit_bytes():
    cap = 128 * 2 ** 20
    try:
        info = pltpu.get_tpu_info()
        cap = int(getattr(info, "vmem_capacity_bytes", cap))
    except Exception:
        pass
    # ~20% headroom for compiler-internal scratch / semaphores (critical on v7x: 64 MiB)
    return int(max(32 * 2 ** 20, min(cap - cap // 5, 110 * 2 ** 20)))


def _pick_tile(n, max_tile):
    """Largest divisor of n <= max_tile, preferring 256-/128-/8-aligned tiles."""
    if n <= max_tile:
        return n
    for align in (256, 128, 8):
        t = (max_tile // align) * align
        while t >= align:
            if n % t == 0:
                return t
            t -= align
    # TODO(synk): pl.cdiv grid + masked last tile for awkward n (keeps pipelining).
    return n


def _pick_hpb(num_heads, hd, d):
    """Smallest heads-per-block whose width is lane-aligned (128-mult) or covers D."""
    for hpb in range(1, num_heads + 1):
        if num_heads % hpb:
            continue
        w = hpb * hd
        if w == d or w % 128 == 0:
            return hpb
    return num_heads


_BUFFERED1 = None


def _buffered1_ok():
    """Probe whether pipeline_mode=pl.Buffered(1) is supported end-to-end."""
    global _BUFFERED1
    if _BUFFERED1 is None:
        try:
            def _probe(x_ref, o_ref):
                o_ref[...] = x_ref[...]

            spec = pl.BlockSpec((8, 128), lambda i: (0, 0),
                                pipeline_mode=pl.Buffered(1))
            out = pl.pallas_call(
                _probe, grid=(2,),
                in_specs=[spec],
                out_specs=pl.BlockSpec((8, 128), lambda i: (0, 0)),
                out_shape=jax.ShapeDtypeStruct((8, 128), jnp.float32),
            )(jnp.zeros((8, 128), jnp.float32))
            jax.block_until_ready(out)
            _BUFFERED1 = True
        except Exception:
            _BUFFERED1 = False
    return _BUFFERED1


def _const_spec(shape):
    """Grid-invariant operand: single-buffered if supported (halves weight VMEM)."""
    n = len(shape)
    idx = lambda *args, _n=n: (0,) * _n
    if _buffered1_ok():
        return pl.BlockSpec(tuple(shape), idx, pipeline_mode=pl.Buffered(1))
    return pl.BlockSpec(tuple(shape), idx)


# ---------------------------------------------------------------------------
# Forward wrapper
# ---------------------------------------------------------------------------
def blip3o_attention_block(x, enc, t, cos, sin, params, *, num_heads, eps=1e-5,
                           mxu_dtype=jnp.bfloat16, gelu_tanh=False):
    B, S, D = x.shape
    L, C = enc.shape[1], enc.shape[2]
    assert D % num_heads == 0
    hd = D // num_heads
    assert hd % 2 == 0
    hd2 = hd // 2
    q_scale = 1.0 / math.sqrt(hd)
    f32 = jnp.float32

    vmem_limit = _vmem_limit_bytes()
    big_vmem = vmem_limit >= 72 * 2 ** 20          # v5e/v6e (128 MiB) vs v7x (64 MiB)

    # ---- hoisted timestep modulation: rows =
    #      [1+s_msa, tanh(g_msa), 1+s_mlp, tanh(g_mlp), 1+s_cross, tanh(g_cross)]
    tc = (t.astype(f32) @ params["wt"].astype(f32)
          + params["bt"].astype(f32).reshape(-1)).reshape(B, 6, D)
    is_gate = (jnp.arange(6) % 2 == 1)[None, :, None]
    mod = jnp.where(is_gate, jnp.tanh(tc), 1.0 + tc).astype(f32)

    cos2 = cos.reshape(S, hd2).astype(f32)
    sin2 = sin.reshape(S, hd2).astype(f32)

    def W(name):     # MXU weights (bf16 by default -> half the VMEM / DMA)
        return params[name].astype(mxu_dtype)

    def P(name):     # layernorm params & biases stay f32
        return params[name].astype(f32)

    TS = _pick_tile(S, 512 if big_vmem else 256)   # row tile (projection / FFN)
    TQ = _pick_tile(S, 256 if big_vmem else 128)   # query tile (attention)
    TL = _pick_tile(L, 512 if big_vmem else 256)   # encoder row tile
    H4 = 4 * D
    TH = _pick_tile(H4, 1024 if big_vmem else 512)  # FFN hidden-dim tile
    nT, nTQ, nTL, nH = S // TS, S // TQ, L // TL, H4 // TH

    HPB = _pick_hpb(num_heads, hd, D)              # heads per attention block
    G = num_heads // HPB
    HW = HPB * hd                                  # lane width of a head group

    def cparams(sems):
        return pltpu.CompilerParams(dimension_semantics=sems,
                                    vmem_limit_bytes=vmem_limit)

    cs = _const_spec
    row = lambda tile: pl.BlockSpec((1, tile, D), lambda b, tt: (b, tt, 0))
    mod_spec2 = pl.BlockSpec((1, 6, D), lambda b, tt: (b, 0, 0))

    # ---- P0: cross K/V projection ------------------------------------------
    ck, cv = pl.pallas_call(
        functools.partial(_enc_kv_kernel, eps=eps),
        grid=(B, nTL),
        in_specs=[pl.BlockSpec((1, TL, C), lambda b, lt: (b, lt, 0)),
                  cs((1, C)), cs((1, C)),
                  cs((C, D)), cs((1, D)), cs((C, D)), cs((1, D))],
        out_specs=(pl.BlockSpec((1, TL, D), lambda b, lt: (b, lt, 0)),
                   pl.BlockSpec((1, TL, D), lambda b, lt: (b, lt, 0))),
        out_shape=(jax.ShapeDtypeStruct((B, L, D), mxu_dtype),
                   jax.ShapeDtypeStruct((B, L, D), mxu_dtype)),
        compiler_params=cparams(("parallel", "parallel")),
    )(enc, P("cnw"), P("cnb"), W("cwk"), P("cbk"), W("cwv"), P("cbv"))

    # ---- P1: norm1 + QKV projection + RoPE(Q,K), tiled over sequence --------
    # TODO(synk): column-stream a fused [D,3D] QKV weight for D>=3072 on v7x.
    q, k, v = pl.pallas_call(
        functools.partial(_qkv_rope_kernel, eps=eps, num_heads=num_heads,
                          q_scale=q_scale),
        grid=(B, nT),
        in_specs=[row(TS), mod_spec2,
                  pl.BlockSpec((TS, hd2), lambda b, tt: (tt, 0)),
                  pl.BlockSpec((TS, hd2), lambda b, tt: (tt, 0)),
                  cs((1, D)), cs((1, D)),
                  cs((D, D)), cs((1, D)),
                  cs((D, D)), cs((1, D)),
                  cs((D, D)), cs((1, D))],
        out_specs=tuple(pl.BlockSpec((1, TS, D), lambda b, tt: (b, tt, 0))
                        for _ in range(3)),
        out_shape=tuple(jax.ShapeDtypeStruct((B, S, D), mxu_dtype) for _ in range(3)),
        compiler_params=cparams(("parallel", "parallel")),
    )(x, mod, cos2, sin2, P("ln1w"), P("ln1b"),
      W("wq"), P("bq"), W("wk"), P("bk"), W("wv"), P("bv"))

    # ---- P2: head-group self attention (reads/writes merged [B,S,D]) --------
    attn = pl.pallas_call(
        functools.partial(_head_attn_kernel, hpb=HPB, mxu_dtype=mxu_dtype),
        grid=(B, G, nTQ),
        in_specs=[pl.BlockSpec((1, TQ, HW), lambda b, g, tt: (b, tt, g)),
                  pl.BlockSpec((1, S, HW), lambda b, g, tt: (b, 0, g)),
                  pl.BlockSpec((1, S, HW), lambda b, g, tt: (b, 0, g))],
        out_specs=pl.BlockSpec((1, TQ, HW), lambda b, g, tt: (b, tt, g)),
        out_shape=jax.ShapeDtypeStruct((B, S, D), mxu_dtype),
        compiler_params=cparams(("parallel", "parallel", "parallel")),
    )(q, k, v)

    # ---- P3: self out-proj + residual; norm2 + cross-Q projection ------------
    x1, cq = pl.pallas_call(
        functools.partial(_selfout_crossq_kernel, eps=eps, q_scale=q_scale),
        grid=(B, nT),
        in_specs=[row(TS), row(TS), mod_spec2,
                  cs((D, D)), cs((1, D)),
                  cs((1, D)), cs((1, D)),
                  cs((D, D)), cs((1, D))],
        out_specs=(pl.BlockSpec((1, TS, D), lambda b, tt: (b, tt, 0)),
                   pl.BlockSpec((1, TS, D), lambda b, tt: (b, tt, 0))),
        out_shape=(jax.ShapeDtypeStruct((B, S, D), x.dtype),
                   jax.ShapeDtypeStruct((B, S, D), mxu_dtype)),
        compiler_params=cparams(("parallel", "parallel")),
    )(x, attn, mod, W("wo"), P("bo"), P("ln2w"), P("ln2b"), W("cwq"), P("cbq"))

    # ---- P4: head-group cross attention ---------------------------------------
    cross = pl.pallas_call(
        functools.partial(_head_attn_kernel, hpb=HPB, mxu_dtype=mxu_dtype),
        grid=(B, G, nTQ),
        in_specs=[pl.BlockSpec((1, TQ, HW), lambda b, g, tt: (b, tt, g)),
                  pl.BlockSpec((1, L, HW), lambda b, g, tt: (b, 0, g)),
                  pl.BlockSpec((1, L, HW), lambda b, g, tt: (b, 0, g))],
        out_specs=pl.BlockSpec((1, TQ, HW), lambda b, g, tt: (b, tt, g)),
        out_shape=jax.ShapeDtypeStruct((B, S, D), mxu_dtype),
        compiler_params=cparams(("parallel", "parallel", "parallel")),
    )(cq, ck, cv)

    # ---- P5a: cross out-proj + residual; norm3*(1+scale_mlp) ------------------
    x2, nh3 = pl.pallas_call(
        functools.partial(_crossout_norm3_kernel, eps=eps),
        grid=(B, nT),
        in_specs=[row(TS), row(TS), mod_spec2,
                  cs((D, D)), cs((1, D)), cs((1, D)), cs((1, D))],
        out_specs=(pl.BlockSpec((1, TS, D), lambda b, tt: (b, tt, 0)),
                   pl.BlockSpec((1, TS, D), lambda b, tt: (b, tt, 0))),
        out_shape=(jax.ShapeDtypeStruct((B, S, D), x.dtype),
                   jax.ShapeDtypeStruct((B, S, D), mxu_dtype)),
        compiler_params=cparams(("parallel", "parallel")),
    )(x1, cross, mod, W("cwo"), P("cbo"), P("ln3w"), P("ln3b"))

    # ---- P5b: FFN with streamed hidden dimension + residual -------------------
    out = pl.pallas_call(
        functools.partial(_ffn_kernel, gelu_tanh=gelu_tanh),
        grid=(B, nT, nH),
        in_specs=[pl.BlockSpec((1, TS, D), lambda b, tt, h: (b, tt, 0)),
                  pl.BlockSpec((1, TS, D), lambda b, tt, h: (b, tt, 0)),
                  pl.BlockSpec((1, 6, D), lambda b, tt, h: (b, 0, 0)),
                  pl.BlockSpec((D, TH), lambda b, tt, h: (0, h)),
                  pl.BlockSpec((1, TH), lambda b, tt, h: (0, h)),
                  pl.BlockSpec((TH, D), lambda b, tt, h: (h, 0)),
                  cs((1, D))],
        out_specs=pl.BlockSpec((1, TS, D), lambda b, tt, h: (b, tt, 0)),
        out_shape=jax.ShapeDtypeStruct((B, S, D), x.dtype),
        scratch_shapes=[pltpu.VMEM((TS, D), jnp.float32)],
        compiler_params=cparams(("parallel", "parallel", "arbitrary")),
    )(x2, nh3, mod, W("wf1"), P("bf1"), W("wf2"), P("bf2"))

    return out


# ---------------------------------------------------------------------------
# Deterministic parameter init (synthetic; shapes follow the module __init__).
# Dense weights stored pre-transposed (in_dim, out_dim): x @ W + b == x @ W_pt.T + b.
# ---------------------------------------------------------------------------
def init_params(key, dim, cross_dim, dtype=jnp.float32):
    keys = iter(jax.random.split(key, 40))

    def w(shape, scl=0.05):
        return (scl * jax.random.normal(next(keys), shape)).astype(dtype)

    p = {}
    p["wt"], p["bt"] = w((dim, 6 * dim)), w((1, 6 * dim))
    for name, width in [("ln1", dim), ("ln2", dim), ("ln3", dim), ("cn", cross_dim)]:
        p[name + "w"] = (1.0 + w((1, width))).astype(dtype)
        p[name + "b"] = w((1, width))
    for name in ["q", "k", "v", "o"]:
        p["w" + name], p["b" + name] = w((dim, dim)), w((1, dim))
    p["cwq"], p["cbq"] = w((dim, dim)), w((1, dim))
    p["cwk"], p["cbk"] = w((cross_dim, dim)), w((1, dim))
    p["cwv"], p["cbv"] = w((cross_dim, dim)), w((1, dim))
    p["cwo"], p["cbo"] = w((dim, dim)), w((1, dim))
    p["wf1"], p["bf1"] = w((dim, 4 * dim)), w((1, 4 * dim))
    p["wf2"], p["bf2"] = w((4 * dim, dim)), w((1, dim))
    return p


# ---------------------------------------------------------------------------
# Pure-JAX reference (mirrors the PyTorch forward) for validation
# ---------------------------------------------------------------------------
def reference_forward(x, enc, t, cos, sin, p, num_heads, eps=1e-5):
    B, S, D = x.shape
    hd = D // num_heads
    hd2 = hd // 2
    scale = 1.0 / math.sqrt(hd)

    def ln(v, w, b):
        mu = v.mean(-1, keepdims=True)
        var = ((v - mu) ** 2).mean(-1, keepdims=True)
        return (v - mu) / jnp.sqrt(var + eps) * w[0] + b[0]

    tc = t @ p["wt"] + p["bt"][0]
    sm, gm, smlp, gmlp, sc, gc = jnp.split(tc, 6, axis=-1)

    # self-attn with RoPE
    nh = ln(x, p["ln1w"], p["ln1b"]) * (1 + sm[:, None, :])
    q = (nh @ p["wq"] + p["bq"][0]).reshape(B, S, num_heads, hd)
    k = (nh @ p["wk"] + p["bk"][0]).reshape(B, S, num_heads, hd)
    v = (nh @ p["wv"] + p["bv"][0]).reshape(B, S, num_heads, hd)
    cb, sb = cos[:, :, None, :], sin[:, :, None, :]
    q1, q2 = q[..., :hd2], q[..., hd2:]
    k1, k2 = k[..., :hd2], k[..., hd2:]
    qr = jnp.concatenate([q1 * cb - q2 * sb, q1 * sb + q2 * cb], -1)
    kr = jnp.concatenate([k1 * cb - k2 * sb, k1 * sb + k2 * cb], -1)
    s = jnp.einsum("bqhd,bkhd->bhqk", qr, kr) * scale
    attn = jnp.einsum("bhqk,bkhd->bqhd", jax.nn.softmax(s, -1), v).reshape(B, S, D)
    attn = attn @ p["wo"] + p["bo"][0]
    x = x + jnp.tanh(gm)[:, None, :] * attn

    # cross-attn
    nh = ln(x, p["ln2w"], p["ln2b"]) * (1 + sc[:, None, :])
    ne = ln(enc, p["cnw"], p["cnb"])
    cq = (nh @ p["cwq"] + p["cbq"][0]).reshape(B, S, num_heads, hd)
    ck = (ne @ p["cwk"] + p["cbk"][0]).reshape(B, -1, num_heads, hd)
    cv = (ne @ p["cwv"] + p["cbv"][0]).reshape(B, -1, num_heads, hd)
    s = jnp.einsum("bqhd,bkhd->bhqk", cq, ck) * scale
    cr = jnp.einsum("bhqk,bkhd->bqhd", jax.nn.softmax(s, -1), cv).reshape(B, S, D)
    cr = cr @ p["cwo"] + p["cbo"][0]
    x = x + jnp.tanh(gc)[:, None, :] * cr

    # FFN
    nh = ln(x, p["ln3w"], p["ln3b"]) * (1 + smlp[:, None, :])
    h1 = nh @ p["wf1"] + p["bf1"][0]
    h1 = 0.5 * h1 * (1.0 + jax.scipy.special.erf(h1 / math.sqrt(2.0)))
    ffn = h1 @ p["wf2"] + p["bf2"][0]
    return x + jnp.tanh(gmlp)[:, None, :] * ffn


if __name__ == "__main__":
    B, S, L = 2, 8, 8
    dim, heads, cross_dim = 32, 4, 48
    hd = dim // heads

    key = jax.random.PRNGKey(0)
    k1, k2, k3, kp = jax.random.split(key, 4)
    x = jax.random.normal(k1, (B, S, dim), jnp.float32)
    enc = jax.random.normal(k2, (B, L, cross_dim), jnp.float32)
    t = jax.random.normal(k3, (B, dim), jnp.float32)

    pos = jnp.arange(S, dtype=jnp.float32)[:, None]
    inv_freq = 1.0 / (10000.0 ** (jnp.arange(0, hd // 2, dtype=jnp.float32) / (hd // 2)))
    ang = pos * inv_freq[None, :]
    cos = jnp.cos(ang)[None]   # [1, S, hd//2]
    sin = jnp.sin(ang)[None]

    params = init_params(kp, dim, cross_dim)
    ref = reference_forward(x, enc, t, cos, sin, params, heads)

    # f32 MXU path: tight check (only approx-reciprocal softmax / op-order diffs)
    fwd_f32 = jax.jit(functools.partial(blip3o_attention_block, num_heads=heads,
                                        mxu_dtype=jnp.float32))
    out_f32 = jax.block_until_ready(fwd_f32(x, enc, t, cos, sin, params))
    assert out_f32.shape == (B, S, dim)
    np.testing.assert_allclose(np.asarray(out_f32), np.asarray(ref),
                               rtol=5e-3, atol=5e-3)

    # bf16 MXU path (default performance configuration): looser check
    fwd_bf16 = jax.jit(functools.partial(blip3o_attention_block, num_heads=heads,
                                         mxu_dtype=jnp.bfloat16))
    out_bf16 = jax.block_until_ready(fwd_bf16(x, enc, t, cos, sin, params))
    assert out_bf16.shape == (B, S, dim)
    np.testing.assert_allclose(np.asarray(out_bf16), np.asarray(ref),
                               rtol=5e-2, atol=5e-2)

    print("KERNEL_OK")
</pallas_src>

<mosaic_0001>
module attributes {stable_mosaic.version = 11 : i64} {
  func.func @_head_attn_kernel(%arg0: i32, %arg1: i32, %arg2: i32, %arg3: memref<1x8x32xf32, #tpu.memory_space<vmem>>, %arg4: memref<1x8x32xf32, #tpu.memory_space<vmem>>, %arg5: memref<1x8x32xf32, #tpu.memory_space<vmem>>, %arg6: memref<1x8x32xf32, #tpu.memory_space<vmem>>) attributes {dimension_semantics = [#tpu.dimension_semantics<parallel>, #tpu.dimension_semantics<parallel>, #tpu.dimension_semantics<parallel>], iteration_bounds = array<i64: 2, 1, 1>, scalar_prefetch = 0 : i64, scratch_operands = 0 : i64, tpu.core_type = #tpu.core_type<tc>, window_params = [{transform_indices = @transform_0, window_bounds = array<i64: 1, 8, 32>}, {transform_indices = @transform_1, window_bounds = array<i64: 1, 8, 32>}, {transform_indices = @transform_2, window_bounds = array<i64: 1, 8, 32>}, {transform_indices = @transform_3, window_bounds = array<i64: 1, 8, 32>}]} {
    %c0 = arith.constant 0 : index
    %c0_0 = arith.constant 0 : index
    %c0_1 = arith.constant 0 : index
    %0 = vector.load %arg3[%c0, %c0_0, %c0_1] : memref<1x8x32xf32, #tpu.memory_space<vmem>>, vector<1x8x32xf32>
    %1 = vector.shape_cast %0 : vector<1x8x32xf32> to vector<8x32xf32>
    %2 = vector.shape_cast %1 : vector<8x32xf32> to vector<8x4x8xf32>
    %c0_2 = arith.constant 0 : index
    %c0_3 = arith.constant 0 : index
    %c0_4 = arith.constant 0 : index
    %3 = vector.load %arg4[%c0_2, %c0_3, %c0_4] : memref<1x8x32xf32, #tpu.memory_space<vmem>>, vector<1x8x32xf32>
    %4 = vector.shape_cast %3 : vector<1x8x32xf32> to vector<8x32xf32>
    %5 = vector.shape_cast %4 : vector<8x32xf32> to vector<8x4x8xf32>
    %c0_5 = arith.constant 0 : index
    %c0_6 = arith.constant 0 : index
    %c0_7 = arith.constant 0 : index
    %6 = vector.load %arg5[%c0_5, %c0_6, %c0_7] : memref<1x8x32xf32, #tpu.memory_space<vmem>>, vector<1x8x32xf32>
    %7 = vector.shape_cast %6 : vector<1x8x32xf32> to vector<8x32xf32>
    %8 = vector.shape_cast %7 : vector<8x32xf32> to vector<8x4x8xf32>
    "tpu.trace_start"() <{level = 10 : i32, message = "qhd,khd->hqk"}> : () -> ()
    %cst = arith.constant dense<0.000000e+00> : vector<4x8x8xf32>
    %9 = tpu.matmul %2, %5, %cst {dimension_numbers = #tpu.dot_dimension_numbers<[2], [2], [0], [0], [0, 1, 0, 0, 1, 0], [1], [1]>} : vector<8x4x8xf32>, vector<8x4x8xf32>, vector<4x8x8xf32> -> vector<4x8x8xf32>
    "tpu.trace_stop"() : () -> ()
    %cst_8 = arith.constant dense<0xFF800000> : vector<4x8xf32>
    %10 = vector.multi_reduction <maximumf>, %9, %cst_8 [2] : vector<4x8x8xf32> to vector<4x8xf32>
    %11 = vector.shape_cast %10 : vector<4x8xf32> to vector<4x8x1xf32>
    %12 = vector.broadcast %11 : vector<4x8x1xf32> to vector<4x8x8xf32>
    %13 = arith.subf %9, %12 : vector<4x8x8xf32>
    %14 = math.exp %13 : vector<4x8x8xf32>
    %cst_9 = arith.constant dense<0.000000e+00> : vector<4x8xf32>
    %15 = vector.multi_reduction <add>, %14, %cst_9 [2] : vector<4x8x8xf32> to vector<4x8xf32>
    %16 = vector.shape_cast %15 : vector<4x8xf32> to vector<4x8x1xf32>
    %17 = tpu.reciprocal %16 {approx = true} : vector<4x8x1xf32> -> vector<4x8x1xf32>
    %18 = vector.broadcast %17 : vector<4x8x1xf32> to vector<4x8x8xf32>
    %19 = arith.mulf %14, %18 : vector<4x8x8xf32>
    "tpu.trace_start"() <{level = 10 : i32, message = "hqk,khd->qhd"}> : () -> ()
    %cst_10 = arith.constant dense<0.000000e+00> : vector<4x8x8xf32>
    %20 = tpu.matmul %8, %19, %cst_10 {dimension_numbers = #tpu.dot_dimension_numbers<[0], [2], [2], [1], [0, 1, 0, 2, 1, 1], [1], [0]>} : vector<8x4x8xf32>, vector<4x8x8xf32>, vector<4x8x8xf32> -> vector<4x8x8xf32>
    %21 = tpu.transpose %20, [2, 0, 1] : vector<4x8x8xf32> -> vector<8x4x8xf32>
    "tpu.trace_stop"() : () -> ()
    %22 = vector.shape_cast %21 : vector<8x4x8xf32> to vector<8x32xf32>
    %c0_11 = arith.constant 0 : index
    %c0_12 = arith.constant 0 : index
    %c0_13 = arith.constant 0 : index
    %23 = vector.load %arg6[%c0_11, %c0_12, %c0_13] : memref<1x8x32xf32, #tpu.memory_space<vmem>>, vector<1x8x32xf32>
    %24 = vector.shape_cast %23 : vector<1x8x32xf32> to vector<8x32xf32>
    %25 = vector.shape_cast %22 : vector<8x32xf32> to vector<1x8x32xf32>
    tpu.vector_store %arg6[%c0_11, %c0_12, %c0_13], %25 {strides = array<i32>} : memref<1x8x32xf32, #tpu.memory_space<vmem>>, vector<1x8x32xf32>,
    return
  }
  func.func @transform_0(%arg0: i32, %arg1: i32, %arg2: i32) -> (i32, i32, i32) {
    %c0_i32 = arith.constant 0 : i32
    return %arg0, %arg2, %arg1 : i32, i32, i32
  }
  func.func @transform_1(%arg0: i32, %arg1: i32, %arg2: i32) -> (i32, i32, i32) {
    %c0_i32 = arith.constant 0 : i32
    %c0_i32_0 = arith.constant 0 : i32
    return %arg0, %c0_i32, %arg1 : i32, i32, i32
  }
  func.func @transform_2(%arg0: i32, %arg1: i32, %arg2: i32) -> (i32, i32, i32) {
    %c0_i32 = arith.constant 0 : i32
    %c0_i32_0 = arith.constant 0 : i32
    return %arg0, %c0_i32, %arg1 : i32, i32, i32
  }
  func.func @transform_3(%arg0: i32, %arg1: i32, %arg2: i32) -> (i32, i32, i32) {
    %c0_i32 = arith.constant 0 : i32
    return %arg0, %arg2, %arg1 : i32, i32, i32
  }
}

module attributes {stable_mosaic.version = 11 : i64} {
  func.func @_selfout_crossq_kernel(%arg0: i32, %arg1: i32, %arg2: memref<1x8x32xf32, #tpu.memory_space<vmem>>, %arg3: memref<1x8x32xf32, #tpu.memory_space<vmem>>, %arg4: memref<1x6x32xf32, #tpu.memory_space<vmem>>, %arg5: memref<32x32xf32, #tpu.memory_space<vmem>>, %arg6: memref<1x32xf32, #tpu.memory_space<vmem>>, %arg7: memref<1x32xf32, #tpu.memory_space<vmem>>, %arg8: memref<1x32xf32, #tpu.memory_space<vmem>>, %arg9: memref<32x32xf32, #tpu.memory_space<vmem>>, %arg10: memref<1x32xf32, #tpu.memory_space<vmem>>, %arg11: memref<1x8x32xf32, #tpu.memory_space<vmem>>, %arg12: memref<1x8x32xf32, #tpu.memory_space<vmem>>) attributes {dimension_semantics = [#tpu.dimension_semantics<parallel>, #tpu.dimension_semantics<parallel>], iteration_bounds = array<i64: 2, 1>, scalar_prefetch = 0 : i64, scratch_operands = 0 : i64, tpu.core_type = #tpu.core_type<tc>, window_params = [{transform_indices = @transform_0, window_bounds = array<i64: 1, 8, 32>}, {transform_indices = @transform_1, window_bounds = array<i64: 1, 8, 32>}, {transform_indices = @transform_2, window_bounds = array<i64: 1, 6, 32>}, {pipeline_mode = #tpu.pipeline_mode<synchronous>, transform_indices = @transform_3, window_bounds = array<i64: 32, 32>}, {pipeline_mode = #tpu.pipeline_mode<synchronous>, transform_indices = @transform_4, window_bounds = array<i64: 1, 32>}, {pipeline_mode = #tpu.pipeline_mode<synchronous>, transform_indices = @transform_5, window_bounds = array<i64: 1, 32>}, {pipeline_mode = #tpu.pipeline_mode<synchronous>, transform_indices = @transform_6, window_bounds = array<i64: 1, 32>}, {pipeline_mode = #tpu.pipeline_mode<synchronous>, transform_indices = @transform_7, window_bounds = array<i64: 32, 32>}, {pipeline_mode = #tpu.pipeline_mode<synchronous>, transform_indices = @transform_8, window_bounds = array<i64: 1, 32>}, {transform_indices = @transform_9, window_bounds = array<i64: 1, 8, 32>}, {transform_indices = @transform_10, window_bounds = array<i64: 1, 8, 32>}]} {
    %c0 = arith.constant 0 : index
    %c0_0 = arith.constant 0 : index
    %c0_1 = arith.constant 0 : index
    %0 = vector.load %arg2[%c0, %c0_0, %c0_1] : memref<1x8x32xf32, #tpu.memory_space<vmem>>, vector<1x8x32xf32>
    %1 = vector.shape_cast %0 : vector<1x8x32xf32> to vector<8x32xf32>
    %c0_2 = arith.constant 0 : index
    %c0_3 = arith.constant 0 : index
    %c0_4 = arith.constant 0 : index
    %2 = vector.load %arg4[%c0_2, %c0_3, %c0_4] : memref<1x6x32xf32, #tpu.memory_space<vmem>>, vector<1x6x32xf32>
    %3 = vector.shape_cast %2 : vector<1x6x32xf32> to vector<6x32xf32>
    %4 = vector.extract_strided_slice %3 {offsets = [1, 0], sizes = [1, 32], strides = [1, 1]} : vector<6x32xf32> to vector<1x32xf32>
    %5 = vector.extract_strided_slice %3 {offsets = [4, 0], sizes = [1, 32], strides = [1, 1]} : vector<6x32xf32> to vector<1x32xf32>
    %c0_5 = arith.constant 0 : index
    %c0_6 = arith.constant 0 : index
    %c0_7 = arith.constant 0 : index
    %6 = vector.load %arg3[%c0_5, %c0_6, %c0_7] : memref<1x8x32xf32, #tpu.memory_space<vmem>>, vector<1x8x32xf32>
    %7 = vector.shape_cast %6 : vector<1x8x32xf32> to vector<8x32xf32>
    %c0_8 = arith.constant 0 : index
    %c0_9 = arith.constant 0 : index
    %8 = vector.load %arg5[%c0_8, %c0_9] : memref<32x32xf32, #tpu.memory_space<vmem>>, vector<32x32xf32>
    %cst = arith.constant dense<0.000000e+00> : vector<8x32xf32>
    %9 = tpu.matmul %7, %8, %cst {dimension_numbers = #tpu.dot_dimension_numbers<[1], [0], [0], [1], [0, 0, 1, 1], [], []>} : vector<8x32xf32>, vector<32x32xf32>, vector<8x32xf32> -> vector<8x32xf32>
    %c0_10 = arith.constant 0 : index
    %c0_11 = arith.constant 0 : index
    %10 = vector.load %arg6[%c0_10, %c0_11] : memref<1x32xf32, #tpu.memory_space<vmem>>, vector<1x32xf32>
    %11 = vector.broadcast %10 : vector<1x32xf32> to vector<8x32xf32>
    %12 = arith.addf %9, %11 : vector<8x32xf32>
    %13 = vector.broadcast %4 : vector<1x32xf32> to vector<8x32xf32>
    %14 = arith.mulf %13, %12 : vector<8x32xf32>
    %15 = arith.addf %1, %14 : vector<8x32xf32>
    %c0_12 = arith.constant 0 : index
    %c0_13 = arith.constant 0 : index
    %c0_14 = arith.constant 0 : index
    %16 = vector.load %arg11[%c0_12, %c0_13, %c0_14] : memref<1x8x32xf32, #tpu.memory_space<vmem>>, vector<1x8x32xf32>
    %17 = vector.shape_cast %16 : vector<1x8x32xf32> to vector<8x32xf32>
    %18 = vector.shape_cast %15 : vector<8x32xf32> to vector<1x8x32xf32>
    tpu.vector_store %arg11[%c0_12, %c0_13, %c0_14], %18 {strides = array<i32>} : memref<1x8x32xf32, #tpu.memory_space<vmem>>, vector<1x8x32xf32>,
    %c0_15 = arith.constant 0 : index
    %c0_16 = arith.constant 0 : index
    %19 = vector.load %arg7[%c0_15, %c0_16] : memref<1x32xf32, #tpu.memory_space<vmem>>, vector<1x32xf32>
    %c0_17 = arith.constant 0 : index
    %c0_18 = arith.constant 0 : index
    %20 = vector.load %arg8[%c0_17, %c0_18] : memref<1x32xf32, #tpu.memory_space<vmem>>, vector<1x32xf32>
    %cst_19 = arith.constant dense<0.000000e+00> : vector<8xf32>
    %21 = vector.multi_reduction <add>, %15, %cst_19 [1] : vector<8x32xf32> to vector<8xf32>
    %22 = vector.shape_cast %21 : vector<8xf32> to vector<8x1xf32>
    %cst_20 = arith.constant 3.200000e+01 : f32
    %23 = vector.broadcast %cst_20 : f32 to vector<8x1xf32>
    %24 = arith.divf %22, %23 : vector<8x1xf32>
    %25 = vector.broadcast %24 : vector<8x1xf32> to vector<8x32xf32>
    %26 = arith.subf %15, %25 : vector<8x32xf32>
    %27 = arith.mulf %26, %26 : vector<8x32xf32>
    %cst_21 = arith.constant dense<0.000000e+00> : vector<8xf32>
    %28 = vector.multi_reduction <add>, %27, %cst_21 [1] : vector<8x32xf32> to vector<8xf32>
    %29 = vector.shape_cast %28 : vector<8xf32> to vector<8x1xf32>
    %cst_22 = arith.constant 3.200000e+01 : f32
    %30 = vector.broadcast %cst_22 : f32 to vector<8x1xf32>
    %31 = arith.divf %29, %30 : vector<8x1xf32>
    %32 = vector.broadcast %24 : vector<8x1xf32> to vector<8x32xf32>
    %33 = arith.subf %15, %32 : vector<8x32xf32>
    %cst_23 = arith.constant 9.99999974E-6 : f32
    %34 = vector.broadcast %cst_23 : f32 to vector<8x1xf32>
    %35 = arith.addf %31, %34 : vector<8x1xf32>
    %36 = math.rsqrt %35 : vector<8x1xf32>
    %37 = vector.broadcast %36 : vector<8x1xf32> to vector<8x32xf32>
    %38 = arith.mulf %33, %37 : vector<8x32xf32>
    %39 = vector.broadcast %19 : vector<1x32xf32> to vector<8x32xf32>
    %40 = arith.mulf %38, %39 : vector<8x32xf32>
    %41 = vector.broadcast %20 : vector<1x32xf32> to vector<8x32xf32>
    %42 = arith.addf %40, %41 : vector<8x32xf32>
    %43 = vector.broadcast %5 : vector<1x32xf32> to vector<8x32xf32>
    %44 = arith.mulf %42, %43 : vector<8x32xf32>
    %c0_24 = arith.constant 0 : index
    %c0_25 = arith.constant 0 : index
    %45 = vector.load %arg9[%c0_24, %c0_25] : memref<32x32xf32, #tpu.memory_space<vmem>>, vector<32x32xf32>
    %cst_26 = arith.constant dense<0.000000e+00> : vector<8x32xf32>
    %46 = tpu.matmul %44, %45, %cst_26 {dimension_numbers = #tpu.dot_dimension_numbers<[1], [0], [0], [1], [0, 0, 1, 1], [], []>} : vector<8x32xf32>, vector<32x32xf32>, vector<8x32xf32> -> vector<8x32xf32>
    %c0_27 = arith.constant 0 : index
    %c0_28 = arith.constant 0 : index
    %47 = vector.load %arg10[%c0_27, %c0_28] : memref<1x32xf32, #tpu.memory_space<vmem>>, vector<1x32xf32>
    %48 = vector.broadcast %47 : vector<1x32xf32> to vector<8x32xf32>
    %49 = arith.addf %46, %48 : vector<8x32xf32>
    %cst_29 = arith.constant 0.353553385 : f32
    %50 = vector.broadcast %cst_29 : f32 to vector<8x32xf32>
    %51 = arith.mulf %49, %50 : vector<8x32xf32>
    %c0_30 = arith.constant 0 : index
    %c0_31 = arith.constant 0 : index
    %c0_32 = arith.constant 0 : index
    %52 = vector.load %arg12[%c0_30, %c0_31, %c0_32] : memref<1x8x32xf32, #tpu.memory_space<vmem>>, vector<1x8x32xf32>
    %53 = vector.shape_cast %52 : vector<1x8x32xf32> to vector<8x32xf32>
    %54 = vector.shape_cast %51 : vector<8x32xf32> to vector<1x8x32xf32>
    tpu.vector_store %arg12[%c0_30, %c0_31, %c0_32], %54 {strides = array<i32>} : memref<1x8x32xf32, #tpu.memory_space<vmem>>, vector<1x8x32xf32>,
    return
  }
  func.func @transform_0(%arg0: i32, %arg1: i32) -> (i32, i32, i32) {
    %c0_i32 = arith.constant 0 : i32
    %c0_i32_0 = arith.constant 0 : i32
    return %arg0, %arg1, %c0_i32 : i32, i32, i32
  }
  func.func @transform_1(%arg0: i32, %arg1: i32) -> (i32, i32, i32) {
    %c0_i32 = arith.constant 0 : i32
    %c0_i32_0 = arith.constant 0 : i32
    return %arg0, %arg1, %c0_i32 : i32, i32, i32
  }
  func.func @transform_2(%arg0: i32, %arg1: i32) -> (i32, i32, i32) {
    %c0_i32 = arith.constant 0 : i32
    %c0_i32_0 = arith.constant 0 : i32
    %c0_i32_1 = arith.constant 0 : i32
    return %arg0, %c0_i32, %c0_i32_0 : i32, i32, i32
  }
  func.func @transform_3(%arg0: i32, %arg1: i32) -> (i32, i32) {
    %c0_i32 = arith.constant 0 : i32
    %c0_i32_0 = arith.constant 0 : i32
    %c0_i32_1 = arith.constant 0 : i32
    return %c0_i32, %c0_i32_0 : i32, i32
  }
  func.func @transform_4(%arg0: i32, %arg1: i32) -> (i32, i32) {
    %c0_i32 = arith.constant 0 : i32
    %c0_i32_0 = arith.constant 0 : i32
    %c0_i32_1 = arith.constant 0 : i32
    return %c0_i32, %c0_i32_0 : i32, i32
  }
  func.func @transform_5(%arg0: i32, %arg1: i32) -> (i32, i32) {
    %c0_i32 = arith.constant 0 : i32
    %c0_i32_0 = arith.constant 0 : i32
    %c0_i32_1 = arith.constant 0 : i32
    return %c0_i32, %c0_i32_0 : i32, i32
  }
  func.func @transform_6(%arg0: i32, %arg1: i32) -> (i32, i32) {
    %c0_i32 = arith.constant 0 : i32
    %c0_i32_0 = arith.constant 0 : i32
    %c0_i32_1 = arith.constant 0 : i32
    return %c0_i32, %c0_i32_0 : i32, i32
  }
  func.func @transform_7(%arg0: i32, %arg1: i32) -> (i32, i32) {
    %c0_i32 = arith.constant 0 : i32
    %c0_i32_0 = arith.constant 0 : i32
    %c0_i32_1 = arith.constant 0 : i32
    return %c0_i32, %c0_i32_0 : i32, i32
  }
  func.func @transform_8(%arg0: i32, %arg1: i32) -> (i32, i32) {
    %c0_i32 = arith.constant 0 : i32
    %c0_i32_0 = arith.constant 0 : i32
    %c0_i32_1 = arith.constant 0 : i32
    return %c0_i32, %c0_i32_0 : i32, i32
  }
  func.func @transform_9(%arg0: i32, %arg1: i32) -> (i32, i32, i32) {
    %c0_i32 = arith.constant 0 : i32
    %c0_i32_0 = arith.constant 0 : i32
    return %arg0, %arg1, %c0_i32 : i32, i32, i32
  }
  func.func @transform_10(%arg0: i32, %arg1: i32) -> (i32, i32, i32) {
    %c0_i32 = arith.constant 0 : i32
    %c0_i32_0 = arith.constant 0 : i32
    return %arg0, %arg1, %c0_i32 : i32, i32, i32
  }
}

module attributes {stable_mosaic.version = 11 : i64} {
  func.func @_qkv_rope_kernel(%arg0: i32, %arg1: i32, %arg2: memref<1x8x32xf32, #tpu.memory_space<vmem>>, %arg3: memref<1x6x32xf32, #tpu.memory_space<vmem>>, %arg4: memref<8x4xf32, #tpu.memory_space<vmem>>, %arg5: memref<8x4xf32, #tpu.memory_space<vmem>>, %arg6: memref<1x32xf32, #tpu.memory_space<vmem>>, %arg7: memref<1x32xf32, #tpu.memory_space<vmem>>, %arg8: memref<32x32xf32, #tpu.memory_space<vmem>>, %arg9: memref<1x32xf32, #tpu.memory_space<vmem>>, %arg10: memref<32x32xf32, #tpu.memory_space<vmem>>, %arg11: memref<1x32xf32, #tpu.memory_space<vmem>>, %arg12: memref<32x32xf32, #tpu.memory_space<vmem>>, %arg13: memref<1x32xf32, #tpu.memory_space<vmem>>, %arg14: memref<1x8x32xf32, #tpu.memory_space<vmem>>, %arg15: memref<1x8x32xf32, #tpu.memory_space<vmem>>, %arg16: memref<1x8x32xf32, #tpu.memory_space<vmem>>) attributes {dimension_semantics = [#tpu.dimension_semantics<parallel>, #tpu.dimension_semantics<parallel>], iteration_bounds = array<i64: 2, 1>, scalar_prefetch = 0 : i64, scratch_operands = 0 : i64, tpu.core_type = #tpu.core_type<tc>, window_params = [{transform_indices = @transform_0, window_bounds = array<i64: 1, 8, 32>}, {transform_indices = @transform_1, window_bounds = array<i64: 1, 6, 32>}, {transform_indices = @transform_2, window_bounds = array<i64: 8, 4>}, {transform_indices = @transform_3, window_bounds = array<i64: 8, 4>}, {pipeline_mode = #tpu.pipeline_mode<synchronous>, transform_indices = @transform_4, window_bounds = array<i64: 1, 32>}, {pipeline_mode = #tpu.pipeline_mode<synchronous>, transform_indices = @transform_5, window_bounds = array<i64: 1, 32>}, {pipeline_mode = #tpu.pipeline_mode<synchronous>, transform_indices = @transform_6, window_bounds = array<i64: 32, 32>}, {pipeline_mode = #tpu.pipeline_mode<synchronous>, transform_indices = @transform_7, window_bounds = array<i64: 1, 32>}, {pipeline_mode = #tpu.pipeline_mode<synchronous>, transform_indices = @transform_8, window_bounds = array<i64: 32, 32>}, {pipeline_mode = #tpu.pipeline_mode<synchronous>, transform_indices = @transform_9, window_bounds = array<i64: 1, 32>}, {pipeline_mode = #tpu.pipeline_mode<synchronous>, transform_indices = @transform_10, window_bounds = array<i64: 32, 32>}, {pipeline_mode = #tpu.pipeline_mode<synchronous>, transform_indices = @transform_11, window_bounds = array<i64: 1, 32>}, {transform_indices = @transform_12, window_bounds = array<i64: 1, 8, 32>}, {transform_indices = @transform_13, window_bounds = array<i64: 1, 8, 32>}, {transform_indices = @transform_14, window_bounds = array<i64: 1, 8, 32>}]} {
    %c0 = arith.constant 0 : index
    %c0_0 = arith.constant 0 : index
    %c0_1 = arith.constant 0 : index
    %0 = vector.load %arg2[%c0, %c0_0, %c0_1] : memref<1x8x32xf32, #tpu.memory_space<vmem>>, vector<1x8x32xf32>
    %1 = vector.shape_cast %0 : vector<1x8x32xf32> to vector<8x32xf32>
    %c0_2 = arith.constant 0 : index
    %c0_3 = arith.constant 0 : index
    %c0_4 = arith.constant 0 : index
    %2 = vector.load %arg3[%c0_2, %c0_3, %c0_4] : memref<1x6x32xf32, #tpu.memory_space<vmem>>, vector<1x6x32xf32>
    %3 = vector.shape_cast %2 : vector<1x6x32xf32> to vector<6x32xf32>
    %4 = vector.extract_strided_slice %3 {offsets = [0, 0], sizes = [1, 32], strides = [1, 1]} : vector<6x32xf32> to vector<1x32xf32>
    %c0_5 = arith.constant 0 : index
    %c0_6 = arith.constant 0 : index
    %5 = vector.load %arg6[%c0_5, %c0_6] : memref<1x32xf32, #tpu.memory_space<vmem>>, vector<1x32xf32>
    %c0_7 = arith.constant 0 : index
    %c0_8 = arith.constant 0 : index
    %6 = vector.load %arg7[%c0_7, %c0_8] : memref<1x32xf32, #tpu.memory_space<vmem>>, vector<1x32xf32>
    %cst = arith.constant dense<0.000000e+00> : vector<8xf32>
    %7 = vector.multi_reduction <add>, %1, %cst [1] : vector<8x32xf32> to vector<8xf32>
    %8 = vector.shape_cast %7 : vector<8xf32> to vector<8x1xf32>
    %cst_9 = arith.constant 3.200000e+01 : f32
    %9 = vector.broadcast %cst_9 : f32 to vector<8x1xf32>
    %10 = arith.divf %8, %9 : vector<8x1xf32>
    %11 = vector.broadcast %10 : vector<8x1xf32> to vector<8x32xf32>
    %12 = arith.subf %1, %11 : vector<8x32xf32>
    %13 = arith.mulf %12, %12 : vector<8x32xf32>
    %cst_10 = arith.constant dense<0.000000e+00> : vector<8xf32>
    %14 = vector.multi_reduction <add>, %13, %cst_10 [1] : vector<8x32xf32> to vector<8xf32>
    %15 = vector.shape_cast %14 : vector<8xf32> to vector<8x1xf32>
    %cst_11 = arith.constant 3.200000e+01 : f32
    %16 = vector.broadcast %cst_11 : f32 to vector<8x1xf32>
    %17 = arith.divf %15, %16 : vector<8x1xf32>
    %18 = vector.broadcast %10 : vector<8x1xf32> to vector<8x32xf32>
    %19 = arith.subf %1, %18 : vector<8x32xf32>
    %cst_12 = arith.constant 9.99999974E-6 : f32
    %20 = vector.broadcast %cst_12 : f32 to vector<8x1xf32>
    %21 = arith.addf %17, %20 : vector<8x1xf32>
    %22 = math.rsqrt %21 : vector<8x1xf32>
    %23 = vector.broadcast %22 : vector<8x1xf32> to vector<8x32xf32>
    %24 = arith.mulf %19, %23 : vector<8x32xf32>
    %25 = vector.broadcast %5 : vector<1x32xf32> to vector<8x32xf32>
    %26 = arith.mulf %24, %25 : vector<8x32xf32>
    %27 = vector.broadcast %6 : vector<1x32xf32> to vector<8x32xf32>
    %28 = arith.addf %26, %27 : vector<8x32xf32>
    %29 = vector.broadcast %4 : vector<1x32xf32> to vector<8x32xf32>
    %30 = arith.mulf %28, %29 : vector<8x32xf32>
    %c0_13 = arith.constant 0 : index
    %c0_14 = arith.constant 0 : index
    %31 = vector.load %arg8[%c0_13, %c0_14] : memref<32x32xf32, #tpu.memory_space<vmem>>, vector<32x32xf32>
    %cst_15 = arith.constant dense<0.000000e+00> : vector<8x32xf32>
    %32 = tpu.matmul %30, %31, %cst_15 {dimension_numbers = #tpu.dot_dimension_numbers<[1], [0], [0], [1], [0, 0, 1, 1], [], []>} : vector<8x32xf32>, vector<32x32xf32>, vector<8x32xf32> -> vector<8x32xf32>
    %c0_16 = arith.constant 0 : index
    %c0_17 = arith.constant 0 : index
    %33 = vector.load %arg9[%c0_16, %c0_17] : memref<1x32xf32, #tpu.memory_space<vmem>>, vector<1x32xf32>
    %34 = vector.broadcast %33 : vector<1x32xf32> to vector<8x32xf32>
    %35 = arith.addf %32, %34 : vector<8x32xf32>
    %c0_18 = arith.constant 0 : index
    %c0_19 = arith.constant 0 : index
    %36 = vector.load %arg10[%c0_18, %c0_19] : memref<32x32xf32, #tpu.memory_space<vmem>>, vector<32x32xf32>
    %cst_20 = arith.constant dense<0.000000e+00> : vector<8x32xf32>
    %37 = tpu.matmul %30, %36, %cst_20 {dimension_numbers = #tpu.dot_dimension_numbers<[1], [0], [0], [1], [0, 0, 1, 1], [], []>} : vector<8x32xf32>, vector<32x32xf32>, vector<8x32xf32> -> vector<8x32xf32>
    %c0_21 = arith.constant 0 : index
    %c0_22 = arith.constant 0 : index
    %38 = vector.load %arg11[%c0_21, %c0_22] : memref<1x32xf32, #tpu.memory_space<vmem>>, vector<1x32xf32>
    %39 = vector.broadcast %38 : vector<1x32xf32> to vector<8x32xf32>
    %40 = arith.addf %37, %39 : vector<8x32xf32>
    %c0_23 = arith.constant 0 : index
    %c0_24 = arith.constant 0 : index
    %41 = vector.load %arg12[%c0_23, %c0_24] : memref<32x32xf32, #tpu.memory_space<vmem>>, vector<32x32xf32>
    %cst_25 = arith.constant dense<0.000000e+00> : vector<8x32xf32>
    %42 = tpu.matmul %30, %41, %cst_25 {dimension_numbers = #tpu.dot_dimension_numbers<[1], [0], [0], [1], [0, 0, 1, 1], [], []>} : vector<8x32xf32>, vector<32x32xf32>, vector<8x32xf32> -> vector<8x32xf32>
    %c0_26 = arith.constant 0 : index
    %c0_27 = arith.constant 0 : index
    %43 = vector.load %arg13[%c0_26, %c0_27] : memref<1x32xf32, #tpu.memory_space<vmem>>, vector<1x32xf32>
    %44 = vector.broadcast %43 : vector<1x32xf32> to vector<8x32xf32>
    %45 = arith.addf %42, %44 : vector<8x32xf32>
    %c0_28 = arith.constant 0 : index
    %c0_29 = arith.constant 0 : index
    %46 = vector.load %arg4[%c0_28, %c0_29] : memref<8x4xf32, #tpu.memory_space<vmem>>, vector<8x4xf32>
    %47 = vector.shape_cast %46 : vector<8x4xf32> to vector<8x1x4xf32>
    %c0_30 = arith.constant 0 : index
    %c0_31 = arith.constant 0 : index
    %48 = vector.load %arg5[%c0_30, %c0_31] : memref<8x4xf32, #tpu.memory_space<vmem>>, vector<8x4xf32>
    %49 = vector.shape_cast %48 : vector<8x4xf32> to vector<8x1x4xf32>
    %50 = vector.shape_cast %35 : vector<8x32xf32> to vector<8x4x8xf32>
    %51 = vector.extract_strided_slice %50 {offsets = [0, 0, 0], sizes = [8, 4, 4], strides = [1, 1, 1]} : vector<8x4x8xf32> to vector<8x4x4xf32>
    %52 = vector.extract_strided_slice %50 {offsets = [0, 0, 4], sizes = [8, 4, 4], strides = [1, 1, 1]} : vector<8x4x8xf32> to vector<8x4x4xf32>
    %53 = vector.broadcast %47 : vector<8x1x4xf32> to vector<8x4x4xf32>
    %54 = arith.mulf %51, %53 : vector<8x4x4xf32>
    %55 = vector.broadcast %49 : vector<8x1x4xf32> to vector<8x4x4xf32>
    %56 = arith.mulf %52, %55 : vector<8x4x4xf32>
    %57 = arith.subf %54, %56 : vector<8x4x4xf32>
    %58 = vector.broadcast %49 : vector<8x1x4xf32> to vector<8x4x4xf32>
    %59 = arith.mulf %51, %58 : vector<8x4x4xf32>
    %60 = vector.broadcast %47 : vector<8x1x4xf32> to vector<8x4x4xf32>
    %61 = arith.mulf %52, %60 : vector<8x4x4xf32>
    %62 = arith.addf %59, %61 : vector<8x4x4xf32>
    %63 = tpu.concatenate %57, %62 in 2 : vector<8x4x4xf32>, vector<8x4x4xf32> -> vector<8x4x8xf32>
    %64 = vector.shape_cast %63 : vector<8x4x8xf32> to vector<8x32xf32>
    %cst_32 = arith.constant 0.353553385 : f32
    %65 = vector.broadcast %cst_32 : f32 to vector<8x32xf32>
    %66 = arith.mulf %64, %65 : vector<8x32xf32>
    %c0_33 = arith.constant 0 : index
    %c0_34 = arith.constant 0 : index
    %c0_35 = arith.constant 0 : index
    %67 = vector.load %arg14[%c0_33, %c0_34, %c0_35] : memref<1x8x32xf32, #tpu.memory_space<vmem>>, vector<1x8x32xf32>
    %68 = vector.shape_cast %67 : vector<1x8x32xf32> to vector<8x32xf32>
    %69 = vector.shape_cast %66 : vector<8x32xf32> to vector<1x8x32xf32>
    tpu.vector_store %arg14[%c0_33, %c0_34, %c0_35], %69 {strides = array<i32>} : memref<1x8x32xf32, #tpu.memory_space<vmem>>, vector<1x8x32xf32>,
    %70 = vector.shape_cast %40 : vector<8x32xf32> to vector<8x4x8xf32>
    %71 = vector.extract_strided_slice %70 {offsets = [0, 0, 0], sizes = [8, 4, 4], strides = [1, 1, 1]} : vector<8x4x8xf32> to vector<8x4x4xf32>
    %72 = vector.extract_strided_slice %70 {offsets = [0, 0, 4], sizes = [8, 4, 4], strides = [1, 1, 1]} : vector<8x4x8xf32> to vector<8x4x4xf32>
    %73 = vector.broadcast %47 : vector<8x1x4xf32> to vector<8x4x4xf32>
    %74 = arith.mulf %71, %73 : vector<8x4x4xf32>
    %75 = vector.broadcast %49 : vector<8x1x4xf32> to vector<8x4x4xf32>
    %76 = arith.mulf %72, %75 : vector<8x4x4xf32>
    %77 = arith.subf %74, %76 : vector<8x4x4xf32>
    %78 = vector.broadcast %49 : vector<8x1x4xf32> to vector<8x4x4xf32>
    %79 = arith.mulf %71, %78 : vector<8x4x4xf32>
    %80 = vector.broadcast %47 : vector<8x1x4xf32> to vector<8x4x4xf32>
    %81 = arith.mulf %72, %80 : vector<8x4x4xf32>
    %82 = arith.addf %79, %81 : vector<8x4x4xf32>
    %83 = tpu.concatenate %77, %82 in 2 : vector<8x4x4xf32>, vector<8x4x4xf32> -> vector<8x4x8xf32>
    %84 = vector.shape_cast %83 : vector<8x4x8xf32> to vector<8x32xf32>
    %c0_36 = arith.constant 0 : index
    %c0_37 = arith.constant 0 : index
    %c0_38 = arith.constant 0 : index
    %85 = vector.load %arg15[%c0_36, %c0_37, %c0_38] : memref<1x8x32xf32, #tpu.memory_space<vmem>>, vector<1x8x32xf32>
    %86 = vector.shape_cast %85 : vector<1x8x32xf32> to vector<8x32xf32>
    %87 = vector.shape_cast %84 : vector<8x32xf32> to vector<1x8x32xf32>
    tpu.vector_store %arg15[%c0_36, %c0_37, %c0_38], %87 {strides = array<i32>} : memref<1x8x32xf32, #tpu.memory_space<vmem>>, vector<1x8x32xf32>,
    %c0_39 = arith.constant 0 : index
    %c0_40 = arith.constant 0 : index
    %c0_41 = arith.constant 0 : index
    %88 = vector.load %arg16[%c0_39, %c0_40, %c0_41] : memref<1x8x32xf32, #tpu.memory_space<vmem>>, vector<1x8x32xf32>
    %89 = vector.shape_cast %88 : vector<1x8x32xf32> to vector<8x32xf32>
    %90 = vector.shape_cast %45 : vector<8x32xf32> to vector<1x8x32xf32>
    tpu.vector_store %arg16[%c0_39, %c0_40, %c0_41], %90 {strides = array<i32>} : memref<1x8x32xf32, #tpu.memory_space<vmem>>, vector<1x8x32xf32>,
    return
  }
  func.func @transform_0(%arg0: i32, %arg1: i32) -> (i32, i32, i32) {
    %c0_i32 = arith.constant 0 : i32
    %c0_i32_0 = arith.constant 0 : i32
    return %arg0, %arg1, %c0_i32 : i32, i32, i32
  }
  func.func @transform_1(%arg0: i32, %arg1: i32) -> (i32, i32, i32) {
    %c0_i32 = arith.constant 0 : i32
    %c0_i32_0 = arith.constant 0 : i32
    %c0_i32_1 = arith.constant 0 : i32
    return %arg0, %c0_i32, %c0_i32_0 : i32, i32, i32
  }
  func.func @transform_2(%arg0: i32, %arg1: i32) -> (i32, i32) {
    %c0_i32 = arith.constant 0 : i32
    %c0_i32_0 = arith.constant 0 : i32
    return %arg1, %c0_i32 : i32, i32
  }
  func.func @transform_3(%arg0: i32, %arg1: i32) -> (i32, i32) {
    %c0_i32 = arith.constant 0 : i32
    %c0_i32_0 = arith.constant 0 : i32
    return %arg1, %c0_i32 : i32, i32
  }
  func.func @transform_4(%arg0: i32, %arg1: i32) -> (i32, i32) {
    %c0_i32 = arith.constant 0 : i32
    %c0_i32_0 = arith.constant 0 : i32
    %c0_i32_1 = arith.constant 0 : i32
    return %c0_i32, %c0_i32_0 : i32, i32
  }
  func.func @transform_5(%arg0: i32, %arg1: i32) -> (i32, i32) {
    %c0_i32 = arith.constant 0 : i32
    %c0_i32_0 = arith.constant 0 : i32
    %c0_i32_1 = arith.constant 0 : i32
    return %c0_i32, %c0_i32_0 : i32, i32
  }
  func.func @transform_6(%arg0: i32, %arg1: i32) -> (i32, i32) {
    %c0_i32 = arith.constant 0 : i32
    %c0_i32_0 = arith.constant 0 : i32
    %c0_i32_1 = arith.constant 0 : i32
    return %c0_i32, %c0_i32_0 : i32, i32
  }
  func.func @transform_7(%arg0: i32, %arg1: i32) -> (i32, i32) {
    %c0_i32 = arith.constant 0 : i32
    %c0_i32_0 = arith.constant 0 : i32
    %c0_i32_1 = arith.constant 0 : i32
    return %c0_i32, %c0_i32_0 : i32, i32
  }
  func.func @transform_8(%arg0: i32, %arg1: i32) -> (i32, i32) {
    %c0_i32 = arith.constant 0 : i32
    %c0_i32_0 = arith.constant 0 : i32
    %c0_i32_1 = arith.constant 0 : i32
    return %c0_i32, %c0_i32_0 : i32, i32
  }
  func.func @transform_9(%arg0: i32, %arg1: i32) -> (i32, i32) {
    %c0_i32 = arith.constant 0 : i32
    %c0_i32_0 = arith.constant 0 : i32
    %c0_i32_1 = arith.constant 0 : i32
    return %c0_i32, %c0_i32_0 : i32, i32
  }
  func.func @transform_10(%arg0: i32, %arg1: i32) -> (i32, i32) {
    %c0_i32 = arith.constant 0 : i32
    %c0_i32_0 = arith.constant 0 : i32
    %c0_i32_1 = arith.constant 0 : i32
    return %c0_i32, %c0_i32_0 : i32, i32
  }
  func.func @transform_11(%arg0: i32, %arg1: i32) -> (i32, i32) {
    %c0_i32 = arith.constant 0 : i32
    %c0_i32_0 = arith.constant 0 : i32
    %c0_i32_1 = arith.constant 0 : i32
    return %c0_i32, %c0_i32_0 : i32, i32
  }
  func.func @transform_12(%arg0: i32, %arg1: i32) -> (i32, i32, i32) {
    %c0_i32 = arith.constant 0 : i32
    %c0_i32_0 = arith.constant 0 : i32
    return %arg0, %arg1, %c0_i32 : i32, i32, i32
  }
  func.func @transform_13(%arg0: i32, %arg1: i32) -> (i32, i32, i32) {
    %c0_i32 = arith.constant 0 : i32
    %c0_i32_0 = arith.constant 0 : i32
    return %arg0, %arg1, %c0_i32 : i32, i32, i32
  }
  func.func @transform_14(%arg0: i32, %arg1: i32) -> (i32, i32, i32) {
    %c0_i32 = arith.constant 0 : i32
    %c0_i32_0 = arith.constant 0 : i32
    return %arg0, %arg1, %c0_i32 : i32, i32, i32
  }
}

module attributes {stable_mosaic.version = 11 : i64} {
  func.func @_enc_kv_kernel(%arg0: i32, %arg1: i32, %arg2: memref<1x8x48xf32, #tpu.memory_space<vmem>>, %arg3: memref<1x48xf32, #tpu.memory_space<vmem>>, %arg4: memref<1x48xf32, #tpu.memory_space<vmem>>, %arg5: memref<48x32xf32, #tpu.memory_space<vmem>>, %arg6: memref<1x32xf32, #tpu.memory_space<vmem>>, %arg7: memref<48x32xf32, #tpu.memory_space<vmem>>, %arg8: memref<1x32xf32, #tpu.memory_space<vmem>>, %arg9: memref<1x8x32xf32, #tpu.memory_space<vmem>>, %arg10: memref<1x8x32xf32, #tpu.memory_space<vmem>>) attributes {dimension_semantics = [#tpu.dimension_semantics<parallel>, #tpu.dimension_semantics<parallel>], iteration_bounds = array<i64: 2, 1>, scalar_prefetch = 0 : i64, scratch_operands = 0 : i64, tpu.core_type = #tpu.core_type<tc>, window_params = [{transform_indices = @transform_0, window_bounds = array<i64: 1, 8, 48>}, {pipeline_mode = #tpu.pipeline_mode<synchronous>, transform_indices = @transform_1, window_bounds = array<i64: 1, 48>}, {pipeline_mode = #tpu.pipeline_mode<synchronous>, transform_indices = @transform_2, window_bounds = array<i64: 1, 48>}, {pipeline_mode = #tpu.pipeline_mode<synchronous>, transform_indices = @transform_3, window_bounds = array<i64: 48, 32>}, {pipeline_mode = #tpu.pipeline_mode<synchronous>, transform_indices = @transform_4, window_bounds = array<i64: 1, 32>}, {pipeline_mode = #tpu.pipeline_mode<synchronous>, transform_indices = @transform_5, window_bounds = array<i64: 48, 32>}, {pipeline_mode = #tpu.pipeline_mode<synchronous>, transform_indices = @transform_6, window_bounds = array<i64: 1, 32>}, {transform_indices = @transform_7, window_bounds = array<i64: 1, 8, 32>}, {transform_indices = @transform_8, window_bounds = array<i64: 1, 8, 32>}]} {
    %c0 = arith.constant 0 : index
    %c0_0 = arith.constant 0 : index
    %c0_1 = arith.constant 0 : index
    %0 = vector.load %arg2[%c0, %c0_0, %c0_1] : memref<1x8x48xf32, #tpu.memory_space<vmem>>, vector<1x8x48xf32>
    %1 = vector.shape_cast %0 : vector<1x8x48xf32> to vector<8x48xf32>
    %c0_2 = arith.constant 0 : index
    %c0_3 = arith.constant 0 : index
    %2 = vector.load %arg3[%c0_2, %c0_3] : memref<1x48xf32, #tpu.memory_space<vmem>>, vector<1x48xf32>
    %c0_4 = arith.constant 0 : index
    %c0_5 = arith.constant 0 : index
    %3 = vector.load %arg4[%c0_4, %c0_5] : memref<1x48xf32, #tpu.memory_space<vmem>>, vector<1x48xf32>
    %cst = arith.constant dense<0.000000e+00> : vector<8xf32>
    %4 = vector.multi_reduction <add>, %1, %cst [1] : vector<8x48xf32> to vector<8xf32>
    %5 = vector.shape_cast %4 : vector<8xf32> to vector<8x1xf32>
    %cst_6 = arith.constant 4.800000e+01 : f32
    %6 = vector.broadcast %cst_6 : f32 to vector<8x1xf32>
    %7 = arith.divf %5, %6 : vector<8x1xf32>
    %8 = vector.broadcast %7 : vector<8x1xf32> to vector<8x48xf32>
    %9 = arith.subf %1, %8 : vector<8x48xf32>
    %10 = arith.mulf %9, %9 : vector<8x48xf32>
    %cst_7 = arith.constant dense<0.000000e+00> : vector<8xf32>
    %11 = vector.multi_reduction <add>, %10, %cst_7 [1] : vector<8x48xf32> to vector<8xf32>
    %12 = vector.shape_cast %11 : vector<8xf32> to vector<8x1xf32>
    %cst_8 = arith.constant 4.800000e+01 : f32
    %13 = vector.broadcast %cst_8 : f32 to vector<8x1xf32>
    %14 = arith.divf %12, %13 : vector<8x1xf32>
    %15 = vector.broadcast %7 : vector<8x1xf32> to vector<8x48xf32>
    %16 = arith.subf %1, %15 : vector<8x48xf32>
    %cst_9 = arith.constant 9.99999974E-6 : f32
    %17 = vector.broadcast %cst_9 : f32 to vector<8x1xf32>
    %18 = arith.addf %14, %17 : vector<8x1xf32>
    %19 = math.rsqrt %18 : vector<8x1xf32>
    %20 = vector.broadcast %19 : vector<8x1xf32> to vector<8x48xf32>
    %21 = arith.mulf %16, %20 : vector<8x48xf32>
    %22 = vector.broadcast %2 : vector<1x48xf32> to vector<8x48xf32>
    %23 = arith.mulf %21, %22 : vector<8x48xf32>
    %24 = vector.broadcast %3 : vector<1x48xf32> to vector<8x48xf32>
    %25 = arith.addf %23, %24 : vector<8x48xf32>
    %c0_10 = arith.constant 0 : index
    %c0_11 = arith.constant 0 : index
    %26 = vector.load %arg5[%c0_10, %c0_11] : memref<48x32xf32, #tpu.memory_space<vmem>>, vector<48x32xf32>
    %cst_12 = arith.constant dense<0.000000e+00> : vector<8x32xf32>
    %27 = tpu.matmul %25, %26, %cst_12 {dimension_numbers = #tpu.dot_dimension_numbers<[1], [0], [0], [1], [0, 0, 1, 1], [], []>} : vector<8x48xf32>, vector<48x32xf32>, vector<8x32xf32> -> vector<8x32xf32>
    %c0_13 = arith.constant 0 : index
    %c0_14 = arith.constant 0 : index
    %28 = vector.load %arg6[%c0_13, %c0_14] : memref<1x32xf32, #tpu.memory_space<vmem>>, vector<1x32xf32>
    %29 = vector.broadcast %28 : vector<1x32xf32> to vector<8x32xf32>
    %30 = arith.addf %27, %29 : vector<8x32xf32>
    %c0_15 = arith.constant 0 : index
    %c0_16 = arith.constant 0 : index
    %c0_17 = arith.constant 0 : index
    %31 = vector.load %arg9[%c0_15, %c0_16, %c0_17] : memref<1x8x32xf32, #tpu.memory_space<vmem>>, vector<1x8x32xf32>
    %32 = vector.shape_cast %31 : vector<1x8x32xf32> to vector<8x32xf32>
    %33 = vector.shape_cast %30 : vector<8x32xf32> to vector<1x8x32xf32>
    tpu.vector_store %arg9[%c0_15, %c0_16, %c0_17], %33 {strides = array<i32>} : memref<1x8x32xf32, #tpu.memory_space<vmem>>, vector<1x8x32xf32>,
    %c0_18 = arith.constant 0 : index
    %c0_19 = arith.constant 0 : index
    %34 = vector.load %arg7[%c0_18, %c0_19] : memref<48x32xf32, #tpu.memory_space<vmem>>, vector<48x32xf32>
    %cst_20 = arith.constant dense<0.000000e+00> : vector<8x32xf32>
    %35 = tpu.matmul %25, %34, %cst_20 {dimension_numbers = #tpu.dot_dimension_numbers<[1], [0], [0], [1], [0, 0, 1, 1], [], []>} : vector<8x48xf32>, vector<48x32xf32>, vector<8x32xf32> -> vector<8x32xf32>
    %c0_21 = arith.constant 0 : index
    %c0_22 = arith.constant 0 : index
    %36 = vector.load %arg8[%c0_21, %c0_22] : memref<1x32xf32, #tpu.memory_space<vmem>>, vector<1x32xf32>
    %37 = vector.broadcast %36 : vector<1x32xf32> to vector<8x32xf32>
    %38 = arith.addf %35, %37 : vector<8x32xf32>
    %c0_23 = arith.constant 0 : index
    %c0_24 = arith.constant 0 : index
    %c0_25 = arith.constant 0 : index
    %39 = vector.load %arg10[%c0_23, %c0_24, %c0_25] : memref<1x8x32xf32, #tpu.memory_space<vmem>>, vector<1x8x32xf32>
    %40 = vector.shape_cast %39 : vector<1x8x32xf32> to vector<8x32xf32>
    %41 = vector.shape_cast %38 : vector<8x32xf32> to vector<1x8x32xf32>
    tpu.vector_store %arg10[%c0_23, %c0_24, %c0_25], %41 {strides = array<i32>} : memref<1x8x32xf32, #tpu.memory_space<vmem>>, vector<1x8x32xf32>,
    return
  }
  func.func @transform_0(%arg0: i32, %arg1: i32) -> (i32, i32, i32) {
    %c0_i32 = arith.constant 0 : i32
    %c0_i32_0 = arith.constant 0 : i32
    return %arg0, %arg1, %c0_i32 : i32, i32, i32
  }
  func.func @transform_1(%arg0: i32, %arg1: i32) -> (i32, i32) {
    %c0_i32 = arith.constant 0 : i32
    %c0_i32_0 = arith.constant 0 : i32
    %c0_i32_1 = arith.constant 0 : i32
    return %c0_i32, %c0_i32_0 : i32, i32
  }
  func.func @transform_2(%arg0: i32, %arg1: i32) -> (i32, i32) {
    %c0_i32 = arith.constant 0 : i32
    %c0_i32_0 = arith.constant 0 : i32
    %c0_i32_1 = arith.constant 0 : i32
    return %c0_i32, %c0_i32_0 : i32, i32
  }
  func.func @transform_3(%arg0: i32, %arg1: i32) -> (i32, i32) {
    %c0_i32 = arith.constant 0 : i32
    %c0_i32_0 = arith.constant 0 : i32
    %c0_i32_1 = arith.constant 0 : i32
    return %c0_i32, %c0_i32_0 : i32, i32
  }
  func.func @transform_4(%arg0: i32, %arg1: i32) -> (i32, i32) {
    %c0_i32 = arith.constant 0 : i32
    %c0_i32_0 = arith.constant 0 : i32
    %c0_i32_1 = arith.constant 0 : i32
    return %c0_i32, %c0_i32_0 : i32, i32
  }
  func.func @transform_5(%arg0: i32, %arg1: i32) -> (i32, i32) {
    %c0_i32 = arith.constant 0 : i32
    %c0_i32_0 = arith.constant 0 : i32
    %c0_i32_1 = arith.constant 0 : i32
    return %c0_i32, %c0_i32_0 : i32, i32
  }
  func.func @transform_6(%arg0: i32, %arg1: i32) -> (i32, i32) {
    %c0_i32 = arith.constant 0 : i32
    %c0_i32_0 = arith.constant 0 : i32
    %c0_i32_1 = arith.constant 0 : i32
    return %c0_i32, %c0_i32_0 : i32, i32
  }
  func.func @transform_7(%arg0: i32, %arg1: i32) -> (i32, i32, i32) {
    %c0_i32 = arith.constant 0 : i32
    %c0_i32_0 = arith.constant 0 : i32
    return %arg0, %arg1, %c0_i32 : i32, i32, i32
  }
  func.func @transform_8(%arg0: i32, %arg1: i32) -> (i32, i32, i32) {
    %c0_i32 = arith.constant 0 : i32
    %c0_i32_0 = arith.constant 0 : i32
    return %arg0, %arg1, %c0_i32 : i32, i32, i32
  }
}

module attributes {stable_mosaic.version = 11 : i64} {
  func.func @_crossout_norm3_kernel(%arg0: i32, %arg1: i32, %arg2: memref<1x8x32xf32, #tpu.memory_space<vmem>>, %arg3: memref<1x8x32xf32, #tpu.memory_space<vmem>>, %arg4: memref<1x6x32xf32, #tpu.memory_space<vmem>>, %arg5: memref<32x32xf32, #tpu.memory_space<vmem>>, %arg6: memref<1x32xf32, #tpu.memory_space<vmem>>, %arg7: memref<1x32xf32, #tpu.memory_space<vmem>>, %arg8: memref<1x32xf32, #tpu.memory_space<vmem>>, %arg9: memref<1x8x32xf32, #tpu.memory_space<vmem>>, %arg10: memref<1x8x32xf32, #tpu.memory_space<vmem>>) attributes {dimension_semantics = [#tpu.dimension_semantics<parallel>, #tpu.dimension_semantics<parallel>], iteration_bounds = array<i64: 2, 1>, scalar_prefetch = 0 : i64, scratch_operands = 0 : i64, tpu.core_type = #tpu.core_type<tc>, window_params = [{transform_indices = @transform_0, window_bounds = array<i64: 1, 8, 32>}, {transform_indices = @transform_1, window_bounds = array<i64: 1, 8, 32>}, {transform_indices = @transform_2, window_bounds = array<i64: 1, 6, 32>}, {pipeline_mode = #tpu.pipeline_mode<synchronous>, transform_indices = @transform_3, window_bounds = array<i64: 32, 32>}, {pipeline_mode = #tpu.pipeline_mode<synchronous>, transform_indices = @transform_4, window_bounds = array<i64: 1, 32>}, {pipeline_mode = #tpu.pipeline_mode<synchronous>, transform_indices = @transform_5, window_bounds = array<i64: 1, 32>}, {pipeline_mode = #tpu.pipeline_mode<synchronous>, transform_indices = @transform_6, window_bounds = array<i64: 1, 32>}, {transform_indices = @transform_7, window_bounds = array<i64: 1, 8, 32>}, {transform_indices = @transform_8, window_bounds = array<i64: 1, 8, 32>}]} {
    %c0 = arith.constant 0 : index
    %c0_0 = arith.constant 0 : index
    %c0_1 = arith.constant 0 : index
    %0 = vector.load %arg2[%c0, %c0_0, %c0_1] : memref<1x8x32xf32, #tpu.memory_space<vmem>>, vector<1x8x32xf32>
    %1 = vector.shape_cast %0 : vector<1x8x32xf32> to vector<8x32xf32>
    %c0_2 = arith.constant 0 : index
    %c0_3 = arith.constant 0 : index
    %c0_4 = arith.constant 0 : index
    %2 = vector.load %arg4[%c0_2, %c0_3, %c0_4] : memref<1x6x32xf32, #tpu.memory_space<vmem>>, vector<1x6x32xf32>
    %3 = vector.shape_cast %2 : vector<1x6x32xf32> to vector<6x32xf32>
    %4 = vector.extract_strided_slice %3 {offsets = [2, 0], sizes = [1, 32], strides = [1, 1]} : vector<6x32xf32> to vector<1x32xf32>
    %5 = vector.extract_strided_slice %3 {offsets = [5, 0], sizes = [1, 32], strides = [1, 1]} : vector<6x32xf32> to vector<1x32xf32>
    %c0_5 = arith.constant 0 : index
    %c0_6 = arith.constant 0 : index
    %c0_7 = arith.constant 0 : index
    %6 = vector.load %arg3[%c0_5, %c0_6, %c0_7] : memref<1x8x32xf32, #tpu.memory_space<vmem>>, vector<1x8x32xf32>
    %7 = vector.shape_cast %6 : vector<1x8x32xf32> to vector<8x32xf32>
    %c0_8 = arith.constant 0 : index
    %c0_9 = arith.constant 0 : index
    %8 = vector.load %arg5[%c0_8, %c0_9] : memref<32x32xf32, #tpu.memory_space<vmem>>, vector<32x32xf32>
    %cst = arith.constant dense<0.000000e+00> : vector<8x32xf32>
    %9 = tpu.matmul %7, %8, %cst {dimension_numbers = #tpu.dot_dimension_numbers<[1], [0], [0], [1], [0, 0, 1, 1], [], []>} : vector<8x32xf32>, vector<32x32xf32>, vector<8x32xf32> -> vector<8x32xf32>
    %c0_10 = arith.constant 0 : index
    %c0_11 = arith.constant 0 : index
    %10 = vector.load %arg6[%c0_10, %c0_11] : memref<1x32xf32, #tpu.memory_space<vmem>>, vector<1x32xf32>
    %11 = vector.broadcast %10 : vector<1x32xf32> to vector<8x32xf32>
    %12 = arith.addf %9, %11 : vector<8x32xf32>
    %13 = vector.broadcast %5 : vector<1x32xf32> to vector<8x32xf32>
    %14 = arith.mulf %13, %12 : vector<8x32xf32>
    %15 = arith.addf %1, %14 : vector<8x32xf32>
    %c0_12 = arith.constant 0 : index
    %c0_13 = arith.constant 0 : index
    %c0_14 = arith.constant 0 : index
    %16 = vector.load %arg9[%c0_12, %c0_13, %c0_14] : memref<1x8x32xf32, #tpu.memory_space<vmem>>, vector<1x8x32xf32>
    %17 = vector.shape_cast %16 : vector<1x8x32xf32> to vector<8x32xf32>
    %18 = vector.shape_cast %15 : vector<8x32xf32> to vector<1x8x32xf32>
    tpu.vector_store %arg9[%c0_12, %c0_13, %c0_14], %18 {strides = array<i32>} : memref<1x8x32xf32, #tpu.memory_space<vmem>>, vector<1x8x32xf32>,
    %c0_15 = arith.constant 0 : index
    %c0_16 = arith.constant 0 : index
    %19 = vector.load %arg7[%c0_15, %c0_16] : memref<1x32xf32, #tpu.memory_space<vmem>>, vector<1x32xf32>
    %c0_17 = arith.constant 0 : index
    %c0_18 = arith.constant 0 : index
    %20 = vector.load %arg8[%c0_17, %c0_18] : memref<1x32xf32, #tpu.memory_space<vmem>>, vector<1x32xf32>
    %cst_19 = arith.constant dense<0.000000e+00> : vector<8xf32>
    %21 = vector.multi_reduction <add>, %15, %cst_19 [1] : vector<8x32xf32> to vector<8xf32>
    %22 = vector.shape_cast %21 : vector<8xf32> to vector<8x1xf32>
    %cst_20 = arith.constant 3.200000e+01 : f32
    %23 = vector.broadcast %cst_20 : f32 to vector<8x1xf32>
    %24 = arith.divf %22, %23 : vector<8x1xf32>
    %25 = vector.broadcast %24 : vector<8x1xf32> to vector<8x32xf32>
    %26 = arith.subf %15, %25 : vector<8x32xf32>
    %27 = arith.mulf %26, %26 : vector<8x32xf32>
    %cst_21 = arith.constant dense<0.000000e+00> : vector<8xf32>
    %28 = vector.multi_reduction <add>, %27, %cst_21 [1] : vector<8x32xf32> to vector<8xf32>
    %29 = vector.shape_cast %28 : vector<8xf32> to vector<8x1xf32>
    %cst_22 = arith.constant 3.200000e+01 : f32
    %30 = vector.broadcast %cst_22 : f32 to vector<8x1xf32>
    %31 = arith.divf %29, %30 : vector<8x1xf32>
    %32 = vector.broadcast %24 : vector<8x1xf32> to vector<8x32xf32>
    %33 = arith.subf %15, %32 : vector<8x32xf32>
    %cst_23 = arith.constant 9.99999974E-6 : f32
    %34 = vector.broadcast %cst_23 : f32 to vector<8x1xf32>
    %35 = arith.addf %31, %34 : vector<8x1xf32>
    %36 = math.rsqrt %35 : vector<8x1xf32>
    %37 = vector.broadcast %36 : vector<8x1xf32> to vector<8x32xf32>
    %38 = arith.mulf %33, %37 : vector<8x32xf32>
    %39 = vector.broadcast %19 : vector<1x32xf32> to vector<8x32xf32>
    %40 = arith.mulf %38, %39 : vector<8x32xf32>
    %41 = vector.broadcast %20 : vector<1x32xf32> to vector<8x32xf32>
    %42 = arith.addf %40, %41 : vector<8x32xf32>
    %43 = vector.broadcast %4 : vector<1x32xf32> to vector<8x32xf32>
    %44 = arith.mulf %42, %43 : vector<8x32xf32>
    %c0_24 = arith.constant 0 : index
    %c0_25 = arith.constant 0 : index
    %c0_26 = arith.constant 0 : index
    %45 = vector.load %arg10[%c0_24, %c0_25, %c0_26] : memref<1x8x32xf32, #tpu.memory_space<vmem>>, vector<1x8x32xf32>
    %46 = vector.shape_cast %45 : vector<1x8x32xf32> to vector<8x32xf32>
    %47 = vector.shape_cast %44 : vector<8x32xf32> to vector<1x8x32xf32>
    tpu.vector_store %arg10[%c0_24, %c0_25, %c0_26], %47 {strides = array<i32>} : memref<1x8x32xf32, #tpu.memory_space<vmem>>, vector<1x8x32xf32>,
    return
  }
  func.func @transform_0(%arg0: i32, %arg1: i32) -> (i32, i32, i32) {
    %c0_i32 = arith.constant 0 : i32
    %c0_i32_0 = arith.constant 0 : i32
    return %arg0, %arg1, %c0_i32 : i32, i32, i32
  }
  func.func @transform_1(%arg0: i32, %arg1: i32) -> (i32, i32, i32) {
    %c0_i32 = arith.constant 0 : i32
    %c0_i32_0 = arith.constant 0 : i32
    return %arg0, %arg1, %c0_i32 : i32, i32, i32
  }
  func.func @transform_2(%arg0: i32, %arg1: i32) -> (i32, i32, i32) {
    %c0_i32 = arith.constant 0 : i32
    %c0_i32_0 = arith.constant 0 : i32
    %c0_i32_1 = arith.constant 0 : i32
    return %arg0, %c0_i32, %c0_i32_0 : i32, i32, i32
  }
  func.func @transform_3(%arg0: i32, %arg1: i32) -> (i32, i32) {
    %c0_i32 = arith.constant 0 : i32
    %c0_i32_0 = arith.constant 0 : i32
    %c0_i32_1 = arith.constant 0 : i32
    return %c0_i32, %c0_i32_0 : i32, i32
  }
  func.func @transform_4(%arg0: i32, %arg1: i32) -> (i32, i32) {
    %c0_i32 = arith.constant 0 : i32
    %c0_i32_0 = arith.constant 0 : i32
    %c0_i32_1 = arith.constant 0 : i32
    return %c0_i32, %c0_i32_0 : i32, i32
  }
  func.func @transform_5(%arg0: i32, %arg1: i32) -> (i32, i32) {
    %c0_i32 = arith.constant 0 : i32
    %c0_i32_0 = arith.constant 0 : i32
    %c0_i32_1 = arith.constant 0 : i32
    return %c0_i32, %c0_i32_0 : i32, i32
  }
  func.func @transform_6(%arg0: i32, %arg1: i32) -> (i32, i32) {
    %c0_i32 = arith.constant 0 : i32
    %c0_i32_0 = arith.constant 0 : i32
    %c0_i32_1 = arith.constant 0 : i32
    return %c0_i32, %c0_i32_0 : i32, i32
  }
  func.func @transform_7(%arg0: i32, %arg1: i32) -> (i32, i32, i32) {
    %c0_i32 = arith.constant 0 : i32
    %c0_i32_0 = arith.constant 0 : i32
    return %arg0, %arg1, %c0_i32 : i32, i32, i32
  }
  func.func @transform_8(%arg0: i32, %arg1: i32) -> (i32, i32, i32) {
    %c0_i32 = arith.constant 0 : i32
    %c0_i32_0 = arith.constant 0 : i32
    return %arg0, %arg1, %c0_i32 : i32, i32, i32
  }
}

module attributes {stable_mosaic.version = 11 : i64} {
  func.func @_ffn_kernel(%arg0: i32, %arg1: i32, %arg2: i32, %arg3: memref<1x8x32xf32, #tpu.memory_space<vmem>>, %arg4: memref<1x8x32xf32, #tpu.memory_space<vmem>>, %arg5: memref<1x6x32xf32, #tpu.memory_space<vmem>>, %arg6: memref<32x128xf32, #tpu.memory_space<vmem>>, %arg7: memref<1x128xf32, #tpu.memory_space<vmem>>, %arg8: memref<128x32xf32, #tpu.memory_space<vmem>>, %arg9: memref<1x32xf32, #tpu.memory_space<vmem>>, %arg10: memref<1x8x32xf32, #tpu.memory_space<vmem>>, %arg11: memref<8x32xf32, #tpu.memory_space<vmem>>) attributes {dimension_semantics = [#tpu.dimension_semantics<parallel>, #tpu.dimension_semantics<parallel>, #tpu.dimension_semantics<arbitrary>], iteration_bounds = array<i64: 2, 1, 1>, scalar_prefetch = 0 : i64, scratch_operands = 1 : i64, tpu.core_type = #tpu.core_type<tc>, window_params = [{transform_indices = @transform_0, window_bounds = array<i64: 1, 8, 32>}, {transform_indices = @transform_1, window_bounds = array<i64: 1, 8, 32>}, {transform_indices = @transform_2, window_bounds = array<i64: 1, 6, 32>}, {transform_indices = @transform_3, window_bounds = array<i64: 32, 128>}, {transform_indices = @transform_4, window_bounds = array<i64: 1, 128>}, {transform_indices = @transform_5, window_bounds = array<i64: 128, 32>}, {pipeline_mode = #tpu.pipeline_mode<synchronous>, transform_indices = @transform_6, window_bounds = array<i64: 1, 32>}, {transform_indices = @transform_7, window_bounds = array<i64: 1, 8, 32>}]} {
    %c0_i32 = arith.constant 0 : i32
    %0 = arith.cmpi eq, %arg2, %c0_i32 : i32
    %1 = arith.extui %0 : i1 to i32
    %c0_i32_0 = arith.constant 0 : i32
    %2 = arith.cmpi ne, %1, %c0_i32_0 : i32
    scf.if %2 {
      %cst_19 = arith.constant 0.000000e+00 : f32
      %26 = vector.broadcast %cst_19 : f32 to vector<8x32xf32>
      %c0_20 = arith.constant 0 : index
      %c0_21 = arith.constant 0 : index
      %27 = vector.load %arg11[%c0_20, %c0_21] : memref<8x32xf32, #tpu.memory_space<vmem>>, vector<8x32xf32>
      tpu.vector_store %arg11[%c0_20, %c0_21], %26 {strides = array<i32>} : memref<8x32xf32, #tpu.memory_space<vmem>>, vector<8x32xf32>,
    } else {
    }
    %c0 = arith.constant 0 : index
    %c0_1 = arith.constant 0 : index
    %c0_2 = arith.constant 0 : index
    %3 = vector.load %arg4[%c0, %c0_1, %c0_2] : memref<1x8x32xf32, #tpu.memory_space<vmem>>, vector<1x8x32xf32>
    %4 = vector.shape_cast %3 : vector<1x8x32xf32> to vector<8x32xf32>
    %c0_3 = arith.constant 0 : index
    %c0_4 = arith.constant 0 : index
    %5 = vector.load %arg6[%c0_3, %c0_4] : memref<32x128xf32, #tpu.memory_space<vmem>>, vector<32x128xf32>
    %cst = arith.constant dense<0.000000e+00> : vector<8x128xf32>
    %6 = tpu.matmul %4, %5, %cst {dimension_numbers = #tpu.dot_dimension_numbers<[1], [0], [0], [1], [0, 0, 1, 1], [], []>} : vector<8x32xf32>, vector<32x128xf32>, vector<8x128xf32> -> vector<8x128xf32>
    %c0_5 = arith.constant 0 : index
    %c0_6 = arith.constant 0 : index
    %7 = vector.load %arg7[%c0_5, %c0_6] : memref<1x128xf32, #tpu.memory_space<vmem>>, vector<1x128xf32>
    %8 = vector.broadcast %7 : vector<1x128xf32> to vector<8x128xf32>
    %9 = arith.addf %6, %8 : vector<8x128xf32>
    %cst_7 = arith.constant 5.000000e-01 : f32
    %10 = vector.broadcast %cst_7 : f32 to vector<8x128xf32>
    %11 = arith.mulf %10, %9 : vector<8x128xf32>
    %cst_8 = arith.constant 0.707106769 : f32
    %12 = vector.broadcast %cst_8 : f32 to vector<8x128xf32>
    %13 = arith.mulf %9, %12 : vector<8x128xf32>
    %14 = math.erf %13 : vector<8x128xf32>
    %cst_9 = arith.constant 1.000000e+00 : f32
    %15 = vector.broadcast %cst_9 : f32 to vector<8x128xf32>
    %16 = arith.addf %15, %14 : vector<8x128xf32>
    %17 = arith.mulf %11, %16 : vector<8x128xf32>
    %c0_10 = arith.constant 0 : index
    %c0_11 = arith.constant 0 : index
    %18 = vector.load %arg11[%c0_10, %c0_11] : memref<8x32xf32, #tpu.memory_space<vmem>>, vector<8x32xf32>
    %c0_12 = arith.constant 0 : index
    %c0_13 = arith.constant 0 : index
    %19 = vector.load %arg8[%c0_12, %c0_13] : memref<128x32xf32, #tpu.memory_space<vmem>>, vector<128x32xf32>
    %cst_14 = arith.constant dense<0.000000e+00> : vector<8x32xf32>
    %20 = tpu.matmul %17, %19, %cst_14 {dimension_numbers = #tpu.dot_dimension_numbers<[1], [0], [0], [1], [0, 0, 1, 1], [], []>} : vector<8x128xf32>, vector<128x32xf32>, vector<8x32xf32> -> vector<8x32xf32>
    %21 = arith.addf %18, %20 : vector<8x32xf32>
    %c0_15 = arith.constant 0 : index
    %c0_16 = arith.constant 0 : index
    %22 = vector.load %arg11[%c0_15, %c0_16] : memref<8x32xf32, #tpu.memory_space<vmem>>, vector<8x32xf32>
    tpu.vector_store %arg11[%c0_15, %c0_16], %21 {strides = array<i32>} : memref<8x32xf32, #tpu.memory_space<vmem>>, vector<8x32xf32>,
    %c0_i32_17 = arith.constant 0 : i32
    %23 = arith.cmpi eq, %arg2, %c0_i32_17 : i32
    %24 = arith.extui %23 : i1 to i32
    %c0_i32_18 = arith.constant 0 : i32
    %25 = arith.cmpi ne, %24, %c0_i32_18 : i32
    scf.if %25 {
      %c0_19 = arith.constant 0 : index
      %c0_20 = arith.constant 0 : index
      %c0_21 = arith.constant 0 : index
      %26 = vector.load %arg5[%c0_19, %c0_20, %c0_21] : memref<1x6x32xf32, #tpu.memory_space<vmem>>, vector<1x6x32xf32>
      %27 = vector.shape_cast %26 : vector<1x6x32xf32> to vector<6x32xf32>
      %28 = vector.extract_strided_slice %27 {offsets = [3, 0], sizes = [1, 32], strides = [1, 1]} : vector<6x32xf32> to vector<1x32xf32>
      %c0_22 = arith.constant 0 : index
      %c0_23 = arith.constant 0 : index
      %29 = vector.load %arg11[%c0_22, %c0_23] : memref<8x32xf32, #tpu.memory_space<vmem>>, vector<8x32xf32>
      %c0_24 = arith.constant 0 : index
      %c0_25 = arith.constant 0 : index
      %30 = vector.load %arg9[%c0_24, %c0_25] : memref<1x32xf32, #tpu.memory_space<vmem>>, vector<1x32xf32>
      %31 = vector.broadcast %30 : vector<1x32xf32> to vector<8x32xf32>
      %32 = arith.addf %29, %31 : vector<8x32xf32>
      %c0_26 = arith.constant 0 : index
      %c0_27 = arith.constant 0 : index
      %c0_28 = arith.constant 0 : index
      %33 = vector.load %arg3[%c0_26, %c0_27, %c0_28] : memref<1x8x32xf32, #tpu.memory_space<vmem>>, vector<1x8x32xf32>
      %34 = vector.shape_cast %33 : vector<1x8x32xf32> to vector<8x32xf32>
      %35 = vector.broadcast %28 : vector<1x32xf32> to vector<8x32xf32>
      %36 = arith.mulf %35, %32 : vector<8x32xf32>
      %37 = arith.addf %34, %36 : vector<8x32xf32>
      %c0_29 = arith.constant 0 : index
      %c0_30 = arith.constant 0 : index
      %c0_31 = arith.constant 0 : index
      %38 = vector.load %arg10[%c0_29, %c0_30, %c0_31] : memref<1x8x32xf32, #tpu.memory_space<vmem>>, vector<1x8x32xf32>
      %39 = vector.shape_cast %38 : vector<1x8x32xf32> to vector<8x32xf32>
      %40 = vector.shape_cast %37 : vector<8x32xf32> to vector<1x8x32xf32>
      tpu.vector_store %arg10[%c0_29, %c0_30, %c0_31], %40 {strides = array<i32>} : memref<1x8x32xf32, #tpu.memory_space<vmem>>, vector<1x8x32xf32>,
    } else {
    }
    return
  }
  func.func @transform_0(%arg0: i32, %arg1: i32, %arg2: i32) -> (i32, i32, i32) {
    %c0_i32 = arith.constant 0 : i32
    %c0_i32_0 = arith.constant 0 : i32
    return %arg0, %arg1, %c0_i32 : i32, i32, i32
  }
  func.func @transform_1(%arg0: i32, %arg1: i32, %arg2: i32) -> (i32, i32, i32) {
    %c0_i32 = arith.constant 0 : i32
    %c0_i32_0 = arith.constant 0 : i32
    return %arg0, %arg1, %c0_i32 : i32, i32, i32
  }
  func.func @transform_2(%arg0: i32, %arg1: i32, %arg2: i32) -> (i32, i32, i32) {
    %c0_i32 = arith.constant 0 : i32
    %c0_i32_0 = arith.constant 0 : i32
    %c0_i32_1 = arith.constant 0 : i32
    return %arg0, %c0_i32, %c0_i32_0 : i32, i32, i32
  }
  func.func @transform_3(%arg0: i32, %arg1: i32, %arg2: i32) -> (i32, i32) {
    %c0_i32 = arith.constant 0 : i32
    %c0_i32_0 = arith.constant 0 : i32
    return %c0_i32, %arg2 : i32, i32
  }
  func.func @transform_4(%arg0: i32, %arg1: i32, %arg2: i32) -> (i32, i32) {
    %c0_i32 = arith.constant 0 : i32
    %c0_i32_0 = arith.constant 0 : i32
    return %c0_i32, %arg2 : i32, i32
  }
  func.func @transform_5(%arg0: i32, %arg1: i32, %arg2: i32) -> (i32, i32) {
    %c0_i32 = arith.constant 0 : i32
    %c0_i32_0 = arith.constant 0 : i32
    return %arg2, %c0_i32 : i32, i32
  }
  func.func @transform_6(%arg0: i32, %arg1: i32, %arg2: i32) -> (i32, i32) {
    %c0_i32 = arith.constant 0 : i32
    %c0_i32_0 = arith.constant 0 : i32
    %c0_i32_1 = arith.constant 0 : i32
    return %c0_i32, %c0_i32_0 : i32, i32
  }
  func.func @transform_7(%arg0: i32, %arg1: i32, %arg2: i32) -> (i32, i32, i32) {
    %c0_i32 = arith.constant 0 : i32
    %c0_i32_0 = arith.constant 0 : i32
    return %arg0, %arg1, %c0_i32 : i32, i32, i32
  }
}

</mosaic_0001>

<llo_original>
// kernel: blip3o_attention_block.10
$region0: #{blip3o_attention_block.10}
  #allocation0 [shape = 'u32[]', space=smem, size = 0x4, offset = 0x4, fixed_abs, tag = 'smem constant byte address 0x4 - core index']
  #allocation1 [shape = 'u32[144,128]{1,0:T(1,128)}', space=vmem, size = 0x12000, scoped, tag = 'internal scratch']
  %s0 = inlined_call_operand.hbm [shape: f32[2,8,32], index: 0, kind: input, shape index: {}]
  %s1 = inlined_call_operand.hbm [shape: f32[2,8,32], index: 1, kind: input, shape index: {}]
  %s2 = inlined_call_operand.hbm [shape: f32[2,6,32], index: 2, kind: input, shape index: {}]
  %s3 = inlined_call_operand.hbm [shape: f32[32,32], index: 3, kind: input, shape index: {}]
  %s4 = inlined_call_operand.hbm [shape: f32[1,32], index: 4, kind: input, shape index: {}]
  %s5 = inlined_call_operand.hbm [shape: f32[1,32], index: 5, kind: input, shape index: {}]
  %s6 = inlined_call_operand.hbm [shape: f32[1,32], index: 6, kind: input, shape index: {}]
  %s7 = inlined_call_operand.hbm [shape: f32[32,32], index: 7, kind: input, shape index: {}]
  %s8 = inlined_call_operand.hbm [shape: f32[1,32], index: 8, kind: input, shape index: {}]
  %s9 = inlined_call_operand.hbm [shape: f32[2,8,32], index: 9, kind: output, shape index: {0}]
  %s10 = inlined_call_operand.hbm [shape: f32[2,8,32], index: 10, kind: output, shape index: {1}]
  %11 = xla_tuple %s9, %s10
  %s12 = sld [smem:[#allocation0]]
  $region113: #{blip3o_attention_block.10} parent=0
    _
  %s14 = ssub.s32 1, %s12
  %s15 = scalar_select 0, %s14, %s12
  $region1: #{blip3o_attention_block.10} parent=0
    #allocation2 [shape = 'u8[8192]{0}', space=vmem, size = 0x2000, scoped, tag = 'input window, operand 0']
    #allocation3 [shape = 's32[2]{0}', space=sflag, size = 0x8, scoped, tag = 'scoped memory for blip3o_attention_block.10']
    #allocation4 [shape = 's32[2]{0}', space=sflag, size = 0x8, scoped, tag = 'scoped memory for blip3o_attention_block.10']
    #allocation5 [shape = 'u8[8192]{0}', space=vmem, size = 0x2000, scoped, tag = 'input window, operand 1']
    #allocation6 [shape = 's32[2]{0}', space=sflag, size = 0x8, scoped, tag = 'scoped memory for blip3o_attention_block.10']
    #allocation7 [shape = 'u8[8192]{0}', space=vmem, size = 0x2000, scoped, tag = 'input window, operand 2']
    #allocation8 [shape = 'u8[16384]{0}', space=vmem, size = 0x4000, scoped, tag = 'input window, operand 3, single buffered']
    #allocation9 [shape = 's32[1]{0}', space=sflag, size = 0x4, scoped, tag = 'scoped memory for blip3o_attention_block.10']
    #allocation10 [shape = 'u8[512]{0}', space=vmem, size = 0x400, scoped, tag = 'input window, operand 4, single buffered']
    #allocation11 [shape = 'u8[512]{0}', space=vmem, size = 0x400, scoped, tag = 'input window, operand 5, single buffered']
    #allocation12 [shape = 's32[1]{0}', space=sflag, size = 0x4, scoped, tag = 'scoped memory for blip3o_attention_block.10']
    #allocation13 [shape = 'u8[512]{0}', space=vmem, size = 0x400, scoped, tag = 'input window, operand 6, single buffered']
    #allocation14 [shape = 'u8[16384]{0}', space=vmem, size = 0x4000, scoped, tag = 'input window, operand 7, single buffered']
    #allocation15 [shape = 's32[1]{0}', space=sflag, size = 0x4, scoped, tag = 'scoped memory for blip3o_attention_block.10']
    #allocation16 [shape = 'u8[512]{0}', space=vmem, size = 0x400, scoped, tag = 'input window, operand 8, single buffered']
    #allocation17 [shape = 'u8[8192]{0}', space=vmem, size = 0x2000, scoped, tag = 'output window, operand 0']
    #allocation18 [shape = 'u8[8192]{0}', space=vmem, size = 0x2000, scoped, tag = 'output window, operand 1']
    #allocation19 [shape = 's32[2]{0}', space=sflag, size = 0x8, scoped, tag = 'scoped memory for blip3o_attention_block.10']
    %16 = vsyncpa [#allocation3], 0
    %s17 = scalar_lea.sflag [#allocation3], 1
    %18 = vsyncpa %s17, 0
    %19 = vsyncpa [#allocation6], 0
    %s20 = scalar_lea.sflag [#allocation6], 1
    %21 = vsyncpa %s20, 0
    %22 = vsyncpa [#allocation9], 0
    %23 = vsyncpa [#allocation12], 0
    %24 = vsyncpa [#allocation15], 0
    %25 = vsyncpa [#allocation4], 0
    %s26 = scalar_lea.sflag [#allocation4], 1
    %27 = vsyncpa %s26, 0
    %28 = vsyncpa [#allocation19], 0
    %s29 = scalar_lea.sflag [#allocation19], 1
    %30 = vsyncpa %s29, 0
    loop: start=0, step=1, limit=4
    $region2: #{blip3o_attention_block.10} parent=1 // loop_pre_header
      _
    $region3: #{blip3o_attention_block.10} parent=1 // loop_header
      %s32 = sphi 0, %s36
      %p33 = scmp.ge.s32.totalorder %s32, 4
      %s39 = sphi 0, %s51
      %s40 = sphi 0, %s47
      %s41 = sphi 0, %s39
      %s42 = sphi 0, %s40
      %s43 = sphi 0, %s41
      %s44 = sphi 0, %s42
      %s56 = sphi 0, %s58
      %s59 = sphi 0, %s56
      %s60 = sphi 0, %s59
      %s76 = sphi 0, %s60
      %s84 = sphi 0, %s86
      %s87 = sphi 0, %s84
      %s88 = sphi 0, %s87
      %s104 = sphi 0, %s88
      %s110 = sphi 0, %s112
      %s113 = sphi 0, %s110
      %s114 = sphi 0, %s113
      %s130 = sphi 0, %s114
      %s134 = sphi 0, %s134
      %s136 = sphi 0, %s134
      %s137 = sphi 0, %s136
      %s151 = sphi 0, %s137
      %s155 = sphi 0, %s155
      %s157 = sphi 0, %s155
      %s158 = sphi 0, %s157
      %s172 = sphi 0, %s158
      %s176 = sphi 0, %s176
      %s178 = sphi 0, %s176
      %s179 = sphi 0, %s178
      %s193 = sphi 0, %s179
      %s197 = sphi 0, %s197
      %s199 = sphi 0, %s197
      %s200 = sphi 0, %s199
      %s214 = sphi 0, %s200
      %s218 = sphi 0, %s218
      %s220 = sphi 0, %s218
      %s221 = sphi 0, %s220
      %s235 = sphi 0, %s221
      %s239 = sphi 0, %s239
      %s241 = sphi 0, %s239
      %s242 = sphi 0, %s241
      %s256 = sphi 0, %s242
      %s264 = sphi 0, %s266
      %s267 = sphi 0, %s264
      %s268 = sphi 0, %s267
      %s284 = sphi 0, %s268
      %s292 = sphi 0, %s294
      %s295 = sphi 0, %s292
      %s296 = sphi 0, %s295
      %s312 = sphi 0, %s296
    $region4: #{blip3o_attention_block.10} parent=1 // loop_header_branch
      %35 = sbr.rel (%p33) target = $region8
    $region5: #{blip3o_attention_block.10} parent=1 // loop_body
      %s37 = ssub.s32 %s32, 1
      %s38 = ssub.s32 %s32, 2
      %s45 = sadd.s32 1, %s40
      %p46 = scmp.ge.s32.totalorder %s45, 1
      %s47 = scalar_select %p46, 0, %s45
      %s48 = sadd.s32 1, %s39
      %s49 = scalar_select %p46, %s48, %s39
      %p50 = scmp.ge.s32.totalorder %s49, 2
      %s51 = scalar_select %p50, 0, %s49
      %s52 = ssub.s32 %s39, %s51
      %s53 = ssub.s32 %s40, %s47
      %s54 = sor.u32 %s52, %s53
      %p55 = scmp.eq.s32.totalorder %s54, 0
      %s57 = sadd.s32 %s56, 1
      %s58 = scalar_select %p55, %s56, %s57
      %p61 = pneg %p55
      %p62 = scmp.eq.s32.totalorder %s32, 1
      %p63 = por %p61, %p62
      %p64 = scmp.ne.s32.totalorder %s56, %s59
      %p65 = scmp.eq.s32.totalorder %s32, 0
      %p66 = por %p64, %p65
      %p67 = scmp.ne.s32.totalorder %s56, %s59
      %p68 = scmp.eq.s32.totalorder %s37, 1
      %p69 = por %p67, %p68
      %p70 = scmp.ne.s32.totalorder %s59, %s60
      %p71 = scmp.eq.s32.totalorder %s37, 0
      %p72 = por %p70, %p71
      %p73 = scmp.ne.s32.totalorder %s59, %s60
      %p74 = scmp.eq.s32.totalorder %s38, 1
      %p75 = por %p73, %p74
      %p77 = scmp.ne.s32.totalorder %s60, %s76
      %p78 = scmp.eq.s32.totalorder %s38, 0
      %p79 = por %p77, %p78
      %s80 = ssub.s32 %s39, %s51
      %s81 = ssub.s32 %s40, %s47
      %s82 = sor.u32 %s80, %s81
      %p83 = scmp.eq.s32.totalorder %s82, 0
      %s85 = sadd.s32 %s84, 1
      %s86 = scalar_select %p83, %s84, %s85
      %p89 = pneg %p83
      %p90 = scmp.eq.s32.totalorder %s32, 1
      %p91 = por %p89, %p90
      %p92 = scmp.ne.s32.totalorder %s84, %s87
      %p93 = scmp.eq.s32.totalorder %s32, 0
      %p94 = por %p92, %p93
      %p95 = scmp.ne.s32.totalorder %s84, %s87
      %p96 = scmp.eq.s32.totalorder %s37, 1
      %p97 = por %p95, %p96
      %p98 = scmp.ne.s32.totalorder %s87, %s88
      %p99 = scmp.eq.s32.totalorder %s37, 0
      %p100 = por %p98, %p99
      %p101 = scmp.ne.s32.totalorder %s87, %s88
      %p102 = scmp.eq.s32.totalorder %s38, 1
      %p103 = por %p101, %p102
      %p105 = scmp.ne.s32.totalorder %s88, %s104
      %p106 = scmp.eq.s32.totalorder %s38, 0
      %p107 = por %p105, %p106
      %s108 = ssub.s32 %s39, %s51
      %p109 = scmp.eq.s32.totalorder %s108, 0
      %s111 = sadd.s32 %s110, 1
      %s112 = scalar_select %p109, %s110, %s111
      %p115 = pneg %p109
      %p116 = scmp.eq.s32.totalorder %s32, 1
      %p117 = por %p115, %p116
      %p118 = scmp.ne.s32.totalorder %s110, %s113
      %p119 = scmp.eq.s32.totalorder %s32, 0
      %p120 = por %p118, %p119
      %p121 = scmp.ne.s32.totalorder %s110, %s113
      %p122 = scmp.eq.s32.totalorder %s37, 1
      %p123 = por %p121, %p122
      %p124 = scmp.ne.s32.totalorder %s113, %s114
      %p125 = scmp.eq.s32.totalorder %s37, 0
      %p126 = por %p124, %p125
      %p127 = scmp.ne.s32.totalorder %s113, %s114
      %p128 = scmp.eq.s32.totalorder %s38, 1
      %p129 = por %p127, %p128
      %p131 = scmp.ne.s32.totalorder %s114, %s130
      %p132 = scmp.eq.s32.totalorder %s38, 0
      %p133 = por %p131, %p132
      %s135 = sadd.s32 %s134, 1
      %p138 = scmp.eq.s32.totalorder %s32, 1
      %p139 = scmp.ne.s32.totalorder %s134, %s136
      %p140 = scmp.eq.s32.totalorder %s32, 0
      %p141 = por %p139, %p140
      %p142 = scmp.ne.s32.totalorder %s134, %s136
      %p143 = scmp.eq.s32.totalorder %s37, 1
      %p144 = por %p142, %p143
      %p145 = scmp.ne.s32.totalorder %s136, %s137
      %p146 = scmp.eq.s32.totalorder %s37, 0
      %p147 = por %p145, %p146
      %p148 = scmp.ne.s32.totalorder %s136, %s137
      %p149 = scmp.eq.s32.totalorder %s38, 1
      %p150 = por %p148, %p149
      %p152 = scmp.ne.s32.totalorder %s137, %s151
      %p153 = scmp.eq.s32.totalorder %s38, 0
      %p154 = por %p152, %p153
      %s156 = sadd.s32 %s155, 1
      %p159 = scmp.eq.s32.totalorder %s32, 1
      %p160 = scmp.ne.s32.totalorder %s155, %s157
      %p161 = scmp.eq.s32.totalorder %s32, 0
      %p162 = por %p160, %p161
      %p163 = scmp.ne.s32.totalorder %s155, %s157
      %p164 = scmp.eq.s32.totalorder %s37, 1
      %p165 = por %p163, %p164
      %p166 = scmp.ne.s32.totalorder %s157, %s158
      %p167 = scmp.eq.s32.totalorder %s37, 0
      %p168 = por %p166, %p167
      %p169 = scmp.ne.s32.totalorder %s157, %s158
      %p170 = scmp.eq.s32.totalorder %s38, 1
      %p171 = por %p169, %p170
      %p173 = scmp.ne.s32.totalorder %s158, %s172
      %p174 = scmp.eq.s32.totalorder %s38, 0
      %p175 = por %p173, %p174
      %s177 = sadd.s32 %s176, 1
      %p180 = scmp.eq.s32.totalorder %s32, 1
      %p181 = scmp.ne.s32.totalorder %s176, %s178
      %p182 = scmp.eq.s32.totalorder %s32, 0
      %p183 = por %p181, %p182
      %p184 = scmp.ne.s32.totalorder %s176, %s178
      %p185 = scmp.eq.s32.totalorder %s37, 1
      %p186 = por %p184, %p185
      %p187 = scmp.ne.s32.totalorder %s178, %s179
      %p188 = scmp.eq.s32.totalorder %s37, 0
      %p189 = por %p187, %p188
      %p190 = scmp.ne.s32.totalorder %s178, %s179
      %p191 = scmp.eq.s32.totalorder %s38, 1
      %p192 = por %p190, %p191
      %p194 = scmp.ne.s32.totalorder %s179, %s193
      %p195 = scmp.eq.s32.totalorder %s38, 0
      %p196 = por %p194, %p195
      %s198 = sadd.s32 %s197, 1
      %p201 = scmp.eq.s32.totalorder %s32, 1
      %p202 = scmp.ne.s32.totalorder %s197, %s199
      %p203 = scmp.eq.s32.totalorder %s32, 0
      %p204 = por %p202, %p203
      %p205 = scmp.ne.s32.totalorder %s197, %s199
      %p206 = scmp.eq.s32.totalorder %s37, 1
      %p207 = por %p205, %p206
      %p208 = scmp.ne.s32.totalorder %s199, %s200
      %p209 = scmp.eq.s32.totalorder %s37, 0
      %p210 = por %p208, %p209
      %p211 = scmp.ne.s32.totalorder %s199, %s200
      %p212 = scmp.eq.s32.totalorder %s38, 1
      %p213 = por %p211, %p212
      %p215 = scmp.ne.s32.totalorder %s200, %s214
      %p216 = scmp.eq.s32.totalorder %s38, 0
      %p217 = por %p215, %p216
      %s219 = sadd.s32 %s218, 1
      %p222 = scmp.eq.s32.totalorder %s32, 1
      %p223 = scmp.ne.s32.totalorder %s218, %s220
      %p224 = scmp.eq.s32.totalorder %s32, 0
      %p225 = por %p223, %p224
      %p226 = scmp.ne.s32.totalorder %s218, %s220
      %p227 = scmp.eq.s32.totalorder %s37, 1
      %p228 = por %p226, %p227
      %p229 = scmp.ne.s32.totalorder %s220, %s221
      %p230 = scmp.eq.s32.totalorder %s37, 0
      %p231 = por %p229, %p230
      %p232 = scmp.ne.s32.totalorder %s220, %s221
      %p233 = scmp.eq.s32.totalorder %s38, 1
      %p234 = por %p232, %p233
      %p236 = scmp.ne.s32.totalorder %s221, %s235
      %p237 = scmp.eq.s32.totalorder %s38, 0
      %p238 = por %p236, %p237
      %s240 = sadd.s32 %s239, 1
      %p243 = scmp.eq.s32.totalorder %s32, 1
      %p244 = scmp.ne.s32.totalorder %s239, %s241
      %p245 = scmp.eq.s32.totalorder %s32, 0
      %p246 = por %p244, %p245
      %p247 = scmp.ne.s32.totalorder %s239, %s241
      %p248 = scmp.eq.s32.totalorder %s37, 1
      %p249 = por %p247, %p248
      %p250 = scmp.ne.s32.totalorder %s241, %s242
      %p251 = scmp.eq.s32.totalorder %s37, 0
      %p252 = por %p250, %p251
      %p253 = scmp.ne.s32.totalorder %s241, %s242
      %p254 = scmp.eq.s32.totalorder %s38, 1
      %p255 = por %p253, %p254
      %p257 = scmp.ne.s32.totalorder %s242, %s256
      %p258 = scmp.eq.s32.totalorder %s38, 0
      %p259 = por %p257, %p258
      %s260 = ssub.s32 %s39, %s51
      %s261 = ssub.s32 %s40, %s47
      %s262 = sor.u32 %s260, %s261
      %p263 = scmp.eq.s32.totalorder %s262, 0
      %s265 = sadd.s32 %s264, 1
      %s266 = scalar_select %p263, %s264, %s265
      %p269 = pneg %p263
      %p270 = scmp.eq.s32.totalorder %s32, 1
      %p271 = por %p269, %p270
      %p272 = scmp.ne.s32.totalorder %s264, %s267
      %p273 = scmp.eq.s32.totalorder %s32, 0
      %p274 = por %p272, %p273
      %p275 = scmp.ne.s32.totalorder %s264, %s267
      %p276 = scmp.eq.s32.totalorder %s37, 1
      %p277 = por %p275, %p276
      %p278 = scmp.ne.s32.totalorder %s267, %s268
      %p279 = scmp.eq.s32.totalorder %s37, 0
      %p280 = por %p278, %p279
      %p281 = scmp.ne.s32.totalorder %s267, %s268
      %p282 = scmp.eq.s32.totalorder %s38, 1
      %p283 = por %p281, %p282
      %p285 = scmp.ne.s32.totalorder %s268, %s284
      %p286 = scmp.eq.s32.totalorder %s38, 0
      %p287 = por %p285, %p286
      %s288 = ssub.s32 %s39, %s51
      %s289 = ssub.s32 %s40, %s47
      %s290 = sor.u32 %s288, %s289
      %p291 = scmp.eq.s32.totalorder %s290, 0
      %s293 = sadd.s32 %s292, 1
      %s294 = scalar_select %p291, %s292, %s293
      %p297 = pneg %p291
      %p298 = scmp.eq.s32.totalorder %s32, 1
      %p299 = por %p297, %p298
      %p300 = scmp.ne.s32.totalorder %s292, %s295
      %p301 = scmp.eq.s32.totalorder %s32, 0
      %p302 = por %p300, %p301
      %p303 = scmp.ne.s32.totalorder %s292, %s295
      %p304 = scmp.eq.s32.totalorder %s37, 1
      %p305 = por %p303, %p304
      %p306 = scmp.ne.s32.totalorder %s295, %s296
      %p307 = scmp.eq.s32.totalorder %s37, 0
      %p308 = por %p306, %p307
      %p309 = scmp.ne.s32.totalorder %s295, %s296
      %p310 = scmp.eq.s32.totalorder %s38, 1
      %p311 = por %p309, %p310
      %p313 = scmp.ne.s32.totalorder %s296, %s312
      %p314 = scmp.eq.s32.totalorder %s38, 0
      %p315 = por %p313, %p314
      %p316 = scmp.le.s32.totalorder 1, %s32
      %p317 = scmp.lt.s32.totalorder %s32, 3
      %p318 = pnand %p316, %p317
      %p319 = pneg %p318
      // Predicated region
      $region9: #{blip3o_attention_block.10} parent=5 // pred_check
        _
      $region10: #{blip3o_attention_block.10} parent=5 // pred_check_branch
        %321 = sbr.rel (%p318) target = $region12
      $region11: #{blip3o_attention_block.10} parent=5 // pred_region
        %s322 = ssub.s32 %s32, 1
        // Predicated region
        $region13: #{blip3o_attention_block.10} parent=11 // pred_check
          %p323 = pneg %p147
        $region14: #{blip3o_attention_block.10} parent=11 // pred_check_branch
          %325 = sbr.rel (%p323) target = $region16
        $region15: #{blip3o_attention_block.10} parent=11 // pred_region
          %s327 = ssub.s32 512, 512
          %328 = vsyncadd [#allocation9], %s327
          %s329 = sshll.u32 [#allocation8], 4
          %s330 = int_to_ptr.vmem [resolvable:$true] %s329
          %335 = dma.hbm_to_vmem [thread:$0]  %s3, 512, %s330, [#allocation9], 128, 128, 8
        $region16: #{blip3o_attention_block.10} parent=11 // pred_fallthru
          _
        // Predicated region
        $region17: #{blip3o_attention_block.10} parent=11 // pred_check
          %p336 = pneg %p168
        $region18: #{blip3o_attention_block.10} parent=11 // pred_check_branch
          %338 = sbr.rel (%p336) target = $region20
        $region19: #{blip3o_attention_block.10} parent=11 // pred_region
          %s340 = ssub.s32 16, 16
          %341 = vsyncadd [#allocation9], %s340
          %s343 = sshll.u32 [#allocation10], 4
          %s344 = int_to_ptr.vmem [resolvable:$true] %s343
          %346 = dma.hbm_to_vmem [thread:$0]  %s4, 16, %s344, [#allocation9]
        $region20: #{blip3o_attention_block.10} parent=11 // pred_fallthru
          _
        // Predicated region
        $region21: #{blip3o_attention_block.10} parent=11 // pred_check
          %p347 = pneg %p189
        $region22: #{blip3o_attention_block.10} parent=11 // pred_check_branch
          %349 = sbr.rel (%p347) target = $region24
        $region23: #{blip3o_attention_block.10} parent=11 // pred_region
          %s351 = ssub.s32 16, 16
          %352 = vsyncadd [#allocation12], %s351
          %s354 = sshll.u32 [#allocation11], 4
          %s355 = int_to_ptr.vmem [resolvable:$true] %s354
          %357 = dma.hbm_to_vmem [thread:$0]  %s5, 16, %s355, [#allocation12]
        $region24: #{blip3o_attention_block.10} parent=11 // pred_fallthru
          _
        // Predicated region
        $region25: #{blip3o_attention_block.10} parent=11 // pred_check
          %p358 = pneg %p210
        $region26: #{blip3o_attention_block.10} parent=11 // pred_check_branch
          %360 = sbr.rel (%p358) target = $region28
        $region27: #{blip3o_attention_block.10} parent=11 // pred_region
          %s362 = ssub.s32 16, 16
          %363 = vsyncadd [#allocation12], %s362
          %s365 = sshll.u32 [#allocation13], 4
          %s366 = int_to_ptr.vmem [resolvable:$true] %s365
          %368 = dma.hbm_to_vmem [thread:$0]  %s6, 16, %s366, [#allocation12]
        $region28: #{blip3o_attention_block.10} parent=11 // pred_fallthru
          _
        // Predicated region
        $region29: #{blip3o_attention_block.10} parent=11 // pred_check
          %p369 = pneg %p231
        $region30: #{blip3o_attention_block.10} parent=11 // pred_check_branch
          %371 = sbr.rel (%p369) target = $region32
        $region31: #{blip3o_attention_block.10} parent=11 // pred_region
          %s373 = ssub.s32 512, 512
          %374 = vsyncadd [#allocation15], %s373
          %s375 = sshll.u32 [#allocation14], 4
          %s376 = int_to_ptr.vmem [resolvable:$true] %s375
          %381 = dma.hbm_to_vmem [thread:$0]  %s7, 512, %s376, [#allocation15], 128, 128, 8
        $region32: #{blip3o_attention_block.10} parent=11 // pred_fallthru
          _
        // Predicated region
        $region33: #{blip3o_attention_block.10} parent=11 // pred_check
          %p382 = pneg %p252
        $region34: #{blip3o_attention_block.10} parent=11 // pred_check_branch
          %384 = sbr.rel (%p382) target = $region36
        $region35: #{blip3o_attention_block.10} parent=11 // pred_region
          %s386 = ssub.s32 16, 16
          %387 = vsyncadd [#allocation15], %s386
          %s389 = sshll.u32 [#allocation16], 4
          %s390 = int_to_ptr.vmem [resolvable:$true] %s389
          %392 = dma.hbm_to_vmem [thread:$0]  %s8, 16, %s390, [#allocation15]
        $region36: #{blip3o_attention_block.10} parent=11 // pred_fallthru
          _
      $region12: #{blip3o_attention_block.10} parent=5 // pred_fallthru
        _
      %p393 = scmp.lt.s32.totalorder %s32, 2
      // Predicated region
      $region37: #{blip3o_attention_block.10} parent=5 // pred_check
        %p394 = pneg %p393
      $region38: #{blip3o_attention_block.10} parent=5 // pred_check_branch
        %396 = sbr.rel (%p394) target = $region40
      $region39: #{blip3o_attention_block.10} parent=5 // pred_region
        // Predicated region
        $region41: #{blip3o_attention_block.10} parent=39 // pred_check
          %p397 = pneg %p66
        $region42: #{blip3o_attention_block.10} parent=39 // pred_check_branch
          %399 = sbr.rel (%p397) target = $region44
        $region43: #{blip3o_attention_block.10} parent=39 // pred_region
          %s400 = sand.u32 %s56, 1
          %s401 = scalar_lea.sflag [#allocation3], %s400
          %s402 = sand.u32 %s56, 1
          %s403 = smul.addr %s402, 8
          %s404 = scalar_lea.vmem [#allocation2], %s403
          %s406 = ssub.s32 128, 128
          %407 = vsyncadd %s401, %s406
          %s408 = sadd.s32 %s40, %s39
          %s409 = smul.addr %s408, 128
          %s410 = scalar_lea.hbm %s0, %s409
          %s412 = sshll.u32 %s404, 4
          %s413 = int_to_ptr.vmem [resolvable:$true] %s412
          %415 = dma.hbm_to_vmem [thread:$0]  %s410, 128, %s413, %s401
        $region44: #{blip3o_attention_block.10} parent=39 // pred_fallthru
          _
        // Predicated region
        $region45: #{blip3o_attention_block.10} parent=39 // pred_check
          %p416 = pneg %p94
        $region46: #{blip3o_attention_block.10} parent=39 // pred_check_branch
          %418 = sbr.rel (%p416) target = $region48
        $region47: #{blip3o_attention_block.10} parent=39 // pred_region
          %s419 = sand.u32 %s32, 1
          %s420 = scalar_lea.sflag [#allocation6], %s419
          %s421 = sand.u32 %s84, 1
          %s422 = smul.addr %s421, 8
          %s423 = scalar_lea.vmem [#allocation5], %s422
          %s425 = ssub.s32 128, 128
          %426 = vsyncadd %s420, %s425
          %s427 = sadd.s32 %s40, %s39
          %s428 = smul.addr %s427, 128
          %s429 = scalar_lea.hbm %s1, %s428
          %s431 = sshll.u32 %s423, 4
          %s432 = int_to_ptr.vmem [resolvable:$true] %s431
          %434 = dma.hbm_to_vmem [thread:$0]  %s429, 128, %s432, %s420
        $region48: #{blip3o_attention_block.10} parent=39 // pred_fallthru
          _
        // Predicated region
        $region49: #{blip3o_attention_block.10} parent=39 // pred_check
          %p435 = pneg %p120
        $region50: #{blip3o_attention_block.10} parent=39 // pred_check_branch
          %437 = sbr.rel (%p435) target = $region52
        $region51: #{blip3o_attention_block.10} parent=39 // pred_region
          %s438 = sand.u32 %s32, 1
          %s439 = scalar_lea.sflag [#allocation6], %s438
          %s440 = sand.u32 %s110, 1
          %s441 = smul.addr %s440, 8
          %s442 = scalar_lea.vmem [#allocation7], %s441
          %s444 = ssub.s32 128, 128
          %445 = vsyncadd %s439, %s444
          %s446 = smul.addr %s39, 128
          %s447 = scalar_lea.hbm %s2, %s446
          %s449 = sshll.u32 %s442, 4
          %s450 = int_to_ptr.vmem [resolvable:$true] %s449
          %452 = dma.hbm_to_vmem [thread:$0]  %s447, 128, %s450, %s439
        $region52: #{blip3o_attention_block.10} parent=39 // pred_fallthru
          _
      $region40: #{blip3o_attention_block.10} parent=5 // pred_fallthru
        _
      %p453 = scmp.le.s32.totalorder 1, %s32
      %p454 = scmp.lt.s32.totalorder %s32, 3
      %p455 = pnand %p453, %p454
      %p456 = pneg %p455
      // Predicated region
      $region53: #{blip3o_attention_block.10} parent=5 // pred_check
        _
      $region54: #{blip3o_attention_block.10} parent=5 // pred_check_branch
        %458 = sbr.rel (%p455) target = $region56
      $region55: #{blip3o_attention_block.10} parent=5 // pred_region
        %s459 = ssub.s32 %s32, 1
        %s460 = sand.u32 %s59, 1
        %s461 = scalar_lea.sflag [#allocation3], %s460
        %s462 = sand.u32 %s59, 1
        %s463 = smul.addr %s462, 8
        %s464 = scalar_lea.vmem [#allocation2], %s463
        // Predicated region
        $region57: #{blip3o_attention_block.10} parent=55 // pred_check
          %p465 = pneg %p72
        $region58: #{blip3o_attention_block.10} parent=55 // pred_check_branch
          %467 = sbr.rel (%p465) target = $region60
        $region59: #{blip3o_attention_block.10} parent=55 // pred_region
          %468 = dma.done %s461, 128
        $region60: #{blip3o_attention_block.10} parent=55 // pred_fallthru
          _
        %s469 = sand.u32 %s37, 1
        %s470 = scalar_lea.sflag [#allocation6], %s469
        %s471 = sand.u32 %s87, 1
        %s472 = smul.addr %s471, 8
        %s473 = scalar_lea.vmem [#allocation5], %s472
        // Predicated region
        $region61: #{blip3o_attention_block.10} parent=55 // pred_check
          %p474 = pneg %p100
        $region62: #{blip3o_attention_block.10} parent=55 // pred_check_branch
          %476 = sbr.rel (%p474) target = $region64
        $region63: #{blip3o_attention_block.10} parent=55 // pred_region
          %477 = dma.done %s470, 128
        $region64: #{blip3o_attention_block.10} parent=55 // pred_fallthru
          _
        %s478 = sand.u32 %s37, 1
        %s479 = scalar_lea.sflag [#allocation6], %s478
        %s480 = sand.u32 %s113, 1
        %s481 = smul.addr %s480, 8
        %s482 = scalar_lea.vmem [#allocation7], %s481
        // Predicated region
        $region65: #{blip3o_attention_block.10} parent=55 // pred_check
          %p483 = pneg %p126
        $region66: #{blip3o_attention_block.10} parent=55 // pred_check_branch
          %485 = sbr.rel (%p483) target = $region68
        $region67: #{blip3o_attention_block.10} parent=55 // pred_region
          %486 = dma.done %s479, 128
        $region68: #{blip3o_attention_block.10} parent=55 // pred_fallthru
          _
        // Predicated region
        $region69: #{blip3o_attention_block.10} parent=55 // pred_check
          %p487 = pneg %p147
        $region70: #{blip3o_attention_block.10} parent=55 // pred_check_branch
          %489 = sbr.rel (%p487) target = $region72
        $region71: #{blip3o_attention_block.10} parent=55 // pred_region
          %490 = dma.done [#allocation9], 512
        $region72: #{blip3o_attention_block.10} parent=55 // pred_fallthru
          _
        // Predicated region
        $region73: #{blip3o_attention_block.10} parent=55 // pred_check
          %p491 = pneg %p168
        $region74: #{blip3o_attention_block.10} parent=55 // pred_check_branch
          %493 = sbr.rel (%p491) target = $region76
        $region75: #{blip3o_attention_block.10} parent=55 // pred_region
          %494 = dma.done [#allocation9], 16
        $region76: #{blip3o_attention_block.10} parent=55 // pred_fallthru
          _
        // Predicated region
        $region77: #{blip3o_attention_block.10} parent=55 // pred_check
          %p495 = pneg %p189
        $region78: #{blip3o_attention_block.10} parent=55 // pred_check_branch
          %497 = sbr.rel (%p495) target = $region80
        $region79: #{blip3o_attention_block.10} parent=55 // pred_region
          %498 = dma.done [#allocation12], 16
        $region80: #{blip3o_attention_block.10} parent=55 // pred_fallthru
          _
        // Predicated region
        $region81: #{blip3o_attention_block.10} parent=55 // pred_check
          %p499 = pneg %p210
        $region82: #{blip3o_attention_block.10} parent=55 // pred_check_branch
          %501 = sbr.rel (%p499) target = $region84
        $region83: #{blip3o_attention_block.10} parent=55 // pred_region
          %502 = dma.done [#allocation12], 16
        $region84: #{blip3o_attention_block.10} parent=55 // pred_fallthru
          _
        // Predicated region
        $region85: #{blip3o_attention_block.10} parent=55 // pred_check
          %p503 = pneg %p231
        $region86: #{blip3o_attention_block.10} parent=55 // pred_check_branch
          %505 = sbr.rel (%p503) target = $region88
        $region87: #{blip3o_attention_block.10} parent=55 // pred_region
          %506 = dma.done [#allocation15], 512
        $region88: #{blip3o_attention_block.10} parent=55 // pred_fallthru
          _
        // Predicated region
        $region89: #{blip3o_attention_block.10} parent=55 // pred_check
          %p507 = pneg %p252
        $region90: #{blip3o_attention_block.10} parent=55 // pred_check_branch
          %509 = sbr.rel (%p507) target = $region92
        $region91: #{blip3o_attention_block.10} parent=55 // pred_region
          %510 = dma.done [#allocation15], 16
        $region92: #{blip3o_attention_block.10} parent=55 // pred_fallthru
          _
        %s511 = sand.u32 %s59, 1
        %s512 = scalar_lea.sflag [#allocation3], %s511
        %s513 = sand.u32 %s59, 1
        %s514 = smul.addr %s513, 8
        %s515 = scalar_lea.vmem [#allocation2], %s514
        %p516 = pneg %p72
        %p517 = pneg %p69
        %s518 = sand.u32 %s37, 1
        %s519 = scalar_lea.sflag [#allocation6], %s518
        %s520 = sand.u32 %s87, 1
        %s521 = smul.addr %s520, 8
        %s522 = scalar_lea.vmem [#allocation5], %s521
        %p523 = pneg %p100
        %p524 = pneg %p97
        %s525 = sand.u32 %s37, 1
        %s526 = scalar_lea.sflag [#allocation6], %s525
        %s527 = sand.u32 %s113, 1
        %s528 = smul.addr %s527, 8
        %s529 = scalar_lea.vmem [#allocation7], %s528
        %p530 = pneg %p126
        %p531 = pneg %p123
        %p532 = pneg %p147
        %p533 = pneg %p144
        %p534 = pneg %p168
        %p535 = pneg %p165
        %p536 = pneg %p189
        %p537 = pneg %p186
        %p538 = pneg %p210
        %p539 = pneg %p207
        %p540 = pneg %p231
        %p541 = pneg %p228
        %p542 = pneg %p252
        %p543 = pneg %p249
        %p544 = pneg %p280
        %p545 = pneg %p277
        %s546 = sand.u32 %s267, 1
        %s547 = scalar_lea.sflag [#allocation4], %s546
        %s548 = sand.u32 %s267, 1
        %s549 = smul.addr %s548, 8
        %s550 = scalar_lea.vmem [#allocation17], %s549
        %p551 = pneg %p308
        %p552 = pneg %p305
        %s553 = sand.u32 %s295, 1
        %s554 = scalar_lea.sflag [#allocation19], %s553
        %s555 = sand.u32 %s295, 1
        %s556 = smul.addr %s555, 8
        %s557 = scalar_lea.vmem [#allocation18], %s556
        %v558 = vld [vmem:[%s464] sm:$0xff]
        %v559 = vld [vmem:[%s482] sm:$0x3f]
        %v560 = vld [vmem:[%s473] sm:$0xff]
        %v561 = vld [vmem:[#allocation8] sm:$0xff]
        %v562 = vld [vmem:[#allocation8 + $0x8] sm:$0xff]
        %v563 = vld [vmem:[#allocation8 + $0x10] sm:$0xff]
        %v564 = vld [vmem:[#allocation8 + $0x18] sm:$0xff]
        %v565 = vld [vmem:[#allocation10] sm:$0x1]
        %v567 = vlaneseq
        %v568 = vshrl.u32 %v567, 7
        %v569 = vsub.s32 0, %v568
        %v570 = vrot.slane %v565, %v569
        %vm572 = vcmask 261120
        %v574 = vsel %vm572, %v560, 0
        %576 = vmatprep.subr.mxu0 0.0
        %577 = vmatpush1.msra.mxu0 %v561
        %578 = vmatprep.subr.mxu0 0.0
        %579 = vmatpush1.msra.mxu0 %v562
        %580 = vmatprep.subr.mxu0 0.0
        %581 = vmatpush1.msra.mxu0 %v563
        %582 = vmatprep.subr.mxu0 0.0
        %583 = vmatpush1.msra.mxu0 %v564
        %584 = vmatprep.subr.mxu0 0.0
        %585 = vmatpush1.msra.mxu0 0.0
        %586 = vmatprep.subr.mxu0 0.0
        %587 = vmatpush1.msra.mxu0 0.0
        %588 = vmatprep.subr.mxu0 0.0
        %589 = vmatpush1.msra.mxu0 0.0
        %590 = vmatprep.subr.mxu0 0.0
        %591 = vmatpush1.msra.mxu0 0.0
        %592 = vmatprep.subr.mxu0 0.0
        %593 = vmatpush1.msra.mxu0 0.0
        %594 = vmatprep.subr.mxu0 0.0
        %595 = vmatpush1.msra.mxu0 0.0
        %596 = vmatprep.subr.mxu0 0.0
        %597 = vmatpush1.msra.mxu0 0.0
        %598 = vmatprep.subr.mxu0 0.0
        %599 = vmatpush1.msra.mxu0 0.0
        %600 = vmatprep.subr.mxu0 0.0
        %601 = vmatpush1.msra.mxu0 0.0
        %602 = vmatprep.subr.mxu0 0.0
        %603 = vmatpush1.msra.mxu0 0.0
        %604 = vmatprep.subr.mxu0 0.0
        %605 = vmatpush1.msra.mxu0 0.0
        %606 = vmatprep.subr.mxu0 0.0
        %607 = vmatpush1.msra.mxu0 0.0
        %608 = vmatprep.subr.mxu0 0.0
        %609 = vmatpush1.msra.mxu0 0.0
        %610 = vmatprep.subr.mxu0 0.0
        %611 = vmatpush1.msra.mxu0 0.0
        %612 = vmatprep.subr.mxu0 0.0
        %613 = vmatpush1.msra.mxu0 0.0
        %614 = vmatprep.subr.mxu0 0.0
        %615 = vmatpush1.msra.mxu0 0.0
        %616 = vmatprep.subr.mxu0 0.0
        %617 = vmatpush1.msra.mxu0 0.0
        %618 = vmatprep.subr.mxu0 0.0
        %619 = vmatpush1.msra.mxu0 0.0
        %620 = vmatprep.subr.mxu0 0.0
        %621 = vmatpush1.msra.mxu0 0.0
        %622 = vmatprep.subr.mxu0 0.0
        %623 = vmatpush1.msra.mxu0 0.0
        %624 = vmatprep.subr.mxu0 0.0
        %625 = vmatpush1.msra.mxu0 0.0
        %626 = vmatprep.subr.mxu0 0.0
        %627 = vmatpush1.msra.mxu0 0.0
        %628 = vmatprep.subr.mxu0 0.0
        %629 = vmatpush1.msra.mxu0 0.0
        %630 = vmatprep.subr.mxu0 0.0
        %631 = vmatpush1.msra.mxu0 0.0
        %632 = vmatprep.subr.mxu0 0.0
        %633 = vmatpush1.msra.mxu0 0.0
        %634 = vmatprep.subr.mxu0 0.0
        %635 = vmatpush1.msra.mxu0 0.0
        %636 = vmatprep.subr.mxu0 0.0
        %637 = vmatpush1.msra.mxu0 0.0
        %638 = vmatprep.subr.mxu0 0.0
        %639 = vmatpush1.msra.mxu0 0.0
        %640 = vmatprep.mubr.f32.mxu0 0.0
        %641 = vmatmul.mubr.f32.gmra.mrb[0].mxu0 %v574
        %v642 = vpop.f32.mrb[0].mxu0
        %v643 = vadd.f32 %v570, %v642
        %v644 = vpop.f32.mrb[0].mxu0
        %645 = vdwg.mxu0
        %v646 = vlaneseq
        %v647 = vshrl.u32 %v646, 7
        %v648 = vsub.s32 1, %v647
        %v649 = vrot.slane %v559, %v648
        %v650 = vmul.f32 %v649, %v643
        %v651 = vadd.f32 %v558, %v650
        %652 = vst.msk [vmem:[%s550] sm:$0xff] %vm572, %v651
        %v653 = vld [vmem:[#allocation11] sm:$0x1]
        %v654 = vld [vmem:[#allocation13] sm:$0x1]
        %v655 = vsel %vm572, %v651, 0.0
        %656 = vadd.xlane.f32.xlu0 %v655
        %v657 = vpop.xlane.xlu0 %656
        %v658 = vrcp.pop 32.0
        %v659 = vmul.f32 %v657, %v658
        %v660 = vsub.f32 %v651, %v659
        %v661 = vmul.f32 %v660, %v660
        %v662 = vsel %vm572, %v661, 0.0
        %663 = vadd.xlane.f32.xlu0 %v662
        %v664 = vpop.xlane.xlu0 %663
        %v665 = vmul.f32 %v664, %v658
        %v666 = vadd.f32 %v665, 1e-05
        %v667 = vrsqrt.pop %v666
        %v668 = vmul.f32 %v660, %v667
        %v670 = vlaneseq
        %v671 = vshrl.u32 %v670, 7
        %v672 = vsub.s32 0, %v671
        %v673 = vrot.slane %v653, %v672
        %v675 = vmul.f32 %v668, %v673
        %v677 = vlaneseq
        %v678 = vshrl.u32 %v677, 7
        %v679 = vsub.s32 0, %v678
        %v680 = vrot.slane %v654, %v679
        %v682 = vadd.f32 %v675, %v680
        %v683 = vlaneseq
        %v684 = vshrl.u32 %v683, 7
        %v685 = vsub.s32 4, %v684
        %v686 = vrot.slane %v559, %v685
        %v687 = vmul.f32 %v682, %v686
        %v688 = vld [vmem:[#allocation14] sm:$0xff]
        %v689 = vld [vmem:[#allocation14 + $0x8] sm:$0xff]
        %v690 = vld [vmem:[#allocation14 + $0x10] sm:$0xff]
        %v691 = vld [vmem:[#allocation14 + $0x18] sm:$0xff]
        %v692 = vld [vmem:[#allocation16] sm:$0x1]
        %v694 = vlaneseq
        %v695 = vshrl.u32 %v694, 7
        %v696 = vsub.s32 0, %v695
        %v697 = vrot.slane %v692, %v696
        %v700 = vsel %vm572, %v687, 0
        %702 = vmatprep.subr.mxu0 0.0
        %703 = vmatpush1.msra.mxu0 %v688
        %704 = vmatprep.subr.mxu0 0.0
        %705 = vmatpush1.msra.mxu0 %v689
        %706 = vmatprep.subr.mxu0 0.0
        %707 = vmatpush1.msra.mxu0 %v690
        %708 = vmatprep.subr.mxu0 0.0
        %709 = vmatpush1.msra.mxu0 %v691
        %710 = vmatprep.subr.mxu0 0.0
        %711 = vmatpush1.msra.mxu0 0.0
        %712 = vmatprep.subr.mxu0 0.0
        %713 = vmatpush1.msra.mxu0 0.0
        %714 = vmatprep.subr.mxu0 0.0
        %715 = vmatpush1.msra.mxu0 0.0
        %716 = vmatprep.subr.mxu0 0.0
        %717 = vmatpush1.msra.mxu0 0.0
        %718 = vmatprep.subr.mxu0 0.0
        %719 = vmatpush1.msra.mxu0 0.0
        %720 = vmatprep.subr.mxu0 0.0
        %721 = vmatpush1.msra.mxu0 0.0
        %722 = vmatprep.subr.mxu0 0.0
        %723 = vmatpush1.msra.mxu0 0.0
        %724 = vmatprep.subr.mxu0 0.0
        %725 = vmatpush1.msra.mxu0 0.0
        %726 = vmatprep.subr.mxu0 0.0
        %727 = vmatpush1.msra.mxu0 0.0
        %728 = vmatprep.subr.mxu0 0.0
        %729 = vmatpush1.msra.mxu0 0.0
        %730 = vmatprep.subr.mxu0 0.0
        %731 = vmatpush1.msra.mxu0 0.0
        %732 = vmatprep.subr.mxu0 0.0
        %733 = vmatpush1.msra.mxu0 0.0
        %734 = vmatprep.subr.mxu0 0.0
        %735 = vmatpush1.msra.mxu0 0.0
        %736 = vmatprep.subr.mxu0 0.0
        %737 = vmatpush1.msra.mxu0 0.0
        %738 = vmatprep.subr.mxu0 0.0
        %739 = vmatpush1.msra.mxu0 0.0
        %740 = vmatprep.subr.mxu0 0.0
        %741 = vmatpush1.msra.mxu0 0.0
        %742 = vmatprep.subr.mxu0 0.0
        %743 = vmatpush1.msra.mxu0 0.0
        %744 = vmatprep.subr.mxu0 0.0
        %745 = vmatpush1.msra.mxu0 0.0
        %746 = vmatprep.subr.mxu0 0.0
        %747 = vmatpush1.msra.mxu0 0.0
        %748 = vmatprep.subr.mxu0 0.0
        %749 = vmatpush1.msra.mxu0 0.0
        %750 = vmatprep.subr.mxu0 0.0
        %751 = vmatpush1.msra.mxu0 0.0
        %752 = vmatprep.subr.mxu0 0.0
        %753 = vmatpush1.msra.mxu0 0.0
        %754 = vmatprep.subr.mxu0 0.0
        %755 = vmatpush1.msra.mxu0 0.0
        %756 = vmatprep.subr.mxu0 0.0
        %757 = vmatpush1.msra.mxu0 0.0
        %758 = vmatprep.subr.mxu0 0.0
        %759 = vmatpush1.msra.mxu0 0.0
        %760 = vmatprep.subr.mxu0 0.0
        %761 = vmatpush1.msra.mxu0 0.0
        %762 = vmatprep.subr.mxu0 0.0
        %763 = vmatpush1.msra.mxu0 0.0
        %764 = vmatprep.subr.mxu0 0.0
        %765 = vmatpush1.msra.mxu0 0.0
        %766 = vmatprep.mubr.f32.mxu0 0.0
        %767 = vmatmul.mubr.f32.gmra.mrb[0].mxu0 %v700
        %v768 = vpop.f32.mrb[0].mxu0
        %v769 = vadd.f32 %v697, %v768
        %v770 = vpop.f32.mrb[0].mxu0
        %771 = vdwg.mxu0
        %v772 = vmul.f32 %v769, 0.35355338
        %773 = vst.msk [vmem:[%s557] sm:$0xff] %vm572, %v772
        %s774 = sand.u32 %s267, 1
        %s775 = scalar_lea.sflag [#allocation4], %s774
        %s776 = sand.u32 %s267, 1
        %s777 = smul.addr %s776, 8
        %s778 = scalar_lea.vmem [#allocation17], %s777
        %s779 = sand.u32 %s295, 1
        %s780 = scalar_lea.sflag [#allocation19], %s779
        %s781 = sand.u32 %s295, 1
        %s782 = smul.addr %s781, 8
        %s783 = scalar_lea.vmem [#allocation18], %s782
        // Predicated region
        $region93: #{blip3o_attention_block.10} parent=55 // pred_check
          %p784 = pneg %p277
        $region94: #{blip3o_attention_block.10} parent=55 // pred_check_branch
          %786 = sbr.rel (%p784) target = $region96
        $region95: #{blip3o_attention_block.10} parent=55 // pred_region
          %s788 = ssub.s32 128, 128
          %789 = vsyncadd %s775, %s788
          %s790 = sadd.s32 %s42, %s41
          %s791 = smul.addr %s790, 128
          %s792 = scalar_lea.hbm %s9, %s791
          %s794 = sshll.u32 %s778, 4
          %s795 = int_to_ptr.vmem [resolvable:$true] %s794
          %797 = dma.vmem_to_hbm [thread:$0]  %s795, 128, %s792, %s775
        $region96: #{blip3o_attention_block.10} parent=55 // pred_fallthru
          _
        // Predicated region
        $region97: #{blip3o_attention_block.10} parent=55 // pred_check
          %p798 = pneg %p305
        $region98: #{blip3o_attention_block.10} parent=55 // pred_check_branch
          %800 = sbr.rel (%p798) target = $region100
        $region99: #{blip3o_attention_block.10} parent=55 // pred_region
          %s802 = ssub.s32 128, 128
          %803 = vsyncadd %s780, %s802
          %s804 = sadd.s32 %s42, %s41
          %s805 = smul.addr %s804, 128
          %s806 = scalar_lea.hbm %s10, %s805
          %s808 = sshll.u32 %s783, 4
          %s809 = int_to_ptr.vmem [resolvable:$true] %s808
          %811 = dma.vmem_to_hbm [thread:$0]  %s809, 128, %s806, %s780
        $region100: #{blip3o_attention_block.10} parent=55 // pred_fallthru
          _
      $region56: #{blip3o_attention_block.10} parent=5 // pred_fallthru
        _
      %p812 = scmp.le.s32.totalorder 2, %s32
      // Predicated region
      $region101: #{blip3o_attention_block.10} parent=5 // pred_check
        %p813 = pneg %p812
      $region102: #{blip3o_attention_block.10} parent=5 // pred_check_branch
        %815 = sbr.rel (%p813) target = $region104
      $region103: #{blip3o_attention_block.10} parent=5 // pred_region
        %s816 = ssub.s32 %s32, 2
        // Predicated region
        $region105: #{blip3o_attention_block.10} parent=103 // pred_check
          %p817 = pneg %p283
        $region106: #{blip3o_attention_block.10} parent=103 // pred_check_branch
          %819 = sbr.rel (%p817) target = $region108
        $region107: #{blip3o_attention_block.10} parent=103 // pred_region
          %s820 = sand.u32 %s268, 1
          %s821 = scalar_lea.sflag [#allocation4], %s820
          %s822 = sand.u32 %s268, 1
          %s823 = smul.addr %s822, 8
          %s824 = scalar_lea.vmem [#allocation17], %s823
          %825 = dma.done %s821, 128
        $region108: #{blip3o_attention_block.10} parent=103 // pred_fallthru
          _
        // Predicated region
        $region109: #{blip3o_attention_block.10} parent=103 // pred_check
          %p826 = pneg %p311
        $region110: #{blip3o_attention_block.10} parent=103 // pred_check_branch
          %828 = sbr.rel (%p826) target = $region112
        $region111: #{blip3o_attention_block.10} parent=103 // pred_region
          %s829 = sand.u32 %s296, 1
          %s830 = scalar_lea.sflag [#allocation19], %s829
          %s831 = sand.u32 %s296, 1
          %s832 = smul.addr %s831, 8
          %s833 = scalar_lea.vmem [#allocation18], %s832
          %834 = dma.done %s830, 128
        $region112: #{blip3o_attention_block.10} parent=103 // pred_fallthru
          _
      $region104: #{blip3o_attention_block.10} parent=5 // pred_fallthru
        _
    $region6: #{blip3o_attention_block.10} parent=1 // loop_footer
      %s36 = sadd.s32 1, %s32
    $region7: #{blip3o_attention_block.10} parent=1 // loop_footer_branch
      %31 = sbr.rel target = $region3
    $region8: #{blip3o_attention_block.10} parent=1 // loop_exit
      _
    %835 = vsyncpa [#allocation3], 1
    %s836 = scalar_lea.sflag [#allocation3], 1
    %837 = vsyncpa %s836, 1
    %838 = vsyncpa [#allocation6], 1
    %s839 = scalar_lea.sflag [#allocation6], 1
    %840 = vsyncpa %s839, 1
    %841 = vsyncpa [#allocation9], 1
    %842 = vsyncpa [#allocation12], 1
    %843 = vsyncpa [#allocation15], 1
    %844 = vsyncpa [#allocation4], 1
    %s845 = scalar_lea.sflag [#allocation4], 1
    %846 = vsyncpa %s845, 1
    %847 = vsyncpa [#allocation19], 1
    %s848 = scalar_lea.sflag [#allocation19], 1
    %849 = vsyncpa %s848, 1

// kernel: blip3o_attention_block.8
$region0: #{blip3o_attention_block.8}
  #allocation0 [shape = 'u32[]', space=smem, size = 0x4, offset = 0x4, fixed_abs, tag = 'smem constant byte address 0x4 - core index']
  #allocation1 [shape = 'u32[144,128]{1,0:T(1,128)}', space=vmem, size = 0x12000, scoped, tag = 'internal scratch']
  %s0 = inlined_call_operand.hbm [shape: f32[2,8,32], index: 0, kind: input, shape index: {}]
  %s1 = inlined_call_operand.hbm [shape: f32[2,6,32], index: 1, kind: input, shape index: {}]
  %s2 = inlined_call_operand.hbm [shape: f32[8,4], index: 2, kind: input, shape index: {}]
  %s3 = inlined_call_operand.hbm [shape: f32[8,4], index: 3, kind: input, shape index: {}]
  %s4 = inlined_call_operand.hbm [shape: f32[1,32], index: 4, kind: input, shape index: {}]
  %s5 = inlined_call_operand.hbm [shape: f32[1,32], index: 5, kind: input, shape index: {}]
  %s6 = inlined_call_operand.hbm [shape: f32[32,32], index: 6, kind: input, shape index: {}]
  %s7 = inlined_call_operand.hbm [shape: f32[1,32], index: 7, kind: input, shape index: {}]
  %s8 = inlined_call_operand.hbm [shape: f32[32,32], index: 8, kind: input, shape index: {}]
  %s9 = inlined_call_operand.hbm [shape: f32[1,32], index: 9, kind: input, shape index: {}]
  %s10 = inlined_call_operand.hbm [shape: f32[32,32], index: 10, kind: input, shape index: {}]
  %s11 = inlined_call_operand.hbm [shape: f32[1,32], index: 11, kind: input, shape index: {}]
  %s12 = inlined_call_operand.hbm [shape: f32[2,8,32], index: 12, kind: output, shape index: {0}]
  %s13 = inlined_call_operand.hbm [shape: f32[2,8,32], index: 13, kind: output, shape index: {1}]
  %s14 = inlined_call_operand.hbm [shape: f32[2,8,32], index: 14, kind: output, shape index: {2}]
  %15 = xla_tuple %s12, %s13, %s14
  %s16 = sld [smem:[#allocation0]]
  $region145: #{blip3o_attention_block.8} parent=0
    _
  %s18 = ssub.s32 1, %s16
  %s19 = scalar_select 0, %s18, %s16
  $region1: #{blip3o_attention_block.8} parent=0
    #allocation2 [shape = 'u8[8192]{0}', space=vmem, size = 0x2000, scoped, tag = 'input window, operand 0']
    #allocation3 [shape = 's32[2]{0}', space=sflag, size = 0x8, scoped, tag = 'scoped memory for blip3o_attention_block.8']
    #allocation4 [shape = 's32[2]{0}', space=sflag, size = 0x8, scoped, tag = 'scoped memory for blip3o_attention_block.8']
    #allocation5 [shape = 'u8[8192]{0}', space=vmem, size = 0x2000, scoped, tag = 'input window, operand 1']
    #allocation6 [shape = 's32[2]{0}', space=sflag, size = 0x8, scoped, tag = 'scoped memory for blip3o_attention_block.8']
    #allocation7 [shape = 'u8[4096]{0}', space=vmem, size = 0x1000, scoped, tag = 'input window, operand 2, single buffered']
    #allocation8 [shape = 'u8[4096]{0}', space=vmem, size = 0x1000, scoped, tag = 'input window, operand 3, single buffered']
    #allocation9 [shape = 's32[1]{0}', space=sflag, size = 0x4, scoped, tag = 'scoped memory for blip3o_attention_block.8']
    #allocation10 [shape = 'u8[512]{0}', space=vmem, size = 0x400, scoped, tag = 'input window, operand 4, single buffered']
    #allocation11 [shape = 'u8[512]{0}', space=vmem, size = 0x400, scoped, tag = 'input window, operand 5, single buffered']
    #allocation12 [shape = 's32[1]{0}', space=sflag, size = 0x4, scoped, tag = 'scoped memory for blip3o_attention_block.8']
    #allocation13 [shape = 'u8[16384]{0}', space=vmem, size = 0x4000, scoped, tag = 'input window, operand 6, single buffered']
    #allocation14 [shape = 'u8[512]{0}', space=vmem, size = 0x400, scoped, tag = 'input window, operand 7, single buffered']
    #allocation15 [shape = 's32[1]{0}', space=sflag, size = 0x4, scoped, tag = 'scoped memory for blip3o_attention_block.8']
    #allocation16 [shape = 'u8[16384]{0}', space=vmem, size = 0x4000, scoped, tag = 'input window, operand 8, single buffered']
    #allocation17 [shape = 'u8[512]{0}', space=vmem, size = 0x400, scoped, tag = 'input window, operand 9, single buffered']
    #allocation18 [shape = 's32[1]{0}', space=sflag, size = 0x4, scoped, tag = 'scoped memory for blip3o_attention_block.8']
    #allocation19 [shape = 'u8[16384]{0}', space=vmem, size = 0x4000, scoped, tag = 'input window, operand 10, single buffered']
    #allocation20 [shape = 'u8[512]{0}', space=vmem, size = 0x400, scoped, tag = 'input window, operand 11, single buffered']
    #allocation21 [shape = 's32[1]{0}', space=sflag, size = 0x4, scoped, tag = 'scoped memory for blip3o_attention_block.8']
    #allocation22 [shape = 'u8[8192]{0}', space=vmem, size = 0x2000, scoped, tag = 'output window, operand 0']
    #allocation23 [shape = 'u8[8192]{0}', space=vmem, size = 0x2000, scoped, tag = 'output window, operand 1']
    #allocation24 [shape = 's32[2]{0}', space=sflag, size = 0x8, scoped, tag = 'scoped memory for blip3o_attention_block.8']
    #allocation25 [shape = 'u8[8192]{0}', space=vmem, size = 0x2000, scoped, tag = 'output window, operand 2']
    %20 = vsyncpa [#allocation3], 0
    %s21 = scalar_lea.sflag [#allocation3], 1
    %22 = vsyncpa %s21, 0
    %23 = vsyncpa [#allocation6], 0
    %s24 = scalar_lea.sflag [#allocation6], 1
    %25 = vsyncpa %s24, 0
    %26 = vsyncpa [#allocation9], 0
    %27 = vsyncpa [#allocation12], 0
    %28 = vsyncpa [#allocation15], 0
    %29 = vsyncpa [#allocation18], 0
    %30 = vsyncpa [#allocation21], 0
    %31 = vsyncpa [#allocation4], 0
    %s32 = scalar_lea.sflag [#allocation4], 1
    %33 = vsyncpa %s32, 0
    %34 = vsyncpa [#allocation24], 0
    %s35 = scalar_lea.sflag [#allocation24], 1
    %36 = vsyncpa %s35, 0
    loop: start=0, step=1, limit=4
    $region2: #{blip3o_attention_block.8} parent=1 // loop_pre_header
      _
    $region3: #{blip3o_attention_block.8} parent=1 // loop_header
      %s38 = sphi 0, %s42
      %p39 = scmp.ge.s32.totalorder %s38, 4
      %s45 = sphi 0, %s57
      %s46 = sphi 0, %s53
      %s47 = sphi 0, %s45
      %s48 = sphi 0, %s46
      %s49 = sphi 0, %s47
      %s50 = sphi 0, %s48
      %s62 = sphi 0, %s64
      %s65 = sphi 0, %s62
      %s66 = sphi 0, %s65
      %s82 = sphi 0, %s66
      %s88 = sphi 0, %s90
      %s91 = sphi 0, %s88
      %s92 = sphi 0, %s91
      %s108 = sphi 0, %s92
      %s114 = sphi 0, %s116
      %s117 = sphi 0, %s114
      %s118 = sphi 0, %s117
      %s134 = sphi 0, %s118
      %s140 = sphi 0, %s142
      %s143 = sphi 0, %s140
      %s144 = sphi 0, %s143
      %s160 = sphi 0, %s144
      %s164 = sphi 0, %s164
      %s166 = sphi 0, %s164
      %s167 = sphi 0, %s166
      %s181 = sphi 0, %s167
      %s185 = sphi 0, %s185
      %s187 = sphi 0, %s185
      %s188 = sphi 0, %s187
      %s202 = sphi 0, %s188
      %s206 = sphi 0, %s206
      %s208 = sphi 0, %s206
      %s209 = sphi 0, %s208
      %s223 = sphi 0, %s209
      %s227 = sphi 0, %s227
      %s229 = sphi 0, %s227
      %s230 = sphi 0, %s229
      %s244 = sphi 0, %s230
      %s248 = sphi 0, %s248
      %s250 = sphi 0, %s248
      %s251 = sphi 0, %s250
      %s265 = sphi 0, %s251
      %s269 = sphi 0, %s269
      %s271 = sphi 0, %s269
      %s272 = sphi 0, %s271
      %s286 = sphi 0, %s272
      %s290 = sphi 0, %s290
      %s292 = sphi 0, %s290
      %s293 = sphi 0, %s292
      %s307 = sphi 0, %s293
      %s311 = sphi 0, %s311
      %s313 = sphi 0, %s311
      %s314 = sphi 0, %s313
      %s328 = sphi 0, %s314
      %s336 = sphi 0, %s338
      %s339 = sphi 0, %s336
      %s340 = sphi 0, %s339
      %s356 = sphi 0, %s340
      %s364 = sphi 0, %s366
      %s367 = sphi 0, %s364
      %s368 = sphi 0, %s367
      %s384 = sphi 0, %s368
      %s392 = sphi 0, %s394
      %s395 = sphi 0, %s392
      %s396 = sphi 0, %s395
      %s412 = sphi 0, %s396
    $region4: #{blip3o_attention_block.8} parent=1 // loop_header_branch
      %41 = sbr.rel (%p39) target = $region8
    $region5: #{blip3o_attention_block.8} parent=1 // loop_body
      %s43 = ssub.s32 %s38, 1
      %s44 = ssub.s32 %s38, 2
      %s51 = sadd.s32 1, %s46
      %p52 = scmp.ge.s32.totalorder %s51, 1
      %s53 = scalar_select %p52, 0, %s51
      %s54 = sadd.s32 1, %s45
      %s55 = scalar_select %p52, %s54, %s45
      %p56 = scmp.ge.s32.totalorder %s55, 2
      %s57 = scalar_select %p56, 0, %s55
      %s58 = ssub.s32 %s45, %s57
      %s59 = ssub.s32 %s46, %s53
      %s60 = sor.u32 %s58, %s59
      %p61 = scmp.eq.s32.totalorder %s60, 0
      %s63 = sadd.s32 %s62, 1
      %s64 = scalar_select %p61, %s62, %s63
      %p67 = pneg %p61
      %p68 = scmp.eq.s32.totalorder %s38, 1
      %p69 = por %p67, %p68
      %p70 = scmp.ne.s32.totalorder %s62, %s65
      %p71 = scmp.eq.s32.totalorder %s38, 0
      %p72 = por %p70, %p71
      %p73 = scmp.ne.s32.totalorder %s62, %s65
      %p74 = scmp.eq.s32.totalorder %s43, 1
      %p75 = por %p73, %p74
      %p76 = scmp.ne.s32.totalorder %s65, %s66
      %p77 = scmp.eq.s32.totalorder %s43, 0
      %p78 = por %p76, %p77
      %p79 = scmp.ne.s32.totalorder %s65, %s66
      %p80 = scmp.eq.s32.totalorder %s44, 1
      %p81 = por %p79, %p80
      %p83 = scmp.ne.s32.totalorder %s66, %s82
      %p84 = scmp.eq.s32.totalorder %s44, 0
      %p85 = por %p83, %p84
      %s86 = ssub.s32 %s45, %s57
      %p87 = scmp.eq.s32.totalorder %s86, 0
      %s89 = sadd.s32 %s88, 1
      %s90 = scalar_select %p87, %s88, %s89
      %p93 = pneg %p87
      %p94 = scmp.eq.s32.totalorder %s38, 1
      %p95 = por %p93, %p94
      %p96 = scmp.ne.s32.totalorder %s88, %s91
      %p97 = scmp.eq.s32.totalorder %s38, 0
      %p98 = por %p96, %p97
      %p99 = scmp.ne.s32.totalorder %s88, %s91
      %p100 = scmp.eq.s32.totalorder %s43, 1
      %p101 = por %p99, %p100
      %p102 = scmp.ne.s32.totalorder %s91, %s92
      %p103 = scmp.eq.s32.totalorder %s43, 0
      %p104 = por %p102, %p103
      %p105 = scmp.ne.s32.totalorder %s91, %s92
      %p106 = scmp.eq.s32.totalorder %s44, 1
      %p107 = por %p105, %p106
      %p109 = scmp.ne.s32.totalorder %s92, %s108
      %p110 = scmp.eq.s32.totalorder %s44, 0
      %p111 = por %p109, %p110
      %s112 = ssub.s32 %s46, %s53
      %p113 = scmp.eq.s32.totalorder %s112, 0
      %s115 = sadd.s32 %s114, 1
      %s116 = scalar_select %p113, %s114, %s115
      %p119 = pneg %p113
      %p120 = scmp.eq.s32.totalorder %s38, 1
      %p121 = por %p119, %p120
      %p122 = scmp.ne.s32.totalorder %s114, %s117
      %p123 = scmp.eq.s32.totalorder %s38, 0
      %p124 = por %p122, %p123
      %p125 = scmp.ne.s32.totalorder %s114, %s117
      %p126 = scmp.eq.s32.totalorder %s43, 1
      %p127 = por %p125, %p126
      %p128 = scmp.ne.s32.totalorder %s117, %s118
      %p129 = scmp.eq.s32.totalorder %s43, 0
      %p130 = por %p128, %p129
      %p131 = scmp.ne.s32.totalorder %s117, %s118
      %p132 = scmp.eq.s32.totalorder %s44, 1
      %p133 = por %p131, %p132
      %p135 = scmp.ne.s32.totalorder %s118, %s134
      %p136 = scmp.eq.s32.totalorder %s44, 0
      %p137 = por %p135, %p136
      %s138 = ssub.s32 %s46, %s53
      %p139 = scmp.eq.s32.totalorder %s138, 0
      %s141 = sadd.s32 %s140, 1
      %s142 = scalar_select %p139, %s140, %s141
      %p145 = pneg %p139
      %p146 = scmp.eq.s32.totalorder %s38, 1
      %p147 = por %p145, %p146
      %p148 = scmp.ne.s32.totalorder %s140, %s143
      %p149 = scmp.eq.s32.totalorder %s38, 0
      %p150 = por %p148, %p149
      %p151 = scmp.ne.s32.totalorder %s140, %s143
      %p152 = scmp.eq.s32.totalorder %s43, 1
      %p153 = por %p151, %p152
      %p154 = scmp.ne.s32.totalorder %s143, %s144
      %p155 = scmp.eq.s32.totalorder %s43, 0
      %p156 = por %p154, %p155
      %p157 = scmp.ne.s32.totalorder %s143, %s144
      %p158 = scmp.eq.s32.totalorder %s44, 1
      %p159 = por %p157, %p158
      %p161 = scmp.ne.s32.totalorder %s144, %s160
      %p162 = scmp.eq.s32.totalorder %s44, 0
      %p163 = por %p161, %p162
      %s165 = sadd.s32 %s164, 1
      %p168 = scmp.eq.s32.totalorder %s38, 1
      %p169 = scmp.ne.s32.totalorder %s164, %s166
      %p170 = scmp.eq.s32.totalorder %s38, 0
      %p171 = por %p169, %p170
      %p172 = scmp.ne.s32.totalorder %s164, %s166
      %p173 = scmp.eq.s32.totalorder %s43, 1
      %p174 = por %p172, %p173
      %p175 = scmp.ne.s32.totalorder %s166, %s167
      %p176 = scmp.eq.s32.totalorder %s43, 0
      %p177 = por %p175, %p176
      %p178 = scmp.ne.s32.totalorder %s166, %s167
      %p179 = scmp.eq.s32.totalorder %s44, 1
      %p180 = por %p178, %p179
      %p182 = scmp.ne.s32.totalorder %s167, %s181
      %p183 = scmp.eq.s32.totalorder %s44, 0
      %p184 = por %p182, %p183
      %s186 = sadd.s32 %s185, 1
      %p189 = scmp.eq.s32.totalorder %s38, 1
      %p190 = scmp.ne.s32.totalorder %s185, %s187
      %p191 = scmp.eq.s32.totalorder %s38, 0
      %p192 = por %p190, %p191
      %p193 = scmp.ne.s32.totalorder %s185, %s187
      %p194 = scmp.eq.s32.totalorder %s43, 1
      %p195 = por %p193, %p194
      %p196 = scmp.ne.s32.totalorder %s187, %s188
      %p197 = scmp.eq.s32.totalorder %s43, 0
      %p198 = por %p196, %p197
      %p199 = scmp.ne.s32.totalorder %s187, %s188
      %p200 = scmp.eq.s32.totalorder %s44, 1
      %p201 = por %p199, %p200
      %p203 = scmp.ne.s32.totalorder %s188, %s202
      %p204 = scmp.eq.s32.totalorder %s44, 0
      %p205 = por %p203, %p204
      %s207 = sadd.s32 %s206, 1
      %p210 = scmp.eq.s32.totalorder %s38, 1
      %p211 = scmp.ne.s32.totalorder %s206, %s208
      %p212 = scmp.eq.s32.totalorder %s38, 0
      %p213 = por %p211, %p212
      %p214 = scmp.ne.s32.totalorder %s206, %s208
      %p215 = scmp.eq.s32.totalorder %s43, 1
      %p216 = por %p214, %p215
      %p217 = scmp.ne.s32.totalorder %s208, %s209
      %p218 = scmp.eq.s32.totalorder %s43, 0
      %p219 = por %p217, %p218
      %p220 = scmp.ne.s32.totalorder %s208, %s209
      %p221 = scmp.eq.s32.totalorder %s44, 1
      %p222 = por %p220, %p221
      %p224 = scmp.ne.s32.totalorder %s209, %s223
      %p225 = scmp.eq.s32.totalorder %s44, 0
      %p226 = por %p224, %p225
      %s228 = sadd.s32 %s227, 1
      %p231 = scmp.eq.s32.totalorder %s38, 1
      %p232 = scmp.ne.s32.totalorder %s227, %s229
      %p233 = scmp.eq.s32.totalorder %s38, 0
      %p234 = por %p232, %p233
      %p235 = scmp.ne.s32.totalorder %s227, %s229
      %p236 = scmp.eq.s32.totalorder %s43, 1
      %p237 = por %p235, %p236
      %p238 = scmp.ne.s32.totalorder %s229, %s230
      %p239 = scmp.eq.s32.totalorder %s43, 0
      %p240 = por %p238, %p239
      %p241 = scmp.ne.s32.totalorder %s229, %s230
      %p242 = scmp.eq.s32.totalorder %s44, 1
      %p243 = por %p241, %p242
      %p245 = scmp.ne.s32.totalorder %s230, %s244
      %p246 = scmp.eq.s32.totalorder %s44, 0
      %p247 = por %p245, %p246
      %s249 = sadd.s32 %s248, 1
      %p252 = scmp.eq.s32.totalorder %s38, 1
      %p253 = scmp.ne.s32.totalorder %s248, %s250
      %p254 = scmp.eq.s32.totalorder %s38, 0
      %p255 = por %p253, %p254
      %p256 = scmp.ne.s32.totalorder %s248, %s250
      %p257 = scmp.eq.s32.totalorder %s43, 1
      %p258 = por %p256, %p257
      %p259 = scmp.ne.s32.totalorder %s250, %s251
      %p260 = scmp.eq.s32.totalorder %s43, 0
      %p261 = por %p259, %p260
      %p262 = scmp.ne.s32.totalorder %s250, %s251
      %p263 = scmp.eq.s32.totalorder %s44, 1
      %p264 = por %p262, %p263
      %p266 = scmp.ne.s32.totalorder %s251, %s265
      %p267 = scmp.eq.s32.totalorder %s44, 0
      %p268 = por %p266, %p267
      %s270 = sadd.s32 %s269, 1
      %p273 = scmp.eq.s32.totalorder %s38, 1
      %p274 = scmp.ne.s32.totalorder %s269, %s271
      %p275 = scmp.eq.s32.totalorder %s38, 0
      %p276 = por %p274, %p275
      %p277 = scmp.ne.s32.totalorder %s269, %s271
      %p278 = scmp.eq.s32.totalorder %s43, 1
      %p279 = por %p277, %p278
      %p280 = scmp.ne.s32.totalorder %s271, %s272
      %p281 = scmp.eq.s32.totalorder %s43, 0
      %p282 = por %p280, %p281
      %p283 = scmp.ne.s32.totalorder %s271, %s272
      %p284 = scmp.eq.s32.totalorder %s44, 1
      %p285 = por %p283, %p284
      %p287 = scmp.ne.s32.totalorder %s272, %s286
      %p288 = scmp.eq.s32.totalorder %s44, 0
      %p289 = por %p287, %p288
      %s291 = sadd.s32 %s290, 1
      %p294 = scmp.eq.s32.totalorder %s38, 1
      %p295 = scmp.ne.s32.totalorder %s290, %s292
      %p296 = scmp.eq.s32.totalorder %s38, 0
      %p297 = por %p295, %p296
      %p298 = scmp.ne.s32.totalorder %s290, %s292
      %p299 = scmp.eq.s32.totalorder %s43, 1
      %p300 = por %p298, %p299
      %p301 = scmp.ne.s32.totalorder %s292, %s293
      %p302 = scmp.eq.s32.totalorder %s43, 0
      %p303 = por %p301, %p302
      %p304 = scmp.ne.s32.totalorder %s292, %s293
      %p305 = scmp.eq.s32.totalorder %s44, 1
      %p306 = por %p304, %p305
      %p308 = scmp.ne.s32.totalorder %s293, %s307
      %p309 = scmp.eq.s32.totalorder %s44, 0
      %p310 = por %p308, %p309
      %s312 = sadd.s32 %s311, 1
      %p315 = scmp.eq.s32.totalorder %s38, 1
      %p316 = scmp.ne.s32.totalorder %s311, %s313
      %p317 = scmp.eq.s32.totalorder %s38, 0
      %p318 = por %p316, %p317
      %p319 = scmp.ne.s32.totalorder %s311, %s313
      %p320 = scmp.eq.s32.totalorder %s43, 1
      %p321 = por %p319, %p320
      %p322 = scmp.ne.s32.totalorder %s313, %s314
      %p323 = scmp.eq.s32.totalorder %s43, 0
      %p324 = por %p322, %p323
      %p325 = scmp.ne.s32.totalorder %s313, %s314
      %p326 = scmp.eq.s32.totalorder %s44, 1
      %p327 = por %p325, %p326
      %p329 = scmp.ne.s32.totalorder %s314, %s328
      %p330 = scmp.eq.s32.totalorder %s44, 0
      %p331 = por %p329, %p330
      %s332 = ssub.s32 %s45, %s57
      %s333 = ssub.s32 %s46, %s53
      %s334 = sor.u32 %s332, %s333
      %p335 = scmp.eq.s32.totalorder %s334, 0
      %s337 = sadd.s32 %s336, 1
      %s338 = scalar_select %p335, %s336, %s337
      %p341 = pneg %p335
      %p342 = scmp.eq.s32.totalorder %s38, 1
      %p343 = por %p341, %p342
      %p344 = scmp.ne.s32.totalorder %s336, %s339
      %p345 = scmp.eq.s32.totalorder %s38, 0
      %p346 = por %p344, %p345
      %p347 = scmp.ne.s32.totalorder %s336, %s339
      %p348 = scmp.eq.s32.totalorder %s43, 1
      %p349 = por %p347, %p348
      %p350 = scmp.ne.s32.totalorder %s339, %s340
      %p351 = scmp.eq.s32.totalorder %s43, 0
      %p352 = por %p350, %p351
      %p353 = scmp.ne.s32.totalorder %s339, %s340
      %p354 = scmp.eq.s32.totalorder %s44, 1
      %p355 = por %p353, %p354
      %p357 = scmp.ne.s32.totalorder %s340, %s356
      %p358 = scmp.eq.s32.totalorder %s44, 0
      %p359 = por %p357, %p358
      %s360 = ssub.s32 %s45, %s57
      %s361 = ssub.s32 %s46, %s53
      %s362 = sor.u32 %s360, %s361
      %p363 = scmp.eq.s32.totalorder %s362, 0
      %s365 = sadd.s32 %s364, 1
      %s366 = scalar_select %p363, %s364, %s365
      %p369 = pneg %p363
      %p370 = scmp.eq.s32.totalorder %s38, 1
      %p371 = por %p369, %p370
      %p372 = scmp.ne.s32.totalorder %s364, %s367
      %p373 = scmp.eq.s32.totalorder %s38, 0
      %p374 = por %p372, %p373
      %p375 = scmp.ne.s32.totalorder %s364, %s367
      %p376 = scmp.eq.s32.totalorder %s43, 1
      %p377 = por %p375, %p376
      %p378 = scmp.ne.s32.totalorder %s367, %s368
      %p379 = scmp.eq.s32.totalorder %s43, 0
      %p380 = por %p378, %p379
      %p381 = scmp.ne.s32.totalorder %s367, %s368
      %p382 = scmp.eq.s32.totalorder %s44, 1
      %p383 = por %p381, %p382
      %p385 = scmp.ne.s32.totalorder %s368, %s384
      %p386 = scmp.eq.s32.totalorder %s44, 0
      %p387 = por %p385, %p386
      %s388 = ssub.s32 %s45, %s57
      %s389 = ssub.s32 %s46, %s53
      %s390 = sor.u32 %s388, %s389
      %p391 = scmp.eq.s32.totalorder %s390, 0
      %s393 = sadd.s32 %s392, 1
      %s394 = scalar_select %p391, %s392, %s393
      %p397 = pneg %p391
      %p398 = scmp.eq.s32.totalorder %s38, 1
      %p399 = por %p397, %p398
      %p400 = scmp.ne.s32.totalorder %s392, %s395
      %p401 = scmp.eq.s32.totalorder %s38, 0
      %p402 = por %p400, %p401
      %p403 = scmp.ne.s32.totalorder %s392, %s395
      %p404 = scmp.eq.s32.totalorder %s43, 1
      %p405 = por %p403, %p404
      %p406 = scmp.ne.s32.totalorder %s395, %s396
      %p407 = scmp.eq.s32.totalorder %s43, 0
      %p408 = por %p406, %p407
      %p409 = scmp.ne.s32.totalorder %s395, %s396
      %p410 = scmp.eq.s32.totalorder %s44, 1
      %p411 = por %p409, %p410
      %p413 = scmp.ne.s32.totalorder %s396, %s412
      %p414 = scmp.eq.s32.totalorder %s44, 0
      %p415 = por %p413, %p414
      %p416 = scmp.le.s32.totalorder 1, %s38
      %p417 = scmp.lt.s32.totalorder %s38, 3
      %p418 = pnand %p416, %p417
      %p419 = pneg %p418
      // Predicated region
      $region9: #{blip3o_attention_block.8} parent=5 // pred_check
        _
      $region10: #{blip3o_attention_block.8} parent=5 // pred_check_branch
        %421 = sbr.rel (%p418) target = $region12
      $region11: #{blip3o_attention_block.8} parent=5 // pred_region
        %s422 = ssub.s32 %s38, 1
        // Predicated region
        $region13: #{blip3o_attention_block.8} parent=11 // pred_check
          %p423 = pneg %p130
        $region14: #{blip3o_attention_block.8} parent=11 // pred_check_branch
          %425 = sbr.rel (%p423) target = $region16
        $region15: #{blip3o_attention_block.8} parent=11 // pred_region
          %s427 = ssub.s32 128, 128
          %428 = vsyncadd [#allocation6], %s427
          %s429 = smul.addr %s48, 128
          %s430 = scalar_lea.hbm %s2, %s429
          %s432 = sshll.u32 [#allocation7], 4
          %s433 = int_to_ptr.vmem [resolvable:$true] %s432
          %435 = dma.hbm_to_vmem [thread:$0]  %s430, 128, %s433, [#allocation6]
        $region16: #{blip3o_attention_block.8} parent=11 // pred_fallthru
          _
        // Predicated region
        $region17: #{blip3o_attention_block.8} parent=11 // pred_check
          %p436 = pneg %p156
        $region18: #{blip3o_attention_block.8} parent=11 // pred_check_branch
          %438 = sbr.rel (%p436) target = $region20
        $region19: #{blip3o_attention_block.8} parent=11 // pred_region
          %s440 = ssub.s32 128, 128
          %441 = vsyncadd [#allocation9], %s440
          %s442 = smul.addr %s48, 128
          %s443 = scalar_lea.hbm %s3, %s442
          %s445 = sshll.u32 [#allocation8], 4
          %s446 = int_to_ptr.vmem [resolvable:$true] %s445
          %448 = dma.hbm_to_vmem [thread:$0]  %s443, 128, %s446, [#allocation9]
        $region20: #{blip3o_attention_block.8} parent=11 // pred_fallthru
          _
        // Predicated region
        $region21: #{blip3o_attention_block.8} parent=11 // pred_check
          %p449 = pneg %p177
        $region22: #{blip3o_attention_block.8} parent=11 // pred_check_branch
          %451 = sbr.rel (%p449) target = $region24
        $region23: #{blip3o_attention_block.8} parent=11 // pred_region
          %s453 = ssub.s32 16, 16
          %454 = vsyncadd [#allocation9], %s453
          %s456 = sshll.u32 [#allocation10], 4
          %s457 = int_to_ptr.vmem [resolvable:$true] %s456
          %459 = dma.hbm_to_vmem [thread:$0]  %s4, 16, %s457, [#allocation9]
        $region24: #{blip3o_attention_block.8} parent=11 // pred_fallthru
          _
        // Predicated region
        $region25: #{blip3o_attention_block.8} parent=11 // pred_check
          %p460 = pneg %p198
        $region26: #{blip3o_attention_block.8} parent=11 // pred_check_branch
          %462 = sbr.rel (%p460) target = $region28
        $region27: #{blip3o_attention_block.8} parent=11 // pred_region
          %s464 = ssub.s32 16, 16
          %465 = vsyncadd [#allocation12], %s464
          %s467 = sshll.u32 [#allocation11], 4
          %s468 = int_to_ptr.vmem [resolvable:$true] %s467
          %470 = dma.hbm_to_vmem [thread:$0]  %s5, 16, %s468, [#allocation12]
        $region28: #{blip3o_attention_block.8} parent=11 // pred_fallthru
          _
        // Predicated region
        $region29: #{blip3o_attention_block.8} parent=11 // pred_check
          %p471 = pneg %p219
        $region30: #{blip3o_attention_block.8} parent=11 // pred_check_branch
          %473 = sbr.rel (%p471) target = $region32
        $region31: #{blip3o_attention_block.8} parent=11 // pred_region
          %s475 = ssub.s32 512, 512
          %476 = vsyncadd [#allocation12], %s475
          %s477 = sshll.u32 [#allocation13], 4
          %s478 = int_to_ptr.vmem [resolvable:$true] %s477
          %483 = dma.hbm_to_vmem [thread:$0]  %s6, 512, %s478, [#allocation12], 128, 128, 8
        $region32: #{blip3o_attention_block.8} parent=11 // pred_fallthru
          _
        // Predicated region
        $region33: #{blip3o_attention_block.8} parent=11 // pred_check
          %p484 = pneg %p240
        $region34: #{blip3o_attention_block.8} parent=11 // pred_check_branch
          %486 = sbr.rel (%p484) target = $region36
        $region35: #{blip3o_attention_block.8} parent=11 // pred_region
          %s488 = ssub.s32 16, 16
          %489 = vsyncadd [#allocation15], %s488
          %s491 = sshll.u32 [#allocation14], 4
          %s492 = int_to_ptr.vmem [resolvable:$true] %s491
          %494 = dma.hbm_to_vmem [thread:$0]  %s7, 16, %s492, [#allocation15]
        $region36: #{blip3o_attention_block.8} parent=11 // pred_fallthru
          _
        // Predicated region
        $region37: #{blip3o_attention_block.8} parent=11 // pred_check
          %p495 = pneg %p261
        $region38: #{blip3o_attention_block.8} parent=11 // pred_check_branch
          %497 = sbr.rel (%p495) target = $region40
        $region39: #{blip3o_attention_block.8} parent=11 // pred_region
          %s499 = ssub.s32 512, 512
          %500 = vsyncadd [#allocation15], %s499
          %s501 = sshll.u32 [#allocation16], 4
          %s502 = int_to_ptr.vmem [resolvable:$true] %s501
          %507 = dma.hbm_to_vmem [thread:$0]  %s8, 512, %s502, [#allocation15], 128, 128, 8
        $region40: #{blip3o_attention_block.8} parent=11 // pred_fallthru
          _
        // Predicated region
        $region41: #{blip3o_attention_block.8} parent=11 // pred_check
          %p508 = pneg %p282
        $region42: #{blip3o_attention_block.8} parent=11 // pred_check_branch
          %510 = sbr.rel (%p508) target = $region44
        $region43: #{blip3o_attention_block.8} parent=11 // pred_region
          %s512 = ssub.s32 16, 16
          %513 = vsyncadd [#allocation18], %s512
          %s515 = sshll.u32 [#allocation17], 4
          %s516 = int_to_ptr.vmem [resolvable:$true] %s515
          %518 = dma.hbm_to_vmem [thread:$0]  %s9, 16, %s516, [#allocation18]
        $region44: #{blip3o_attention_block.8} parent=11 // pred_fallthru
          _
        // Predicated region
        $region45: #{blip3o_attention_block.8} parent=11 // pred_check
          %p519 = pneg %p303
        $region46: #{blip3o_attention_block.8} parent=11 // pred_check_branch
          %521 = sbr.rel (%p519) target = $region48
        $region47: #{blip3o_attention_block.8} parent=11 // pred_region
          %s523 = ssub.s32 512, 512
          %524 = vsyncadd [#allocation18], %s523
          %s525 = sshll.u32 [#allocation19], 4
          %s526 = int_to_ptr.vmem [resolvable:$true] %s525
          %531 = dma.hbm_to_vmem [thread:$0]  %s10, 512, %s526, [#allocation18], 128, 128, 8
        $region48: #{blip3o_attention_block.8} parent=11 // pred_fallthru
          _
        // Predicated region
        $region49: #{blip3o_attention_block.8} parent=11 // pred_check
          %p532 = pneg %p324
        $region50: #{blip3o_attention_block.8} parent=11 // pred_check_branch
          %534 = sbr.rel (%p532) target = $region52
        $region51: #{blip3o_attention_block.8} parent=11 // pred_region
          %s536 = ssub.s32 16, 16
          %537 = vsyncadd [#allocation21], %s536
          %s539 = sshll.u32 [#allocation20], 4
          %s540 = int_to_ptr.vmem [resolvable:$true] %s539
          %542 = dma.hbm_to_vmem [thread:$0]  %s11, 16, %s540, [#allocation21]
        $region52: #{blip3o_attention_block.8} parent=11 // pred_fallthru
          _
      $region12: #{blip3o_attention_block.8} parent=5 // pred_fallthru
        _
      %p543 = scmp.lt.s32.totalorder %s38, 2
      // Predicated region
      $region53: #{blip3o_attention_block.8} parent=5 // pred_check
        %p544 = pneg %p543
      $region54: #{blip3o_attention_block.8} parent=5 // pred_check_branch
        %546 = sbr.rel (%p544) target = $region56
      $region55: #{blip3o_attention_block.8} parent=5 // pred_region
        // Predicated region
        $region57: #{blip3o_attention_block.8} parent=55 // pred_check
          %p547 = pneg %p72
        $region58: #{blip3o_attention_block.8} parent=55 // pred_check_branch
          %549 = sbr.rel (%p547) target = $region60
        $region59: #{blip3o_attention_block.8} parent=55 // pred_region
          %s550 = sand.u32 %s62, 1
          %s551 = scalar_lea.sflag [#allocation3], %s550
          %s552 = sand.u32 %s62, 1
          %s553 = smul.addr %s552, 8
          %s554 = scalar_lea.vmem [#allocation2], %s553
          %s556 = ssub.s32 128, 128
          %557 = vsyncadd %s551, %s556
          %s558 = sadd.s32 %s46, %s45
          %s559 = smul.addr %s558, 128
          %s560 = scalar_lea.hbm %s0, %s559
          %s562 = sshll.u32 %s554, 4
          %s563 = int_to_ptr.vmem [resolvable:$true] %s562
          %565 = dma.hbm_to_vmem [thread:$0]  %s560, 128, %s563, %s551
        $region60: #{blip3o_attention_block.8} parent=55 // pred_fallthru
          _
        // Predicated region
        $region61: #{blip3o_attention_block.8} parent=55 // pred_check
          %p566 = pneg %p98
        $region62: #{blip3o_attention_block.8} parent=55 // pred_check_branch
          %568 = sbr.rel (%p566) target = $region64
        $region63: #{blip3o_attention_block.8} parent=55 // pred_region
          %s569 = sand.u32 %s38, 1
          %s570 = scalar_lea.sflag [#allocation6], %s569
          %s571 = sand.u32 %s88, 1
          %s572 = smul.addr %s571, 8
          %s573 = scalar_lea.vmem [#allocation5], %s572
          %s575 = ssub.s32 128, 128
          %576 = vsyncadd %s570, %s575
          %s577 = smul.addr %s45, 128
          %s578 = scalar_lea.hbm %s1, %s577
          %s580 = sshll.u32 %s573, 4
          %s581 = int_to_ptr.vmem [resolvable:$true] %s580
          %583 = dma.hbm_to_vmem [thread:$0]  %s578, 128, %s581, %s570
        $region64: #{blip3o_attention_block.8} parent=55 // pred_fallthru
          _
      $region56: #{blip3o_attention_block.8} parent=5 // pred_fallthru
        _
      %p584 = scmp.le.s32.totalorder 1, %s38
      %p585 = scmp.lt.s32.totalorder %s38, 3
      %p586 = pnand %p584, %p585
      %p587 = pneg %p586
      // Predicated region
      $region65: #{blip3o_attention_block.8} parent=5 // pred_check
        _
      $region66: #{blip3o_attention_block.8} parent=5 // pred_check_branch
        %589 = sbr.rel (%p586) target = $region68
      $region67: #{blip3o_attention_block.8} parent=5 // pred_region
        %s590 = ssub.s32 %s38, 1
        %s591 = sand.u32 %s65, 1
        %s592 = scalar_lea.sflag [#allocation3], %s591
        %s593 = sand.u32 %s65, 1
        %s594 = smul.addr %s593, 8
        %s595 = scalar_lea.vmem [#allocation2], %s594
        // Predicated region
        $region69: #{blip3o_attention_block.8} parent=67 // pred_check
          %p596 = pneg %p78
        $region70: #{blip3o_attention_block.8} parent=67 // pred_check_branch
          %598 = sbr.rel (%p596) target = $region72
        $region71: #{blip3o_attention_block.8} parent=67 // pred_region
          %599 = dma.done %s592, 128
        $region72: #{blip3o_attention_block.8} parent=67 // pred_fallthru
          _
        %s600 = sand.u32 %s43, 1
        %s601 = scalar_lea.sflag [#allocation6], %s600
        %s602 = sand.u32 %s91, 1
        %s603 = smul.addr %s602, 8
        %s604 = scalar_lea.vmem [#allocation5], %s603
        // Predicated region
        $region73: #{blip3o_attention_block.8} parent=67 // pred_check
          %p605 = pneg %p104
        $region74: #{blip3o_attention_block.8} parent=67 // pred_check_branch
          %607 = sbr.rel (%p605) target = $region76
        $region75: #{blip3o_attention_block.8} parent=67 // pred_region
          %608 = dma.done %s601, 128
        $region76: #{blip3o_attention_block.8} parent=67 // pred_fallthru
          _
        // Predicated region
        $region77: #{blip3o_attention_block.8} parent=67 // pred_check
          %p609 = pneg %p130
        $region78: #{blip3o_attention_block.8} parent=67 // pred_check_branch
          %611 = sbr.rel (%p609) target = $region80
        $region79: #{blip3o_attention_block.8} parent=67 // pred_region
          %612 = dma.done [#allocation6], 128
        $region80: #{blip3o_attention_block.8} parent=67 // pred_fallthru
          _
        // Predicated region
        $region81: #{blip3o_attention_block.8} parent=67 // pred_check
          %p613 = pneg %p156
        $region82: #{blip3o_attention_block.8} parent=67 // pred_check_branch
          %615 = sbr.rel (%p613) target = $region84
        $region83: #{blip3o_attention_block.8} parent=67 // pred_region
          %616 = dma.done [#allocation9], 128
        $region84: #{blip3o_attention_block.8} parent=67 // pred_fallthru
          _
        // Predicated region
        $region85: #{blip3o_attention_block.8} parent=67 // pred_check
          %p617 = pneg %p177
        $region86: #{blip3o_attention_block.8} parent=67 // pred_check_branch
          %619 = sbr.rel (%p617) target = $region88
        $region87: #{blip3o_attention_block.8} parent=67 // pred_region
          %620 = dma.done [#allocation9], 16
        $region88: #{blip3o_attention_block.8} parent=67 // pred_fallthru
          _
        // Predicated region
        $region89: #{blip3o_attention_block.8} parent=67 // pred_check
          %p621 = pneg %p198
        $region90: #{blip3o_attention_block.8} parent=67 // pred_check_branch
          %623 = sbr.rel (%p621) target = $region92
        $region91: #{blip3o_attention_block.8} parent=67 // pred_region
          %624 = dma.done [#allocation12], 16
        $region92: #{blip3o_attention_block.8} parent=67 // pred_fallthru
          _
        // Predicated region
        $region93: #{blip3o_attention_block.8} parent=67 // pred_check
          %p625 = pneg %p219
        $region94: #{blip3o_attention_block.8} parent=67 // pred_check_branch
          %627 = sbr.rel (%p625) target = $region96
        $region95: #{blip3o_attention_block.8} parent=67 // pred_region
          %628 = dma.done [#allocation12], 512
        $region96: #{blip3o_attention_block.8} parent=67 // pred_fallthru
          _
        // Predicated region
        $region97: #{blip3o_attention_block.8} parent=67 // pred_check
          %p629 = pneg %p240
        $region98: #{blip3o_attention_block.8} parent=67 // pred_check_branch
          %631 = sbr.rel (%p629) target = $region100
        $region99: #{blip3o_attention_block.8} parent=67 // pred_region
          %632 = dma.done [#allocation15], 16
        $region100: #{blip3o_attention_block.8} parent=67 // pred_fallthru
          _
        // Predicated region
        $region101: #{blip3o_attention_block.8} parent=67 // pred_check
          %p633 = pneg %p261
        $region102: #{blip3o_attention_block.8} parent=67 // pred_check_branch
          %635 = sbr.rel (%p633) target = $region104
        $region103: #{blip3o_attention_block.8} parent=67 // pred_region
          %636 = dma.done [#allocation15], 512
        $region104: #{blip3o_attention_block.8} parent=67 // pred_fallthru
          _
        // Predicated region
        $region105: #{blip3o_attention_block.8} parent=67 // pred_check
          %p637 = pneg %p282
        $region106: #{blip3o_attention_block.8} parent=67 // pred_check_branch
          %639 = sbr.rel (%p637) target = $region108
        $region107: #{blip3o_attention_block.8} parent=67 // pred_region
          %640 = dma.done [#allocation18], 16
        $region108: #{blip3o_attention_block.8} parent=67 // pred_fallthru
          _
        // Predicated region
        $region109: #{blip3o_attention_block.8} parent=67 // pred_check
          %p641 = pneg %p303
        $region110: #{blip3o_attention_block.8} parent=67 // pred_check_branch
          %643 = sbr.rel (%p641) target = $region112
        $region111: #{blip3o_attention_block.8} parent=67 // pred_region
          %644 = dma.done [#allocation18], 512
        $region112: #{blip3o_attention_block.8} parent=67 // pred_fallthru
          _
        // Predicated region
        $region113: #{blip3o_attention_block.8} parent=67 // pred_check
          %p645 = pneg %p324
        $region114: #{blip3o_attention_block.8} parent=67 // pred_check_branch
          %647 = sbr.rel (%p645) target = $region116
        $region115: #{blip3o_attention_block.8} parent=67 // pred_region
          %648 = dma.done [#allocation21], 16
        $region116: #{blip3o_attention_block.8} parent=67 // pred_fallthru
          _
        %s649 = sand.u32 %s65, 1
        %s650 = scalar_lea.sflag [#allocation3], %s649
        %s651 = sand.u32 %s65, 1
        %s652 = smul.addr %s651, 8
        %s653 = scalar_lea.vmem [#allocation2], %s652
        %p654 = pneg %p78
        %p655 = pneg %p75
        %s656 = sand.u32 %s43, 1
        %s657 = scalar_lea.sflag [#allocation6], %s656
        %s658 = sand.u32 %s91, 1
        %s659 = smul.addr %s658, 8
        %s660 = scalar_lea.vmem [#allocation5], %s659
        %p661 = pneg %p104
        %p662 = pneg %p101
        %p663 = pneg %p130
        %p664 = pneg %p127
        %p665 = pneg %p156
        %p666 = pneg %p153
        %p667 = pneg %p177
        %p668 = pneg %p174
        %p669 = pneg %p198
        %p670 = pneg %p195
        %p671 = pneg %p219
        %p672 = pneg %p216
        %p673 = pneg %p240
        %p674 = pneg %p237
        %p675 = pneg %p261
        %p676 = pneg %p258
        %p677 = pneg %p282
        %p678 = pneg %p279
        %p679 = pneg %p303
        %p680 = pneg %p300
        %p681 = pneg %p324
        %p682 = pneg %p321
        %p683 = pneg %p352
        %p684 = pneg %p349
        %s685 = sand.u32 %s339, 1
        %s686 = scalar_lea.sflag [#allocation4], %s685
        %s687 = sand.u32 %s339, 1
        %s688 = smul.addr %s687, 8
        %s689 = scalar_lea.vmem [#allocation22], %s688
        %p690 = pneg %p380
        %p691 = pneg %p377
        %s692 = sand.u32 %s43, 1
        %s693 = scalar_lea.sflag [#allocation24], %s692
        %s694 = sand.u32 %s367, 1
        %s695 = smul.addr %s694, 8
        %s696 = scalar_lea.vmem [#allocation23], %s695
        %p697 = pneg %p408
        %p698 = pneg %p405
        %s699 = sand.u32 %s43, 1
        %s700 = scalar_lea.sflag [#allocation24], %s699
        %s701 = sand.u32 %s395, 1
        %s702 = smul.addr %s701, 8
        %s703 = scalar_lea.vmem [#allocation25], %s702
        %v704 = vld [vmem:[%s595] sm:$0xff]
        %v705 = vld [vmem:[%s604] sm:$0x3f]
        %v706 = vld [vmem:[#allocation10] sm:$0x1]
        %v707 = vld [vmem:[#allocation11] sm:$0x1]
        %vm708 = vcmask 261120
        %v709 = vsel %vm708, %v704, 0.0
        %710 = vadd.xlane.f32.xlu0 %v709
        %v711 = vpop.xlane.xlu0 %710
        %v712 = vrcp.pop 32.0
        %v713 = vmul.f32 %v711, %v712
        %v714 = vsub.f32 %v704, %v713
        %v715 = vmul.f32 %v714, %v714
        %v716 = vsel %vm708, %v715, 0.0
        %717 = vadd.xlane.f32.xlu0 %v716
        %v718 = vpop.xlane.xlu0 %717
        %v719 = vmul.f32 %v718, %v712
        %v720 = vadd.f32 %v719, 1e-05
        %v721 = vrsqrt.pop %v720
        %v722 = vmul.f32 %v714, %v721
        %v724 = vlaneseq
        %v725 = vshrl.u32 %v724, 7
        %v726 = vsub.s32 0, %v725
        %v727 = vrot.slane %v706, %v726
        %v729 = vmul.f32 %v722, %v727
        %v731 = vlaneseq
        %v732 = vshrl.u32 %v731, 7
        %v733 = vsub.s32 0, %v732
        %v734 = vrot.slane %v707, %v733
        %v736 = vadd.f32 %v729, %v734
        %v737 = vlaneseq
        %v738 = vshrl.u32 %v737, 7
        %v739 = vsub.s32 0, %v738
        %v740 = vrot.slane %v705, %v739
        %v741 = vmul.f32 %v736, %v740
        %v742 = vld [vmem:[#allocation13] sm:$0xff]
        %v743 = vld [vmem:[#allocation13 + $0x8] sm:$0xff]
        %v744 = vld [vmem:[#allocation13 + $0x10] sm:$0xff]
        %v745 = vld [vmem:[#allocation13 + $0x18] sm:$0xff]
        %v746 = vld [vmem:[#allocation14] sm:$0x1]
        %v748 = vlaneseq
        %v749 = vshrl.u32 %v748, 7
        %v750 = vsub.s32 0, %v749
        %v751 = vrot.slane %v746, %v750
        %v754 = vsel %vm708, %v741, 0
        %756 = vmatprep.subr.mxu0 0.0
        %757 = vmatpush1.msra.mxu0 %v742
        %758 = vmatprep.subr.mxu0 0.0
        %759 = vmatpush1.msra.mxu0 %v743
        %760 = vmatprep.subr.mxu0 0.0
        %761 = vmatpush1.msra.mxu0 %v744
        %762 = vmatprep.subr.mxu0 0.0
        %763 = vmatpush1.msra.mxu0 %v745
        %764 = vmatprep.subr.mxu0 0.0
        %765 = vmatpush1.msra.mxu0 0.0
        %766 = vmatprep.subr.mxu0 0.0
        %767 = vmatpush1.msra.mxu0 0.0
        %768 = vmatprep.subr.mxu0 0.0
        %769 = vmatpush1.msra.mxu0 0.0
        %770 = vmatprep.subr.mxu0 0.0
        %771 = vmatpush1.msra.mxu0 0.0
        %772 = vmatprep.subr.mxu0 0.0
        %773 = vmatpush1.msra.mxu0 0.0
        %774 = vmatprep.subr.mxu0 0.0
        %775 = vmatpush1.msra.mxu0 0.0
        %776 = vmatprep.subr.mxu0 0.0
        %777 = vmatpush1.msra.mxu0 0.0
        %778 = vmatprep.subr.mxu0 0.0
        %779 = vmatpush1.msra.mxu0 0.0
        %780 = vmatprep.subr.mxu0 0.0
        %781 = vmatpush1.msra.mxu0 0.0
        %782 = vmatprep.subr.mxu0 0.0
        %783 = vmatpush1.msra.mxu0 0.0
        %784 = vmatprep.subr.mxu0 0.0
        %785 = vmatpush1.msra.mxu0 0.0
        %786 = vmatprep.subr.mxu0 0.0
        %787 = vmatpush1.msra.mxu0 0.0
        %788 = vmatprep.subr.mxu0 0.0
        %789 = vmatpush1.msra.mxu0 0.0
        %790 = vmatprep.subr.mxu0 0.0
        %791 = vmatpush1.msra.mxu0 0.0
        %792 = vmatprep.subr.mxu0 0.0
        %793 = vmatpush1.msra.mxu0 0.0
        %794 = vmatprep.subr.mxu0 0.0
        %795 = vmatpush1.msra.mxu0 0.0
        %796 = vmatprep.subr.mxu0 0.0
        %797 = vmatpush1.msra.mxu0 0.0
        %798 = vmatprep.subr.mxu0 0.0
        %799 = vmatpush1.msra.mxu0 0.0
        %800 = vmatprep.subr.mxu0 0.0
        %801 = vmatpush1.msra.mxu0 0.0
        %802 = vmatprep.subr.mxu0 0.0
        %803 = vmatpush1.msra.mxu0 0.0
        %804 = vmatprep.subr.mxu0 0.0
        %805 = vmatpush1.msra.mxu0 0.0
        %806 = vmatprep.subr.mxu0 0.0
        %807 = vmatpush1.msra.mxu0 0.0
        %808 = vmatprep.subr.mxu0 0.0
        %809 = vmatpush1.msra.mxu0 0.0
        %810 = vmatprep.subr.mxu0 0.0
        %811 = vmatpush1.msra.mxu0 0.0
        %812 = vmatprep.subr.mxu0 0.0
        %813 = vmatpush1.msra.mxu0 0.0
        %814 = vmatprep.subr.mxu0 0.0
        %815 = vmatpush1.msra.mxu0 0.0
        %816 = vmatprep.subr.mxu0 0.0
        %817 = vmatpush1.msra.mxu0 0.0
        %818 = vmatprep.subr.mxu0 0.0
        %819 = vmatpush1.msra.mxu0 0.0
        %820 = vmatprep.mubr.f32.mxu0 0.0
        %821 = vmatmul.mubr.f32.gmra.mrb[0].mxu0 %v754
        %v822 = vpop.f32.mrb[0].mxu0
        %v823 = vadd.f32 %v751, %v822
        %v824 = vpop.f32.mrb[0].mxu0
        %825 = vdwg.mxu0
        %v826 = vld [vmem:[#allocation16] sm:$0xff]
        %v827 = vld [vmem:[#allocation16 + $0x8] sm:$0xff]
        %v828 = vld [vmem:[#allocation16 + $0x10] sm:$0xff]
        %v829 = vld [vmem:[#allocation16 + $0x18] sm:$0xff]
        %v830 = vld [vmem:[#allocation17] sm:$0x1]
        %v832 = vlaneseq
        %v833 = vshrl.u32 %v832, 7
        %v834 = vsub.s32 0, %v833
        %v835 = vrot.slane %v830, %v834
        %837 = vmatprep.subr.mxu0 0.0
        %838 = vmatpush1.msra.mxu0 %v826
        %839 = vmatprep.subr.mxu0 0.0
        %840 = vmatpush1.msra.mxu0 %v827
        %841 = vmatprep.subr.mxu0 0.0
        %842 = vmatpush1.msra.mxu0 %v828
        %843 = vmatprep.subr.mxu0 0.0
        %844 = vmatpush1.msra.mxu0 %v829
        %845 = vmatprep.subr.mxu0 0.0
        %846 = vmatpush1.msra.mxu0 0.0
        %847 = vmatprep.subr.mxu0 0.0
        %848 = vmatpush1.msra.mxu0 0.0
        %849 = vmatprep.subr.mxu0 0.0
        %850 = vmatpush1.msra.mxu0 0.0
        %851 = vmatprep.subr.mxu0 0.0
        %852 = vmatpush1.msra.mxu0 0.0
        %853 = vmatprep.subr.mxu0 0.0
        %854 = vmatpush1.msra.mxu0 0.0
        %855 = vmatprep.subr.mxu0 0.0
        %856 = vmatpush1.msra.mxu0 0.0
        %857 = vmatprep.subr.mxu0 0.0
        %858 = vmatpush1.msra.mxu0 0.0
        %859 = vmatprep.subr.mxu0 0.0
        %860 = vmatpush1.msra.mxu0 0.0
        %861 = vmatprep.subr.mxu0 0.0
        %862 = vmatpush1.msra.mxu0 0.0
        %863 = vmatprep.subr.mxu0 0.0
        %864 = vmatpush1.msra.mxu0 0.0
        %865 = vmatprep.subr.mxu0 0.0
        %866 = vmatpush1.msra.mxu0 0.0
        %867 = vmatprep.subr.mxu0 0.0
        %868 = vmatpush1.msra.mxu0 0.0
        %869 = vmatprep.subr.mxu0 0.0
        %870 = vmatpush1.msra.mxu0 0.0
        %871 = vmatprep.subr.mxu0 0.0
        %872 = vmatpush1.msra.mxu0 0.0
        %873 = vmatprep.subr.mxu0 0.0
        %874 = vmatpush1.msra.mxu0 0.0
        %875 = vmatprep.subr.mxu0 0.0
        %876 = vmatpush1.msra.mxu0 0.0
        %877 = vmatprep.subr.mxu0 0.0
        %878 = vmatpush1.msra.mxu0 0.0
        %879 = vmatprep.subr.mxu0 0.0
        %880 = vmatpush1.msra.mxu0 0.0
        %881 = vmatprep.subr.mxu0 0.0
        %882 = vmatpush1.msra.mxu0 0.0
        %883 = vmatprep.subr.mxu0 0.0
        %884 = vmatpush1.msra.mxu0 0.0
        %885 = vmatprep.subr.mxu0 0.0
        %886 = vmatpush1.msra.mxu0 0.0
        %887 = vmatprep.subr.mxu0 0.0
        %888 = vmatpush1.msra.mxu0 0.0
        %889 = vmatprep.subr.mxu0 0.0
        %890 = vmatpush1.msra.mxu0 0.0
        %891 = vmatprep.subr.mxu0 0.0
        %892 = vmatpush1.msra.mxu0 0.0
        %893 = vmatprep.subr.mxu0 0.0
        %894 = vmatpush1.msra.mxu0 0.0
        %895 = vmatprep.subr.mxu0 0.0
        %896 = vmatpush1.msra.mxu0 0.0
        %897 = vmatprep.subr.mxu0 0.0
        %898 = vmatpush1.msra.mxu0 0.0
        %899 = vmatprep.subr.mxu0 0.0
        %900 = vmatpush1.msra.mxu0 0.0
        %901 = vmatprep.mubr.f32.mxu0 0.0
        %902 = vmatmul.mubr.f32.gmra.mrb[0].mxu0 %v754
        %v903 = vpop.f32.mrb[0].mxu0
        %v904 = vadd.f32 %v835, %v903
        %v905 = vpop.f32.mrb[0].mxu0
        %906 = vdwg.mxu0
        %v907 = vld [vmem:[#allocation19] sm:$0xff]
        %v908 = vld [vmem:[#allocation19 + $0x8] sm:$0xff]
        %v909 = vld [vmem:[#allocation19 + $0x10] sm:$0xff]
        %v910 = vld [vmem:[#allocation19 + $0x18] sm:$0xff]
        %v911 = vld [vmem:[#allocation20] sm:$0x1]
        %v913 = vlaneseq
        %v914 = vshrl.u32 %v913, 7
        %v915 = vsub.s32 0, %v914
        %v916 = vrot.slane %v911, %v915
        %918 = vmatprep.subr.mxu0 0.0
        %919 = vmatpush1.msra.mxu0 %v907
        %920 = vmatprep.subr.mxu0 0.0
        %921 = vmatpush1.msra.mxu0 %v908
        %922 = vmatprep.subr.mxu0 0.0
        %923 = vmatpush1.msra.mxu0 %v909
        %924 = vmatprep.subr.mxu0 0.0
        %925 = vmatpush1.msra.mxu0 %v910
        %926 = vmatprep.subr.mxu0 0.0
        %927 = vmatpush1.msra.mxu0 0.0
        %928 = vmatprep.subr.mxu0 0.0
        %929 = vmatpush1.msra.mxu0 0.0
        %930 = vmatprep.subr.mxu0 0.0
        %931 = vmatpush1.msra.mxu0 0.0
        %932 = vmatprep.subr.mxu0 0.0
        %933 = vmatpush1.msra.mxu0 0.0
        %934 = vmatprep.subr.mxu0 0.0
        %935 = vmatpush1.msra.mxu0 0.0
        %936 = vmatprep.subr.mxu0 0.0
        %937 = vmatpush1.msra.mxu0 0.0
        %938 = vmatprep.subr.mxu0 0.0
        %939 = vmatpush1.msra.mxu0 0.0
        %940 = vmatprep.subr.mxu0 0.0
        %941 = vmatpush1.msra.mxu0 0.0
        %942 = vmatprep.subr.mxu0 0.0
        %943 = vmatpush1.msra.mxu0 0.0
        %944 = vmatprep.subr.mxu0 0.0
        %945 = vmatpush1.msra.mxu0 0.0
        %946 = vmatprep.subr.mxu0 0.0
        %947 = vmatpush1.msra.mxu0 0.0
        %948 = vmatprep.subr.mxu0 0.0
        %949 = vmatpush1.msra.mxu0 0.0
        %950 = vmatprep.subr.mxu0 0.0
        %951 = vmatpush1.msra.mxu0 0.0
        %952 = vmatprep.subr.mxu0 0.0
        %953 = vmatpush1.msra.mxu0 0.0
        %954 = vmatprep.subr.mxu0 0.0
        %955 = vmatpush1.msra.mxu0 0.0
        %956 = vmatprep.subr.mxu0 0.0
        %957 = vmatpush1.msra.mxu0 0.0
        %958 = vmatprep.subr.mxu0 0.0
        %959 = vmatpush1.msra.mxu0 0.0
        %960 = vmatprep.subr.mxu0 0.0
        %961 = vmatpush1.msra.mxu0 0.0
        %962 = vmatprep.subr.mxu0 0.0
        %963 = vmatpush1.msra.mxu0 0.0
        %964 = vmatprep.subr.mxu0 0.0
        %965 = vmatpush1.msra.mxu0 0.0
        %966 = vmatprep.subr.mxu0 0.0
        %967 = vmatpush1.msra.mxu0 0.0
        %968 = vmatprep.subr.mxu0 0.0
        %969 = vmatpush1.msra.mxu0 0.0
        %970 = vmatprep.subr.mxu0 0.0
        %971 = vmatpush1.msra.mxu0 0.0
        %972 = vmatprep.subr.mxu0 0.0
        %973 = vmatpush1.msra.mxu0 0.0
        %974 = vmatprep.subr.mxu0 0.0
        %975 = vmatpush1.msra.mxu0 0.0
        %976 = vmatprep.subr.mxu0 0.0
        %977 = vmatpush1.msra.mxu0 0.0
        %978 = vmatprep.subr.mxu0 0.0
        %979 = vmatpush1.msra.mxu0 0.0
        %980 = vmatprep.subr.mxu0 0.0
        %981 = vmatpush1.msra.mxu0 0.0
        %982 = vmatprep.mubr.f32.mxu0 0.0
        %983 = vmatmul.mubr.f32.gmra.mrb[0].mxu0 %v754
        %v984 = vpop.f32.mrb[0].mxu0
        %v985 = vadd.f32 %v916, %v984
        %v986 = vpop.f32.mrb[0].mxu0
        %987 = vdwg.mxu0
        %v988 = vld [vmem:[#allocation7] sm:$0xff]
        %v990 = vcombine.high %v988, %v988
        %v992 = vunpack.c.l.s4 1966171168
        %v993 = vunpack.c.0.s8 %v992
        %v994 = vlaneseq
        %v995 = vshrl.u32 %v994, 7
        %v996 = vsub.s32 %v993, %v995
        %v997 = vrot.slane %v988, %v996
        %v999 = vunpack.c.l.s4 1966171168
        %v1000 = vunpack.c.0.s8 %v999
        %v1001 = vlaneseq
        %v1002 = vshrl.u32 %v1001, 7
        %v1003 = vsub.s32 %v1000, %v1002
        %v1004 = vrot.slane %v990, %v1003
        %v1005 = vcombine.high %v997, %v997
        %v1006 = vcombine.high %v1004, %v1004
        %v1008 = vunpack.c.l.s4 1966171168
        %v1009 = vunpack.c.0.s8 %v1008
        %v1010 = vlaneseq
        %v1011 = vshrl.u32 %v1010, 7
        %v1012 = vsub.s32 %v1009, %v1011
        %v1013 = vrot.slane %v997, %v1012
        %v1015 = vunpack.c.l.s4 1966171168
        %v1016 = vunpack.c.0.s8 %v1015
        %v1017 = vlaneseq
        %v1018 = vshrl.u32 %v1017, 7
        %v1019 = vsub.s32 %v1016, %v1018
        %v1020 = vrot.slane %v1004, %v1019
        %v1022 = vunpack.c.l.s4 1966171168
        %v1023 = vunpack.c.0.s8 %v1022
        %v1024 = vlaneseq
        %v1025 = vshrl.u32 %v1024, 7
        %v1026 = vsub.s32 %v1023, %v1025
        %v1027 = vrot.slane %v1005, %v1026
        %v1029 = vunpack.c.l.s4 1966171168
        %v1030 = vunpack.c.0.s8 %v1029
        %v1031 = vlaneseq
        %v1032 = vshrl.u32 %v1031, 7
        %v1033 = vsub.s32 %v1030, %v1032
        %v1034 = vrot.slane %v1006, %v1033
        %v1035 = vcombine.high %v1013, %v1013
        %v1036 = vcombine.high %v1020, %v1020
        %v1037 = vcombine.high %v1027, %v1027
        %v1038 = vcombine.high %v1034, %v1034
        %v1039 = vld [vmem:[#allocation8] sm:$0xff]
        %v1041 = vcombine.high %v1039, %v1039
        %v1043 = vunpack.c.l.s4 1966171168
        %v1044 = vunpack.c.0.s8 %v1043
        %v1045 = vlaneseq
        %v1046 = vshrl.u32 %v1045, 7
        %v1047 = vsub.s32 %v1044, %v1046
        %v1048 = vrot.slane %v1039, %v1047
        %v1050 = vunpack.c.l.s4 1966171168
        %v1051 = vunpack.c.0.s8 %v1050
        %v1052 = vlaneseq
        %v1053 = vshrl.u32 %v1052, 7
        %v1054 = vsub.s32 %v1051, %v1053
        %v1055 = vrot.slane %v1041, %v1054
        %v1056 = vcombine.high %v1048, %v1048
        %v1057 = vcombine.high %v1055, %v1055
        %v1059 = vunpack.c.l.s4 1966171168
        %v1060 = vunpack.c.0.s8 %v1059
        %v1061 = vlaneseq
        %v1062 = vshrl.u32 %v1061, 7
        %v1063 = vsub.s32 %v1060, %v1062
        %v1064 = vrot.slane %v1048, %v1063
        %v1066 = vunpack.c.l.s4 1966171168
        %v1067 = vunpack.c.0.s8 %v1066
        %v1068 = vlaneseq
        %v1069 = vshrl.u32 %v1068, 7
        %v1070 = vsub.s32 %v1067, %v1069
        %v1071 = vrot.slane %v1055, %v1070
        %v1073 = vunpack.c.l.s4 1966171168
        %v1074 = vunpack.c.0.s8 %v1073
        %v1075 = vlaneseq
        %v1076 = vshrl.u32 %v1075, 7
        %v1077 = vsub.s32 %v1074, %v1076
        %v1078 = vrot.slane %v1056, %v1077
        %v1080 = vunpack.c.l.s4 1966171168
        %v1081 = vunpack.c.0.s8 %v1080
        %v1082 = vlaneseq
        %v1083 = vshrl.u32 %v1082, 7
        %v1084 = vsub.s32 %v1081, %v1083
        %v1085 = vrot.slane %v1057, %v1084
        %v1086 = vcombine.high %v1064, %v1064
        %v1087 = vcombine.high %v1071, %v1071
        %v1088 = vcombine.high %v1078, %v1078
        %v1089 = vcombine.high %v1085, %v1085
        %1091 = vrot.lane.b32.xlu0 %v823, 120
        %v1092 = vpop.permute.xlu0 %1091
        %1094 = vrot.lane.b32.xlu0 %v823, 112
        %v1095 = vpop.permute.xlu0 %1094
        %1097 = vrot.lane.b32.xlu0 %v823, 104
        %v1098 = vpop.permute.xlu0 %1097
        %v1100 = vcombine.low %v823, %v1095
        %v1101 = vcombine.high %v823, %v1095
        %v1103 = vunpack.c.l.s4 1983009808
        %v1104 = vunpack.c.0.s8 %v1103
        %v1105 = vlaneseq
        %v1106 = vshrl.u32 %v1105, 7
        %v1107 = vsub.s32 %v1104, %v1106
        %v1108 = vrot.slane %v1100, %v1107
        %v1110 = vunpack.c.l.s4 1983009808
        %v1111 = vunpack.c.0.s8 %v1110
        %v1112 = vlaneseq
        %v1113 = vshrl.u32 %v1112, 7
        %v1114 = vsub.s32 %v1111, %v1113
        %v1115 = vrot.slane %v1101, %v1114
        %v1116 = vcombine.low %v1092, %v1098
        %v1117 = vcombine.high %v1092, %v1098
        %v1119 = vunpack.c.l.s4 1983009808
        %v1120 = vunpack.c.0.s8 %v1119
        %v1121 = vlaneseq
        %v1122 = vshrl.u32 %v1121, 7
        %v1123 = vsub.s32 %v1120, %v1122
        %v1124 = vrot.slane %v1116, %v1123
        %v1126 = vunpack.c.l.s4 1983009808
        %v1127 = vunpack.c.0.s8 %v1126
        %v1128 = vlaneseq
        %v1129 = vshrl.u32 %v1128, 7
        %v1130 = vsub.s32 %v1127, %v1129
        %v1131 = vrot.slane %v1117, %v1130
        %v1132 = vcombine.low %v1108, %v1124
        %v1133 = vcombine.high %v1108, %v1124
        %v1135 = vunpack.c.l.s4 1934713408
        %v1136 = vunpack.c.0.s8 %v1135
        %v1137 = vlaneseq
        %v1138 = vshrl.u32 %v1137, 7
        %v1139 = vsub.s32 %v1136, %v1138
        %v1140 = vrot.slane %v1132, %v1139
        %v1142 = vunpack.c.l.s4 1934713408
        %v1143 = vunpack.c.0.s8 %v1142
        %v1144 = vlaneseq
        %v1145 = vshrl.u32 %v1144, 7
        %v1146 = vsub.s32 %v1143, %v1145
        %v1147 = vrot.slane %v1133, %v1146
        %v1148 = vcombine.low %v1115, %v1131
        %v1149 = vcombine.high %v1115, %v1131
        %v1151 = vunpack.c.l.s4 1934713408
        %v1152 = vunpack.c.0.s8 %v1151
        %v1153 = vlaneseq
        %v1154 = vshrl.u32 %v1153, 7
        %v1155 = vsub.s32 %v1152, %v1154
        %v1156 = vrot.slane %v1148, %v1155
        %v1158 = vunpack.c.l.s4 1934713408
        %v1159 = vunpack.c.0.s8 %v1158
        %v1160 = vlaneseq
        %v1161 = vshrl.u32 %v1160, 7
        %v1162 = vsub.s32 %v1159, %v1161
        %v1163 = vrot.slane %v1149, %v1162
        %v1164 = vcombine.high %v1140, 0.0
        %v1165 = vcombine.high %v1147, 0.0
        %v1166 = vcombine.high %v1156, 0.0
        %v1167 = vcombine.high %v1163, 0.0
        %v1168 = vlaneseq
        %v1169 = vshrl.u32 %v1168, 7
        %v1170 = vsub.s32 0, %v1169
        %v1171 = vrot.slane %v1013, %v1170
        %v1172 = vlaneseq
        %v1173 = vshrl.u32 %v1172, 7
        %v1174 = vsub.s32 0, %v1173
        %v1175 = vrot.slane %v1027, %v1174
        %v1176 = vlaneseq
        %v1177 = vshrl.u32 %v1176, 7
        %v1178 = vsub.s32 0, %v1177
        %v1179 = vrot.slane %v1035, %v1178
        %v1180 = vlaneseq
        %v1181 = vshrl.u32 %v1180, 7
        %v1182 = vsub.s32 0, %v1181
        %v1183 = vrot.slane %v1037, %v1182
        %v1184 = vlaneseq
        %v1185 = vshrl.u32 %v1184, 7
        %v1186 = vsub.s32 0, %v1185
        %v1187 = vrot.slane %v1020, %v1186
        %v1188 = vlaneseq
        %v1189 = vshrl.u32 %v1188, 7
        %v1190 = vsub.s32 0, %v1189
        %v1191 = vrot.slane %v1034, %v1190
        %v1192 = vlaneseq
        %v1193 = vshrl.u32 %v1192, 7
        %v1194 = vsub.s32 0, %v1193
        %v1195 = vrot.slane %v1036, %v1194
        %v1196 = vlaneseq
        %v1197 = vshrl.u32 %v1196, 7
        %v1198 = vsub.s32 0, %v1197
        %v1199 = vrot.slane %v1038, %v1198
        %v1208 = vmul.f32 %v1140, %v1171
        %v1209 = vmul.f32 %v1164, %v1175
        %v1210 = vmul.f32 %v1147, %v1179
        %v1211 = vmul.f32 %v1165, %v1183
        %v1212 = vmul.f32 %v1156, %v1187
        %v1213 = vmul.f32 %v1166, %v1191
        %v1214 = vmul.f32 %v1163, %v1195
        %v1215 = vmul.f32 %v1167, %v1199
        %v1216 = vlaneseq
        %v1217 = vshrl.u32 %v1216, 7
        %v1218 = vsub.s32 0, %v1217
        %v1219 = vrot.slane %v1064, %v1218
        %v1220 = vlaneseq
        %v1221 = vshrl.u32 %v1220, 7
        %v1222 = vsub.s32 0, %v1221
        %v1223 = vrot.slane %v1078, %v1222
        %v1224 = vlaneseq
        %v1225 = vshrl.u32 %v1224, 7
        %v1226 = vsub.s32 0, %v1225
        %v1227 = vrot.slane %v1086, %v1226
        %v1228 = vlaneseq
        %v1229 = vshrl.u32 %v1228, 7
        %v1230 = vsub.s32 0, %v1229
        %v1231 = vrot.slane %v1088, %v1230
        %v1232 = vlaneseq
        %v1233 = vshrl.u32 %v1232, 7
        %v1234 = vsub.s32 0, %v1233
        %v1235 = vrot.slane %v1071, %v1234
        %v1236 = vlaneseq
        %v1237 = vshrl.u32 %v1236, 7
        %v1238 = vsub.s32 0, %v1237
        %v1239 = vrot.slane %v1085, %v1238
        %v1240 = vlaneseq
        %v1241 = vshrl.u32 %v1240, 7
        %v1242 = vsub.s32 0, %v1241
        %v1243 = vrot.slane %v1087, %v1242
        %v1244 = vlaneseq
        %v1245 = vshrl.u32 %v1244, 7
        %v1246 = vsub.s32 0, %v1245
        %v1247 = vrot.slane %v1089, %v1246
        %1256 = vrot.lane.b32.xlu0 %v1219, 4
        %v1257 = vpop.permute.xlu0 %1256
        %1258 = vrot.lane.b32.xlu0 %v1223, 4
        %v1259 = vpop.permute.xlu0 %1258
        %1260 = vrot.lane.b32.xlu0 %v1227, 4
        %v1261 = vpop.permute.xlu0 %1260
        %1262 = vrot.lane.b32.xlu0 %v1231, 4
        %v1263 = vpop.permute.xlu0 %1262
        %1264 = vrot.lane.b32.xlu0 %v1235, 4
        %v1265 = vpop.permute.xlu0 %1264
        %1266 = vrot.lane.b32.xlu0 %v1239, 4
        %v1267 = vpop.permute.xlu0 %1266
        %1268 = vrot.lane.b32.xlu0 %v1243, 4
        %v1269 = vpop.permute.xlu0 %1268
        %1270 = vrot.lane.b32.xlu0 %v1247, 4
        %v1271 = vpop.permute.xlu0 %1270
        %v1280 = vmul.f32 %v1140, %v1257
        %v1281 = vmul.f32 %v1164, %v1259
        %v1282 = vmul.f32 %v1147, %v1261
        %v1283 = vmul.f32 %v1165, %v1263
        %v1284 = vmul.f32 %v1156, %v1265
        %v1285 = vmul.f32 %v1166, %v1267
        %v1286 = vmul.f32 %v1163, %v1269
        %v1287 = vmul.f32 %v1167, %v1271
        %1296 = vrot.lane.b32.xlu0 %v1280, 124
        %v1297 = vpop.permute.xlu0 %1296
        %1298 = vrot.lane.b32.xlu0 %v1281, 124
        %v1299 = vpop.permute.xlu0 %1298
        %1300 = vrot.lane.b32.xlu0 %v1282, 124
        %v1301 = vpop.permute.xlu0 %1300
        %1302 = vrot.lane.b32.xlu0 %v1283, 124
        %v1303 = vpop.permute.xlu0 %1302
        %1304 = vrot.lane.b32.xlu0 %v1284, 124
        %v1305 = vpop.permute.xlu0 %1304
        %1306 = vrot.lane.b32.xlu0 %v1285, 124
        %v1307 = vpop.permute.xlu0 %1306
        %1308 = vrot.lane.b32.xlu0 %v1286, 124
        %v1309 = vpop.permute.xlu0 %1308
        %1310 = vrot.lane.b32.xlu0 %v1287, 124
        %v1311 = vpop.permute.xlu0 %1310
        %v1320 = vsub.f32 %v1208, %v1297
        %v1321 = vsub.f32 %v1209, %v1299
        %v1322 = vsub.f32 %v1210, %v1301
        %v1323 = vsub.f32 %v1211, %v1303
        %v1324 = vsub.f32 %v1212, %v1305
        %v1325 = vsub.f32 %v1213, %v1307
        %v1326 = vsub.f32 %v1214, %v1309
        %v1327 = vsub.f32 %v1215, %v1311
        %v1328 = vmul.f32 %v1140, %v1219
        %v1329 = vmul.f32 %v1164, %v1223
        %v1330 = vmul.f32 %v1147, %v1227
        %v1331 = vmul.f32 %v1165, %v1231
        %v1332 = vmul.f32 %v1156, %v1235
        %v1333 = vmul.f32 %v1166, %v1239
        %v1334 = vmul.f32 %v1163, %v1243
        %v1335 = vmul.f32 %v1167, %v1247
        %1336 = vrot.lane.b32.xlu0 %v1171, 4
        %v1337 = vpop.permute.xlu0 %1336
        %1338 = vrot.lane.b32.xlu0 %v1175, 4
        %v1339 = vpop.permute.xlu0 %1338
        %1340 = vrot.lane.b32.xlu0 %v1179, 4
        %v1341 = vpop.permute.xlu0 %1340
        %1342 = vrot.lane.b32.xlu0 %v1183, 4
        %v1343 = vpop.permute.xlu0 %1342
        %1344 = vrot.lane.b32.xlu0 %v1187, 4
        %v1345 = vpop.permute.xlu0 %1344
        %1346 = vrot.lane.b32.xlu0 %v1191, 4
        %v1347 = vpop.permute.xlu0 %1346
        %1348 = vrot.lane.b32.xlu0 %v1195, 4
        %v1349 = vpop.permute.xlu0 %1348
        %1350 = vrot.lane.b32.xlu0 %v1199, 4
        %v1351 = vpop.permute.xlu0 %1350
        %v1360 = vmul.f32 %v1140, %v1337
        %v1361 = vmul.f32 %v1164, %v1339
        %v1362 = vmul.f32 %v1147, %v1341
        %v1363 = vmul.f32 %v1165, %v1343
        %v1364 = vmul.f32 %v1156, %v1345
        %v1365 = vmul.f32 %v1166, %v1347
        %v1366 = vmul.f32 %v1163, %v1349
        %v1367 = vmul.f32 %v1167, %v1351
        %1376 = vrot.lane.b32.xlu0 %v1360, 124
        %v1377 = vpop.permute.xlu0 %1376
        %1378 = vrot.lane.b32.xlu0 %v1361, 124
        %v1379 = vpop.permute.xlu0 %1378
        %1380 = vrot.lane.b32.xlu0 %v1362, 124
        %v1381 = vpop.permute.xlu0 %1380
        %1382 = vrot.lane.b32.xlu0 %v1363, 124
        %v1383 = vpop.permute.xlu0 %1382
        %1384 = vrot.lane.b32.xlu0 %v1364, 124
        %v1385 = vpop.permute.xlu0 %1384
        %1386 = vrot.lane.b32.xlu0 %v1365, 124
        %v1387 = vpop.permute.xlu0 %1386
        %1388 = vrot.lane.b32.xlu0 %v1366, 124
        %v1389 = vpop.permute.xlu0 %1388
        %1390 = vrot.lane.b32.xlu0 %v1367, 124
        %v1391 = vpop.permute.xlu0 %1390
        %v1400 = vadd.f32 %v1328, %v1377
        %v1401 = vadd.f32 %v1329, %v1379
        %v1402 = vadd.f32 %v1330, %v1381
        %v1403 = vadd.f32 %v1331, %v1383
        %v1404 = vadd.f32 %v1332, %v1385
        %v1405 = vadd.f32 %v1333, %v1387
        %v1406 = vadd.f32 %v1334, %v1389
        %v1407 = vadd.f32 %v1335, %v1391
        %1416 = vrot.lane.b32.xlu0 %v1400, 4
        %v1417 = vpop.permute.xlu0 %1416
        %1418 = vrot.lane.b32.xlu0 %v1401, 4
        %v1419 = vpop.permute.xlu0 %1418
        %1420 = vrot.lane.b32.xlu0 %v1402, 4
        %v1421 = vpop.permute.xlu0 %1420
        %1422 = vrot.lane.b32.xlu0 %v1403, 4
        %v1423 = vpop.permute.xlu0 %1422
        %1424 = vrot.lane.b32.xlu0 %v1404, 4
        %v1425 = vpop.permute.xlu0 %1424
        %1426 = vrot.lane.b32.xlu0 %v1405, 4
        %v1427 = vpop.permute.xlu0 %1426
        %1428 = vrot.lane.b32.xlu0 %v1406, 4
        %v1429 = vpop.permute.xlu0 %1428
        %1430 = vrot.lane.b32.xlu0 %v1407, 4
        %v1431 = vpop.permute.xlu0 %1430
        %vm1440 = vcmask 31744
        %v1441 = vsel %vm1440, %v1320, %v1417
        %v1442 = vsel %vm1440, %v1321, %v1419
        %v1443 = vsel %vm1440, %v1322, %v1421
        %v1444 = vsel %vm1440, %v1323, %v1423
        %v1445 = vsel %vm1440, %v1324, %v1425
        %v1446 = vsel %vm1440, %v1325, %v1427
        %v1447 = vsel %vm1440, %v1326, %v1429
        %v1448 = vsel %vm1440, %v1327, %v1431
        %v1449 = vcombine.low %v1441, %v1443
        %v1451 = vunpack.c.l.s4 1983009808
        %v1452 = vunpack.c.0.s8 %v1451
        %v1453 = vlaneseq
        %v1454 = vshrl.u32 %v1453, 7
        %v1455 = vsub.s32 %v1452, %v1454
        %v1456 = vrot.slane %v1449, %v1455
        %v1457 = vcombine.low %v1442, %v1444
        %v1459 = vunpack.c.l.s4 1983009808
        %v1460 = vunpack.c.0.s8 %v1459
        %v1461 = vlaneseq
        %v1462 = vshrl.u32 %v1461, 7
        %v1463 = vsub.s32 %v1460, %v1462
        %v1464 = vrot.slane %v1457, %v1463
        %v1465 = vcombine.low %v1445, %v1447
        %v1467 = vunpack.c.l.s4 1983009808
        %v1468 = vunpack.c.0.s8 %v1467
        %v1469 = vlaneseq
        %v1470 = vshrl.u32 %v1469, 7
        %v1471 = vsub.s32 %v1468, %v1470
        %v1472 = vrot.slane %v1465, %v1471
        %v1473 = vcombine.low %v1446, %v1448
        %v1475 = vunpack.c.l.s4 1983009808
        %v1476 = vunpack.c.0.s8 %v1475
        %v1477 = vlaneseq
        %v1478 = vshrl.u32 %v1477, 7
        %v1479 = vsub.s32 %v1476, %v1478
        %v1480 = vrot.slane %v1473, %v1479
        %v1481 = vcombine.low %v1456, %v1464
        %v1482 = vcombine.high %v1456, %v1464
        %v1484 = vunpack.c.l.s4 1934713408
        %v1485 = vunpack.c.0.s8 %v1484
        %v1486 = vlaneseq
        %v1487 = vshrl.u32 %v1486, 7
        %v1488 = vsub.s32 %v1485, %v1487
        %v1489 = vrot.slane %v1481, %v1488
        %v1491 = vunpack.c.l.s4 1934713408
        %v1492 = vunpack.c.0.s8 %v1491
        %v1493 = vlaneseq
        %v1494 = vshrl.u32 %v1493, 7
        %v1495 = vsub.s32 %v1492, %v1494
        %v1496 = vrot.slane %v1482, %v1495
        %v1497 = vcombine.low %v1472, %v1480
        %v1498 = vcombine.high %v1472, %v1480
        %v1500 = vunpack.c.l.s4 1934713408
        %v1501 = vunpack.c.0.s8 %v1500
        %v1502 = vlaneseq
        %v1503 = vshrl.u32 %v1502, 7
        %v1504 = vsub.s32 %v1501, %v1503
        %v1505 = vrot.slane %v1497, %v1504
        %v1507 = vunpack.c.l.s4 1934713408
        %v1508 = vunpack.c.0.s8 %v1507
        %v1509 = vlaneseq
        %v1510 = vshrl.u32 %v1509, 7
        %v1511 = vsub.s32 %v1508, %v1510
        %v1512 = vrot.slane %v1498, %v1511
        %v1513 = vcombine.low %v1489, %v1505
        %v1514 = vcombine.high %v1489, %v1505
        %v1515 = vcombine.low %v1496, %v1512
        %v1516 = vcombine.high %v1496, %v1512
        %1518 = vrot.lane.b32.xlu0 %v1514, 8
        %v1519 = vpop.permute.xlu0 %1518
        %1522 = vrot.lane.b32.xlu0 %v1515, 16
        %v1523 = vpop.permute.xlu0 %1522
        %1526 = vrot.lane.b32.xlu0 %v1516, 24
        %v1527 = vpop.permute.xlu0 %1526
        %vm1529 = vcmask 64512
        %v1530 = vsel %vm1529, %v1513, %v1519
        %vm1531 = vcmask 130048
        %v1532 = vsel %vm1531, %v1530, %v1523
        %vm1533 = vcmask 195584
        %v1534 = vsel %vm1533, %v1532, %v1527
        %v1535 = vmul.f32 %v1534, 0.35355338
        %1536 = vst.msk [vmem:[%s689] sm:$0xff] %vm708, %v1535
        %1538 = vrot.lane.b32.xlu0 %v904, 120
        %v1539 = vpop.permute.xlu0 %1538
        %1541 = vrot.lane.b32.xlu0 %v904, 112
        %v1542 = vpop.permute.xlu0 %1541
        %1544 = vrot.lane.b32.xlu0 %v904, 104
        %v1545 = vpop.permute.xlu0 %1544
        %v1547 = vcombine.low %v904, %v1542
        %v1548 = vcombine.high %v904, %v1542
        %v1550 = vunpack.c.l.s4 1983009808
        %v1551 = vunpack.c.0.s8 %v1550
        %v1552 = vlaneseq
        %v1553 = vshrl.u32 %v1552, 7
        %v1554 = vsub.s32 %v1551, %v1553
        %v1555 = vrot.slane %v1547, %v1554
        %v1557 = vunpack.c.l.s4 1983009808
        %v1558 = vunpack.c.0.s8 %v1557
        %v1559 = vlaneseq
        %v1560 = vshrl.u32 %v1559, 7
        %v1561 = vsub.s32 %v1558, %v1560
        %v1562 = vrot.slane %v1548, %v1561
        %v1563 = vcombine.low %v1539, %v1545
        %v1564 = vcombine.high %v1539, %v1545
        %v1566 = vunpack.c.l.s4 1983009808
        %v1567 = vunpack.c.0.s8 %v1566
        %v1568 = vlaneseq
        %v1569 = vshrl.u32 %v1568, 7
        %v1570 = vsub.s32 %v1567, %v1569
        %v1571 = vrot.slane %v1563, %v1570
        %v1573 = vunpack.c.l.s4 1983009808
        %v1574 = vunpack.c.0.s8 %v1573
        %v1575 = vlaneseq
        %v1576 = vshrl.u32 %v1575, 7
        %v1577 = vsub.s32 %v1574, %v1576
        %v1578 = vrot.slane %v1564, %v1577
        %v1579 = vcombine.low %v1555, %v1571
        %v1580 = vcombine.high %v1555, %v1571
        %v1582 = vunpack.c.l.s4 1934713408
        %v1583 = vunpack.c.0.s8 %v1582
        %v1584 = vlaneseq
        %v1585 = vshrl.u32 %v1584, 7
        %v1586 = vsub.s32 %v1583, %v1585
        %v1587 = vrot.slane %v1579, %v1586
        %v1589 = vunpack.c.l.s4 1934713408
        %v1590 = vunpack.c.0.s8 %v1589
        %v1591 = vlaneseq
        %v1592 = vshrl.u32 %v1591, 7
        %v1593 = vsub.s32 %v1590, %v1592
        %v1594 = vrot.slane %v1580, %v1593
        %v1595 = vcombine.low %v1562, %v1578
        %v1596 = vcombine.high %v1562, %v1578
        %v1598 = vunpack.c.l.s4 1934713408
        %v1599 = vunpack.c.0.s8 %v1598
        %v1600 = vlaneseq
        %v1601 = vshrl.u32 %v1600, 7
        %v1602 = vsub.s32 %v1599, %v1601
        %v1603 = vrot.slane %v1595, %v1602
        %v1605 = vunpack.c.l.s4 1934713408
        %v1606 = vunpack.c.0.s8 %v1605
        %v1607 = vlaneseq
        %v1608 = vshrl.u32 %v1607, 7
        %v1609 = vsub.s32 %v1606, %v1608
        %v1610 = vrot.slane %v1596, %v1609
        %v1611 = vcombine.high %v1587, 0.0
        %v1612 = vcombine.high %v1594, 0.0
        %v1613 = vcombine.high %v1603, 0.0
        %v1614 = vcombine.high %v1610, 0.0
        %v1615 = vmul.f32 %v1587, %v1171
        %v1616 = vmul.f32 %v1611, %v1175
        %v1617 = vmul.f32 %v1594, %v1179
        %v1618 = vmul.f32 %v1612, %v1183
        %v1619 = vmul.f32 %v1603, %v1187
        %v1620 = vmul.f32 %v1613, %v1191
        %v1621 = vmul.f32 %v1610, %v1195
        %v1622 = vmul.f32 %v1614, %v1199
        %v1623 = vmul.f32 %v1587, %v1257
        %v1624 = vmul.f32 %v1611, %v1259
        %v1625 = vmul.f32 %v1594, %v1261
        %v1626 = vmul.f32 %v1612, %v1263
        %v1627 = vmul.f32 %v1603, %v1265
        %v1628 = vmul.f32 %v1613, %v1267
        %v1629 = vmul.f32 %v1610, %v1269
        %v1630 = vmul.f32 %v1614, %v1271
        %1639 = vrot.lane.b32.xlu0 %v1623, 124
        %v1640 = vpop.permute.xlu0 %1639
        %1641 = vrot.lane.b32.xlu0 %v1624, 124
        %v1642 = vpop.permute.xlu0 %1641
        %1643 = vrot.lane.b32.xlu0 %v1625, 124
        %v1644 = vpop.permute.xlu0 %1643
        %1645 = vrot.lane.b32.xlu0 %v1626, 124
        %v1646 = vpop.permute.xlu0 %1645
        %1647 = vrot.lane.b32.xlu0 %v1627, 124
        %v1648 = vpop.permute.xlu0 %1647
        %1649 = vrot.lane.b32.xlu0 %v1628, 124
        %v1650 = vpop.permute.xlu0 %1649
        %1651 = vrot.lane.b32.xlu0 %v1629, 124
        %v1652 = vpop.permute.xlu0 %1651
        %1653 = vrot.lane.b32.xlu0 %v1630, 124
        %v1654 = vpop.permute.xlu0 %1653
        %v1663 = vsub.f32 %v1615, %v1640
        %v1664 = vsub.f32 %v1616, %v1642
        %v1665 = vsub.f32 %v1617, %v1644
        %v1666 = vsub.f32 %v1618, %v1646
        %v1667 = vsub.f32 %v1619, %v1648
        %v1668 = vsub.f32 %v1620, %v1650
        %v1669 = vsub.f32 %v1621, %v1652
        %v1670 = vsub.f32 %v1622, %v1654
        %v1671 = vmul.f32 %v1587, %v1219
        %v1672 = vmul.f32 %v1611, %v1223
        %v1673 = vmul.f32 %v1594, %v1227
        %v1674 = vmul.f32 %v1612, %v1231
        %v1675 = vmul.f32 %v1603, %v1235
        %v1676 = vmul.f32 %v1613, %v1239
        %v1677 = vmul.f32 %v1610, %v1243
        %v1678 = vmul.f32 %v1614, %v1247
        %v1679 = vmul.f32 %v1587, %v1337
        %v1680 = vmul.f32 %v1611, %v1339
        %v1681 = vmul.f32 %v1594, %v1341
        %v1682 = vmul.f32 %v1612, %v1343
        %v1683 = vmul.f32 %v1603, %v1345
        %v1684 = vmul.f32 %v1613, %v1347
        %v1685 = vmul.f32 %v1610, %v1349
        %v1686 = vmul.f32 %v1614, %v1351
        %1695 = vrot.lane.b32.xlu0 %v1679, 124
        %v1696 = vpop.permute.xlu0 %1695
        %1697 = vrot.lane.b32.xlu0 %v1680, 124
        %v1698 = vpop.permute.xlu0 %1697
        %1699 = vrot.lane.b32.xlu0 %v1681, 124
        %v1700 = vpop.permute.xlu0 %1699
        %1701 = vrot.lane.b32.xlu0 %v1682, 124
        %v1702 = vpop.permute.xlu0 %1701
        %1703 = vrot.lane.b32.xlu0 %v1683, 124
        %v1704 = vpop.permute.xlu0 %1703
        %1705 = vrot.lane.b32.xlu0 %v1684, 124
        %v1706 = vpop.permute.xlu0 %1705
        %1707 = vrot.lane.b32.xlu0 %v1685, 124
        %v1708 = vpop.permute.xlu0 %1707
        %1709 = vrot.lane.b32.xlu0 %v1686, 124
        %v1710 = vpop.permute.xlu0 %1709
        %v1719 = vadd.f32 %v1671, %v1696
        %v1720 = vadd.f32 %v1672, %v1698
        %v1721 = vadd.f32 %v1673, %v1700
        %v1722 = vadd.f32 %v1674, %v1702
        %v1723 = vadd.f32 %v1675, %v1704
        %v1724 = vadd.f32 %v1676, %v1706
        %v1725 = vadd.f32 %v1677, %v1708
        %v1726 = vadd.f32 %v1678, %v1710
        %1735 = vrot.lane.b32.xlu0 %v1719, 4
        %v1736 = vpop.permute.xlu0 %1735
        %1737 = vrot.lane.b32.xlu0 %v1720, 4
        %v1738 = vpop.permute.xlu0 %1737
        %1739 = vrot.lane.b32.xlu0 %v1721, 4
        %v1740 = vpop.permute.xlu0 %1739
        %1741 = vrot.lane.b32.xlu0 %v1722, 4
        %v1742 = vpop.permute.xlu0 %1741
        %1743 = vrot.lane.b32.xlu0 %v1723, 4
        %v1744 = vpop.permute.xlu0 %1743
        %1745 = vrot.lane.b32.xlu0 %v1724, 4
        %v1746 = vpop.permute.xlu0 %1745
        %1747 = vrot.lane.b32.xlu0 %v1725, 4
        %v1748 = vpop.permute.xlu0 %1747
        %1749 = vrot.lane.b32.xlu0 %v1726, 4
        %v1750 = vpop.permute.xlu0 %1749
        %v1759 = vsel %vm1440, %v1663, %v1736
        %v1760 = vsel %vm1440, %v1664, %v1738
        %v1761 = vsel %vm1440, %v1665, %v1740
        %v1762 = vsel %vm1440, %v1666, %v1742
        %v1763 = vsel %vm1440, %v1667, %v1744
        %v1764 = vsel %vm1440, %v1668, %v1746
        %v1765 = vsel %vm1440, %v1669, %v1748
        %v1766 = vsel %vm1440, %v1670, %v1750
        %v1767 = vcombine.low %v1759, %v1761
        %v1769 = vunpack.c.l.s4 1983009808
        %v1770 = vunpack.c.0.s8 %v1769
        %v1771 = vlaneseq
        %v1772 = vshrl.u32 %v1771, 7
        %v1773 = vsub.s32 %v1770, %v1772
        %v1774 = vrot.slane %v1767, %v1773
        %v1775 = vcombine.low %v1760, %v1762
        %v1777 = vunpack.c.l.s4 1983009808
        %v1778 = vunpack.c.0.s8 %v1777
        %v1779 = vlaneseq
        %v1780 = vshrl.u32 %v1779, 7
        %v1781 = vsub.s32 %v1778, %v1780
        %v1782 = vrot.slane %v1775, %v1781
        %v1783 = vcombine.low %v1763, %v1765
        %v1785 = vunpack.c.l.s4 1983009808
        %v1786 = vunpack.c.0.s8 %v1785
        %v1787 = vlaneseq
        %v1788 = vshrl.u32 %v1787, 7
        %v1789 = vsub.s32 %v1786, %v1788
        %v1790 = vrot.slane %v1783, %v1789
        %v1791 = vcombine.low %v1764, %v1766
        %v1793 = vunpack.c.l.s4 1983009808
        %v1794 = vunpack.c.0.s8 %v1793
        %v1795 = vlaneseq
        %v1796 = vshrl.u32 %v1795, 7
        %v1797 = vsub.s32 %v1794, %v1796
        %v1798 = vrot.slane %v1791, %v1797
        %v1799 = vcombine.low %v1774, %v1782
        %v1800 = vcombine.high %v1774, %v1782
        %v1802 = vunpack.c.l.s4 1934713408
        %v1803 = vunpack.c.0.s8 %v1802
        %v1804 = vlaneseq
        %v1805 = vshrl.u32 %v1804, 7
        %v1806 = vsub.s32 %v1803, %v1805
        %v1807 = vrot.slane %v1799, %v1806
        %v1809 = vunpack.c.l.s4 1934713408
        %v1810 = vunpack.c.0.s8 %v1809
        %v1811 = vlaneseq
        %v1812 = vshrl.u32 %v1811, 7
        %v1813 = vsub.s32 %v1810, %v1812
        %v1814 = vrot.slane %v1800, %v1813
        %v1815 = vcombine.low %v1790, %v1798
        %v1816 = vcombine.high %v1790, %v1798
        %v1818 = vunpack.c.l.s4 1934713408
        %v1819 = vunpack.c.0.s8 %v1818
        %v1820 = vlaneseq
        %v1821 = vshrl.u32 %v1820, 7
        %v1822 = vsub.s32 %v1819, %v1821
        %v1823 = vrot.slane %v1815, %v1822
        %v1825 = vunpack.c.l.s4 1934713408
        %v1826 = vunpack.c.0.s8 %v1825
        %v1827 = vlaneseq
        %v1828 = vshrl.u32 %v1827, 7
        %v1829 = vsub.s32 %v1826, %v1828
        %v1830 = vrot.slane %v1816, %v1829
        %v1831 = vcombine.low %v1807, %v1823
        %v1832 = vcombine.high %v1807, %v1823
        %v1833 = vcombine.low %v1814, %v1830
        %v1834 = vcombine.high %v1814, %v1830
        %1836 = vrot.lane.b32.xlu0 %v1832, 8
        %v1837 = vpop.permute.xlu0 %1836
        %1840 = vrot.lane.b32.xlu0 %v1833, 16
        %v1841 = vpop.permute.xlu0 %1840
        %1844 = vrot.lane.b32.xlu0 %v1834, 24
        %v1845 = vpop.permute.xlu0 %1844
        %v1847 = vsel %vm1529, %v1831, %v1837
        %v1848 = vsel %vm1531, %v1847, %v1841
        %v1849 = vsel %vm1533, %v1848, %v1845
        %1850 = vst.msk [vmem:[%s696] sm:$0xff] %vm708, %v1849
        %1851 = vst.msk [vmem:[%s703] sm:$0xff] %vm708, %v985
        %s1852 = sand.u32 %s339, 1
        %s1853 = scalar_lea.sflag [#allocation4], %s1852
        %s1854 = sand.u32 %s339, 1
        %s1855 = smul.addr %s1854, 8
        %s1856 = scalar_lea.vmem [#allocation22], %s1855
        %s1857 = sand.u32 %s43, 1
        %s1858 = scalar_lea.sflag [#allocation24], %s1857
        %s1859 = sand.u32 %s367, 1
        %s1860 = smul.addr %s1859, 8
        %s1861 = scalar_lea.vmem [#allocation23], %s1860
        %s1862 = sand.u32 %s43, 1
        %s1863 = scalar_lea.sflag [#allocation24], %s1862
        %s1864 = sand.u32 %s395, 1
        %s1865 = smul.addr %s1864, 8
        %s1866 = scalar_lea.vmem [#allocation25], %s1865
        // Predicated region
        $region117: #{blip3o_attention_block.8} parent=67 // pred_check
          %p1867 = pneg %p349
        $region118: #{blip3o_attention_block.8} parent=67 // pred_check_branch
          %1869 = sbr.rel (%p1867) target = $region120
        $region119: #{blip3o_attention_block.8} parent=67 // pred_region
          %s1871 = ssub.s32 128, 128
          %1872 = vsyncadd %s1853, %s1871
          %s1873 = sadd.s32 %s48, %s47
          %s1874 = smul.addr %s1873, 128
          %s1875 = scalar_lea.hbm %s12, %s1874
          %s1877 = sshll.u32 %s1856, 4
          %s1878 = int_to_ptr.vmem [resolvable:$true] %s1877
          %1880 = dma.vmem_to_hbm [thread:$0]  %s1878, 128, %s1875, %s1853
        $region120: #{blip3o_attention_block.8} parent=67 // pred_fallthru
          _
        // Predicated region
        $region121: #{blip3o_attention_block.8} parent=67 // pred_check
          %p1881 = pneg %p377
        $region122: #{blip3o_attention_block.8} parent=67 // pred_check_branch
          %1883 = sbr.rel (%p1881) target = $region124
        $region123: #{blip3o_attention_block.8} parent=67 // pred_region
          %s1885 = ssub.s32 128, 128
          %1886 = vsyncadd %s1858, %s1885
          %s1887 = sadd.s32 %s48, %s47
          %s1888 = smul.addr %s1887, 128
          %s1889 = scalar_lea.hbm %s13, %s1888
          %s1891 = sshll.u32 %s1861, 4
          %s1892 = int_to_ptr.vmem [resolvable:$true] %s1891
          %1894 = dma.vmem_to_hbm [thread:$0]  %s1892, 128, %s1889, %s1858
        $region124: #{blip3o_attention_block.8} parent=67 // pred_fallthru
          _
        // Predicated region
        $region125: #{blip3o_attention_block.8} parent=67 // pred_check
          %p1895 = pneg %p405
        $region126: #{blip3o_attention_block.8} parent=67 // pred_check_branch
          %1897 = sbr.rel (%p1895) target = $region128
        $region127: #{blip3o_attention_block.8} parent=67 // pred_region
          %s1899 = ssub.s32 128, 128
          %1900 = vsyncadd %s1863, %s1899
          %s1901 = sadd.s32 %s48, %s47
          %s1902 = smul.addr %s1901, 128
          %s1903 = scalar_lea.hbm %s14, %s1902
          %s1905 = sshll.u32 %s1866, 4
          %s1906 = int_to_ptr.vmem [resolvable:$true] %s1905
          %1908 = dma.vmem_to_hbm [thread:$0]  %s1906, 128, %s1903, %s1863
        $region128: #{blip3o_attention_block.8} parent=67 // pred_fallthru
          _
      $region68: #{blip3o_attention_block.8} parent=5 // pred_fallthru
        _
      %p1909 = scmp.le.s32.totalorder 2, %s38
      // Predicated region
      $region129: #{blip3o_attention_block.8} parent=5 // pred_check
        %p1910 = pneg %p1909
      $region130: #{blip3o_attention_block.8} parent=5 // pred_check_branch
        %1912 = sbr.rel (%p1910) target = $region132
      $region131: #{blip3o_attention_block.8} parent=5 // pred_region
        %s1913 = ssub.s32 %s38, 2
        // Predicated region
        $region133: #{blip3o_attention_block.8} parent=131 // pred_check
          %p1914 = pneg %p355
        $region134: #{blip3o_attention_block.8} parent=131 // pred_check_branch
          %1916 = sbr.rel (%p1914) target = $region136
        $region135: #{blip3o_attention_block.8} parent=131 // pred_region
          %s1917 = sand.u32 %s340, 1
          %s1918 = scalar_lea.sflag [#allocation4], %s1917
          %s1919 = sand.u32 %s340, 1
          %s1920 = smul.addr %s1919, 8
          %s1921 = scalar_lea.vmem [#allocation22], %s1920
          %1922 = dma.done %s1918, 128
        $region136: #{blip3o_attention_block.8} parent=131 // pred_fallthru
          _
        // Predicated region
        $region137: #{blip3o_attention_block.8} parent=131 // pred_check
          %p1923 = pneg %p383
        $region138: #{blip3o_attention_block.8} parent=131 // pred_check_branch
          %1925 = sbr.rel (%p1923) target = $region140
        $region139: #{blip3o_attention_block.8} parent=131 // pred_region
          %s1926 = sand.u32 %s44, 1
          %s1927 = scalar_lea.sflag [#allocation24], %s1926
          %s1928 = sand.u32 %s368, 1
          %s1929 = smul.addr %s1928, 8
          %s1930 = scalar_lea.vmem [#allocation23], %s1929
          %1931 = dma.done %s1927, 128
        $region140: #{blip3o_attention_block.8} parent=131 // pred_fallthru
          _
        // Predicated region
        $region141: #{blip3o_attention_block.8} parent=131 // pred_check
          %p1932 = pneg %p411
        $region142: #{blip3o_attention_block.8} parent=131 // pred_check_branch
          %1934 = sbr.rel (%p1932) target = $region144
        $region143: #{blip3o_attention_block.8} parent=131 // pred_region
          %s1935 = sand.u32 %s44, 1
          %s1936 = scalar_lea.sflag [#allocation24], %s1935
          %s1937 = sand.u32 %s396, 1
          %s1938 = smul.addr %s1937, 8
          %s1939 = scalar_lea.vmem [#allocation25], %s1938
          %1940 = dma.done %s1936, 128
        $region144: #{blip3o_attention_block.8} parent=131 // pred_fallthru
          _
      $region132: #{blip3o_attention_block.8} parent=5 // pred_fallthru
        _
    $region6: #{blip3o_attention_block.8} parent=1 // loop_footer
      %s42 = sadd.s32 1, %s38
    $region7: #{blip3o_attention_block.8} parent=1 // loop_footer_branch
      %37 = sbr.rel target = $region3
    $region8: #{blip3o_attention_block.8} parent=1 // loop_exit
      _
    %1941 = vsyncpa [#allocation3], 1
    %s1942 = scalar_lea.sflag [#allocation3], 1
    %1943 = vsyncpa %s1942, 1
    %1944 = vsyncpa [#allocation6], 1
    %s1945 = scalar_lea.sflag [#allocation6], 1
    %1946 = vsyncpa %s1945, 1
    %1947 = vsyncpa [#allocation9], 1
    %1948 = vsyncpa [#allocation12], 1
    %1949 = vsyncpa [#allocation15], 1
    %1950 = vsyncpa [#allocation18], 1
    %1951 = vsyncpa [#allocation21], 1
    %1952 = vsyncpa [#allocation4], 1
    %s1953 = scalar_lea.sflag [#allocation4], 1
    %1954 = vsyncpa %s1953, 1
    %1955 = vsyncpa [#allocation24], 1
    %s1956 = scalar_lea.sflag [#allocation24], 1
    %1957 = vsyncpa %s1956, 1

// kernel: blip3o_attention_block.7
$region0: #{blip3o_attention_block.7}
  #allocation0 [shape = 'u32[]', space=smem, size = 0x4, offset = 0x4, fixed_abs, tag = 'smem constant byte address 0x4 - core index']
  #allocation1 [shape = 'u32[144,128]{1,0:T(1,128)}', space=vmem, size = 0x12000, scoped, tag = 'internal scratch']
  %s0 = inlined_call_operand.hbm [shape: f32[2,8,48], index: 0, kind: input, shape index: {}]
  %s1 = inlined_call_operand.hbm [shape: f32[1,48], index: 1, kind: input, shape index: {}]
  %s2 = inlined_call_operand.hbm [shape: f32[1,48], index: 2, kind: input, shape index: {}]
  %s3 = inlined_call_operand.hbm [shape: f32[48,32], index: 3, kind: input, shape index: {}]
  %s4 = inlined_call_operand.hbm [shape: f32[1,32], index: 4, kind: input, shape index: {}]
  %s5 = inlined_call_operand.hbm [shape: f32[48,32], index: 5, kind: input, shape index: {}]
  %s6 = inlined_call_operand.hbm [shape: f32[1,32], index: 6, kind: input, shape index: {}]
  %s7 = inlined_call_operand.hbm [shape: f32[2,8,32], index: 7, kind: output, shape index: {0}]
  %s8 = inlined_call_operand.hbm [shape: f32[2,8,32], index: 8, kind: output, shape index: {1}]
  %9 = xla_tuple %s7, %s8
  %s10 = sld [smem:[#allocation0]]
  $region97: #{blip3o_attention_block.7} parent=0
    _
  %s12 = ssub.s32 1, %s10
  %s13 = scalar_select 0, %s12, %s10
  $region1: #{blip3o_attention_block.7} parent=0
    #allocation2 [shape = 'u8[8192]{0}', space=vmem, size = 0x2000, scoped, tag = 'input window, operand 0']
    #allocation3 [shape = 's32[2]{0}', space=sflag, size = 0x8, scoped, tag = 'scoped memory for blip3o_attention_block.7']
    #allocation4 [shape = 's32[2]{0}', space=sflag, size = 0x8, scoped, tag = 'scoped memory for blip3o_attention_block.7']
    #allocation5 [shape = 'u8[512]{0}', space=vmem, size = 0x400, scoped, tag = 'input window, operand 1, single buffered']
    #allocation6 [shape = 's32[1]{0}', space=sflag, size = 0x4, scoped, tag = 'scoped memory for blip3o_attention_block.7']
    #allocation7 [shape = 'u8[512]{0}', space=vmem, size = 0x400, scoped, tag = 'input window, operand 2, single buffered']
    #allocation8 [shape = 'u8[24576]{0}', space=vmem, size = 0x6000, scoped, tag = 'input window, operand 3, single buffered']
    #allocation9 [shape = 's32[1]{0}', space=sflag, size = 0x4, scoped, tag = 'scoped memory for blip3o_attention_block.7']
    #allocation10 [shape = 'u8[512]{0}', space=vmem, size = 0x400, scoped, tag = 'input window, operand 4, single buffered']
    #allocation11 [shape = 'u8[24576]{0}', space=vmem, size = 0x6000, scoped, tag = 'input window, operand 5, single buffered']
    #allocation12 [shape = 's32[1]{0}', space=sflag, size = 0x4, scoped, tag = 'scoped memory for blip3o_attention_block.7']
    #allocation13 [shape = 'u8[512]{0}', space=vmem, size = 0x400, scoped, tag = 'input window, operand 6, single buffered']
    #allocation14 [shape = 'u8[8192]{0}', space=vmem, size = 0x2000, scoped, tag = 'output window, operand 0']
    #allocation15 [shape = 'u8[8192]{0}', space=vmem, size = 0x2000, scoped, tag = 'output window, operand 1']
    #allocation16 [shape = 's32[2]{0}', space=sflag, size = 0x8, scoped, tag = 'scoped memory for blip3o_attention_block.7']
    %14 = vsyncpa [#allocation3], 0
    %s15 = scalar_lea.sflag [#allocation3], 1
    %16 = vsyncpa %s15, 0
    %17 = vsyncpa [#allocation6], 0
    %18 = vsyncpa [#allocation9], 0
    %19 = vsyncpa [#allocation12], 0
    %20 = vsyncpa [#allocation4], 0
    %s21 = scalar_lea.sflag [#allocation4], 1
    %22 = vsyncpa %s21, 0
    %23 = vsyncpa [#allocation16], 0
    %s24 = scalar_lea.sflag [#allocation16], 1
    %25 = vsyncpa %s24, 0
    loop: start=0, step=1, limit=4
    $region2: #{blip3o_attention_block.7} parent=1 // loop_pre_header
      _
    $region3: #{blip3o_attention_block.7} parent=1 // loop_header
      %s27 = sphi 0, %s31
      %p28 = scmp.ge.s32.totalorder %s27, 4
      %s34 = sphi 0, %s46
      %s35 = sphi 0, %s42
      %s36 = sphi 0, %s34
      %s37 = sphi 0, %s35
      %s38 = sphi 0, %s36
      %s39 = sphi 0, %s37
      %s51 = sphi 0, %s53
      %s54 = sphi 0, %s51
      %s55 = sphi 0, %s54
      %s71 = sphi 0, %s55
      %s75 = sphi 0, %s75
      %s77 = sphi 0, %s75
      %s78 = sphi 0, %s77
      %s92 = sphi 0, %s78
      %s96 = sphi 0, %s96
      %s98 = sphi 0, %s96
      %s99 = sphi 0, %s98
      %s113 = sphi 0, %s99
      %s117 = sphi 0, %s117
      %s119 = sphi 0, %s117
      %s120 = sphi 0, %s119
      %s134 = sphi 0, %s120
      %s138 = sphi 0, %s138
      %s140 = sphi 0, %s138
      %s141 = sphi 0, %s140
      %s155 = sphi 0, %s141
      %s159 = sphi 0, %s159
      %s161 = sphi 0, %s159
      %s162 = sphi 0, %s161
      %s176 = sphi 0, %s162
      %s180 = sphi 0, %s180
      %s182 = sphi 0, %s180
      %s183 = sphi 0, %s182
      %s197 = sphi 0, %s183
      %s205 = sphi 0, %s207
      %s208 = sphi 0, %s205
      %s209 = sphi 0, %s208
      %s225 = sphi 0, %s209
      %s233 = sphi 0, %s235
      %s236 = sphi 0, %s233
      %s237 = sphi 0, %s236
      %s253 = sphi 0, %s237
    $region4: #{blip3o_attention_block.7} parent=1 // loop_header_branch
      %30 = sbr.rel (%p28) target = $region8
    $region5: #{blip3o_attention_block.7} parent=1 // loop_body
      %s32 = ssub.s32 %s27, 1
      %s33 = ssub.s32 %s27, 2
      %s40 = sadd.s32 1, %s35
      %p41 = scmp.ge.s32.totalorder %s40, 1
      %s42 = scalar_select %p41, 0, %s40
      %s43 = sadd.s32 1, %s34
      %s44 = scalar_select %p41, %s43, %s34
      %p45 = scmp.ge.s32.totalorder %s44, 2
      %s46 = scalar_select %p45, 0, %s44
      %s47 = ssub.s32 %s34, %s46
      %s48 = ssub.s32 %s35, %s42
      %s49 = sor.u32 %s47, %s48
      %p50 = scmp.eq.s32.totalorder %s49, 0
      %s52 = sadd.s32 %s51, 1
      %s53 = scalar_select %p50, %s51, %s52
      %p56 = pneg %p50
      %p57 = scmp.eq.s32.totalorder %s27, 1
      %p58 = por %p56, %p57
      %p59 = scmp.ne.s32.totalorder %s51, %s54
      %p60 = scmp.eq.s32.totalorder %s27, 0
      %p61 = por %p59, %p60
      %p62 = scmp.ne.s32.totalorder %s51, %s54
      %p63 = scmp.eq.s32.totalorder %s32, 1
      %p64 = por %p62, %p63
      %p65 = scmp.ne.s32.totalorder %s54, %s55
      %p66 = scmp.eq.s32.totalorder %s32, 0
      %p67 = por %p65, %p66
      %p68 = scmp.ne.s32.totalorder %s54, %s55
      %p69 = scmp.eq.s32.totalorder %s33, 1
      %p70 = por %p68, %p69
      %p72 = scmp.ne.s32.totalorder %s55, %s71
      %p73 = scmp.eq.s32.totalorder %s33, 0
      %p74 = por %p72, %p73
      %s76 = sadd.s32 %s75, 1
      %p79 = scmp.eq.s32.totalorder %s27, 1
      %p80 = scmp.ne.s32.totalorder %s75, %s77
      %p81 = scmp.eq.s32.totalorder %s27, 0
      %p82 = por %p80, %p81
      %p83 = scmp.ne.s32.totalorder %s75, %s77
      %p84 = scmp.eq.s32.totalorder %s32, 1
      %p85 = por %p83, %p84
      %p86 = scmp.ne.s32.totalorder %s77, %s78
      %p87 = scmp.eq.s32.totalorder %s32, 0
      %p88 = por %p86, %p87
      %p89 = scmp.ne.s32.totalorder %s77, %s78
      %p90 = scmp.eq.s32.totalorder %s33, 1
      %p91 = por %p89, %p90
      %p93 = scmp.ne.s32.totalorder %s78, %s92
      %p94 = scmp.eq.s32.totalorder %s33, 0
      %p95 = por %p93, %p94
      %s97 = sadd.s32 %s96, 1
      %p100 = scmp.eq.s32.totalorder %s27, 1
      %p101 = scmp.ne.s32.totalorder %s96, %s98
      %p102 = scmp.eq.s32.totalorder %s27, 0
      %p103 = por %p101, %p102
      %p104 = scmp.ne.s32.totalorder %s96, %s98
      %p105 = scmp.eq.s32.totalorder %s32, 1
      %p106 = por %p104, %p105
      %p107 = scmp.ne.s32.totalorder %s98, %s99
      %p108 = scmp.eq.s32.totalorder %s32, 0
      %p109 = por %p107, %p108
      %p110 = scmp.ne.s32.totalorder %s98, %s99
      %p111 = scmp.eq.s32.totalorder %s33, 1
      %p112 = por %p110, %p111
      %p114 = scmp.ne.s32.totalorder %s99, %s113
      %p115 = scmp.eq.s32.totalorder %s33, 0
      %p116 = por %p114, %p115
      %s118 = sadd.s32 %s117, 1
      %p121 = scmp.eq.s32.totalorder %s27, 1
      %p122 = scmp.ne.s32.totalorder %s117, %s119
      %p123 = scmp.eq.s32.totalorder %s27, 0
      %p124 = por %p122, %p123
      %p125 = scmp.ne.s32.totalorder %s117, %s119
      %p126 = scmp.eq.s32.totalorder %s32, 1
      %p127 = por %p125, %p126
      %p128 = scmp.ne.s32.totalorder %s119, %s120
      %p129 = scmp.eq.s32.totalorder %s32, 0
      %p130 = por %p128, %p129
      %p131 = scmp.ne.s32.totalorder %s119, %s120
      %p132 = scmp.eq.s32.totalorder %s33, 1
      %p133 = por %p131, %p132
      %p135 = scmp.ne.s32.totalorder %s120, %s134
      %p136 = scmp.eq.s32.totalorder %s33, 0
      %p137 = por %p135, %p136
      %s139 = sadd.s32 %s138, 1
      %p142 = scmp.eq.s32.totalorder %s27, 1
      %p143 = scmp.ne.s32.totalorder %s138, %s140
      %p144 = scmp.eq.s32.totalorder %s27, 0
      %p145 = por %p143, %p144
      %p146 = scmp.ne.s32.totalorder %s138, %s140
      %p147 = scmp.eq.s32.totalorder %s32, 1
      %p148 = por %p146, %p147
      %p149 = scmp.ne.s32.totalorder %s140, %s141
      %p150 = scmp.eq.s32.totalorder %s32, 0
      %p151 = por %p149, %p150
      %p152 = scmp.ne.s32.totalorder %s140, %s141
      %p153 = scmp.eq.s32.totalorder %s33, 1
      %p154 = por %p152, %p153
      %p156 = scmp.ne.s32.totalorder %s141, %s155
      %p157 = scmp.eq.s32.totalorder %s33, 0
      %p158 = por %p156, %p157
      %s160 = sadd.s32 %s159, 1
      %p163 = scmp.eq.s32.totalorder %s27, 1
      %p164 = scmp.ne.s32.totalorder %s159, %s161
      %p165 = scmp.eq.s32.totalorder %s27, 0
      %p166 = por %p164, %p165
      %p167 = scmp.ne.s32.totalorder %s159, %s161
      %p168 = scmp.eq.s32.totalorder %s32, 1
      %p169 = por %p167, %p168
      %p170 = scmp.ne.s32.totalorder %s161, %s162
      %p171 = scmp.eq.s32.totalorder %s32, 0
      %p172 = por %p170, %p171
      %p173 = scmp.ne.s32.totalorder %s161, %s162
      %p174 = scmp.eq.s32.totalorder %s33, 1
      %p175 = por %p173, %p174
      %p177 = scmp.ne.s32.totalorder %s162, %s176
      %p178 = scmp.eq.s32.totalorder %s33, 0
      %p179 = por %p177, %p178
      %s181 = sadd.s32 %s180, 1
      %p184 = scmp.eq.s32.totalorder %s27, 1
      %p185 = scmp.ne.s32.totalorder %s180, %s182
      %p186 = scmp.eq.s32.totalorder %s27, 0
      %p187 = por %p185, %p186
      %p188 = scmp.ne.s32.totalorder %s180, %s182
      %p189 = scmp.eq.s32.totalorder %s32, 1
      %p190 = por %p188, %p189
      %p191 = scmp.ne.s32.totalorder %s182, %s183
      %p192 = scmp.eq.s32.totalorder %s32, 0
      %p193 = por %p191, %p192
      %p194 = scmp.ne.s32.totalorder %s182, %s183
      %p195 = scmp.eq.s32.totalorder %s33, 1
      %p196 = por %p194, %p195
      %p198 = scmp.ne.s32.totalorder %s183, %s197
      %p199 = scmp.eq.s32.totalorder %s33, 0
      %p200 = por %p198, %p199
      %s201 = ssub.s32 %s34, %s46
      %s202 = ssub.s32 %s35, %s42
      %s203 = sor.u32 %s201, %s202
      %p204 = scmp.eq.s32.totalorder %s203, 0
      %s206 = sadd.s32 %s205, 1
      %s207 = scalar_select %p204, %s205, %s206
      %p210 = pneg %p204
      %p211 = scmp.eq.s32.totalorder %s27, 1
      %p212 = por %p210, %p211
      %p213 = scmp.ne.s32.totalorder %s205, %s208
      %p214 = scmp.eq.s32.totalorder %s27, 0
      %p215 = por %p213, %p214
      %p216 = scmp.ne.s32.totalorder %s205, %s208
      %p217 = scmp.eq.s32.totalorder %s32, 1
      %p218 = por %p216, %p217
      %p219 = scmp.ne.s32.totalorder %s208, %s209
      %p220 = scmp.eq.s32.totalorder %s32, 0
      %p221 = por %p219, %p220
      %p222 = scmp.ne.s32.totalorder %s208, %s209
      %p223 = scmp.eq.s32.totalorder %s33, 1
      %p224 = por %p222, %p223
      %p226 = scmp.ne.s32.totalorder %s209, %s225
      %p227 = scmp.eq.s32.totalorder %s33, 0
      %p228 = por %p226, %p227
      %s229 = ssub.s32 %s34, %s46
      %s230 = ssub.s32 %s35, %s42
      %s231 = sor.u32 %s229, %s230
      %p232 = scmp.eq.s32.totalorder %s231, 0
      %s234 = sadd.s32 %s233, 1
      %s235 = scalar_select %p232, %s233, %s234
      %p238 = pneg %p232
      %p239 = scmp.eq.s32.totalorder %s27, 1
      %p240 = por %p238, %p239
      %p241 = scmp.ne.s32.totalorder %s233, %s236
      %p242 = scmp.eq.s32.totalorder %s27, 0
      %p243 = por %p241, %p242
      %p244 = scmp.ne.s32.totalorder %s233, %s236
      %p245 = scmp.eq.s32.totalorder %s32, 1
      %p246 = por %p244, %p245
      %p247 = scmp.ne.s32.totalorder %s236, %s237
      %p248 = scmp.eq.s32.totalorder %s32, 0
      %p249 = por %p247, %p248
      %p250 = scmp.ne.s32.totalorder %s236, %s237
      %p251 = scmp.eq.s32.totalorder %s33, 1
      %p252 = por %p250, %p251
      %p254 = scmp.ne.s32.totalorder %s237, %s253
      %p255 = scmp.eq.s32.totalorder %s33, 0
      %p256 = por %p254, %p255
      %p257 = scmp.le.s32.totalorder 1, %s27
      %p258 = scmp.lt.s32.totalorder %s27, 3
      %p259 = pnand %p257, %p258
      %p260 = pneg %p259
      // Predicated region
      $region9: #{blip3o_attention_block.7} parent=5 // pred_check
        _
      $region10: #{blip3o_attention_block.7} parent=5 // pred_check_branch
        %262 = sbr.rel (%p259) target = $region12
      $region11: #{blip3o_attention_block.7} parent=5 // pred_region
        %s263 = ssub.s32 %s27, 1
        // Predicated region
        $region13: #{blip3o_attention_block.7} parent=11 // pred_check
          %p264 = pneg %p88
        $region14: #{blip3o_attention_block.7} parent=11 // pred_check_branch
          %266 = sbr.rel (%p264) target = $region16
        $region15: #{blip3o_attention_block.7} parent=11 // pred_region
          %s268 = ssub.s32 16, 16
          %269 = vsyncadd [#allocation6], %s268
          %s271 = sshll.u32 [#allocation5], 4
          %s272 = int_to_ptr.vmem [resolvable:$true] %s271
          %274 = dma.hbm_to_vmem [thread:$0]  %s1, 16, %s272, [#allocation6]
        $region16: #{blip3o_attention_block.7} parent=11 // pred_fallthru
          _
        // Predicated region
        $region17: #{blip3o_attention_block.7} parent=11 // pred_check
          %p275 = pneg %p109
        $region18: #{blip3o_attention_block.7} parent=11 // pred_check_branch
          %277 = sbr.rel (%p275) target = $region20
        $region19: #{blip3o_attention_block.7} parent=11 // pred_region
          %s279 = ssub.s32 16, 16
          %280 = vsyncadd [#allocation6], %s279
          %s282 = sshll.u32 [#allocation7], 4
          %s283 = int_to_ptr.vmem [resolvable:$true] %s282
          %285 = dma.hbm_to_vmem [thread:$0]  %s2, 16, %s283, [#allocation6]
        $region20: #{blip3o_attention_block.7} parent=11 // pred_fallthru
          _
        // Predicated region
        $region21: #{blip3o_attention_block.7} parent=11 // pred_check
          %p286 = pneg %p130
        $region22: #{blip3o_attention_block.7} parent=11 // pred_check_branch
          %288 = sbr.rel (%p286) target = $region24
        $region23: #{blip3o_attention_block.7} parent=11 // pred_region
          %s290 = ssub.s32 768, 768
          %291 = vsyncadd [#allocation9], %s290
          %s292 = sshll.u32 [#allocation8], 4
          %s293 = int_to_ptr.vmem [resolvable:$true] %s292
          %298 = dma.hbm_to_vmem [thread:$0]  %s3, 768, %s293, [#allocation9], 128, 128, 8
        $region24: #{blip3o_attention_block.7} parent=11 // pred_fallthru
          _
        // Predicated region
        $region25: #{blip3o_attention_block.7} parent=11 // pred_check
          %p299 = pneg %p151
        $region26: #{blip3o_attention_block.7} parent=11 // pred_check_branch
          %301 = sbr.rel (%p299) target = $region28
        $region27: #{blip3o_attention_block.7} parent=11 // pred_region
          %s303 = ssub.s32 16, 16
          %304 = vsyncadd [#allocation9], %s303
          %s306 = sshll.u32 [#allocation10], 4
          %s307 = int_to_ptr.vmem [resolvable:$true] %s306
          %309 = dma.hbm_to_vmem [thread:$0]  %s4, 16, %s307, [#allocation9]
        $region28: #{blip3o_attention_block.7} parent=11 // pred_fallthru
          _
        // Predicated region
        $region29: #{blip3o_attention_block.7} parent=11 // pred_check
          %p310 = pneg %p172
        $region30: #{blip3o_attention_block.7} parent=11 // pred_check_branch
          %312 = sbr.rel (%p310) target = $region32
        $region31: #{blip3o_attention_block.7} parent=11 // pred_region
          %s314 = ssub.s32 768, 768
          %315 = vsyncadd [#allocation12], %s314
          %s316 = sshll.u32 [#allocation11], 4
          %s317 = int_to_ptr.vmem [resolvable:$true] %s316
          %322 = dma.hbm_to_vmem [thread:$0]  %s5, 768, %s317, [#allocation12], 128, 128, 8
        $region32: #{blip3o_attention_block.7} parent=11 // pred_fallthru
          _
        // Predicated region
        $region33: #{blip3o_attention_block.7} parent=11 // pred_check
          %p323 = pneg %p193
        $region34: #{blip3o_attention_block.7} parent=11 // pred_check_branch
          %325 = sbr.rel (%p323) target = $region36
        $region35: #{blip3o_attention_block.7} parent=11 // pred_region
          %s327 = ssub.s32 16, 16
          %328 = vsyncadd [#allocation12], %s327
          %s330 = sshll.u32 [#allocation13], 4
          %s331 = int_to_ptr.vmem [resolvable:$true] %s330
          %333 = dma.hbm_to_vmem [thread:$0]  %s6, 16, %s331, [#allocation12]
        $region36: #{blip3o_attention_block.7} parent=11 // pred_fallthru
          _
      $region12: #{blip3o_attention_block.7} parent=5 // pred_fallthru
        _
      %p334 = scmp.lt.s32.totalorder %s27, 2
      // Predicated region
      $region37: #{blip3o_attention_block.7} parent=5 // pred_check
        %p335 = pneg %p334
      $region38: #{blip3o_attention_block.7} parent=5 // pred_check_branch
        %337 = sbr.rel (%p335) target = $region40
      $region39: #{blip3o_attention_block.7} parent=5 // pred_region
        // Predicated region
        $region41: #{blip3o_attention_block.7} parent=39 // pred_check
          %p338 = pneg %p61
        $region42: #{blip3o_attention_block.7} parent=39 // pred_check_branch
          %340 = sbr.rel (%p338) target = $region44
        $region43: #{blip3o_attention_block.7} parent=39 // pred_region
          %s341 = sand.u32 %s51, 1
          %s342 = scalar_lea.sflag [#allocation3], %s341
          %s343 = sand.u32 %s51, 1
          %s344 = smul.addr %s343, 8
          %s345 = scalar_lea.vmem [#allocation2], %s344
          %s347 = ssub.s32 128, 128
          %348 = vsyncadd %s342, %s347
          %s349 = sadd.s32 %s35, %s34
          %s350 = smul.addr %s349, 128
          %s351 = scalar_lea.hbm %s0, %s350
          %s353 = sshll.u32 %s345, 4
          %s354 = int_to_ptr.vmem [resolvable:$true] %s353
          %356 = dma.hbm_to_vmem [thread:$0]  %s351, 128, %s354, %s342
        $region44: #{blip3o_attention_block.7} parent=39 // pred_fallthru
          _
      $region40: #{blip3o_attention_block.7} parent=5 // pred_fallthru
        _
      %p357 = scmp.le.s32.totalorder 1, %s27
      %p358 = scmp.lt.s32.totalorder %s27, 3
      %p359 = pnand %p357, %p358
      %p360 = pneg %p359
      // Predicated region
      $region45: #{blip3o_attention_block.7} parent=5 // pred_check
        _
      $region46: #{blip3o_attention_block.7} parent=5 // pred_check_branch
        %362 = sbr.rel (%p359) target = $region48
      $region47: #{blip3o_attention_block.7} parent=5 // pred_region
        %s363 = ssub.s32 %s27, 1
        %s364 = sand.u32 %s54, 1
        %s365 = scalar_lea.sflag [#allocation3], %s364
        %s366 = sand.u32 %s54, 1
        %s367 = smul.addr %s366, 8
        %s368 = scalar_lea.vmem [#allocation2], %s367
        // Predicated region
        $region49: #{blip3o_attention_block.7} parent=47 // pred_check
          %p369 = pneg %p67
        $region50: #{blip3o_attention_block.7} parent=47 // pred_check_branch
          %371 = sbr.rel (%p369) target = $region52
        $region51: #{blip3o_attention_block.7} parent=47 // pred_region
          %372 = dma.done %s365, 128
        $region52: #{blip3o_attention_block.7} parent=47 // pred_fallthru
          _
        // Predicated region
        $region53: #{blip3o_attention_block.7} parent=47 // pred_check
          %p373 = pneg %p88
        $region54: #{blip3o_attention_block.7} parent=47 // pred_check_branch
          %375 = sbr.rel (%p373) target = $region56
        $region55: #{blip3o_attention_block.7} parent=47 // pred_region
          %376 = dma.done [#allocation6], 16
        $region56: #{blip3o_attention_block.7} parent=47 // pred_fallthru
          _
        // Predicated region
        $region57: #{blip3o_attention_block.7} parent=47 // pred_check
          %p377 = pneg %p109
        $region58: #{blip3o_attention_block.7} parent=47 // pred_check_branch
          %379 = sbr.rel (%p377) target = $region60
        $region59: #{blip3o_attention_block.7} parent=47 // pred_region
          %380 = dma.done [#allocation6], 16
        $region60: #{blip3o_attention_block.7} parent=47 // pred_fallthru
          _
        // Predicated region
        $region61: #{blip3o_attention_block.7} parent=47 // pred_check
          %p381 = pneg %p130
        $region62: #{blip3o_attention_block.7} parent=47 // pred_check_branch
          %383 = sbr.rel (%p381) target = $region64
        $region63: #{blip3o_attention_block.7} parent=47 // pred_region
          %384 = dma.done [#allocation9], 768
        $region64: #{blip3o_attention_block.7} parent=47 // pred_fallthru
          _
        // Predicated region
        $region65: #{blip3o_attention_block.7} parent=47 // pred_check
          %p385 = pneg %p151
        $region66: #{blip3o_attention_block.7} parent=47 // pred_check_branch
          %387 = sbr.rel (%p385) target = $region68
        $region67: #{blip3o_attention_block.7} parent=47 // pred_region
          %388 = dma.done [#allocation9], 16
        $region68: #{blip3o_attention_block.7} parent=47 // pred_fallthru
          _
        // Predicated region
        $region69: #{blip3o_attention_block.7} parent=47 // pred_check
          %p389 = pneg %p172
        $region70: #{blip3o_attention_block.7} parent=47 // pred_check_branch
          %391 = sbr.rel (%p389) target = $region72
        $region71: #{blip3o_attention_block.7} parent=47 // pred_region
          %392 = dma.done [#allocation12], 768
        $region72: #{blip3o_attention_block.7} parent=47 // pred_fallthru
          _
        // Predicated region
        $region73: #{blip3o_attention_block.7} parent=47 // pred_check
          %p393 = pneg %p193
        $region74: #{blip3o_attention_block.7} parent=47 // pred_check_branch
          %395 = sbr.rel (%p393) target = $region76
        $region75: #{blip3o_attention_block.7} parent=47 // pred_region
          %396 = dma.done [#allocation12], 16
        $region76: #{blip3o_attention_block.7} parent=47 // pred_fallthru
          _
        %s397 = sand.u32 %s54, 1
        %s398 = scalar_lea.sflag [#allocation3], %s397
        %s399 = sand.u32 %s54, 1
        %s400 = smul.addr %s399, 8
        %s401 = scalar_lea.vmem [#allocation2], %s400
        %p402 = pneg %p67
        %p403 = pneg %p64
        %p404 = pneg %p88
        %p405 = pneg %p85
        %p406 = pneg %p109
        %p407 = pneg %p106
        %p408 = pneg %p130
        %p409 = pneg %p127
        %p410 = pneg %p151
        %p411 = pneg %p148
        %p412 = pneg %p172
        %p413 = pneg %p169
        %p414 = pneg %p193
        %p415 = pneg %p190
        %p416 = pneg %p221
        %p417 = pneg %p218
        %s418 = sand.u32 %s208, 1
        %s419 = scalar_lea.sflag [#allocation4], %s418
        %s420 = sand.u32 %s208, 1
        %s421 = smul.addr %s420, 8
        %s422 = scalar_lea.vmem [#allocation14], %s421
        %p423 = pneg %p249
        %p424 = pneg %p246
        %s425 = sand.u32 %s236, 1
        %s426 = scalar_lea.sflag [#allocation16], %s425
        %s427 = sand.u32 %s236, 1
        %s428 = smul.addr %s427, 8
        %s429 = scalar_lea.vmem [#allocation15], %s428
        %v430 = vld [vmem:[%s368] sm:$0xff]
        %v431 = vld [vmem:[#allocation5] sm:$0x1]
        %v432 = vld [vmem:[#allocation7] sm:$0x1]
        %vm433 = vcmask 392192
        %v434 = vsel %vm433, %v430, 0.0
        %435 = vadd.xlane.f32.xlu0 %v434
        %v436 = vpop.xlane.xlu0 %435
        %v437 = vrcp.pop 48.0
        %v438 = vmul.f32 %v436, %v437
        %v439 = vsub.f32 %v430, %v438
        %v440 = vmul.f32 %v439, %v439
        %v441 = vsel %vm433, %v440, 0.0
        %442 = vadd.xlane.f32.xlu0 %v441
        %v443 = vpop.xlane.xlu0 %442
        %v444 = vmul.f32 %v443, %v437
        %v445 = vadd.f32 %v444, 1e-05
        %v446 = vrsqrt.pop %v445
        %v447 = vmul.f32 %v439, %v446
        %v449 = vlaneseq
        %v450 = vshrl.u32 %v449, 7
        %v451 = vsub.s32 0, %v450
        %v452 = vrot.slane %v431, %v451
        %v454 = vmul.f32 %v447, %v452
        %v456 = vlaneseq
        %v457 = vshrl.u32 %v456, 7
        %v458 = vsub.s32 0, %v457
        %v459 = vrot.slane %v432, %v458
        %v461 = vadd.f32 %v454, %v459
        %v462 = vld [vmem:[#allocation8] sm:$0xff]
        %v463 = vld [vmem:[#allocation8 + $0x8] sm:$0xff]
        %v464 = vld [vmem:[#allocation8 + $0x10] sm:$0xff]
        %v465 = vld [vmem:[#allocation8 + $0x18] sm:$0xff]
        %v466 = vld [vmem:[#allocation8 + $0x20] sm:$0xff]
        %v467 = vld [vmem:[#allocation8 + $0x28] sm:$0xff]
        %v468 = vld [vmem:[#allocation10] sm:$0x1]
        %v470 = vlaneseq
        %v471 = vshrl.u32 %v470, 7
        %v472 = vsub.s32 0, %v471
        %v473 = vrot.slane %v468, %v472
        %v476 = vsel %vm433, %v461, 0
        %478 = vmatprep.subr.mxu0 0.0
        %479 = vmatpush1.msra.mxu0 %v462
        %480 = vmatprep.subr.mxu0 0.0
        %481 = vmatpush1.msra.mxu0 %v463
        %482 = vmatprep.subr.mxu0 0.0
        %483 = vmatpush1.msra.mxu0 %v464
        %484 = vmatprep.subr.mxu0 0.0
        %485 = vmatpush1.msra.mxu0 %v465
        %486 = vmatprep.subr.mxu0 0.0
        %487 = vmatpush1.msra.mxu0 %v466
        %488 = vmatprep.subr.mxu0 0.0
        %489 = vmatpush1.msra.mxu0 %v467
        %490 = vmatprep.subr.mxu0 0.0
        %491 = vmatpush1.msra.mxu0 0.0
        %492 = vmatprep.subr.mxu0 0.0
        %493 = vmatpush1.msra.mxu0 0.0
        %494 = vmatprep.subr.mxu0 0.0
        %495 = vmatpush1.msra.mxu0 0.0
        %496 = vmatprep.subr.mxu0 0.0
        %497 = vmatpush1.msra.mxu0 0.0
        %498 = vmatprep.subr.mxu0 0.0
        %499 = vmatpush1.msra.mxu0 0.0
        %500 = vmatprep.subr.mxu0 0.0
        %501 = vmatpush1.msra.mxu0 0.0
        %502 = vmatprep.subr.mxu0 0.0
        %503 = vmatpush1.msra.mxu0 0.0
        %504 = vmatprep.subr.mxu0 0.0
        %505 = vmatpush1.msra.mxu0 0.0
        %506 = vmatprep.subr.mxu0 0.0
        %507 = vmatpush1.msra.mxu0 0.0
        %508 = vmatprep.subr.mxu0 0.0
        %509 = vmatpush1.msra.mxu0 0.0
        %510 = vmatprep.subr.mxu0 0.0
        %511 = vmatpush1.msra.mxu0 0.0
        %512 = vmatprep.subr.mxu0 0.0
        %513 = vmatpush1.msra.mxu0 0.0
        %514 = vmatprep.subr.mxu0 0.0
        %515 = vmatpush1.msra.mxu0 0.0
        %516 = vmatprep.subr.mxu0 0.0
        %517 = vmatpush1.msra.mxu0 0.0
        %518 = vmatprep.subr.mxu0 0.0
        %519 = vmatpush1.msra.mxu0 0.0
        %520 = vmatprep.subr.mxu0 0.0
        %521 = vmatpush1.msra.mxu0 0.0
        %522 = vmatprep.subr.mxu0 0.0
        %523 = vmatpush1.msra.mxu0 0.0
        %524 = vmatprep.subr.mxu0 0.0
        %525 = vmatpush1.msra.mxu0 0.0
        %526 = vmatprep.subr.mxu0 0.0
        %527 = vmatpush1.msra.mxu0 0.0
        %528 = vmatprep.subr.mxu0 0.0
        %529 = vmatpush1.msra.mxu0 0.0
        %530 = vmatprep.subr.mxu0 0.0
        %531 = vmatpush1.msra.mxu0 0.0
        %532 = vmatprep.subr.mxu0 0.0
        %533 = vmatpush1.msra.mxu0 0.0
        %534 = vmatprep.subr.mxu0 0.0
        %535 = vmatpush1.msra.mxu0 0.0
        %536 = vmatprep.subr.mxu0 0.0
        %537 = vmatpush1.msra.mxu0 0.0
        %538 = vmatprep.subr.mxu0 0.0
        %539 = vmatpush1.msra.mxu0 0.0
        %540 = vmatprep.subr.mxu0 0.0
        %541 = vmatpush1.msra.mxu0 0.0
        %542 = vmatprep.mubr.f32.mxu0 0.0
        %543 = vmatmul.mubr.f32.gmra.mrb[0].mxu0 %v476
        %v544 = vpop.f32.mrb[0].mxu0
        %v545 = vadd.f32 %v473, %v544
        %v546 = vpop.f32.mrb[0].mxu0
        %547 = vdwg.mxu0
        %vm548 = vcmask 261120
        %549 = vst.msk [vmem:[%s422] sm:$0xff] %vm548, %v545
        %v550 = vld [vmem:[#allocation11] sm:$0xff]
        %v551 = vld [vmem:[#allocation11 + $0x8] sm:$0xff]
        %v552 = vld [vmem:[#allocation11 + $0x10] sm:$0xff]
        %v553 = vld [vmem:[#allocation11 + $0x18] sm:$0xff]
        %v554 = vld [vmem:[#allocation11 + $0x20] sm:$0xff]
        %v555 = vld [vmem:[#allocation11 + $0x28] sm:$0xff]
        %v556 = vld [vmem:[#allocation13] sm:$0x1]
        %v558 = vlaneseq
        %v559 = vshrl.u32 %v558, 7
        %v560 = vsub.s32 0, %v559
        %v561 = vrot.slane %v556, %v560
        %563 = vmatprep.subr.mxu0 0.0
        %564 = vmatpush1.msra.mxu0 %v550
        %565 = vmatprep.subr.mxu0 0.0
        %566 = vmatpush1.msra.mxu0 %v551
        %567 = vmatprep.subr.mxu0 0.0
        %568 = vmatpush1.msra.mxu0 %v552
        %569 = vmatprep.subr.mxu0 0.0
        %570 = vmatpush1.msra.mxu0 %v553
        %571 = vmatprep.subr.mxu0 0.0
        %572 = vmatpush1.msra.mxu0 %v554
        %573 = vmatprep.subr.mxu0 0.0
        %574 = vmatpush1.msra.mxu0 %v555
        %575 = vmatprep.subr.mxu0 0.0
        %576 = vmatpush1.msra.mxu0 0.0
        %577 = vmatprep.subr.mxu0 0.0
        %578 = vmatpush1.msra.mxu0 0.0
        %579 = vmatprep.subr.mxu0 0.0
        %580 = vmatpush1.msra.mxu0 0.0
        %581 = vmatprep.subr.mxu0 0.0
        %582 = vmatpush1.msra.mxu0 0.0
        %583 = vmatprep.subr.mxu0 0.0
        %584 = vmatpush1.msra.mxu0 0.0
        %585 = vmatprep.subr.mxu0 0.0
        %586 = vmatpush1.msra.mxu0 0.0
        %587 = vmatprep.subr.mxu0 0.0
        %588 = vmatpush1.msra.mxu0 0.0
        %589 = vmatprep.subr.mxu0 0.0
        %590 = vmatpush1.msra.mxu0 0.0
        %591 = vmatprep.subr.mxu0 0.0
        %592 = vmatpush1.msra.mxu0 0.0
        %593 = vmatprep.subr.mxu0 0.0
        %594 = vmatpush1.msra.mxu0 0.0
        %595 = vmatprep.subr.mxu0 0.0
        %596 = vmatpush1.msra.mxu0 0.0
        %597 = vmatprep.subr.mxu0 0.0
        %598 = vmatpush1.msra.mxu0 0.0
        %599 = vmatprep.subr.mxu0 0.0
        %600 = vmatpush1.msra.mxu0 0.0
        %601 = vmatprep.subr.mxu0 0.0
        %602 = vmatpush1.msra.mxu0 0.0
        %603 = vmatprep.subr.mxu0 0.0
        %604 = vmatpush1.msra.mxu0 0.0
        %605 = vmatprep.subr.mxu0 0.0
        %606 = vmatpush1.msra.mxu0 0.0
        %607 = vmatprep.subr.mxu0 0.0
        %608 = vmatpush1.msra.mxu0 0.0
        %609 = vmatprep.subr.mxu0 0.0
        %610 = vmatpush1.msra.mxu0 0.0
        %611 = vmatprep.subr.mxu0 0.0
        %612 = vmatpush1.msra.mxu0 0.0
        %613 = vmatprep.subr.mxu0 0.0
        %614 = vmatpush1.msra.mxu0 0.0
        %615 = vmatprep.subr.mxu0 0.0
        %616 = vmatpush1.msra.mxu0 0.0
        %617 = vmatprep.subr.mxu0 0.0
        %618 = vmatpush1.msra.mxu0 0.0
        %619 = vmatprep.subr.mxu0 0.0
        %620 = vmatpush1.msra.mxu0 0.0
        %621 = vmatprep.subr.mxu0 0.0
        %622 = vmatpush1.msra.mxu0 0.0
        %623 = vmatprep.subr.mxu0 0.0
        %624 = vmatpush1.msra.mxu0 0.0
        %625 = vmatprep.subr.mxu0 0.0
        %626 = vmatpush1.msra.mxu0 0.0
        %627 = vmatprep.mubr.f32.mxu0 0.0
        %628 = vmatmul.mubr.f32.gmra.mrb[0].mxu0 %v476
        %v629 = vpop.f32.mrb[0].mxu0
        %v630 = vadd.f32 %v561, %v629
        %v631 = vpop.f32.mrb[0].mxu0
        %632 = vdwg.mxu0
        %633 = vst.msk [vmem:[%s429] sm:$0xff] %vm548, %v630
        %s634 = sand.u32 %s208, 1
        %s635 = scalar_lea.sflag [#allocation4], %s634
        %s636 = sand.u32 %s208, 1
        %s637 = smul.addr %s636, 8
        %s638 = scalar_lea.vmem [#allocation14], %s637
        %s639 = sand.u32 %s236, 1
        %s640 = scalar_lea.sflag [#allocation16], %s639
        %s641 = sand.u32 %s236, 1
        %s642 = smul.addr %s641, 8
        %s643 = scalar_lea.vmem [#allocation15], %s642
        // Predicated region
        $region77: #{blip3o_attention_block.7} parent=47 // pred_check
          %p644 = pneg %p218
        $region78: #{blip3o_attention_block.7} parent=47 // pred_check_branch
          %646 = sbr.rel (%p644) target = $region80
        $region79: #{blip3o_attention_block.7} parent=47 // pred_region
          %s648 = ssub.s32 128, 128
          %649 = vsyncadd %s635, %s648
          %s650 = sadd.s32 %s37, %s36
          %s651 = smul.addr %s650, 128
          %s652 = scalar_lea.hbm %s7, %s651
          %s654 = sshll.u32 %s638, 4
          %s655 = int_to_ptr.vmem [resolvable:$true] %s654
          %657 = dma.vmem_to_hbm [thread:$0]  %s655, 128, %s652, %s635
        $region80: #{blip3o_attention_block.7} parent=47 // pred_fallthru
          _
        // Predicated region
        $region81: #{blip3o_attention_block.7} parent=47 // pred_check
          %p658 = pneg %p246
        $region82: #{blip3o_attention_block.7} parent=47 // pred_check_branch
          %660 = sbr.rel (%p658) target = $region84
        $region83: #{blip3o_attention_block.7} parent=47 // pred_region
          %s662 = ssub.s32 128, 128
          %663 = vsyncadd %s640, %s662
          %s664 = sadd.s32 %s37, %s36
          %s665 = smul.addr %s664, 128
          %s666 = scalar_lea.hbm %s8, %s665
          %s668 = sshll.u32 %s643, 4
          %s669 = int_to_ptr.vmem [resolvable:$true] %s668
          %671 = dma.vmem_to_hbm [thread:$0]  %s669, 128, %s666, %s640
        $region84: #{blip3o_attention_block.7} parent=47 // pred_fallthru
          _
      $region48: #{blip3o_attention_block.7} parent=5 // pred_fallthru
        _
      %p672 = scmp.le.s32.totalorder 2, %s27
      // Predicated region
      $region85: #{blip3o_attention_block.7} parent=5 // pred_check
        %p673 = pneg %p672
      $region86: #{blip3o_attention_block.7} parent=5 // pred_check_branch
        %675 = sbr.rel (%p673) target = $region88
      $region87: #{blip3o_attention_block.7} parent=5 // pred_region
        %s676 = ssub.s32 %s27, 2
        // Predicated region
        $region89: #{blip3o_attention_block.7} parent=87 // pred_check
          %p677 = pneg %p224
        $region90: #{blip3o_attention_block.7} parent=87 // pred_check_branch
          %679 = sbr.rel (%p677) target = $region92
        $region91: #{blip3o_attention_block.7} parent=87 // pred_region
          %s680 = sand.u32 %s209, 1
          %s681 = scalar_lea.sflag [#allocation4], %s680
          %s682 = sand.u32 %s209, 1
          %s683 = smul.addr %s682, 8
          %s684 = scalar_lea.vmem [#allocation14], %s683
          %685 = dma.done %s681, 128
        $region92: #{blip3o_attention_block.7} parent=87 // pred_fallthru
          _
        // Predicated region
        $region93: #{blip3o_attention_block.7} parent=87 // pred_check
          %p686 = pneg %p252
        $region94: #{blip3o_attention_block.7} parent=87 // pred_check_branch
          %688 = sbr.rel (%p686) target = $region96
        $region95: #{blip3o_attention_block.7} parent=87 // pred_region
          %s689 = sand.u32 %s237, 1
          %s690 = scalar_lea.sflag [#allocation16], %s689
          %s691 = sand.u32 %s237, 1
          %s692 = smul.addr %s691, 8
          %s693 = scalar_lea.vmem [#allocation15], %s692
          %694 = dma.done %s690, 128
        $region96: #{blip3o_attention_block.7} parent=87 // pred_fallthru
          _
      $region88: #{blip3o_attention_block.7} parent=5 // pred_fallthru
        _
    $region6: #{blip3o_attention_block.7} parent=1 // loop_footer
      %s31 = sadd.s32 1, %s27
    $region7: #{blip3o_attention_block.7} parent=1 // loop_footer_branch
      %26 = sbr.rel target = $region3
    $region8: #{blip3o_attention_block.7} parent=1 // loop_exit
      _
    %695 = vsyncpa [#allocation3], 1
    %s696 = scalar_lea.sflag [#allocation3], 1
    %697 = vsyncpa %s696, 1
    %698 = vsyncpa [#allocation6], 1
    %699 = vsyncpa [#allocation9], 1
    %700 = vsyncpa [#allocation12], 1
    %701 = vsyncpa [#allocation4], 1
    %s702 = scalar_lea.sflag [#allocation4], 1
    %703 = vsyncpa %s702, 1
    %704 = vsyncpa [#allocation16], 1
    %s705 = scalar_lea.sflag [#allocation16], 1
    %706 = vsyncpa %s705, 1

// kernel: blip3o_attention_block.9
$region0: #{blip3o_attention_block.9}
  #allocation0 [shape = 'u32[]', space=smem, size = 0x4, offset = 0x4, fixed_abs, tag = 'smem constant byte address 0x4 - core index']
  #allocation1 [shape = 'u32[144,128]{1,0:T(1,128)}', space=vmem, size = 0x12000, scoped, tag = 'internal scratch']
  %s0 = inlined_call_operand.hbm [shape: f32[2,8,32], index: 0, kind: input, shape index: {}]
  %s1 = inlined_call_operand.hbm [shape: f32[2,8,32], index: 1, kind: input, shape index: {}]
  %s2 = inlined_call_operand.hbm [shape: f32[2,8,32], index: 2, kind: input, shape index: {}]
  %s3 = inlined_call_operand.hbm [shape: f32[2,8,32], index: 3, kind: output, shape index: {}]
  %s4 = sld [smem:[#allocation0]]
  $region57: #{blip3o_attention_block.9} parent=0
    _
  %s6 = ssub.s32 1, %s4
  %s7 = scalar_select 0, %s6, %s4
  $region1: #{blip3o_attention_block.9} parent=0
    #allocation2 [shape = 'u8[8192]{0}', space=vmem, size = 0x2000, scoped, tag = 'input window, operand 0']
    #allocation3 [shape = 's32[2]{0}', space=sflag, size = 0x8, scoped, tag = 'scoped memory for blip3o_attention_block.9']
    #allocation4 [shape = 's32[2]{0}', space=sflag, size = 0x8, scoped, tag = 'scoped memory for blip3o_attention_block.9']
    #allocation5 [shape = 'u8[8192]{0}', space=vmem, size = 0x2000, scoped, tag = 'input window, operand 1']
    #allocation6 [shape = 's32[2]{0}', space=sflag, size = 0x8, scoped, tag = 'scoped memory for blip3o_attention_block.9']
    #allocation7 [shape = 'u8[8192]{0}', space=vmem, size = 0x2000, scoped, tag = 'input window, operand 2']
    #allocation8 [shape = 'u8[8192]{0}', space=vmem, size = 0x2000, scoped, tag = 'output window, operand 0']
    %8 = vsyncpa [#allocation3], 0
    %s9 = scalar_lea.sflag [#allocation3], 1
    %10 = vsyncpa %s9, 0
    %11 = vsyncpa [#allocation6], 0
    %s12 = scalar_lea.sflag [#allocation6], 1
    %13 = vsyncpa %s12, 0
    %14 = vsyncpa [#allocation4], 0
    %s15 = scalar_lea.sflag [#allocation4], 1
    %16 = vsyncpa %s15, 0
    loop: start=0, step=1, limit=4
    $region2: #{blip3o_attention_block.9} parent=1 // loop_pre_header
      _
    $region3: #{blip3o_attention_block.9} parent=1 // loop_header
      %s18 = sphi 0, %s22
      %p19 = scmp.ge.s32.totalorder %s18, 4
      %s25 = sphi 0, %s44
      %s26 = sphi 0, %s40
      %s27 = sphi 0, %s36
      %s28 = sphi 0, %s25
      %s29 = sphi 0, %s26
      %s30 = sphi 0, %s27
      %s31 = sphi 0, %s28
      %s32 = sphi 0, %s29
      %s33 = sphi 0, %s30
      %s51 = sphi 0, %s53
      %s54 = sphi 0, %s51
      %s55 = sphi 0, %s54
      %s71 = sphi 0, %s55
      %s79 = sphi 0, %s81
      %s82 = sphi 0, %s79
      %s83 = sphi 0, %s82
      %s99 = sphi 0, %s83
      %s107 = sphi 0, %s109
      %s110 = sphi 0, %s107
      %s111 = sphi 0, %s110
      %s127 = sphi 0, %s111
      %s137 = sphi 0, %s139
      %s140 = sphi 0, %s137
      %s141 = sphi 0, %s140
      %s157 = sphi 0, %s141
    $region4: #{blip3o_attention_block.9} parent=1 // loop_header_branch
      %21 = sbr.rel (%p19) target = $region8
    $region5: #{blip3o_attention_block.9} parent=1 // loop_body
      %s23 = ssub.s32 %s18, 1
      %s24 = ssub.s32 %s18, 2
      %s34 = sadd.s32 1, %s27
      %p35 = scmp.ge.s32.totalorder %s34, 1
      %s36 = scalar_select %p35, 0, %s34
      %s37 = sadd.s32 1, %s26
      %s38 = scalar_select %p35, %s37, %s26
      %p39 = scmp.ge.s32.totalorder %s38, 1
      %s40 = scalar_select %p39, 0, %s38
      %s41 = sadd.s32 1, %s25
      %s42 = scalar_select %p39, %s41, %s25
      %p43 = scmp.ge.s32.totalorder %s42, 2
      %s44 = scalar_select %p43, 0, %s42
      %s45 = ssub.s32 %s25, %s44
      %s46 = ssub.s32 %s27, %s36
      %s47 = sor.u32 %s45, %s46
      %s48 = ssub.s32 %s26, %s40
      %s49 = sor.u32 %s47, %s48
      %p50 = scmp.eq.s32.totalorder %s49, 0
      %s52 = sadd.s32 %s51, 1
      %s53 = scalar_select %p50, %s51, %s52
      %p56 = pneg %p50
      %p57 = scmp.eq.s32.totalorder %s18, 1
      %p58 = por %p56, %p57
      %p59 = scmp.ne.s32.totalorder %s51, %s54
      %p60 = scmp.eq.s32.totalorder %s18, 0
      %p61 = por %p59, %p60
      %p62 = scmp.ne.s32.totalorder %s51, %s54
      %p63 = scmp.eq.s32.totalorder %s23, 1
      %p64 = por %p62, %p63
      %p65 = scmp.ne.s32.totalorder %s54, %s55
      %p66 = scmp.eq.s32.totalorder %s23, 0
      %p67 = por %p65, %p66
      %p68 = scmp.ne.s32.totalorder %s54, %s55
      %p69 = scmp.eq.s32.totalorder %s24, 1
      %p70 = por %p68, %p69
      %p72 = scmp.ne.s32.totalorder %s55, %s71
      %p73 = scmp.eq.s32.totalorder %s24, 0
      %p74 = por %p72, %p73
      %s75 = ssub.s32 %s25, %s44
      %s76 = ssub.s32 %s26, %s40
      %s77 = sor.u32 %s75, %s76
      %p78 = scmp.eq.s32.totalorder %s77, 0
      %s80 = sadd.s32 %s79, 1
      %s81 = scalar_select %p78, %s79, %s80
      %p84 = pneg %p78
      %p85 = scmp.eq.s32.totalorder %s18, 1
      %p86 = por %p84, %p85
      %p87 = scmp.ne.s32.totalorder %s79, %s82
      %p88 = scmp.eq.s32.totalorder %s18, 0
      %p89 = por %p87, %p88
      %p90 = scmp.ne.s32.totalorder %s79, %s82
      %p91 = scmp.eq.s32.totalorder %s23, 1
      %p92 = por %p90, %p91
      %p93 = scmp.ne.s32.totalorder %s82, %s83
      %p94 = scmp.eq.s32.totalorder %s23, 0
      %p95 = por %p93, %p94
      %p96 = scmp.ne.s32.totalorder %s82, %s83
      %p97 = scmp.eq.s32.totalorder %s24, 1
      %p98 = por %p96, %p97
      %p100 = scmp.ne.s32.totalorder %s83, %s99
      %p101 = scmp.eq.s32.totalorder %s24, 0
      %p102 = por %p100, %p101
      %s103 = ssub.s32 %s25, %s44
      %s104 = ssub.s32 %s26, %s40
      %s105 = sor.u32 %s103, %s104
      %p106 = scmp.eq.s32.totalorder %s105, 0
      %s108 = sadd.s32 %s107, 1
      %s109 = scalar_select %p106, %s107, %s108
      %p112 = pneg %p106
      %p113 = scmp.eq.s32.totalorder %s18, 1
      %p114 = por %p112, %p113
      %p115 = scmp.ne.s32.totalorder %s107, %s110
      %p116 = scmp.eq.s32.totalorder %s18, 0
      %p117 = por %p115, %p116
      %p118 = scmp.ne.s32.totalorder %s107, %s110
      %p119 = scmp.eq.s32.totalorder %s23, 1
      %p120 = por %p118, %p119
      %p121 = scmp.ne.s32.totalorder %s110, %s111
      %p122 = scmp.eq.s32.totalorder %s23, 0
      %p123 = por %p121, %p122
      %p124 = scmp.ne.s32.totalorder %s110, %s111
      %p125 = scmp.eq.s32.totalorder %s24, 1
      %p126 = por %p124, %p125
      %p128 = scmp.ne.s32.totalorder %s111, %s127
      %p129 = scmp.eq.s32.totalorder %s24, 0
      %p130 = por %p128, %p129
      %s131 = ssub.s32 %s25, %s44
      %s132 = ssub.s32 %s27, %s36
      %s133 = sor.u32 %s131, %s132
      %s134 = ssub.s32 %s26, %s40
      %s135 = sor.u32 %s133, %s134
      %p136 = scmp.eq.s32.totalorder %s135, 0
      %s138 = sadd.s32 %s137, 1
      %s139 = scalar_select %p136, %s137, %s138
      %p142 = pneg %p136
      %p143 = scmp.eq.s32.totalorder %s18, 1
      %p144 = por %p142, %p143
      %p145 = scmp.ne.s32.totalorder %s137, %s140
      %p146 = scmp.eq.s32.totalorder %s18, 0
      %p147 = por %p145, %p146
      %p148 = scmp.ne.s32.totalorder %s137, %s140
      %p149 = scmp.eq.s32.totalorder %s23, 1
      %p150 = por %p148, %p149
      %p151 = scmp.ne.s32.totalorder %s140, %s141
      %p152 = scmp.eq.s32.totalorder %s23, 0
      %p153 = por %p151, %p152
      %p154 = scmp.ne.s32.totalorder %s140, %s141
      %p155 = scmp.eq.s32.totalorder %s24, 1
      %p156 = por %p154, %p155
      %p158 = scmp.ne.s32.totalorder %s141, %s157
      %p159 = scmp.eq.s32.totalorder %s24, 0
      %p160 = por %p158, %p159
      %p161 = scmp.le.s32.totalorder 1, %s18
      %p162 = scmp.lt.s32.totalorder %s18, 3
      %p163 = pnand %p161, %p162
      %p164 = pneg %p163
      // Predicated region
      $region9: #{blip3o_attention_block.9} parent=5 // pred_check
        _
      $region10: #{blip3o_attention_block.9} parent=5 // pred_check_branch
        %166 = sbr.rel (%p163) target = $region12
      $region11: #{blip3o_attention_block.9} parent=5 // pred_region
        %s167 = ssub.s32 %s18, 1
      $region12: #{blip3o_attention_block.9} parent=5 // pred_fallthru
        _
      %p168 = scmp.lt.s32.totalorder %s18, 2
      // Predicated region
      $region13: #{blip3o_attention_block.9} parent=5 // pred_check
        %p169 = pneg %p168
      $region14: #{blip3o_attention_block.9} parent=5 // pred_check_branch
        %171 = sbr.rel (%p169) target = $region16
      $region15: #{blip3o_attention_block.9} parent=5 // pred_region
        // Predicated region
        $region17: #{blip3o_attention_block.9} parent=15 // pred_check
          %p172 = pneg %p61
        $region18: #{blip3o_attention_block.9} parent=15 // pred_check_branch
          %174 = sbr.rel (%p172) target = $region20
        $region19: #{blip3o_attention_block.9} parent=15 // pred_region
          %s175 = sand.u32 %s51, 1
          %s176 = scalar_lea.sflag [#allocation3], %s175
          %s177 = sand.u32 %s51, 1
          %s178 = smul.addr %s177, 8
          %s179 = scalar_lea.vmem [#allocation2], %s178
          %s181 = ssub.s32 128, 128
          %182 = vsyncadd %s176, %s181
          %s183 = sadd.s32 %s26, %s27
          %s184 = sadd.s32 %s183, %s25
          %s185 = smul.addr %s184, 128
          %s186 = scalar_lea.hbm %s0, %s185
          %s188 = sshll.u32 %s179, 4
          %s189 = int_to_ptr.vmem [resolvable:$true] %s188
          %191 = dma.hbm_to_vmem [thread:$0]  %s186, 128, %s189, %s176
        $region20: #{blip3o_attention_block.9} parent=15 // pred_fallthru
          _
        // Predicated region
        $region21: #{blip3o_attention_block.9} parent=15 // pred_check
          %p192 = pneg %p89
        $region22: #{blip3o_attention_block.9} parent=15 // pred_check_branch
          %194 = sbr.rel (%p192) target = $region24
        $region23: #{blip3o_attention_block.9} parent=15 // pred_region
          %s195 = sand.u32 %s18, 1
          %s196 = scalar_lea.sflag [#allocation6], %s195
          %s197 = sand.u32 %s79, 1
          %s198 = smul.addr %s197, 8
          %s199 = scalar_lea.vmem [#allocation5], %s198
          %s201 = ssub.s32 128, 128
          %202 = vsyncadd %s196, %s201
          %s203 = sadd.s32 %s26, %s25
          %s204 = smul.addr %s203, 128
          %s205 = scalar_lea.hbm %s1, %s204
          %s207 = sshll.u32 %s199, 4
          %s208 = int_to_ptr.vmem [resolvable:$true] %s207
          %210 = dma.hbm_to_vmem [thread:$0]  %s205, 128, %s208, %s196
        $region24: #{blip3o_attention_block.9} parent=15 // pred_fallthru
          _
        // Predicated region
        $region25: #{blip3o_attention_block.9} parent=15 // pred_check
          %p211 = pneg %p117
        $region26: #{blip3o_attention_block.9} parent=15 // pred_check_branch
          %213 = sbr.rel (%p211) target = $region28
        $region27: #{blip3o_attention_block.9} parent=15 // pred_region
          %s214 = sand.u32 %s18, 1
          %s215 = scalar_lea.sflag [#allocation6], %s214
          %s216 = sand.u32 %s107, 1
          %s217 = smul.addr %s216, 8
          %s218 = scalar_lea.vmem [#allocation7], %s217
          %s220 = ssub.s32 128, 128
          %221 = vsyncadd %s215, %s220
          %s222 = sadd.s32 %s26, %s25
          %s223 = smul.addr %s222, 128
          %s224 = scalar_lea.hbm %s2, %s223
          %s226 = sshll.u32 %s218, 4
          %s227 = int_to_ptr.vmem [resolvable:$true] %s226
          %229 = dma.hbm_to_vmem [thread:$0]  %s224, 128, %s227, %s215
        $region28: #{blip3o_attention_block.9} parent=15 // pred_fallthru
          _
      $region16: #{blip3o_attention_block.9} parent=5 // pred_fallthru
        _
      %p230 = scmp.le.s32.totalorder 1, %s18
      %p231 = scmp.lt.s32.totalorder %s18, 3
      %p232 = pnand %p230, %p231
      %p233 = pneg %p232
      // Predicated region
      $region29: #{blip3o_attention_block.9} parent=5 // pred_check
        _
      $region30: #{blip3o_attention_block.9} parent=5 // pred_check_branch
        %235 = sbr.rel (%p232) target = $region32
      $region31: #{blip3o_attention_block.9} parent=5 // pred_region
        %s236 = ssub.s32 %s18, 1
        %s237 = sand.u32 %s54, 1
        %s238 = scalar_lea.sflag [#allocation3], %s237
        %s239 = sand.u32 %s54, 1
        %s240 = smul.addr %s239, 8
        %s241 = scalar_lea.vmem [#allocation2], %s240
        // Predicated region
        $region33: #{blip3o_attention_block.9} parent=31 // pred_check
          %p242 = pneg %p67
        $region34: #{blip3o_attention_block.9} parent=31 // pred_check_branch
          %244 = sbr.rel (%p242) target = $region36
        $region35: #{blip3o_attention_block.9} parent=31 // pred_region
          %245 = dma.done %s238, 128
        $region36: #{blip3o_attention_block.9} parent=31 // pred_fallthru
          _
        %s246 = sand.u32 %s23, 1
        %s247 = scalar_lea.sflag [#allocation6], %s246
        %s248 = sand.u32 %s82, 1
        %s249 = smul.addr %s248, 8
        %s250 = scalar_lea.vmem [#allocation5], %s249
        // Predicated region
        $region37: #{blip3o_attention_block.9} parent=31 // pred_check
          %p251 = pneg %p95
        $region38: #{blip3o_attention_block.9} parent=31 // pred_check_branch
          %253 = sbr.rel (%p251) target = $region40
        $region39: #{blip3o_attention_block.9} parent=31 // pred_region
          %254 = dma.done %s247, 128
        $region40: #{blip3o_attention_block.9} parent=31 // pred_fallthru
          _
        %s255 = sand.u32 %s23, 1
        %s256 = scalar_lea.sflag [#allocation6], %s255
        %s257 = sand.u32 %s110, 1
        %s258 = smul.addr %s257, 8
        %s259 = scalar_lea.vmem [#allocation7], %s258
        // Predicated region
        $region41: #{blip3o_attention_block.9} parent=31 // pred_check
          %p260 = pneg %p123
        $region42: #{blip3o_attention_block.9} parent=31 // pred_check_branch
          %262 = sbr.rel (%p260) target = $region44
        $region43: #{blip3o_attention_block.9} parent=31 // pred_region
          %263 = dma.done %s256, 128
        $region44: #{blip3o_attention_block.9} parent=31 // pred_fallthru
          _
        %s264 = sand.u32 %s54, 1
        %s265 = scalar_lea.sflag [#allocation3], %s264
        %s266 = sand.u32 %s54, 1
        %s267 = smul.addr %s266, 8
        %s268 = scalar_lea.vmem [#allocation2], %s267
        %p269 = pneg %p67
        %p270 = pneg %p64
        %s271 = sand.u32 %s23, 1
        %s272 = scalar_lea.sflag [#allocation6], %s271
        %s273 = sand.u32 %s82, 1
        %s274 = smul.addr %s273, 8
        %s275 = scalar_lea.vmem [#allocation5], %s274
        %p276 = pneg %p95
        %p277 = pneg %p92
        %s278 = sand.u32 %s23, 1
        %s279 = scalar_lea.sflag [#allocation6], %s278
        %s280 = sand.u32 %s110, 1
        %s281 = smul.addr %s280, 8
        %s282 = scalar_lea.vmem [#allocation7], %s281
        %p283 = pneg %p123
        %p284 = pneg %p120
        %p285 = pneg %p153
        %p286 = pneg %p150
        %s287 = sand.u32 %s140, 1
        %s288 = scalar_lea.sflag [#allocation4], %s287
        %s289 = sand.u32 %s140, 1
        %s290 = smul.addr %s289, 8
        %s291 = scalar_lea.vmem [#allocation8], %s290
        %v292 = vld [vmem:[%s241] sm:$0xff]
        %294 = vrot.lane.b32.xlu0 %v292, 120
        %v295 = vpop.permute.xlu0 %294
        %297 = vrot.lane.b32.xlu0 %v292, 112
        %v298 = vpop.permute.xlu0 %297
        %300 = vrot.lane.b32.xlu0 %v292, 104
        %v301 = vpop.permute.xlu0 %300
        %v303 = vcombine.low %v292, %v298
        %v304 = vcombine.high %v292, %v298
        %v306 = vunpack.c.l.s4 1983009808
        %v307 = vunpack.c.0.s8 %v306
        %v308 = vlaneseq
        %v309 = vshrl.u32 %v308, 7
        %v310 = vsub.s32 %v307, %v309
        %v311 = vrot.slane %v303, %v310
        %v313 = vunpack.c.l.s4 1983009808
        %v314 = vunpack.c.0.s8 %v313
        %v315 = vlaneseq
        %v316 = vshrl.u32 %v315, 7
        %v317 = vsub.s32 %v314, %v316
        %v318 = vrot.slane %v304, %v317
        %v319 = vcombine.low %v295, %v301
        %v320 = vcombine.high %v295, %v301
        %v322 = vunpack.c.l.s4 1983009808
        %v323 = vunpack.c.0.s8 %v322
        %v324 = vlaneseq
        %v325 = vshrl.u32 %v324, 7
        %v326 = vsub.s32 %v323, %v325
        %v327 = vrot.slane %v319, %v326
        %v329 = vunpack.c.l.s4 1983009808
        %v330 = vunpack.c.0.s8 %v329
        %v331 = vlaneseq
        %v332 = vshrl.u32 %v331, 7
        %v333 = vsub.s32 %v330, %v332
        %v334 = vrot.slane %v320, %v333
        %v335 = vcombine.low %v311, %v327
        %v336 = vcombine.high %v311, %v327
        %v338 = vunpack.c.l.s4 1934713408
        %v339 = vunpack.c.0.s8 %v338
        %v340 = vlaneseq
        %v341 = vshrl.u32 %v340, 7
        %v342 = vsub.s32 %v339, %v341
        %v343 = vrot.slane %v335, %v342
        %v345 = vunpack.c.l.s4 1934713408
        %v346 = vunpack.c.0.s8 %v345
        %v347 = vlaneseq
        %v348 = vshrl.u32 %v347, 7
        %v349 = vsub.s32 %v346, %v348
        %v350 = vrot.slane %v336, %v349
        %v351 = vcombine.low %v318, %v334
        %v352 = vcombine.high %v318, %v334
        %v354 = vunpack.c.l.s4 1934713408
        %v355 = vunpack.c.0.s8 %v354
        %v356 = vlaneseq
        %v357 = vshrl.u32 %v356, 7
        %v358 = vsub.s32 %v355, %v357
        %v359 = vrot.slane %v351, %v358
        %v361 = vunpack.c.l.s4 1934713408
        %v362 = vunpack.c.0.s8 %v361
        %v363 = vlaneseq
        %v364 = vshrl.u32 %v363, 7
        %v365 = vsub.s32 %v362, %v364
        %v366 = vrot.slane %v352, %v365
        %v367 = vcombine.high %v343, 0.0
        %v368 = vcombine.high %v350, 0.0
        %v369 = vcombine.high %v359, 0.0
        %v370 = vcombine.high %v366, 0.0
        %v371 = vld [vmem:[%s250] sm:$0xff]
        %373 = vrot.lane.b32.xlu0 %v371, 120
        %v374 = vpop.permute.xlu0 %373
        %376 = vrot.lane.b32.xlu0 %v371, 112
        %v377 = vpop.permute.xlu0 %376
        %379 = vrot.lane.b32.xlu0 %v371, 104
        %v380 = vpop.permute.xlu0 %379
        %v382 = vcombine.low %v371, %v377
        %v383 = vcombine.high %v371, %v377
        %v385 = vunpack.c.l.s4 1983009808
        %v386 = vunpack.c.0.s8 %v385
        %v387 = vlaneseq
        %v388 = vshrl.u32 %v387, 7
        %v389 = vsub.s32 %v386, %v388
        %v390 = vrot.slane %v382, %v389
        %v392 = vunpack.c.l.s4 1983009808
        %v393 = vunpack.c.0.s8 %v392
        %v394 = vlaneseq
        %v395 = vshrl.u32 %v394, 7
        %v396 = vsub.s32 %v393, %v395
        %v397 = vrot.slane %v383, %v396
        %v398 = vcombine.low %v374, %v380
        %v399 = vcombine.high %v374, %v380
        %v401 = vunpack.c.l.s4 1983009808
        %v402 = vunpack.c.0.s8 %v401
        %v403 = vlaneseq
        %v404 = vshrl.u32 %v403, 7
        %v405 = vsub.s32 %v402, %v404
        %v406 = vrot.slane %v398, %v405
        %v408 = vunpack.c.l.s4 1983009808
        %v409 = vunpack.c.0.s8 %v408
        %v410 = vlaneseq
        %v411 = vshrl.u32 %v410, 7
        %v412 = vsub.s32 %v409, %v411
        %v413 = vrot.slane %v399, %v412
        %v414 = vcombine.low %v390, %v406
        %v415 = vcombine.high %v390, %v406
        %v417 = vunpack.c.l.s4 1934713408
        %v418 = vunpack.c.0.s8 %v417
        %v419 = vlaneseq
        %v420 = vshrl.u32 %v419, 7
        %v421 = vsub.s32 %v418, %v420
        %v422 = vrot.slane %v414, %v421
        %v424 = vunpack.c.l.s4 1934713408
        %v425 = vunpack.c.0.s8 %v424
        %v426 = vlaneseq
        %v427 = vshrl.u32 %v426, 7
        %v428 = vsub.s32 %v425, %v427
        %v429 = vrot.slane %v415, %v428
        %v430 = vcombine.low %v397, %v413
        %v431 = vcombine.high %v397, %v413
        %v433 = vunpack.c.l.s4 1934713408
        %v434 = vunpack.c.0.s8 %v433
        %v435 = vlaneseq
        %v436 = vshrl.u32 %v435, 7
        %v437 = vsub.s32 %v434, %v436
        %v438 = vrot.slane %v430, %v437
        %v440 = vunpack.c.l.s4 1934713408
        %v441 = vunpack.c.0.s8 %v440
        %v442 = vlaneseq
        %v443 = vshrl.u32 %v442, 7
        %v444 = vsub.s32 %v441, %v443
        %v445 = vrot.slane %v431, %v444
        %v446 = vcombine.high %v422, 0.0
        %v447 = vcombine.high %v429, 0.0
        %v448 = vcombine.high %v438, 0.0
        %v449 = vcombine.high %v445, 0.0
        %v450 = vld [vmem:[%s259] sm:$0xff]
        %452 = vrot.lane.b32.xlu0 %v450, 120
        %v453 = vpop.permute.xlu0 %452
        %455 = vrot.lane.b32.xlu0 %v450, 112
        %v456 = vpop.permute.xlu0 %455
        %458 = vrot.lane.b32.xlu0 %v450, 104
        %v459 = vpop.permute.xlu0 %458
        %v461 = vcombine.low %v450, %v456
        %v462 = vcombine.high %v450, %v456
        %v464 = vunpack.c.l.s4 1983009808
        %v465 = vunpack.c.0.s8 %v464
        %v466 = vlaneseq
        %v467 = vshrl.u32 %v466, 7
        %v468 = vsub.s32 %v465, %v467
        %v469 = vrot.slane %v461, %v468
        %v471 = vunpack.c.l.s4 1983009808
        %v472 = vunpack.c.0.s8 %v471
        %v473 = vlaneseq
        %v474 = vshrl.u32 %v473, 7
        %v475 = vsub.s32 %v472, %v474
        %v476 = vrot.slane %v462, %v475
        %v477 = vcombine.low %v453, %v459
        %v478 = vcombine.high %v453, %v459
        %v480 = vunpack.c.l.s4 1983009808
        %v481 = vunpack.c.0.s8 %v480
        %v482 = vlaneseq
        %v483 = vshrl.u32 %v482, 7
        %v484 = vsub.s32 %v481, %v483
        %v485 = vrot.slane %v477, %v484
        %v487 = vunpack.c.l.s4 1983009808
        %v488 = vunpack.c.0.s8 %v487
        %v489 = vlaneseq
        %v490 = vshrl.u32 %v489, 7
        %v491 = vsub.s32 %v488, %v490
        %v492 = vrot.slane %v478, %v491
        %v493 = vcombine.low %v469, %v485
        %v494 = vcombine.high %v469, %v485
        %v496 = vunpack.c.l.s4 1934713408
        %v497 = vunpack.c.0.s8 %v496
        %v498 = vlaneseq
        %v499 = vshrl.u32 %v498, 7
        %v500 = vsub.s32 %v497, %v499
        %v501 = vrot.slane %v493, %v500
        %v503 = vunpack.c.l.s4 1934713408
        %v504 = vunpack.c.0.s8 %v503
        %v505 = vlaneseq
        %v506 = vshrl.u32 %v505, 7
        %v507 = vsub.s32 %v504, %v506
        %v508 = vrot.slane %v494, %v507
        %v509 = vcombine.low %v476, %v492
        %v510 = vcombine.high %v476, %v492
        %v512 = vunpack.c.l.s4 1934713408
        %v513 = vunpack.c.0.s8 %v512
        %v514 = vlaneseq
        %v515 = vshrl.u32 %v514, 7
        %v516 = vsub.s32 %v513, %v515
        %v517 = vrot.slane %v509, %v516
        %v519 = vunpack.c.l.s4 1934713408
        %v520 = vunpack.c.0.s8 %v519
        %v521 = vlaneseq
        %v522 = vshrl.u32 %v521, 7
        %v523 = vsub.s32 %v520, %v522
        %v524 = vrot.slane %v510, %v523
        %v525 = vcombine.high %v501, 0.0
        %v526 = vcombine.high %v508, 0.0
        %v527 = vcombine.high %v517, 0.0
        %v528 = vcombine.high %v524, 0.0
        %v529 = vcombine.low %v343, %v350
        %v531 = vunpack.c.l.s4 1983009808
        %v532 = vunpack.c.0.s8 %v531
        %v533 = vlaneseq
        %v534 = vshrl.u32 %v533, 7
        %v535 = vsub.s32 %v532, %v534
        %v536 = vrot.slane %v529, %v535
        %v537 = vcombine.low %v367, %v368
        %v539 = vunpack.c.l.s4 1983009808
        %v540 = vunpack.c.0.s8 %v539
        %v541 = vlaneseq
        %v542 = vshrl.u32 %v541, 7
        %v543 = vsub.s32 %v540, %v542
        %v544 = vrot.slane %v537, %v543
        %v545 = vcombine.low %v359, %v366
        %v547 = vunpack.c.l.s4 1983009808
        %v548 = vunpack.c.0.s8 %v547
        %v549 = vlaneseq
        %v550 = vshrl.u32 %v549, 7
        %v551 = vsub.s32 %v548, %v550
        %v552 = vrot.slane %v545, %v551
        %v553 = vcombine.low %v369, %v370
        %v555 = vunpack.c.l.s4 1983009808
        %v556 = vunpack.c.0.s8 %v555
        %v557 = vlaneseq
        %v558 = vshrl.u32 %v557, 7
        %v559 = vsub.s32 %v556, %v558
        %v560 = vrot.slane %v553, %v559
        %v561 = vcombine.low %v536, %v544
        %v562 = vcombine.high %v536, %v544
        %v564 = vunpack.c.l.s4 1934713408
        %v565 = vunpack.c.0.s8 %v564
        %v566 = vlaneseq
        %v567 = vshrl.u32 %v566, 7
        %v568 = vsub.s32 %v565, %v567
        %v569 = vrot.slane %v561, %v568
        %v571 = vunpack.c.l.s4 1934713408
        %v572 = vunpack.c.0.s8 %v571
        %v573 = vlaneseq
        %v574 = vshrl.u32 %v573, 7
        %v575 = vsub.s32 %v572, %v574
        %v576 = vrot.slane %v562, %v575
        %v577 = vcombine.low %v552, %v560
        %v578 = vcombine.high %v552, %v560
        %v580 = vunpack.c.l.s4 1934713408
        %v581 = vunpack.c.0.s8 %v580
        %v582 = vlaneseq
        %v583 = vshrl.u32 %v582, 7
        %v584 = vsub.s32 %v581, %v583
        %v585 = vrot.slane %v577, %v584
        %v587 = vunpack.c.l.s4 1934713408
        %v588 = vunpack.c.0.s8 %v587
        %v589 = vlaneseq
        %v590 = vshrl.u32 %v589, 7
        %v591 = vsub.s32 %v588, %v590
        %v592 = vrot.slane %v578, %v591
        %v593 = vcombine.low %v569, %v585
        %v594 = vcombine.high %v569, %v585
        %v595 = vcombine.low %v576, %v592
        %v596 = vcombine.high %v576, %v592
        %597 = vxpose.xlu0.b32.start [1/16] %v422, 128
        %598 = vxpose.xlu0.b32.cont [2/16] 0.0, 128
        %599 = vxpose.xlu0.b32.cont [3/16] 0.0, 128
        %600 = vxpose.xlu0.b32.cont [4/16] 0.0, 128
        %601 = vxpose.xlu0.b32.cont [5/16] 0.0, 128
        %602 = vxpose.xlu0.b32.cont [6/16] 0.0, 128
        %603 = vxpose.xlu0.b32.cont [7/16] 0.0, 128
        %604 = vxpose.xlu0.b32.cont [8/16] 0.0, 128
        %605 = vxpose.xlu0.b32.cont [9/16] 0.0, 128
        %606 = vxpose.xlu0.b32.cont [10/16] 0.0, 128
        %607 = vxpose.xlu0.b32.cont [11/16] 0.0, 128
        %608 = vxpose.xlu0.b32.cont [12/16] 0.0, 128
        %609 = vxpose.xlu0.b32.cont [13/16] 0.0, 128
        %610 = vxpose.xlu0.b32.cont [14/16] 0.0, 128
        %611 = vxpose.xlu0.b32.cont [15/16] 0.0, 128
        %612 = vxpose.xlu0.b32.end [16/16] 0.0, 128
        %v613 = vpop.trf.xlu0
        %v614 = vpop.trf.xlu0
        %v615 = vpop.trf.xlu0
        %v616 = vpop.trf.xlu0
        %v617 = vpop.trf.xlu0
        %v618 = vpop.trf.xlu0
        %v619 = vpop.trf.xlu0
        %v620 = vpop.trf.xlu0
        %v621 = vpop.trf.xlu0
        %v622 = vpop.trf.xlu0
        %v623 = vpop.trf.xlu0
        %v624 = vpop.trf.xlu0
        %v625 = vpop.trf.xlu0
        %v626 = vpop.trf.xlu0
        %v627 = vpop.trf.xlu0
        %v628 = vpop.trf.xlu0
        %629 = vxpose.xlu0.b32.start [1/16] %v446, 128
        %630 = vxpose.xlu0.b32.cont [2/16] 0.0, 128
        %631 = vxpose.xlu0.b32.cont [3/16] 0.0, 128
        %632 = vxpose.xlu0.b32.cont [4/16] 0.0, 128
        %633 = vxpose.xlu0.b32.cont [5/16] 0.0, 128
        %634 = vxpose.xlu0.b32.cont [6/16] 0.0, 128
        %635 = vxpose.xlu0.b32.cont [7/16] 0.0, 128
        %636 = vxpose.xlu0.b32.cont [8/16] 0.0, 128
        %637 = vxpose.xlu0.b32.cont [9/16] 0.0, 128
        %638 = vxpose.xlu0.b32.cont [10/16] 0.0, 128
        %639 = vxpose.xlu0.b32.cont [11/16] 0.0, 128
        %640 = vxpose.xlu0.b32.cont [12/16] 0.0, 128
        %641 = vxpose.xlu0.b32.cont [13/16] 0.0, 128
        %642 = vxpose.xlu0.b32.cont [14/16] 0.0, 128
        %643 = vxpose.xlu0.b32.cont [15/16] 0.0, 128
        %644 = vxpose.xlu0.b32.end [16/16] 0.0, 128
        %v645 = vpop.trf.xlu0
        %v646 = vpop.trf.xlu0
        %v647 = vpop.trf.xlu0
        %v648 = vpop.trf.xlu0
        %v649 = vpop.trf.xlu0
        %v650 = vpop.trf.xlu0
        %v651 = vpop.trf.xlu0
        %v652 = vpop.trf.xlu0
        %v653 = vpop.trf.xlu0
        %v654 = vpop.trf.xlu0
        %v655 = vpop.trf.xlu0
        %v656 = vpop.trf.xlu0
        %v657 = vpop.trf.xlu0
        %v658 = vpop.trf.xlu0
        %v659 = vpop.trf.xlu0
        %v660 = vpop.trf.xlu0
        %661 = vxpose.xlu0.b32.start [1/16] %v429, 128
        %662 = vxpose.xlu0.b32.cont [2/16] 0.0, 128
        %663 = vxpose.xlu0.b32.cont [3/16] 0.0, 128
        %664 = vxpose.xlu0.b32.cont [4/16] 0.0, 128
        %665 = vxpose.xlu0.b32.cont [5/16] 0.0, 128
        %666 = vxpose.xlu0.b32.cont [6/16] 0.0, 128
        %667 = vxpose.xlu0.b32.cont [7/16] 0.0, 128
        %668 = vxpose.xlu0.b32.cont [8/16] 0.0, 128
        %669 = vxpose.xlu0.b32.cont [9/16] 0.0, 128
        %670 = vxpose.xlu0.b32.cont [10/16] 0.0, 128
        %671 = vxpose.xlu0.b32.cont [11/16] 0.0, 128
        %672 = vxpose.xlu0.b32.cont [12/16] 0.0, 128
        %673 = vxpose.xlu0.b32.cont [13/16] 0.0, 128
        %674 = vxpose.xlu0.b32.cont [14/16] 0.0, 128
        %675 = vxpose.xlu0.b32.cont [15/16] 0.0, 128
        %676 = vxpose.xlu0.b32.end [16/16] 0.0, 128
        %v677 = vpop.trf.xlu0
        %v678 = vpop.trf.xlu0
        %v679 = vpop.trf.xlu0
        %v680 = vpop.trf.xlu0
        %v681 = vpop.trf.xlu0
        %v682 = vpop.trf.xlu0
        %v683 = vpop.trf.xlu0
        %v684 = vpop.trf.xlu0
        %v685 = vpop.trf.xlu0
        %v686 = vpop.trf.xlu0
        %v687 = vpop.trf.xlu0
        %v688 = vpop.trf.xlu0
        %v689 = vpop.trf.xlu0
        %v690 = vpop.trf.xlu0
        %v691 = vpop.trf.xlu0
        %v692 = vpop.trf.xlu0
        %693 = vxpose.xlu0.b32.start [1/16] %v447, 128
        %694 = vxpose.xlu0.b32.cont [2/16] 0.0, 128
        %695 = vxpose.xlu0.b32.cont [3/16] 0.0, 128
        %696 = vxpose.xlu0.b32.cont [4/16] 0.0, 128
        %697 = vxpose.xlu0.b32.cont [5/16] 0.0, 128
        %698 = vxpose.xlu0.b32.cont [6/16] 0.0, 128
        %699 = vxpose.xlu0.b32.cont [7/16] 0.0, 128
        %700 = vxpose.xlu0.b32.cont [8/16] 0.0, 128
        %701 = vxpose.xlu0.b32.cont [9/16] 0.0, 128
        %702 = vxpose.xlu0.b32.cont [10/16] 0.0, 128
        %703 = vxpose.xlu0.b32.cont [11/16] 0.0, 128
        %704 = vxpose.xlu0.b32.cont [12/16] 0.0, 128
        %705 = vxpose.xlu0.b32.cont [13/16] 0.0, 128
        %706 = vxpose.xlu0.b32.cont [14/16] 0.0, 128
        %707 = vxpose.xlu0.b32.cont [15/16] 0.0, 128
        %708 = vxpose.xlu0.b32.end [16/16] 0.0, 128
        %v709 = vpop.trf.xlu0
        %v710 = vpop.trf.xlu0
        %v711 = vpop.trf.xlu0
        %v712 = vpop.trf.xlu0
        %v713 = vpop.trf.xlu0
        %v714 = vpop.trf.xlu0
        %v715 = vpop.trf.xlu0
        %v716 = vpop.trf.xlu0
        %v717 = vpop.trf.xlu0
        %v718 = vpop.trf.xlu0
        %v719 = vpop.trf.xlu0
        %v720 = vpop.trf.xlu0
        %v721 = vpop.trf.xlu0
        %v722 = vpop.trf.xlu0
        %v723 = vpop.trf.xlu0
        %v724 = vpop.trf.xlu0
        %725 = vxpose.xlu0.b32.start [1/16] %v438, 128
        %726 = vxpose.xlu0.b32.cont [2/16] 0.0, 128
        %727 = vxpose.xlu0.b32.cont [3/16] 0.0, 128
        %728 = vxpose.xlu0.b32.cont [4/16] 0.0, 128
        %729 = vxpose.xlu0.b32.cont [5/16] 0.0, 128
        %730 = vxpose.xlu0.b32.cont [6/16] 0.0, 128
        %731 = vxpose.xlu0.b32.cont [7/16] 0.0, 128
        %732 = vxpose.xlu0.b32.cont [8/16] 0.0, 128
        %733 = vxpose.xlu0.b32.cont [9/16] 0.0, 128
        %734 = vxpose.xlu0.b32.cont [10/16] 0.0, 128
        %735 = vxpose.xlu0.b32.cont [11/16] 0.0, 128
        %736 = vxpose.xlu0.b32.cont [12/16] 0.0, 128
        %737 = vxpose.xlu0.b32.cont [13/16] 0.0, 128
        %738 = vxpose.xlu0.b32.cont [14/16] 0.0, 128
        %739 = vxpose.xlu0.b32.cont [15/16] 0.0, 128
        %740 = vxpose.xlu0.b32.end [16/16] 0.0, 128
        %v741 = vpop.trf.xlu0
        %v742 = vpop.trf.xlu0
        %v743 = vpop.trf.xlu0
        %v744 = vpop.trf.xlu0
        %v745 = vpop.trf.xlu0
        %v746 = vpop.trf.xlu0
        %v747 = vpop.trf.xlu0
        %v748 = vpop.trf.xlu0
        %v749 = vpop.trf.xlu0
        %v750 = vpop.trf.xlu0
        %v751 = vpop.trf.xlu0
        %v752 = vpop.trf.xlu0
        %v753 = vpop.trf.xlu0
        %v754 = vpop.trf.xlu0
        %v755 = vpop.trf.xlu0
        %v756 = vpop.trf.xlu0
        %757 = vxpose.xlu0.b32.start [1/16] %v448, 128
        %758 = vxpose.xlu0.b32.cont [2/16] 0.0, 128
        %759 = vxpose.xlu0.b32.cont [3/16] 0.0, 128
        %760 = vxpose.xlu0.b32.cont [4/16] 0.0, 128
        %761 = vxpose.xlu0.b32.cont [5/16] 0.0, 128
        %762 = vxpose.xlu0.b32.cont [6/16] 0.0, 128
        %763 = vxpose.xlu0.b32.cont [7/16] 0.0, 128
        %764 = vxpose.xlu0.b32.cont [8/16] 0.0, 128
        %765 = vxpose.xlu0.b32.cont [9/16] 0.0, 128
        %766 = vxpose.xlu0.b32.cont [10/16] 0.0, 128
        %767 = vxpose.xlu0.b32.cont [11/16] 0.0, 128
        %768 = vxpose.xlu0.b32.cont [12/16] 0.0, 128
        %769 = vxpose.xlu0.b32.cont [13/16] 0.0, 128
        %770 = vxpose.xlu0.b32.cont [14/16] 0.0, 128
        %771 = vxpose.xlu0.b32.cont [15/16] 0.0, 128
        %772 = vxpose.xlu0.b32.end [16/16] 0.0, 128
        %v773 = vpop.trf.xlu0
        %v774 = vpop.trf.xlu0
        %v775 = vpop.trf.xlu0
        %v776 = vpop.trf.xlu0
        %v777 = vpop.trf.xlu0
        %v778 = vpop.trf.xlu0
        %v779 = vpop.trf.xlu0
        %v780 = vpop.trf.xlu0
        %v781 = vpop.trf.xlu0
        %v782 = vpop.trf.xlu0
        %v783 = vpop.trf.xlu0
        %v784 = vpop.trf.xlu0
        %v785 = vpop.trf.xlu0
        %v786 = vpop.trf.xlu0
        %v787 = vpop.trf.xlu0
        %v788 = vpop.trf.xlu0
        %789 = vxpose.xlu0.b32.start [1/16] %v445, 128
        %790 = vxpose.xlu0.b32.cont [2/16] 0.0, 128
        %791 = vxpose.xlu0.b32.cont [3/16] 0.0, 128
        %792 = vxpose.xlu0.b32.cont [4/16] 0.0, 128
        %793 = vxpose.xlu0.b32.cont [5/16] 0.0, 128
        %794 = vxpose.xlu0.b32.cont [6/16] 0.0, 128
        %795 = vxpose.xlu0.b32.cont [7/16] 0.0, 128
        %796 = vxpose.xlu0.b32.cont [8/16] 0.0, 128
        %797 = vxpose.xlu0.b32.cont [9/16] 0.0, 128
        %798 = vxpose.xlu0.b32.cont [10/16] 0.0, 128
        %799 = vxpose.xlu0.b32.cont [11/16] 0.0, 128
        %800 = vxpose.xlu0.b32.cont [12/16] 0.0, 128
        %801 = vxpose.xlu0.b32.cont [13/16] 0.0, 128
        %802 = vxpose.xlu0.b32.cont [14/16] 0.0, 128
        %803 = vxpose.xlu0.b32.cont [15/16] 0.0, 128
        %804 = vxpose.xlu0.b32.end [16/16] 0.0, 128
        %v805 = vpop.trf.xlu0
        %v806 = vpop.trf.xlu0
        %v807 = vpop.trf.xlu0
        %v808 = vpop.trf.xlu0
        %v809 = vpop.trf.xlu0
        %v810 = vpop.trf.xlu0
        %v811 = vpop.trf.xlu0
        %v812 = vpop.trf.xlu0
        %v813 = vpop.trf.xlu0
        %v814 = vpop.trf.xlu0
        %v815 = vpop.trf.xlu0
        %v816 = vpop.trf.xlu0
        %v817 = vpop.trf.xlu0
        %v818 = vpop.trf.xlu0
        %v819 = vpop.trf.xlu0
        %v820 = vpop.trf.xlu0
        %821 = vxpose.xlu0.b32.start [1/16] %v449, 128
        %822 = vxpose.xlu0.b32.cont [2/16] 0.0, 128
        %823 = vxpose.xlu0.b32.cont [3/16] 0.0, 128
        %824 = vxpose.xlu0.b32.cont [4/16] 0.0, 128
        %825 = vxpose.xlu0.b32.cont [5/16] 0.0, 128
        %826 = vxpose.xlu0.b32.cont [6/16] 0.0, 128
        %827 = vxpose.xlu0.b32.cont [7/16] 0.0, 128
        %828 = vxpose.xlu0.b32.cont [8/16] 0.0, 128
        %829 = vxpose.xlu0.b32.cont [9/16] 0.0, 128
        %830 = vxpose.xlu0.b32.cont [10/16] 0.0, 128
        %831 = vxpose.xlu0.b32.cont [11/16] 0.0, 128
        %832 = vxpose.xlu0.b32.cont [12/16] 0.0, 128
        %833 = vxpose.xlu0.b32.cont [13/16] 0.0, 128
        %834 = vxpose.xlu0.b32.cont [14/16] 0.0, 128
        %835 = vxpose.xlu0.b32.cont [15/16] 0.0, 128
        %836 = vxpose.xlu0.b32.end [16/16] 0.0, 128
        %v837 = vpop.trf.xlu0
        %v838 = vpop.trf.xlu0
        %v839 = vpop.trf.xlu0
        %v840 = vpop.trf.xlu0
        %v841 = vpop.trf.xlu0
        %v842 = vpop.trf.xlu0
        %v843 = vpop.trf.xlu0
        %v844 = vpop.trf.xlu0
        %v845 = vpop.trf.xlu0
        %v846 = vpop.trf.xlu0
        %v847 = vpop.trf.xlu0
        %v848 = vpop.trf.xlu0
        %v849 = vpop.trf.xlu0
        %v850 = vpop.trf.xlu0
        %v851 = vpop.trf.xlu0
        %v852 = vpop.trf.xlu0
        %v853 = vcombine.low %v613, %v677
        %v854 = vcombine.high %v613, %v677
        %v856 = vunpack.c.l.s4 1983009808
        %v857 = vunpack.c.0.s8 %v856
        %v858 = vlaneseq
        %v859 = vshrl.u32 %v858, 7
        %v860 = vsub.s32 %v857, %v859
        %v861 = vrot.slane %v853, %v860
        %v863 = vunpack.c.l.s4 1983009808
        %v864 = vunpack.c.0.s8 %v863
        %v865 = vlaneseq
        %v866 = vshrl.u32 %v865, 7
        %v867 = vsub.s32 %v864, %v866
        %v868 = vrot.slane %v854, %v867
        %v869 = vcombine.low %v645, %v709
        %v870 = vcombine.high %v645, %v709
        %v872 = vunpack.c.l.s4 1983009808
        %v873 = vunpack.c.0.s8 %v872
        %v874 = vlaneseq
        %v875 = vshrl.u32 %v874, 7
        %v876 = vsub.s32 %v873, %v875
        %v877 = vrot.slane %v869, %v876
        %v879 = vunpack.c.l.s4 1983009808
        %v880 = vunpack.c.0.s8 %v879
        %v881 = vlaneseq
        %v882 = vshrl.u32 %v881, 7
        %v883 = vsub.s32 %v880, %v882
        %v884 = vrot.slane %v870, %v883
        %v885 = vcombine.low %v741, %v805
        %v886 = vcombine.high %v741, %v805
        %v888 = vunpack.c.l.s4 1983009808
        %v889 = vunpack.c.0.s8 %v888
        %v890 = vlaneseq
        %v891 = vshrl.u32 %v890, 7
        %v892 = vsub.s32 %v889, %v891
        %v893 = vrot.slane %v885, %v892
        %v895 = vunpack.c.l.s4 1983009808
        %v896 = vunpack.c.0.s8 %v895
        %v897 = vlaneseq
        %v898 = vshrl.u32 %v897, 7
        %v899 = vsub.s32 %v896, %v898
        %v900 = vrot.slane %v886, %v899
        %v901 = vcombine.low %v773, %v837
        %v902 = vcombine.high %v773, %v837
        %v904 = vunpack.c.l.s4 1983009808
        %v905 = vunpack.c.0.s8 %v904
        %v906 = vlaneseq
        %v907 = vshrl.u32 %v906, 7
        %v908 = vsub.s32 %v905, %v907
        %v909 = vrot.slane %v901, %v908
        %v911 = vunpack.c.l.s4 1983009808
        %v912 = vunpack.c.0.s8 %v911
        %v913 = vlaneseq
        %v914 = vshrl.u32 %v913, 7
        %v915 = vsub.s32 %v912, %v914
        %v916 = vrot.slane %v902, %v915
        %v917 = vcombine.low %v861, %v877
        %v918 = vcombine.high %v861, %v877
        %v920 = vunpack.c.l.s4 1934713408
        %v921 = vunpack.c.0.s8 %v920
        %v922 = vlaneseq
        %v923 = vshrl.u32 %v922, 7
        %v924 = vsub.s32 %v921, %v923
        %v925 = vrot.slane %v917, %v924
        %v927 = vunpack.c.l.s4 1934713408
        %v928 = vunpack.c.0.s8 %v927
        %v929 = vlaneseq
        %v930 = vshrl.u32 %v929, 7
        %v931 = vsub.s32 %v928, %v930
        %v932 = vrot.slane %v918, %v931
        %v933 = vcombine.low %v868, %v884
        %v934 = vcombine.high %v868, %v884
        %v936 = vunpack.c.l.s4 1934713408
        %v937 = vunpack.c.0.s8 %v936
        %v938 = vlaneseq
        %v939 = vshrl.u32 %v938, 7
        %v940 = vsub.s32 %v937, %v939
        %v941 = vrot.slane %v933, %v940
        %v943 = vunpack.c.l.s4 1934713408
        %v944 = vunpack.c.0.s8 %v943
        %v945 = vlaneseq
        %v946 = vshrl.u32 %v945, 7
        %v947 = vsub.s32 %v944, %v946
        %v948 = vrot.slane %v934, %v947
        %v949 = vcombine.low %v893, %v909
        %v950 = vcombine.high %v893, %v909
        %v952 = vunpack.c.l.s4 1934713408
        %v953 = vunpack.c.0.s8 %v952
        %v954 = vlaneseq
        %v955 = vshrl.u32 %v954, 7
        %v956 = vsub.s32 %v953, %v955
        %v957 = vrot.slane %v949, %v956
        %v959 = vunpack.c.l.s4 1934713408
        %v960 = vunpack.c.0.s8 %v959
        %v961 = vlaneseq
        %v962 = vshrl.u32 %v961, 7
        %v963 = vsub.s32 %v960, %v962
        %v964 = vrot.slane %v950, %v963
        %v965 = vcombine.low %v900, %v916
        %v966 = vcombine.high %v900, %v916
        %v968 = vunpack.c.l.s4 1934713408
        %v969 = vunpack.c.0.s8 %v968
        %v970 = vlaneseq
        %v971 = vshrl.u32 %v970, 7
        %v972 = vsub.s32 %v969, %v971
        %v973 = vrot.slane %v965, %v972
        %v975 = vunpack.c.l.s4 1934713408
        %v976 = vunpack.c.0.s8 %v975
        %v977 = vlaneseq
        %v978 = vshrl.u32 %v977, 7
        %v979 = vsub.s32 %v976, %v978
        %v980 = vrot.slane %v966, %v979
        %v981 = vcombine.low %v925, %v957
        %v982 = vcombine.high %v925, %v957
        %v983 = vcombine.low %v932, %v964
        %v984 = vcombine.high %v932, %v964
        %v985 = vcombine.low %v941, %v973
        %v986 = vcombine.high %v941, %v973
        %v987 = vcombine.low %v948, %v980
        %v988 = vcombine.high %v948, %v980
        %989 = vxpose.xlu0.b32.start [1/16] %v981, 128
        %990 = vxpose.xlu0.b32.cont [2/16] 0.0, 128
        %991 = vxpose.xlu0.b32.cont [3/16] 0.0, 128
        %992 = vxpose.xlu0.b32.cont [4/16] 0.0, 128
        %993 = vxpose.xlu0.b32.cont [5/16] 0.0, 128
        %994 = vxpose.xlu0.b32.cont [6/16] 0.0, 128
        %995 = vxpose.xlu0.b32.cont [7/16] 0.0, 128
        %996 = vxpose.xlu0.b32.cont [8/16] 0.0, 128
        %997 = vxpose.xlu0.b32.cont [9/16] 0.0, 128
        %998 = vxpose.xlu0.b32.cont [10/16] 0.0, 128
        %999 = vxpose.xlu0.b32.cont [11/16] 0.0, 128
        %1000 = vxpose.xlu0.b32.cont [12/16] 0.0, 128
        %1001 = vxpose.xlu0.b32.cont [13/16] 0.0, 128
        %1002 = vxpose.xlu0.b32.cont [14/16] 0.0, 128
        %1003 = vxpose.xlu0.b32.cont [15/16] 0.0, 128
        %1004 = vxpose.xlu0.b32.end [16/16] 0.0, 128
        %v1005 = vpop.trf.xlu0
        %v1006 = vpop.trf.xlu0
        %v1007 = vpop.trf.xlu0
        %v1008 = vpop.trf.xlu0
        %v1009 = vpop.trf.xlu0
        %v1010 = vpop.trf.xlu0
        %v1011 = vpop.trf.xlu0
        %v1012 = vpop.trf.xlu0
        %v1013 = vpop.trf.xlu0
        %v1014 = vpop.trf.xlu0
        %v1015 = vpop.trf.xlu0
        %v1016 = vpop.trf.xlu0
        %v1017 = vpop.trf.xlu0
        %v1018 = vpop.trf.xlu0
        %v1019 = vpop.trf.xlu0
        %v1020 = vpop.trf.xlu0
        %1021 = vxpose.xlu0.b32.start [1/16] %v982, 128
        %1022 = vxpose.xlu0.b32.cont [2/16] 0.0, 128
        %1023 = vxpose.xlu0.b32.cont [3/16] 0.0, 128
        %1024 = vxpose.xlu0.b32.cont [4/16] 0.0, 128
        %1025 = vxpose.xlu0.b32.cont [5/16] 0.0, 128
        %1026 = vxpose.xlu0.b32.cont [6/16] 0.0, 128
        %1027 = vxpose.xlu0.b32.cont [7/16] 0.0, 128
        %1028 = vxpose.xlu0.b32.cont [8/16] 0.0, 128
        %1029 = vxpose.xlu0.b32.cont [9/16] 0.0, 128
        %1030 = vxpose.xlu0.b32.cont [10/16] 0.0, 128
        %1031 = vxpose.xlu0.b32.cont [11/16] 0.0, 128
        %1032 = vxpose.xlu0.b32.cont [12/16] 0.0, 128
        %1033 = vxpose.xlu0.b32.cont [13/16] 0.0, 128
        %1034 = vxpose.xlu0.b32.cont [14/16] 0.0, 128
        %1035 = vxpose.xlu0.b32.cont [15/16] 0.0, 128
        %1036 = vxpose.xlu0.b32.end [16/16] 0.0, 128
        %v1037 = vpop.trf.xlu0
        %v1038 = vpop.trf.xlu0
        %v1039 = vpop.trf.xlu0
        %v1040 = vpop.trf.xlu0
        %v1041 = vpop.trf.xlu0
        %v1042 = vpop.trf.xlu0
        %v1043 = vpop.trf.xlu0
        %v1044 = vpop.trf.xlu0
        %v1045 = vpop.trf.xlu0
        %v1046 = vpop.trf.xlu0
        %v1047 = vpop.trf.xlu0
        %v1048 = vpop.trf.xlu0
        %v1049 = vpop.trf.xlu0
        %v1050 = vpop.trf.xlu0
        %v1051 = vpop.trf.xlu0
        %v1052 = vpop.trf.xlu0
        %1053 = vxpose.xlu0.b32.start [1/16] %v983, 128
        %1054 = vxpose.xlu0.b32.cont [2/16] 0.0, 128
        %1055 = vxpose.xlu0.b32.cont [3/16] 0.0, 128
        %1056 = vxpose.xlu0.b32.cont [4/16] 0.0, 128
        %1057 = vxpose.xlu0.b32.cont [5/16] 0.0, 128
        %1058 = vxpose.xlu0.b32.cont [6/16] 0.0, 128
        %1059 = vxpose.xlu0.b32.cont [7/16] 0.0, 128
        %1060 = vxpose.xlu0.b32.cont [8/16] 0.0, 128
        %1061 = vxpose.xlu0.b32.cont [9/16] 0.0, 128
        %1062 = vxpose.xlu0.b32.cont [10/16] 0.0, 128
        %1063 = vxpose.xlu0.b32.cont [11/16] 0.0, 128
        %1064 = vxpose.xlu0.b32.cont [12/16] 0.0, 128
        %1065 = vxpose.xlu0.b32.cont [13/16] 0.0, 128
        %1066 = vxpose.xlu0.b32.cont [14/16] 0.0, 128
        %1067 = vxpose.xlu0.b32.cont [15/16] 0.0, 128
        %1068 = vxpose.xlu0.b32.end [16/16] 0.0, 128
        %v1069 = vpop.trf.xlu0
        %v1070 = vpop.trf.xlu0
        %v1071 = vpop.trf.xlu0
        %v1072 = vpop.trf.xlu0
        %v1073 = vpop.trf.xlu0
        %v1074 = vpop.trf.xlu0
        %v1075 = vpop.trf.xlu0
        %v1076 = vpop.trf.xlu0
        %v1077 = vpop.trf.xlu0
        %v1078 = vpop.trf.xlu0
        %v1079 = vpop.trf.xlu0
        %v1080 = vpop.trf.xlu0
        %v1081 = vpop.trf.xlu0
        %v1082 = vpop.trf.xlu0
        %v1083 = vpop.trf.xlu0
        %v1084 = vpop.trf.xlu0
        %1085 = vxpose.xlu0.b32.start [1/16] %v984, 128
        %1086 = vxpose.xlu0.b32.cont [2/16] 0.0, 128
        %1087 = vxpose.xlu0.b32.cont [3/16] 0.0, 128
        %1088 = vxpose.xlu0.b32.cont [4/16] 0.0, 128
        %1089 = vxpose.xlu0.b32.cont [5/16] 0.0, 128
        %1090 = vxpose.xlu0.b32.cont [6/16] 0.0, 128
        %1091 = vxpose.xlu0.b32.cont [7/16] 0.0, 128
        %1092 = vxpose.xlu0.b32.cont [8/16] 0.0, 128
        %1093 = vxpose.xlu0.b32.cont [9/16] 0.0, 128
        %1094 = vxpose.xlu0.b32.cont [10/16] 0.0, 128
        %1095 = vxpose.xlu0.b32.cont [11/16] 0.0, 128
        %1096 = vxpose.xlu0.b32.cont [12/16] 0.0, 128
        %1097 = vxpose.xlu0.b32.cont [13/16] 0.0, 128
        %1098 = vxpose.xlu0.b32.cont [14/16] 0.0, 128
        %1099 = vxpose.xlu0.b32.cont [15/16] 0.0, 128
        %1100 = vxpose.xlu0.b32.end [16/16] 0.0, 128
        %v1101 = vpop.trf.xlu0
        %v1102 = vpop.trf.xlu0
        %v1103 = vpop.trf.xlu0
        %v1104 = vpop.trf.xlu0
        %v1105 = vpop.trf.xlu0
        %v1106 = vpop.trf.xlu0
        %v1107 = vpop.trf.xlu0
        %v1108 = vpop.trf.xlu0
        %v1109 = vpop.trf.xlu0
        %v1110 = vpop.trf.xlu0
        %v1111 = vpop.trf.xlu0
        %v1112 = vpop.trf.xlu0
        %v1113 = vpop.trf.xlu0
        %v1114 = vpop.trf.xlu0
        %v1115 = vpop.trf.xlu0
        %v1116 = vpop.trf.xlu0
        %1117 = vxpose.xlu0.b32.start [1/16] %v985, 128
        %1118 = vxpose.xlu0.b32.cont [2/16] 0.0, 128
        %1119 = vxpose.xlu0.b32.cont [3/16] 0.0, 128
        %1120 = vxpose.xlu0.b32.cont [4/16] 0.0, 128
        %1121 = vxpose.xlu0.b32.cont [5/16] 0.0, 128
        %1122 = vxpose.xlu0.b32.cont [6/16] 0.0, 128
        %1123 = vxpose.xlu0.b32.cont [7/16] 0.0, 128
        %1124 = vxpose.xlu0.b32.cont [8/16] 0.0, 128
        %1125 = vxpose.xlu0.b32.cont [9/16] 0.0, 128
        %1126 = vxpose.xlu0.b32.cont [10/16] 0.0, 128
        %1127 = vxpose.xlu0.b32.cont [11/16] 0.0, 128
        %1128 = vxpose.xlu0.b32.cont [12/16] 0.0, 128
        %1129 = vxpose.xlu0.b32.cont [13/16] 0.0, 128
        %1130 = vxpose.xlu0.b32.cont [14/16] 0.0, 128
        %1131 = vxpose.xlu0.b32.cont [15/16] 0.0, 128
        %1132 = vxpose.xlu0.b32.end [16/16] 0.0, 128
        %v1133 = vpop.trf.xlu0
        %v1134 = vpop.trf.xlu0
        %v1135 = vpop.trf.xlu0
        %v1136 = vpop.trf.xlu0
        %v1137 = vpop.trf.xlu0
        %v1138 = vpop.trf.xlu0
        %v1139 = vpop.trf.xlu0
        %v1140 = vpop.trf.xlu0
        %v1141 = vpop.trf.xlu0
        %v1142 = vpop.trf.xlu0
        %v1143 = vpop.trf.xlu0
        %v1144 = vpop.trf.xlu0
        %v1145 = vpop.trf.xlu0
        %v1146 = vpop.trf.xlu0
        %v1147 = vpop.trf.xlu0
        %v1148 = vpop.trf.xlu0
        %1149 = vxpose.xlu0.b32.start [1/16] %v986, 128
        %1150 = vxpose.xlu0.b32.cont [2/16] 0.0, 128
        %1151 = vxpose.xlu0.b32.cont [3/16] 0.0, 128
        %1152 = vxpose.xlu0.b32.cont [4/16] 0.0, 128
        %1153 = vxpose.xlu0.b32.cont [5/16] 0.0, 128
        %1154 = vxpose.xlu0.b32.cont [6/16] 0.0, 128
        %1155 = vxpose.xlu0.b32.cont [7/16] 0.0, 128
        %1156 = vxpose.xlu0.b32.cont [8/16] 0.0, 128
        %1157 = vxpose.xlu0.b32.cont [9/16] 0.0, 128
        %1158 = vxpose.xlu0.b32.cont [10/16] 0.0, 128
        %1159 = vxpose.xlu0.b32.cont [11/16] 0.0, 128
        %1160 = vxpose.xlu0.b32.cont [12/16] 0.0, 128
        %1161 = vxpose.xlu0.b32.cont [13/16] 0.0, 128
        %1162 = vxpose.xlu0.b32.cont [14/16] 0.0, 128
        %1163 = vxpose.xlu0.b32.cont [15/16] 0.0, 128
        %1164 = vxpose.xlu0.b32.end [16/16] 0.0, 128
        %v1165 = vpop.trf.xlu0
        %v1166 = vpop.trf.xlu0
        %v1167 = vpop.trf.xlu0
        %v1168 = vpop.trf.xlu0
        %v1169 = vpop.trf.xlu0
        %v1170 = vpop.trf.xlu0
        %v1171 = vpop.trf.xlu0
        %v1172 = vpop.trf.xlu0
        %v1173 = vpop.trf.xlu0
        %v1174 = vpop.trf.xlu0
        %v1175 = vpop.trf.xlu0
        %v1176 = vpop.trf.xlu0
        %v1177 = vpop.trf.xlu0
        %v1178 = vpop.trf.xlu0
        %v1179 = vpop.trf.xlu0
        %v1180 = vpop.trf.xlu0
        %1181 = vxpose.xlu0.b32.start [1/16] %v987, 128
        %1182 = vxpose.xlu0.b32.cont [2/16] 0.0, 128
        %1183 = vxpose.xlu0.b32.cont [3/16] 0.0, 128
        %1184 = vxpose.xlu0.b32.cont [4/16] 0.0, 128
        %1185 = vxpose.xlu0.b32.cont [5/16] 0.0, 128
        %1186 = vxpose.xlu0.b32.cont [6/16] 0.0, 128
        %1187 = vxpose.xlu0.b32.cont [7/16] 0.0, 128
        %1188 = vxpose.xlu0.b32.cont [8/16] 0.0, 128
        %1189 = vxpose.xlu0.b32.cont [9/16] 0.0, 128
        %1190 = vxpose.xlu0.b32.cont [10/16] 0.0, 128
        %1191 = vxpose.xlu0.b32.cont [11/16] 0.0, 128
        %1192 = vxpose.xlu0.b32.cont [12/16] 0.0, 128
        %1193 = vxpose.xlu0.b32.cont [13/16] 0.0, 128
        %1194 = vxpose.xlu0.b32.cont [14/16] 0.0, 128
        %1195 = vxpose.xlu0.b32.cont [15/16] 0.0, 128
        %1196 = vxpose.xlu0.b32.end [16/16] 0.0, 128
        %v1197 = vpop.trf.xlu0
        %v1198 = vpop.trf.xlu0
        %v1199 = vpop.trf.xlu0
        %v1200 = vpop.trf.xlu0
        %v1201 = vpop.trf.xlu0
        %v1202 = vpop.trf.xlu0
        %v1203 = vpop.trf.xlu0
        %v1204 = vpop.trf.xlu0
        %v1205 = vpop.trf.xlu0
        %v1206 = vpop.trf.xlu0
        %v1207 = vpop.trf.xlu0
        %v1208 = vpop.trf.xlu0
        %v1209 = vpop.trf.xlu0
        %v1210 = vpop.trf.xlu0
        %v1211 = vpop.trf.xlu0
        %v1212 = vpop.trf.xlu0
        %1213 = vxpose.xlu0.b32.start [1/16] %v988, 128
        %1214 = vxpose.xlu0.b32.cont [2/16] 0.0, 128
        %1215 = vxpose.xlu0.b32.cont [3/16] 0.0, 128
        %1216 = vxpose.xlu0.b32.cont [4/16] 0.0, 128
        %1217 = vxpose.xlu0.b32.cont [5/16] 0.0, 128
        %1218 = vxpose.xlu0.b32.cont [6/16] 0.0, 128
        %1219 = vxpose.xlu0.b32.cont [7/16] 0.0, 128
        %1220 = vxpose.xlu0.b32.cont [8/16] 0.0, 128
        %1221 = vxpose.xlu0.b32.cont [9/16] 0.0, 128
        %1222 = vxpose.xlu0.b32.cont [10/16] 0.0, 128
        %1223 = vxpose.xlu0.b32.cont [11/16] 0.0, 128
        %1224 = vxpose.xlu0.b32.cont [12/16] 0.0, 128
        %1225 = vxpose.xlu0.b32.cont [13/16] 0.0, 128
        %1226 = vxpose.xlu0.b32.cont [14/16] 0.0, 128
        %1227 = vxpose.xlu0.b32.cont [15/16] 0.0, 128
        %1228 = vxpose.xlu0.b32.end [16/16] 0.0, 128
        %v1229 = vpop.trf.xlu0
        %v1230 = vpop.trf.xlu0
        %v1231 = vpop.trf.xlu0
        %v1232 = vpop.trf.xlu0
        %v1233 = vpop.trf.xlu0
        %v1234 = vpop.trf.xlu0
        %v1235 = vpop.trf.xlu0
        %v1236 = vpop.trf.xlu0
        %v1237 = vpop.trf.xlu0
        %v1238 = vpop.trf.xlu0
        %v1239 = vpop.trf.xlu0
        %v1240 = vpop.trf.xlu0
        %v1241 = vpop.trf.xlu0
        %v1242 = vpop.trf.xlu0
        %v1243 = vpop.trf.xlu0
        %v1244 = vpop.trf.xlu0
        %v1245 = vcombine.low %v1005, %v1069
        %v1247 = vunpack.c.l.s4 1983009808
        %v1248 = vunpack.c.0.s8 %v1247
        %v1249 = vlaneseq
        %v1250 = vshrl.u32 %v1249, 7
        %v1251 = vsub.s32 %v1248, %v1250
        %v1252 = vrot.slane %v1245, %v1251
        %v1253 = vcombine.low %v1037, %v1101
        %v1255 = vunpack.c.l.s4 1983009808
        %v1256 = vunpack.c.0.s8 %v1255
        %v1257 = vlaneseq
        %v1258 = vshrl.u32 %v1257, 7
        %v1259 = vsub.s32 %v1256, %v1258
        %v1260 = vrot.slane %v1253, %v1259
        %v1261 = vcombine.low %v1133, %v1197
        %v1263 = vunpack.c.l.s4 1983009808
        %v1264 = vunpack.c.0.s8 %v1263
        %v1265 = vlaneseq
        %v1266 = vshrl.u32 %v1265, 7
        %v1267 = vsub.s32 %v1264, %v1266
        %v1268 = vrot.slane %v1261, %v1267
        %v1269 = vcombine.low %v1165, %v1229
        %v1271 = vunpack.c.l.s4 1983009808
        %v1272 = vunpack.c.0.s8 %v1271
        %v1273 = vlaneseq
        %v1274 = vshrl.u32 %v1273, 7
        %v1275 = vsub.s32 %v1272, %v1274
        %v1276 = vrot.slane %v1269, %v1275
        %v1277 = vcombine.low %v1252, %v1260
        %v1278 = vcombine.high %v1252, %v1260
        %v1280 = vunpack.c.l.s4 1934713408
        %v1281 = vunpack.c.0.s8 %v1280
        %v1282 = vlaneseq
        %v1283 = vshrl.u32 %v1282, 7
        %v1284 = vsub.s32 %v1281, %v1283
        %v1285 = vrot.slane %v1277, %v1284
        %v1287 = vunpack.c.l.s4 1934713408
        %v1288 = vunpack.c.0.s8 %v1287
        %v1289 = vlaneseq
        %v1290 = vshrl.u32 %v1289, 7
        %v1291 = vsub.s32 %v1288, %v1290
        %v1292 = vrot.slane %v1278, %v1291
        %v1293 = vcombine.low %v1268, %v1276
        %v1294 = vcombine.high %v1268, %v1276
        %v1296 = vunpack.c.l.s4 1934713408
        %v1297 = vunpack.c.0.s8 %v1296
        %v1298 = vlaneseq
        %v1299 = vshrl.u32 %v1298, 7
        %v1300 = vsub.s32 %v1297, %v1299
        %v1301 = vrot.slane %v1293, %v1300
        %v1303 = vunpack.c.l.s4 1934713408
        %v1304 = vunpack.c.0.s8 %v1303
        %v1305 = vlaneseq
        %v1306 = vshrl.u32 %v1305, 7
        %v1307 = vsub.s32 %v1304, %v1306
        %v1308 = vrot.slane %v1294, %v1307
        %v1309 = vcombine.low %v1285, %v1301
        %v1310 = vcombine.high %v1285, %v1301
        %v1311 = vcombine.low %v1292, %v1308
        %v1312 = vcombine.high %v1292, %v1308
        %vm1313 = vcmask 64512
        %v1315 = vsel %vm1313, %v593, 0
        %1317 = vmatprep.subr.mxu0 0.0
        %1318 = vmatpush1.msra.mxu0 %v1309
        %1319 = vmatprep.subr.mxu0 0.0
        %1320 = vmatpush1.msra.mxu0 0.0
        %1321 = vmatprep.subr.mxu0 0.0
        %1322 = vmatpush1.msra.mxu0 0.0
        %1323 = vmatprep.subr.mxu0 0.0
        %1324 = vmatpush1.msra.mxu0 0.0
        %1325 = vmatprep.subr.mxu0 0.0
        %1326 = vmatpush1.msra.mxu0 0.0
        %1327 = vmatprep.subr.mxu0 0.0
        %1328 = vmatpush1.msra.mxu0 0.0
        %1329 = vmatprep.subr.mxu0 0.0
        %1330 = vmatpush1.msra.mxu0 0.0
        %1331 = vmatprep.subr.mxu0 0.0
        %1332 = vmatpush1.msra.mxu0 0.0
        %1333 = vmatprep.subr.mxu0 0.0
        %1334 = vmatpush1.msra.mxu0 0.0
        %1335 = vmatprep.subr.mxu0 0.0
        %1336 = vmatpush1.msra.mxu0 0.0
        %1337 = vmatprep.subr.mxu0 0.0
        %1338 = vmatpush1.msra.mxu0 0.0
        %1339 = vmatprep.subr.mxu0 0.0
        %1340 = vmatpush1.msra.mxu0 0.0
        %1341 = vmatprep.subr.mxu0 0.0
        %1342 = vmatpush1.msra.mxu0 0.0
        %1343 = vmatprep.subr.mxu0 0.0
        %1344 = vmatpush1.msra.mxu0 0.0
        %1345 = vmatprep.subr.mxu0 0.0
        %1346 = vmatpush1.msra.mxu0 0.0
        %1347 = vmatprep.subr.mxu0 0.0
        %1348 = vmatpush1.msra.mxu0 0.0
        %1349 = vmatprep.subr.mxu0 0.0
        %1350 = vmatpush1.msra.mxu0 0.0
        %1351 = vmatprep.subr.mxu0 0.0
        %1352 = vmatpush1.msra.mxu0 0.0
        %1353 = vmatprep.subr.mxu0 0.0
        %1354 = vmatpush1.msra.mxu0 0.0
        %1355 = vmatprep.subr.mxu0 0.0
        %1356 = vmatpush1.msra.mxu0 0.0
        %1357 = vmatprep.subr.mxu0 0.0
        %1358 = vmatpush1.msra.mxu0 0.0
        %1359 = vmatprep.subr.mxu0 0.0
        %1360 = vmatpush1.msra.mxu0 0.0
        %1361 = vmatprep.subr.mxu0 0.0
        %1362 = vmatpush1.msra.mxu0 0.0
        %1363 = vmatprep.subr.mxu0 0.0
        %1364 = vmatpush1.msra.mxu0 0.0
        %1365 = vmatprep.subr.mxu0 0.0
        %1366 = vmatpush1.msra.mxu0 0.0
        %1367 = vmatprep.subr.mxu0 0.0
        %1368 = vmatpush1.msra.mxu0 0.0
        %1369 = vmatprep.subr.mxu0 0.0
        %1370 = vmatpush1.msra.mxu0 0.0
        %1371 = vmatprep.subr.mxu0 0.0
        %1372 = vmatpush1.msra.mxu0 0.0
        %1373 = vmatprep.subr.mxu0 0.0
        %1374 = vmatpush1.msra.mxu0 0.0
        %1375 = vmatprep.subr.mxu0 0.0
        %1376 = vmatpush1.msra.mxu0 0.0
        %1377 = vmatprep.subr.mxu0 0.0
        %1378 = vmatpush1.msra.mxu0 0.0
        %1379 = vmatprep.subr.mxu0 0.0
        %1380 = vmatpush1.msra.mxu0 0.0
        %1381 = vmatprep.mubr.f32.mxu0 0.0
        %1382 = vmatmul.mubr.f32.gmra.mrb[0].mxu0 %v1315
        %v1383 = vpop.f32.mrb[0].mxu0
        %v1384 = vadd.f32 0.0, %v1383
        %v1385 = vpop.f32.mrb[0].mxu0
        %1386 = vdwg.mxu0
        %v1388 = vsel %vm1313, %v594, 0
        %1390 = vmatprep.subr.mxu0 0.0
        %1391 = vmatpush1.msra.mxu0 %v1310
        %1392 = vmatprep.subr.mxu0 0.0
        %1393 = vmatpush1.msra.mxu0 0.0
        %1394 = vmatprep.subr.mxu0 0.0
        %1395 = vmatpush1.msra.mxu0 0.0
        %1396 = vmatprep.subr.mxu0 0.0
        %1397 = vmatpush1.msra.mxu0 0.0
        %1398 = vmatprep.subr.mxu0 0.0
        %1399 = vmatpush1.msra.mxu0 0.0
        %1400 = vmatprep.subr.mxu0 0.0
        %1401 = vmatpush1.msra.mxu0 0.0
        %1402 = vmatprep.subr.mxu0 0.0
        %1403 = vmatpush1.msra.mxu0 0.0
        %1404 = vmatprep.subr.mxu0 0.0
        %1405 = vmatpush1.msra.mxu0 0.0
        %1406 = vmatprep.subr.mxu0 0.0
        %1407 = vmatpush1.msra.mxu0 0.0
        %1408 = vmatprep.subr.mxu0 0.0
        %1409 = vmatpush1.msra.mxu0 0.0
        %1410 = vmatprep.subr.mxu0 0.0
        %1411 = vmatpush1.msra.mxu0 0.0
        %1412 = vmatprep.subr.mxu0 0.0
        %1413 = vmatpush1.msra.mxu0 0.0
        %1414 = vmatprep.subr.mxu0 0.0
        %1415 = vmatpush1.msra.mxu0 0.0
        %1416 = vmatprep.subr.mxu0 0.0
        %1417 = vmatpush1.msra.mxu0 0.0
        %1418 = vmatprep.subr.mxu0 0.0
        %1419 = vmatpush1.msra.mxu0 0.0
        %1420 = vmatprep.subr.mxu0 0.0
        %1421 = vmatpush1.msra.mxu0 0.0
        %1422 = vmatprep.subr.mxu0 0.0
        %1423 = vmatpush1.msra.mxu0 0.0
        %1424 = vmatprep.subr.mxu0 0.0
        %1425 = vmatpush1.msra.mxu0 0.0
        %1426 = vmatprep.subr.mxu0 0.0
        %1427 = vmatpush1.msra.mxu0 0.0
        %1428 = vmatprep.subr.mxu0 0.0
        %1429 = vmatpush1.msra.mxu0 0.0
        %1430 = vmatprep.subr.mxu0 0.0
        %1431 = vmatpush1.msra.mxu0 0.0
        %1432 = vmatprep.subr.mxu0 0.0
        %1433 = vmatpush1.msra.mxu0 0.0
        %1434 = vmatprep.subr.mxu0 0.0
        %1435 = vmatpush1.msra.mxu0 0.0
        %1436 = vmatprep.subr.mxu0 0.0
        %1437 = vmatpush1.msra.mxu0 0.0
        %1438 = vmatprep.subr.mxu0 0.0
        %1439 = vmatpush1.msra.mxu0 0.0
        %1440 = vmatprep.subr.mxu0 0.0
        %1441 = vmatpush1.msra.mxu0 0.0
        %1442 = vmatprep.subr.mxu0 0.0
        %1443 = vmatpush1.msra.mxu0 0.0
        %1444 = vmatprep.subr.mxu0 0.0
        %1445 = vmatpush1.msra.mxu0 0.0
        %1446 = vmatprep.subr.mxu0 0.0
        %1447 = vmatpush1.msra.mxu0 0.0
        %1448 = vmatprep.subr.mxu0 0.0
        %1449 = vmatpush1.msra.mxu0 0.0
        %1450 = vmatprep.subr.mxu0 0.0
        %1451 = vmatpush1.msra.mxu0 0.0
        %1452 = vmatprep.subr.mxu0 0.0
        %1453 = vmatpush1.msra.mxu0 0.0
        %1454 = vmatprep.mubr.f32.mxu0 0.0
        %1455 = vmatmul.mubr.f32.gmra.mrb[0].mxu0 %v1388
        %v1456 = vpop.f32.mrb[0].mxu0
        %v1457 = vadd.f32 0.0, %v1456
        %v1458 = vpop.f32.mrb[0].mxu0
        %1459 = vdwg.mxu0
        %v1461 = vsel %vm1313, %v595, 0
        %1463 = vmatprep.subr.mxu0 0.0
        %1464 = vmatpush1.msra.mxu0 %v1311
        %1465 = vmatprep.subr.mxu0 0.0
        %1466 = vmatpush1.msra.mxu0 0.0
        %1467 = vmatprep.subr.mxu0 0.0
        %1468 = vmatpush1.msra.mxu0 0.0
        %1469 = vmatprep.subr.mxu0 0.0
        %1470 = vmatpush1.msra.mxu0 0.0
        %1471 = vmatprep.subr.mxu0 0.0
        %1472 = vmatpush1.msra.mxu0 0.0
        %1473 = vmatprep.subr.mxu0 0.0
        %1474 = vmatpush1.msra.mxu0 0.0
        %1475 = vmatprep.subr.mxu0 0.0
        %1476 = vmatpush1.msra.mxu0 0.0
        %1477 = vmatprep.subr.mxu0 0.0
        %1478 = vmatpush1.msra.mxu0 0.0
        %1479 = vmatprep.subr.mxu0 0.0
        %1480 = vmatpush1.msra.mxu0 0.0
        %1481 = vmatprep.subr.mxu0 0.0
        %1482 = vmatpush1.msra.mxu0 0.0
        %1483 = vmatprep.subr.mxu0 0.0
        %1484 = vmatpush1.msra.mxu0 0.0
        %1485 = vmatprep.subr.mxu0 0.0
        %1486 = vmatpush1.msra.mxu0 0.0
        %1487 = vmatprep.subr.mxu0 0.0
        %1488 = vmatpush1.msra.mxu0 0.0
        %1489 = vmatprep.subr.mxu0 0.0
        %1490 = vmatpush1.msra.mxu0 0.0
        %1491 = vmatprep.subr.mxu0 0.0
        %1492 = vmatpush1.msra.mxu0 0.0
        %1493 = vmatprep.subr.mxu0 0.0
        %1494 = vmatpush1.msra.mxu0 0.0
        %1495 = vmatprep.subr.mxu0 0.0
        %1496 = vmatpush1.msra.mxu0 0.0
        %1497 = vmatprep.subr.mxu0 0.0
        %1498 = vmatpush1.msra.mxu0 0.0
        %1499 = vmatprep.subr.mxu0 0.0
        %1500 = vmatpush1.msra.mxu0 0.0
        %1501 = vmatprep.subr.mxu0 0.0
        %1502 = vmatpush1.msra.mxu0 0.0
        %1503 = vmatprep.subr.mxu0 0.0
        %1504 = vmatpush1.msra.mxu0 0.0
        %1505 = vmatprep.subr.mxu0 0.0
        %1506 = vmatpush1.msra.mxu0 0.0
        %1507 = vmatprep.subr.mxu0 0.0
        %1508 = vmatpush1.msra.mxu0 0.0
        %1509 = vmatprep.subr.mxu0 0.0
        %1510 = vmatpush1.msra.mxu0 0.0
        %1511 = vmatprep.subr.mxu0 0.0
        %1512 = vmatpush1.msra.mxu0 0.0
        %1513 = vmatprep.subr.mxu0 0.0
        %1514 = vmatpush1.msra.mxu0 0.0
        %1515 = vmatprep.subr.mxu0 0.0
        %1516 = vmatpush1.msra.mxu0 0.0
        %1517 = vmatprep.subr.mxu0 0.0
        %1518 = vmatpush1.msra.mxu0 0.0
        %1519 = vmatprep.subr.mxu0 0.0
        %1520 = vmatpush1.msra.mxu0 0.0
        %1521 = vmatprep.subr.mxu0 0.0
        %1522 = vmatpush1.msra.mxu0 0.0
        %1523 = vmatprep.subr.mxu0 0.0
        %1524 = vmatpush1.msra.mxu0 0.0
        %1525 = vmatprep.subr.mxu0 0.0
        %1526 = vmatpush1.msra.mxu0 0.0
        %1527 = vmatprep.mubr.f32.mxu0 0.0
        %1528 = vmatmul.mubr.f32.gmra.mrb[0].mxu0 %v1461
        %v1529 = vpop.f32.mrb[0].mxu0
        %v1530 = vadd.f32 0.0, %v1529
        %v1531 = vpop.f32.mrb[0].mxu0
        %1532 = vdwg.mxu0
        %v1534 = vsel %vm1313, %v596, 0
        %1536 = vmatprep.subr.mxu0 0.0
        %1537 = vmatpush1.msra.mxu0 %v1312
        %1538 = vmatprep.subr.mxu0 0.0
        %1539 = vmatpush1.msra.mxu0 0.0
        %1540 = vmatprep.subr.mxu0 0.0
        %1541 = vmatpush1.msra.mxu0 0.0
        %1542 = vmatprep.subr.mxu0 0.0
        %1543 = vmatpush1.msra.mxu0 0.0
        %1544 = vmatprep.subr.mxu0 0.0
        %1545 = vmatpush1.msra.mxu0 0.0
        %1546 = vmatprep.subr.mxu0 0.0
        %1547 = vmatpush1.msra.mxu0 0.0
        %1548 = vmatprep.subr.mxu0 0.0
        %1549 = vmatpush1.msra.mxu0 0.0
        %1550 = vmatprep.subr.mxu0 0.0
        %1551 = vmatpush1.msra.mxu0 0.0
        %1552 = vmatprep.subr.mxu0 0.0
        %1553 = vmatpush1.msra.mxu0 0.0
        %1554 = vmatprep.subr.mxu0 0.0
        %1555 = vmatpush1.msra.mxu0 0.0
        %1556 = vmatprep.subr.mxu0 0.0
        %1557 = vmatpush1.msra.mxu0 0.0
        %1558 = vmatprep.subr.mxu0 0.0
        %1559 = vmatpush1.msra.mxu0 0.0
        %1560 = vmatprep.subr.mxu0 0.0
        %1561 = vmatpush1.msra.mxu0 0.0
        %1562 = vmatprep.subr.mxu0 0.0
        %1563 = vmatpush1.msra.mxu0 0.0
        %1564 = vmatprep.subr.mxu0 0.0
        %1565 = vmatpush1.msra.mxu0 0.0
        %1566 = vmatprep.subr.mxu0 0.0
        %1567 = vmatpush1.msra.mxu0 0.0
        %1568 = vmatprep.subr.mxu0 0.0
        %1569 = vmatpush1.msra.mxu0 0.0
        %1570 = vmatprep.subr.mxu0 0.0
        %1571 = vmatpush1.msra.mxu0 0.0
        %1572 = vmatprep.subr.mxu0 0.0
        %1573 = vmatpush1.msra.mxu0 0.0
        %1574 = vmatprep.subr.mxu0 0.0
        %1575 = vmatpush1.msra.mxu0 0.0
        %1576 = vmatprep.subr.mxu0 0.0
        %1577 = vmatpush1.msra.mxu0 0.0
        %1578 = vmatprep.subr.mxu0 0.0
        %1579 = vmatpush1.msra.mxu0 0.0
        %1580 = vmatprep.subr.mxu0 0.0
        %1581 = vmatpush1.msra.mxu0 0.0
        %1582 = vmatprep.subr.mxu0 0.0
        %1583 = vmatpush1.msra.mxu0 0.0
        %1584 = vmatprep.subr.mxu0 0.0
        %1585 = vmatpush1.msra.mxu0 0.0
        %1586 = vmatprep.subr.mxu0 0.0
        %1587 = vmatpush1.msra.mxu0 0.0
        %1588 = vmatprep.subr.mxu0 0.0
        %1589 = vmatpush1.msra.mxu0 0.0
        %1590 = vmatprep.subr.mxu0 0.0
        %1591 = vmatpush1.msra.mxu0 0.0
        %1592 = vmatprep.subr.mxu0 0.0
        %1593 = vmatpush1.msra.mxu0 0.0
        %1594 = vmatprep.subr.mxu0 0.0
        %1595 = vmatpush1.msra.mxu0 0.0
        %1596 = vmatprep.subr.mxu0 0.0
        %1597 = vmatpush1.msra.mxu0 0.0
        %1598 = vmatprep.subr.mxu0 0.0
        %1599 = vmatpush1.msra.mxu0 0.0
        %1600 = vmatprep.mubr.f32.mxu0 0.0
        %1601 = vmatmul.mubr.f32.gmra.mrb[0].mxu0 %v1534
        %v1602 = vpop.f32.mrb[0].mxu0
        %v1603 = vadd.f32 0.0, %v1602
        %v1604 = vpop.f32.mrb[0].mxu0
        %1605 = vdwg.mxu0
        %v1606 = vsel %vm1313, %v1384, -inf
        %1607 = vmax.xlane.f32.xlu0 %v1606
        %v1608 = vpop.xlane.xlu0 %1607
        %v1609 = vsel %vm1313, %v1457, -inf
        %1610 = vmax.xlane.f32.xlu0 %v1609
        %v1611 = vpop.xlane.xlu0 %1610
        %v1612 = vsel %vm1313, %v1530, -inf
        %1613 = vmax.xlane.f32.xlu0 %v1612
        %v1614 = vpop.xlane.xlu0 %1613
        %v1615 = vsel %vm1313, %v1603, -inf
        %1616 = vmax.xlane.f32.xlu0 %v1615
        %v1617 = vpop.xlane.xlu0 %1616
        %v1618 = vsub.f32 %v1384, %v1608
        %v1619 = vsub.f32 %v1457, %v1611
        %v1620 = vsub.f32 %v1530, %v1614
        %v1621 = vsub.f32 %v1603, %v1617
        %v1622 = vmul.f32 %v1618, 1.442695
        %v1623 = vpow.pop %v1622
        %v1624 = vmul.f32 %v1619, 1.442695
        %v1625 = vpow.pop %v1624
        %v1626 = vmul.f32 %v1620, 1.442695
        %v1627 = vpow.pop %v1626
        %v1628 = vmul.f32 %v1621, 1.442695
        %v1629 = vpow.pop %v1628
        %v1630 = vsel %vm1313, %v1623, 0.0
        %1631 = vadd.xlane.f32.xlu0 %v1630
        %v1632 = vpop.xlane.xlu0 %1631
        %v1633 = vsel %vm1313, %v1625, 0.0
        %1634 = vadd.xlane.f32.xlu0 %v1633
        %v1635 = vpop.xlane.xlu0 %1634
        %v1636 = vsel %vm1313, %v1627, 0.0
        %1637 = vadd.xlane.f32.xlu0 %v1636
        %v1638 = vpop.xlane.xlu0 %1637
        %v1639 = vsel %vm1313, %v1629, 0.0
        %1640 = vadd.xlane.f32.xlu0 %v1639
        %v1641 = vpop.xlane.xlu0 %1640
        %v1642 = vrcp.pop %v1632
        %v1643 = vrcp.pop %v1635
        %v1644 = vrcp.pop %v1638
        %v1645 = vrcp.pop %v1641
        %v1646 = vmul.f32 %v1623, %v1642
        %v1647 = vmul.f32 %v1625, %v1643
        %v1648 = vmul.f32 %v1627, %v1644
        %v1649 = vmul.f32 %v1629, %v1645
        %1650 = vxpose.xlu0.b32.start [1/16] %v501, 128
        %1651 = vxpose.xlu0.b32.cont [2/16] 0.0, 128
        %1652 = vxpose.xlu0.b32.cont [3/16] 0.0, 128
        %1653 = vxpose.xlu0.b32.cont [4/16] 0.0, 128
        %1654 = vxpose.xlu0.b32.cont [5/16] 0.0, 128
        %1655 = vxpose.xlu0.b32.cont [6/16] 0.0, 128
        %1656 = vxpose.xlu0.b32.cont [7/16] 0.0, 128
        %1657 = vxpose.xlu0.b32.cont [8/16] 0.0, 128
        %1658 = vxpose.xlu0.b32.cont [9/16] 0.0, 128
        %1659 = vxpose.xlu0.b32.cont [10/16] 0.0, 128
        %1660 = vxpose.xlu0.b32.cont [11/16] 0.0, 128
        %1661 = vxpose.xlu0.b32.cont [12/16] 0.0, 128
        %1662 = vxpose.xlu0.b32.cont [13/16] 0.0, 128
        %1663 = vxpose.xlu0.b32.cont [14/16] 0.0, 128
        %1664 = vxpose.xlu0.b32.cont [15/16] 0.0, 128
        %1665 = vxpose.xlu0.b32.end [16/16] 0.0, 128
        %v1666 = vpop.trf.xlu0
        %v1667 = vpop.trf.xlu0
        %v1668 = vpop.trf.xlu0
        %v1669 = vpop.trf.xlu0
        %v1670 = vpop.trf.xlu0
        %v1671 = vpop.trf.xlu0
        %v1672 = vpop.trf.xlu0
        %v1673 = vpop.trf.xlu0
        %v1674 = vpop.trf.xlu0
        %v1675 = vpop.trf.xlu0
        %v1676 = vpop.trf.xlu0
        %v1677 = vpop.trf.xlu0
        %v1678 = vpop.trf.xlu0
        %v1679 = vpop.trf.xlu0
        %v1680 = vpop.trf.xlu0
        %v1681 = vpop.trf.xlu0
        %1682 = vxpose.xlu0.b32.start [1/16] %v525, 128
        %1683 = vxpose.xlu0.b32.cont [2/16] 0.0, 128
        %1684 = vxpose.xlu0.b32.cont [3/16] 0.0, 128
        %1685 = vxpose.xlu0.b32.cont [4/16] 0.0, 128
        %1686 = vxpose.xlu0.b32.cont [5/16] 0.0, 128
        %1687 = vxpose.xlu0.b32.cont [6/16] 0.0, 128
        %1688 = vxpose.xlu0.b32.cont [7/16] 0.0, 128
        %1689 = vxpose.xlu0.b32.cont [8/16] 0.0, 128
        %1690 = vxpose.xlu0.b32.cont [9/16] 0.0, 128
        %1691 = vxpose.xlu0.b32.cont [10/16] 0.0, 128
        %1692 = vxpose.xlu0.b32.cont [11/16] 0.0, 128
        %1693 = vxpose.xlu0.b32.cont [12/16] 0.0, 128
        %1694 = vxpose.xlu0.b32.cont [13/16] 0.0, 128
        %1695 = vxpose.xlu0.b32.cont [14/16] 0.0, 128
        %1696 = vxpose.xlu0.b32.cont [15/16] 0.0, 128
        %1697 = vxpose.xlu0.b32.end [16/16] 0.0, 128
        %v1698 = vpop.trf.xlu0
        %v1699 = vpop.trf.xlu0
        %v1700 = vpop.trf.xlu0
        %v1701 = vpop.trf.xlu0
        %v1702 = vpop.trf.xlu0
        %v1703 = vpop.trf.xlu0
        %v1704 = vpop.trf.xlu0
        %v1705 = vpop.trf.xlu0
        %v1706 = vpop.trf.xlu0
        %v1707 = vpop.trf.xlu0
        %v1708 = vpop.trf.xlu0
        %v1709 = vpop.trf.xlu0
        %v1710 = vpop.trf.xlu0
        %v1711 = vpop.trf.xlu0
        %v1712 = vpop.trf.xlu0
        %v1713 = vpop.trf.xlu0
        %1714 = vxpose.xlu0.b32.start [1/16] %v508, 128
        %1715 = vxpose.xlu0.b32.cont [2/16] 0.0, 128
        %1716 = vxpose.xlu0.b32.cont [3/16] 0.0, 128
        %1717 = vxpose.xlu0.b32.cont [4/16] 0.0, 128
        %1718 = vxpose.xlu0.b32.cont [5/16] 0.0, 128
        %1719 = vxpose.xlu0.b32.cont [6/16] 0.0, 128
        %1720 = vxpose.xlu0.b32.cont [7/16] 0.0, 128
        %1721 = vxpose.xlu0.b32.cont [8/16] 0.0, 128
        %1722 = vxpose.xlu0.b32.cont [9/16] 0.0, 128
        %1723 = vxpose.xlu0.b32.cont [10/16] 0.0, 128
        %1724 = vxpose.xlu0.b32.cont [11/16] 0.0, 128
        %1725 = vxpose.xlu0.b32.cont [12/16] 0.0, 128
        %1726 = vxpose.xlu0.b32.cont [13/16] 0.0, 128
        %1727 = vxpose.xlu0.b32.cont [14/16] 0.0, 128
        %1728 = vxpose.xlu0.b32.cont [15/16] 0.0, 128
        %1729 = vxpose.xlu0.b32.end [16/16] 0.0, 128
        %v1730 = vpop.trf.xlu0
        %v1731 = vpop.trf.xlu0
        %v1732 = vpop.trf.xlu0
        %v1733 = vpop.trf.xlu0
        %v1734 = vpop.trf.xlu0
        %v1735 = vpop.trf.xlu0
        %v1736 = vpop.trf.xlu0
        %v1737 = vpop.trf.xlu0
        %v1738 = vpop.trf.xlu0
        %v1739 = vpop.trf.xlu0
        %v1740 = vpop.trf.xlu0
        %v1741 = vpop.trf.xlu0
        %v1742 = vpop.trf.xlu0
        %v1743 = vpop.trf.xlu0
        %v1744 = vpop.trf.xlu0
        %v1745 = vpop.trf.xlu0
        %1746 = vxpose.xlu0.b32.start [1/16] %v526, 128
        %1747 = vxpose.xlu0.b32.cont [2/16] 0.0, 128
        %1748 = vxpose.xlu0.b32.cont [3/16] 0.0, 128
        %1749 = vxpose.xlu0.b32.cont [4/16] 0.0, 128
        %1750 = vxpose.xlu0.b32.cont [5/16] 0.0, 128
        %1751 = vxpose.xlu0.b32.cont [6/16] 0.0, 128
        %1752 = vxpose.xlu0.b32.cont [7/16] 0.0, 128
        %1753 = vxpose.xlu0.b32.cont [8/16] 0.0, 128
        %1754 = vxpose.xlu0.b32.cont [9/16] 0.0, 128
        %1755 = vxpose.xlu0.b32.cont [10/16] 0.0, 128
        %1756 = vxpose.xlu0.b32.cont [11/16] 0.0, 128
        %1757 = vxpose.xlu0.b32.cont [12/16] 0.0, 128
        %1758 = vxpose.xlu0.b32.cont [13/16] 0.0, 128
        %1759 = vxpose.xlu0.b32.cont [14/16] 0.0, 128
        %1760 = vxpose.xlu0.b32.cont [15/16] 0.0, 128
        %1761 = vxpose.xlu0.b32.end [16/16] 0.0, 128
        %v1762 = vpop.trf.xlu0
        %v1763 = vpop.trf.xlu0
        %v1764 = vpop.trf.xlu0
        %v1765 = vpop.trf.xlu0
        %v1766 = vpop.trf.xlu0
        %v1767 = vpop.trf.xlu0
        %v1768 = vpop.trf.xlu0
        %v1769 = vpop.trf.xlu0
        %v1770 = vpop.trf.xlu0
        %v1771 = vpop.trf.xlu0
        %v1772 = vpop.trf.xlu0
        %v1773 = vpop.trf.xlu0
        %v1774 = vpop.trf.xlu0
        %v1775 = vpop.trf.xlu0
        %v1776 = vpop.trf.xlu0
        %v1777 = vpop.trf.xlu0
        %1778 = vxpose.xlu0.b32.start [1/16] %v517, 128
        %1779 = vxpose.xlu0.b32.cont [2/16] 0.0, 128
        %1780 = vxpose.xlu0.b32.cont [3/16] 0.0, 128
        %1781 = vxpose.xlu0.b32.cont [4/16] 0.0, 128
        %1782 = vxpose.xlu0.b32.cont [5/16] 0.0, 128
        %1783 = vxpose.xlu0.b32.cont [6/16] 0.0, 128
        %1784 = vxpose.xlu0.b32.cont [7/16] 0.0, 128
        %1785 = vxpose.xlu0.b32.cont [8/16] 0.0, 128
        %1786 = vxpose.xlu0.b32.cont [9/16] 0.0, 128
        %1787 = vxpose.xlu0.b32.cont [10/16] 0.0, 128
        %1788 = vxpose.xlu0.b32.cont [11/16] 0.0, 128
        %1789 = vxpose.xlu0.b32.cont [12/16] 0.0, 128
        %1790 = vxpose.xlu0.b32.cont [13/16] 0.0, 128
        %1791 = vxpose.xlu0.b32.cont [14/16] 0.0, 128
        %1792 = vxpose.xlu0.b32.cont [15/16] 0.0, 128
        %1793 = vxpose.xlu0.b32.end [16/16] 0.0, 128
        %v1794 = vpop.trf.xlu0
        %v1795 = vpop.trf.xlu0
        %v1796 = vpop.trf.xlu0
        %v1797 = vpop.trf.xlu0
        %v1798 = vpop.trf.xlu0
        %v1799 = vpop.trf.xlu0
        %v1800 = vpop.trf.xlu0
        %v1801 = vpop.trf.xlu0
        %v1802 = vpop.trf.xlu0
        %v1803 = vpop.trf.xlu0
        %v1804 = vpop.trf.xlu0
        %v1805 = vpop.trf.xlu0
        %v1806 = vpop.trf.xlu0
        %v1807 = vpop.trf.xlu0
        %v1808 = vpop.trf.xlu0
        %v1809 = vpop.trf.xlu0
        %1810 = vxpose.xlu0.b32.start [1/16] %v527, 128
        %1811 = vxpose.xlu0.b32.cont [2/16] 0.0, 128
        %1812 = vxpose.xlu0.b32.cont [3/16] 0.0, 128
        %1813 = vxpose.xlu0.b32.cont [4/16] 0.0, 128
        %1814 = vxpose.xlu0.b32.cont [5/16] 0.0, 128
        %1815 = vxpose.xlu0.b32.cont [6/16] 0.0, 128
        %1816 = vxpose.xlu0.b32.cont [7/16] 0.0, 128
        %1817 = vxpose.xlu0.b32.cont [8/16] 0.0, 128
        %1818 = vxpose.xlu0.b32.cont [9/16] 0.0, 128
        %1819 = vxpose.xlu0.b32.cont [10/16] 0.0, 128
        %1820 = vxpose.xlu0.b32.cont [11/16] 0.0, 128
        %1821 = vxpose.xlu0.b32.cont [12/16] 0.0, 128
        %1822 = vxpose.xlu0.b32.cont [13/16] 0.0, 128
        %1823 = vxpose.xlu0.b32.cont [14/16] 0.0, 128
        %1824 = vxpose.xlu0.b32.cont [15/16] 0.0, 128
        %1825 = vxpose.xlu0.b32.end [16/16] 0.0, 128
        %v1826 = vpop.trf.xlu0
        %v1827 = vpop.trf.xlu0
        %v1828 = vpop.trf.xlu0
        %v1829 = vpop.trf.xlu0
        %v1830 = vpop.trf.xlu0
        %v1831 = vpop.trf.xlu0
        %v1832 = vpop.trf.xlu0
        %v1833 = vpop.trf.xlu0
        %v1834 = vpop.trf.xlu0
        %v1835 = vpop.trf.xlu0
        %v1836 = vpop.trf.xlu0
        %v1837 = vpop.trf.xlu0
        %v1838 = vpop.trf.xlu0
        %v1839 = vpop.trf.xlu0
        %v1840 = vpop.trf.xlu0
        %v1841 = vpop.trf.xlu0
        %1842 = vxpose.xlu0.b32.start [1/16] %v524, 128
        %1843 = vxpose.xlu0.b32.cont [2/16] 0.0, 128
        %1844 = vxpose.xlu0.b32.cont [3/16] 0.0, 128
        %1845 = vxpose.xlu0.b32.cont [4/16] 0.0, 128
        %1846 = vxpose.xlu0.b32.cont [5/16] 0.0, 128
        %1847 = vxpose.xlu0.b32.cont [6/16] 0.0, 128
        %1848 = vxpose.xlu0.b32.cont [7/16] 0.0, 128
        %1849 = vxpose.xlu0.b32.cont [8/16] 0.0, 128
        %1850 = vxpose.xlu0.b32.cont [9/16] 0.0, 128
        %1851 = vxpose.xlu0.b32.cont [10/16] 0.0, 128
        %1852 = vxpose.xlu0.b32.cont [11/16] 0.0, 128
        %1853 = vxpose.xlu0.b32.cont [12/16] 0.0, 128
        %1854 = vxpose.xlu0.b32.cont [13/16] 0.0, 128
        %1855 = vxpose.xlu0.b32.cont [14/16] 0.0, 128
        %1856 = vxpose.xlu0.b32.cont [15/16] 0.0, 128
        %1857 = vxpose.xlu0.b32.end [16/16] 0.0, 128
        %v1858 = vpop.trf.xlu0
        %v1859 = vpop.trf.xlu0
        %v1860 = vpop.trf.xlu0
        %v1861 = vpop.trf.xlu0
        %v1862 = vpop.trf.xlu0
        %v1863 = vpop.trf.xlu0
        %v1864 = vpop.trf.xlu0
        %v1865 = vpop.trf.xlu0
        %v1866 = vpop.trf.xlu0
        %v1867 = vpop.trf.xlu0
        %v1868 = vpop.trf.xlu0
        %v1869 = vpop.trf.xlu0
        %v1870 = vpop.trf.xlu0
        %v1871 = vpop.trf.xlu0
        %v1872 = vpop.trf.xlu0
        %v1873 = vpop.trf.xlu0
        %1874 = vxpose.xlu0.b32.start [1/16] %v528, 128
        %1875 = vxpose.xlu0.b32.cont [2/16] 0.0, 128
        %1876 = vxpose.xlu0.b32.cont [3/16] 0.0, 128
        %1877 = vxpose.xlu0.b32.cont [4/16] 0.0, 128
        %1878 = vxpose.xlu0.b32.cont [5/16] 0.0, 128
        %1879 = vxpose.xlu0.b32.cont [6/16] 0.0, 128
        %1880 = vxpose.xlu0.b32.cont [7/16] 0.0, 128
        %1881 = vxpose.xlu0.b32.cont [8/16] 0.0, 128
        %1882 = vxpose.xlu0.b32.cont [9/16] 0.0, 128
        %1883 = vxpose.xlu0.b32.cont [10/16] 0.0, 128
        %1884 = vxpose.xlu0.b32.cont [11/16] 0.0, 128
        %1885 = vxpose.xlu0.b32.cont [12/16] 0.0, 128
        %1886 = vxpose.xlu0.b32.cont [13/16] 0.0, 128
        %1887 = vxpose.xlu0.b32.cont [14/16] 0.0, 128
        %1888 = vxpose.xlu0.b32.cont [15/16] 0.0, 128
        %1889 = vxpose.xlu0.b32.end [16/16] 0.0, 128
        %v1890 = vpop.trf.xlu0
        %v1891 = vpop.trf.xlu0
        %v1892 = vpop.trf.xlu0
        %v1893 = vpop.trf.xlu0
        %v1894 = vpop.trf.xlu0
        %v1895 = vpop.trf.xlu0
        %v1896 = vpop.trf.xlu0
        %v1897 = vpop.trf.xlu0
        %v1898 = vpop.trf.xlu0
        %v1899 = vpop.trf.xlu0
        %v1900 = vpop.trf.xlu0
        %v1901 = vpop.trf.xlu0
        %v1902 = vpop.trf.xlu0
        %v1903 = vpop.trf.xlu0
        %v1904 = vpop.trf.xlu0
        %v1905 = vpop.trf.xlu0
        %v1906 = vcombine.low %v1666, %v1730
        %v1907 = vcombine.high %v1666, %v1730
        %v1909 = vunpack.c.l.s4 1983009808
        %v1910 = vunpack.c.0.s8 %v1909
        %v1911 = vlaneseq
        %v1912 = vshrl.u32 %v1911, 7
        %v1913 = vsub.s32 %v1910, %v1912
        %v1914 = vrot.slane %v1906, %v1913
        %v1916 = vunpack.c.l.s4 1983009808
        %v1917 = vunpack.c.0.s8 %v1916
        %v1918 = vlaneseq
        %v1919 = vshrl.u32 %v1918, 7
        %v1920 = vsub.s32 %v1917, %v1919
        %v1921 = vrot.slane %v1907, %v1920
        %v1922 = vcombine.low %v1698, %v1762
        %v1923 = vcombine.high %v1698, %v1762
        %v1925 = vunpack.c.l.s4 1983009808
        %v1926 = vunpack.c.0.s8 %v1925
        %v1927 = vlaneseq
        %v1928 = vshrl.u32 %v1927, 7
        %v1929 = vsub.s32 %v1926, %v1928
        %v1930 = vrot.slane %v1922, %v1929
        %v1932 = vunpack.c.l.s4 1983009808
        %v1933 = vunpack.c.0.s8 %v1932
        %v1934 = vlaneseq
        %v1935 = vshrl.u32 %v1934, 7
        %v1936 = vsub.s32 %v1933, %v1935
        %v1937 = vrot.slane %v1923, %v1936
        %v1938 = vcombine.low %v1794, %v1858
        %v1939 = vcombine.high %v1794, %v1858
        %v1941 = vunpack.c.l.s4 1983009808
        %v1942 = vunpack.c.0.s8 %v1941
        %v1943 = vlaneseq
        %v1944 = vshrl.u32 %v1943, 7
        %v1945 = vsub.s32 %v1942, %v1944
        %v1946 = vrot.slane %v1938, %v1945
        %v1948 = vunpack.c.l.s4 1983009808
        %v1949 = vunpack.c.0.s8 %v1948
        %v1950 = vlaneseq
        %v1951 = vshrl.u32 %v1950, 7
        %v1952 = vsub.s32 %v1949, %v1951
        %v1953 = vrot.slane %v1939, %v1952
        %v1954 = vcombine.low %v1826, %v1890
        %v1955 = vcombine.high %v1826, %v1890
        %v1957 = vunpack.c.l.s4 1983009808
        %v1958 = vunpack.c.0.s8 %v1957
        %v1959 = vlaneseq
        %v1960 = vshrl.u32 %v1959, 7
        %v1961 = vsub.s32 %v1958, %v1960
        %v1962 = vrot.slane %v1954, %v1961
        %v1964 = vunpack.c.l.s4 1983009808
        %v1965 = vunpack.c.0.s8 %v1964
        %v1966 = vlaneseq
        %v1967 = vshrl.u32 %v1966, 7
        %v1968 = vsub.s32 %v1965, %v1967
        %v1969 = vrot.slane %v1955, %v1968
        %v1970 = vcombine.low %v1914, %v1930
        %v1971 = vcombine.high %v1914, %v1930
        %v1973 = vunpack.c.l.s4 1934713408
        %v1974 = vunpack.c.0.s8 %v1973
        %v1975 = vlaneseq
        %v1976 = vshrl.u32 %v1975, 7
        %v1977 = vsub.s32 %v1974, %v1976
        %v1978 = vrot.slane %v1970, %v1977
        %v1980 = vunpack.c.l.s4 1934713408
        %v1981 = vunpack.c.0.s8 %v1980
        %v1982 = vlaneseq
        %v1983 = vshrl.u32 %v1982, 7
        %v1984 = vsub.s32 %v1981, %v1983
        %v1985 = vrot.slane %v1971, %v1984
        %v1986 = vcombine.low %v1921, %v1937
        %v1987 = vcombine.high %v1921, %v1937
        %v1989 = vunpack.c.l.s4 1934713408
        %v1990 = vunpack.c.0.s8 %v1989
        %v1991 = vlaneseq
        %v1992 = vshrl.u32 %v1991, 7
        %v1993 = vsub.s32 %v1990, %v1992
        %v1994 = vrot.slane %v1986, %v1993
        %v1996 = vunpack.c.l.s4 1934713408
        %v1997 = vunpack.c.0.s8 %v1996
        %v1998 = vlaneseq
        %v1999 = vshrl.u32 %v1998, 7
        %v2000 = vsub.s32 %v1997, %v1999
        %v2001 = vrot.slane %v1987, %v2000
        %v2002 = vcombine.low %v1946, %v1962
        %v2003 = vcombine.high %v1946, %v1962
        %v2005 = vunpack.c.l.s4 1934713408
        %v2006 = vunpack.c.0.s8 %v2005
        %v2007 = vlaneseq
        %v2008 = vshrl.u32 %v2007, 7
        %v2009 = vsub.s32 %v2006, %v2008
        %v2010 = vrot.slane %v2002, %v2009
        %v2012 = vunpack.c.l.s4 1934713408
        %v2013 = vunpack.c.0.s8 %v2012
        %v2014 = vlaneseq
        %v2015 = vshrl.u32 %v2014, 7
        %v2016 = vsub.s32 %v2013, %v2015
        %v2017 = vrot.slane %v2003, %v2016
        %v2018 = vcombine.low %v1953, %v1969
        %v2019 = vcombine.high %v1953, %v1969
        %v2021 = vunpack.c.l.s4 1934713408
        %v2022 = vunpack.c.0.s8 %v2021
        %v2023 = vlaneseq
        %v2024 = vshrl.u32 %v2023, 7
        %v2025 = vsub.s32 %v2022, %v2024
        %v2026 = vrot.slane %v2018, %v2025
        %v2028 = vunpack.c.l.s4 1934713408
        %v2029 = vunpack.c.0.s8 %v2028
        %v2030 = vlaneseq
        %v2031 = vshrl.u32 %v2030, 7
        %v2032 = vsub.s32 %v2029, %v2031
        %v2033 = vrot.slane %v2019, %v2032
        %v2034 = vcombine.low %v1978, %v2010
        %v2035 = vcombine.high %v1978, %v2010
        %v2036 = vcombine.low %v1985, %v2017
        %v2037 = vcombine.high %v1985, %v2017
        %v2038 = vcombine.low %v1994, %v2026
        %v2039 = vcombine.high %v1994, %v2026
        %v2040 = vcombine.low %v2001, %v2033
        %v2041 = vcombine.high %v2001, %v2033
        %2042 = vxpose.xlu0.b32.start [1/16] %v2034, 128
        %2043 = vxpose.xlu0.b32.cont [2/16] 0.0, 128
        %2044 = vxpose.xlu0.b32.cont [3/16] 0.0, 128
        %2045 = vxpose.xlu0.b32.cont [4/16] 0.0, 128
        %2046 = vxpose.xlu0.b32.cont [5/16] 0.0, 128
        %2047 = vxpose.xlu0.b32.cont [6/16] 0.0, 128
        %2048 = vxpose.xlu0.b32.cont [7/16] 0.0, 128
        %2049 = vxpose.xlu0.b32.cont [8/16] 0.0, 128
        %2050 = vxpose.xlu0.b32.cont [9/16] 0.0, 128
        %2051 = vxpose.xlu0.b32.cont [10/16] 0.0, 128
        %2052 = vxpose.xlu0.b32.cont [11/16] 0.0, 128
        %2053 = vxpose.xlu0.b32.cont [12/16] 0.0, 128
        %2054 = vxpose.xlu0.b32.cont [13/16] 0.0, 128
        %2055 = vxpose.xlu0.b32.cont [14/16] 0.0, 128
        %2056 = vxpose.xlu0.b32.cont [15/16] 0.0, 128
        %2057 = vxpose.xlu0.b32.end [16/16] 0.0, 128
        %v2058 = vpop.trf.xlu0
        %v2059 = vpop.trf.xlu0
        %v2060 = vpop.trf.xlu0
        %v2061 = vpop.trf.xlu0
        %v2062 = vpop.trf.xlu0
        %v2063 = vpop.trf.xlu0
        %v2064 = vpop.trf.xlu0
        %v2065 = vpop.trf.xlu0
        %v2066 = vpop.trf.xlu0
        %v2067 = vpop.trf.xlu0
        %v2068 = vpop.trf.xlu0
        %v2069 = vpop.trf.xlu0
        %v2070 = vpop.trf.xlu0
        %v2071 = vpop.trf.xlu0
        %v2072 = vpop.trf.xlu0
        %v2073 = vpop.trf.xlu0
        %2074 = vxpose.xlu0.b32.start [1/16] %v2035, 128
        %2075 = vxpose.xlu0.b32.cont [2/16] 0.0, 128
        %2076 = vxpose.xlu0.b32.cont [3/16] 0.0, 128
        %2077 = vxpose.xlu0.b32.cont [4/16] 0.0, 128
        %2078 = vxpose.xlu0.b32.cont [5/16] 0.0, 128
        %2079 = vxpose.xlu0.b32.cont [6/16] 0.0, 128
        %2080 = vxpose.xlu0.b32.cont [7/16] 0.0, 128
        %2081 = vxpose.xlu0.b32.cont [8/16] 0.0, 128
        %2082 = vxpose.xlu0.b32.cont [9/16] 0.0, 128
        %2083 = vxpose.xlu0.b32.cont [10/16] 0.0, 128
        %2084 = vxpose.xlu0.b32.cont [11/16] 0.0, 128
        %2085 = vxpose.xlu0.b32.cont [12/16] 0.0, 128
        %2086 = vxpose.xlu0.b32.cont [13/16] 0.0, 128
        %2087 = vxpose.xlu0.b32.cont [14/16] 0.0, 128
        %2088 = vxpose.xlu0.b32.cont [15/16] 0.0, 128
        %2089 = vxpose.xlu0.b32.end [16/16] 0.0, 128
        %v2090 = vpop.trf.xlu0
        %v2091 = vpop.trf.xlu0
        %v2092 = vpop.trf.xlu0
        %v2093 = vpop.trf.xlu0
        %v2094 = vpop.trf.xlu0
        %v2095 = vpop.trf.xlu0
        %v2096 = vpop.trf.xlu0
        %v2097 = vpop.trf.xlu0
        %v2098 = vpop.trf.xlu0
        %v2099 = vpop.trf.xlu0
        %v2100 = vpop.trf.xlu0
        %v2101 = vpop.trf.xlu0
        %v2102 = vpop.trf.xlu0
        %v2103 = vpop.trf.xlu0
        %v2104 = vpop.trf.xlu0
        %v2105 = vpop.trf.xlu0
        %2106 = vxpose.xlu0.b32.start [1/16] %v2036, 128
        %2107 = vxpose.xlu0.b32.cont [2/16] 0.0, 128
        %2108 = vxpose.xlu0.b32.cont [3/16] 0.0, 128
        %2109 = vxpose.xlu0.b32.cont [4/16] 0.0, 128
        %2110 = vxpose.xlu0.b32.cont [5/16] 0.0, 128
        %2111 = vxpose.xlu0.b32.cont [6/16] 0.0, 128
        %2112 = vxpose.xlu0.b32.cont [7/16] 0.0, 128
        %2113 = vxpose.xlu0.b32.cont [8/16] 0.0, 128
        %2114 = vxpose.xlu0.b32.cont [9/16] 0.0, 128
        %2115 = vxpose.xlu0.b32.cont [10/16] 0.0, 128
        %2116 = vxpose.xlu0.b32.cont [11/16] 0.0, 128
        %2117 = vxpose.xlu0.b32.cont [12/16] 0.0, 128
        %2118 = vxpose.xlu0.b32.cont [13/16] 0.0, 128
        %2119 = vxpose.xlu0.b32.cont [14/16] 0.0, 128
        %2120 = vxpose.xlu0.b32.cont [15/16] 0.0, 128
        %2121 = vxpose.xlu0.b32.end [16/16] 0.0, 128
        %v2122 = vpop.trf.xlu0
        %v2123 = vpop.trf.xlu0
        %v2124 = vpop.trf.xlu0
        %v2125 = vpop.trf.xlu0
        %v2126 = vpop.trf.xlu0
        %v2127 = vpop.trf.xlu0
        %v2128 = vpop.trf.xlu0
        %v2129 = vpop.trf.xlu0
        %v2130 = vpop.trf.xlu0
        %v2131 = vpop.trf.xlu0
        %v2132 = vpop.trf.xlu0
        %v2133 = vpop.trf.xlu0
        %v2134 = vpop.trf.xlu0
        %v2135 = vpop.trf.xlu0
        %v2136 = vpop.trf.xlu0
        %v2137 = vpop.trf.xlu0
        %2138 = vxpose.xlu0.b32.start [1/16] %v2037, 128
        %2139 = vxpose.xlu0.b32.cont [2/16] 0.0, 128
        %2140 = vxpose.xlu0.b32.cont [3/16] 0.0, 128
        %2141 = vxpose.xlu0.b32.cont [4/16] 0.0, 128
        %2142 = vxpose.xlu0.b32.cont [5/16] 0.0, 128
        %2143 = vxpose.xlu0.b32.cont [6/16] 0.0, 128
        %2144 = vxpose.xlu0.b32.cont [7/16] 0.0, 128
        %2145 = vxpose.xlu0.b32.cont [8/16] 0.0, 128
        %2146 = vxpose.xlu0.b32.cont [9/16] 0.0, 128
        %2147 = vxpose.xlu0.b32.cont [10/16] 0.0, 128
        %2148 = vxpose.xlu0.b32.cont [11/16] 0.0, 128
        %2149 = vxpose.xlu0.b32.cont [12/16] 0.0, 128
        %2150 = vxpose.xlu0.b32.cont [13/16] 0.0, 128
        %2151 = vxpose.xlu0.b32.cont [14/16] 0.0, 128
        %2152 = vxpose.xlu0.b32.cont [15/16] 0.0, 128
        %2153 = vxpose.xlu0.b32.end [16/16] 0.0, 128
        %v2154 = vpop.trf.xlu0
        %v2155 = vpop.trf.xlu0
        %v2156 = vpop.trf.xlu0
        %v2157 = vpop.trf.xlu0
        %v2158 = vpop.trf.xlu0
        %v2159 = vpop.trf.xlu0
        %v2160 = vpop.trf.xlu0
        %v2161 = vpop.trf.xlu0
        %v2162 = vpop.trf.xlu0
        %v2163 = vpop.trf.xlu0
        %v2164 = vpop.trf.xlu0
        %v2165 = vpop.trf.xlu0
        %v2166 = vpop.trf.xlu0
        %v2167 = vpop.trf.xlu0
        %v2168 = vpop.trf.xlu0
        %v2169 = vpop.trf.xlu0
        %2170 = vxpose.xlu0.b32.start [1/16] %v2038, 128
        %2171 = vxpose.xlu0.b32.cont [2/16] 0.0, 128
        %2172 = vxpose.xlu0.b32.cont [3/16] 0.0, 128
        %2173 = vxpose.xlu0.b32.cont [4/16] 0.0, 128
        %2174 = vxpose.xlu0.b32.cont [5/16] 0.0, 128
        %2175 = vxpose.xlu0.b32.cont [6/16] 0.0, 128
        %2176 = vxpose.xlu0.b32.cont [7/16] 0.0, 128
        %2177 = vxpose.xlu0.b32.cont [8/16] 0.0, 128
        %2178 = vxpose.xlu0.b32.cont [9/16] 0.0, 128
        %2179 = vxpose.xlu0.b32.cont [10/16] 0.0, 128
        %2180 = vxpose.xlu0.b32.cont [11/16] 0.0, 128
        %2181 = vxpose.xlu0.b32.cont [12/16] 0.0, 128
        %2182 = vxpose.xlu0.b32.cont [13/16] 0.0, 128
        %2183 = vxpose.xlu0.b32.cont [14/16] 0.0, 128
        %2184 = vxpose.xlu0.b32.cont [15/16] 0.0, 128
        %2185 = vxpose.xlu0.b32.end [16/16] 0.0, 128
        %v2186 = vpop.trf.xlu0
        %v2187 = vpop.trf.xlu0
        %v2188 = vpop.trf.xlu0
        %v2189 = vpop.trf.xlu0
        %v2190 = vpop.trf.xlu0
        %v2191 = vpop.trf.xlu0
        %v2192 = vpop.trf.xlu0
        %v2193 = vpop.trf.xlu0
        %v2194 = vpop.trf.xlu0
        %v2195 = vpop.trf.xlu0
        %v2196 = vpop.trf.xlu0
        %v2197 = vpop.trf.xlu0
        %v2198 = vpop.trf.xlu0
        %v2199 = vpop.trf.xlu0
        %v2200 = vpop.trf.xlu0
        %v2201 = vpop.trf.xlu0
        %2202 = vxpose.xlu0.b32.start [1/16] %v2039, 128
        %2203 = vxpose.xlu0.b32.cont [2/16] 0.0, 128
        %2204 = vxpose.xlu0.b32.cont [3/16] 0.0, 128
        %2205 = vxpose.xlu0.b32.cont [4/16] 0.0, 128
        %2206 = vxpose.xlu0.b32.cont [5/16] 0.0, 128
        %2207 = vxpose.xlu0.b32.cont [6/16] 0.0, 128
        %2208 = vxpose.xlu0.b32.cont [7/16] 0.0, 128
        %2209 = vxpose.xlu0.b32.cont [8/16] 0.0, 128
        %2210 = vxpose.xlu0.b32.cont [9/16] 0.0, 128
        %2211 = vxpose.xlu0.b32.cont [10/16] 0.0, 128
        %2212 = vxpose.xlu0.b32.cont [11/16] 0.0, 128
        %2213 = vxpose.xlu0.b32.cont [12/16] 0.0, 128
        %2214 = vxpose.xlu0.b32.cont [13/16] 0.0, 128
        %2215 = vxpose.xlu0.b32.cont [14/16] 0.0, 128
        %2216 = vxpose.xlu0.b32.cont [15/16] 0.0, 128
        %2217 = vxpose.xlu0.b32.end [16/16] 0.0, 128
        %v2218 = vpop.trf.xlu0
        %v2219 = vpop.trf.xlu0
        %v2220 = vpop.trf.xlu0
        %v2221 = vpop.trf.xlu0
        %v2222 = vpop.trf.xlu0
        %v2223 = vpop.trf.xlu0
        %v2224 = vpop.trf.xlu0
        %v2225 = vpop.trf.xlu0
        %v2226 = vpop.trf.xlu0
        %v2227 = vpop.trf.xlu0
        %v2228 = vpop.trf.xlu0
        %v2229 = vpop.trf.xlu0
        %v2230 = vpop.trf.xlu0
        %v2231 = vpop.trf.xlu0
        %v2232 = vpop.trf.xlu0
        %v2233 = vpop.trf.xlu0
        %2234 = vxpose.xlu0.b32.start [1/16] %v2040, 128
        %2235 = vxpose.xlu0.b32.cont [2/16] 0.0, 128
        %2236 = vxpose.xlu0.b32.cont [3/16] 0.0, 128
        %2237 = vxpose.xlu0.b32.cont [4/16] 0.0, 128
        %2238 = vxpose.xlu0.b32.cont [5/16] 0.0, 128
        %2239 = vxpose.xlu0.b32.cont [6/16] 0.0, 128
        %2240 = vxpose.xlu0.b32.cont [7/16] 0.0, 128
        %2241 = vxpose.xlu0.b32.cont [8/16] 0.0, 128
        %2242 = vxpose.xlu0.b32.cont [9/16] 0.0, 128
        %2243 = vxpose.xlu0.b32.cont [10/16] 0.0, 128
        %2244 = vxpose.xlu0.b32.cont [11/16] 0.0, 128
        %2245 = vxpose.xlu0.b32.cont [12/16] 0.0, 128
        %2246 = vxpose.xlu0.b32.cont [13/16] 0.0, 128
        %2247 = vxpose.xlu0.b32.cont [14/16] 0.0, 128
        %2248 = vxpose.xlu0.b32.cont [15/16] 0.0, 128
        %2249 = vxpose.xlu0.b32.end [16/16] 0.0, 128
        %v2250 = vpop.trf.xlu0
        %v2251 = vpop.trf.xlu0
        %v2252 = vpop.trf.xlu0
        %v2253 = vpop.trf.xlu0
        %v2254 = vpop.trf.xlu0
        %v2255 = vpop.trf.xlu0
        %v2256 = vpop.trf.xlu0
        %v2257 = vpop.trf.xlu0
        %v2258 = vpop.trf.xlu0
        %v2259 = vpop.trf.xlu0
        %v2260 = vpop.trf.xlu0
        %v2261 = vpop.trf.xlu0
        %v2262 = vpop.trf.xlu0
        %v2263 = vpop.trf.xlu0
        %v2264 = vpop.trf.xlu0
        %v2265 = vpop.trf.xlu0
        %2266 = vxpose.xlu0.b32.start [1/16] %v2041, 128
        %2267 = vxpose.xlu0.b32.cont [2/16] 0.0, 128
        %2268 = vxpose.xlu0.b32.cont [3/16] 0.0, 128
        %2269 = vxpose.xlu0.b32.cont [4/16] 0.0, 128
        %2270 = vxpose.xlu0.b32.cont [5/16] 0.0, 128
        %2271 = vxpose.xlu0.b32.cont [6/16] 0.0, 128
        %2272 = vxpose.xlu0.b32.cont [7/16] 0.0, 128
        %2273 = vxpose.xlu0.b32.cont [8/16] 0.0, 128
        %2274 = vxpose.xlu0.b32.cont [9/16] 0.0, 128
        %2275 = vxpose.xlu0.b32.cont [10/16] 0.0, 128
        %2276 = vxpose.xlu0.b32.cont [11/16] 0.0, 128
        %2277 = vxpose.xlu0.b32.cont [12/16] 0.0, 128
        %2278 = vxpose.xlu0.b32.cont [13/16] 0.0, 128
        %2279 = vxpose.xlu0.b32.cont [14/16] 0.0, 128
        %2280 = vxpose.xlu0.b32.cont [15/16] 0.0, 128
        %2281 = vxpose.xlu0.b32.end [16/16] 0.0, 128
        %v2282 = vpop.trf.xlu0
        %v2283 = vpop.trf.xlu0
        %v2284 = vpop.trf.xlu0
        %v2285 = vpop.trf.xlu0
        %v2286 = vpop.trf.xlu0
        %v2287 = vpop.trf.xlu0
        %v2288 = vpop.trf.xlu0
        %v2289 = vpop.trf.xlu0
        %v2290 = vpop.trf.xlu0
        %v2291 = vpop.trf.xlu0
        %v2292 = vpop.trf.xlu0
        %v2293 = vpop.trf.xlu0
        %v2294 = vpop.trf.xlu0
        %v2295 = vpop.trf.xlu0
        %v2296 = vpop.trf.xlu0
        %v2297 = vpop.trf.xlu0
        %v2298 = vcombine.low %v2058, %v2122
        %v2300 = vunpack.c.l.s4 1983009808
        %v2301 = vunpack.c.0.s8 %v2300
        %v2302 = vlaneseq
        %v2303 = vshrl.u32 %v2302, 7
        %v2304 = vsub.s32 %v2301, %v2303
        %v2305 = vrot.slane %v2298, %v2304
        %v2306 = vcombine.low %v2090, %v2154
        %v2308 = vunpack.c.l.s4 1983009808
        %v2309 = vunpack.c.0.s8 %v2308
        %v2310 = vlaneseq
        %v2311 = vshrl.u32 %v2310, 7
        %v2312 = vsub.s32 %v2309, %v2311
        %v2313 = vrot.slane %v2306, %v2312
        %v2314 = vcombine.low %v2186, %v2250
        %v2316 = vunpack.c.l.s4 1983009808
        %v2317 = vunpack.c.0.s8 %v2316
        %v2318 = vlaneseq
        %v2319 = vshrl.u32 %v2318, 7
        %v2320 = vsub.s32 %v2317, %v2319
        %v2321 = vrot.slane %v2314, %v2320
        %v2322 = vcombine.low %v2218, %v2282
        %v2324 = vunpack.c.l.s4 1983009808
        %v2325 = vunpack.c.0.s8 %v2324
        %v2326 = vlaneseq
        %v2327 = vshrl.u32 %v2326, 7
        %v2328 = vsub.s32 %v2325, %v2327
        %v2329 = vrot.slane %v2322, %v2328
        %v2330 = vcombine.low %v2305, %v2313
        %v2331 = vcombine.high %v2305, %v2313
        %v2333 = vunpack.c.l.s4 1934713408
        %v2334 = vunpack.c.0.s8 %v2333
        %v2335 = vlaneseq
        %v2336 = vshrl.u32 %v2335, 7
        %v2337 = vsub.s32 %v2334, %v2336
        %v2338 = vrot.slane %v2330, %v2337
        %v2340 = vunpack.c.l.s4 1934713408
        %v2341 = vunpack.c.0.s8 %v2340
        %v2342 = vlaneseq
        %v2343 = vshrl.u32 %v2342, 7
        %v2344 = vsub.s32 %v2341, %v2343
        %v2345 = vrot.slane %v2331, %v2344
        %v2346 = vcombine.low %v2321, %v2329
        %v2347 = vcombine.high %v2321, %v2329
        %v2349 = vunpack.c.l.s4 1934713408
        %v2350 = vunpack.c.0.s8 %v2349
        %v2351 = vlaneseq
        %v2352 = vshrl.u32 %v2351, 7
        %v2353 = vsub.s32 %v2350, %v2352
        %v2354 = vrot.slane %v2346, %v2353
        %v2356 = vunpack.c.l.s4 1934713408
        %v2357 = vunpack.c.0.s8 %v2356
        %v2358 = vlaneseq
        %v2359 = vshrl.u32 %v2358, 7
        %v2360 = vsub.s32 %v2357, %v2359
        %v2361 = vrot.slane %v2347, %v2360
        %v2362 = vcombine.low %v2338, %v2354
        %v2363 = vcombine.high %v2338, %v2354
        %v2364 = vcombine.low %v2345, %v2361
        %v2365 = vcombine.high %v2345, %v2361
        %v2367 = vsel %vm1313, %v2362, 0
        %v2370 = vsel %vm1313, %v1646, 0
        %2372 = vmatprep.subr.mxu0 0.0
        %2373 = vmatpush1.xpose.msra.mxu0 %v2370
        %2374 = vmatprep.subr.mxu0 0.0
        %2375 = vmatpush1.xpose.msra.mxu0 0.0
        %2376 = vmatprep.subr.mxu0 0.0
        %2377 = vmatpush1.xpose.msra.mxu0 0.0
        %2378 = vmatprep.subr.mxu0 0.0
        %2379 = vmatpush1.xpose.msra.mxu0 0.0
        %2380 = vmatprep.subr.mxu0 0.0
        %2381 = vmatpush1.xpose.msra.mxu0 0.0
        %2382 = vmatprep.subr.mxu0 0.0
        %2383 = vmatpush1.xpose.msra.mxu0 0.0
        %2384 = vmatprep.subr.mxu0 0.0
        %2385 = vmatpush1.xpose.msra.mxu0 0.0
        %2386 = vmatprep.subr.mxu0 0.0
        %2387 = vmatpush1.xpose.msra.mxu0 0.0
        %2388 = vmatprep.subr.mxu0 0.0
        %2389 = vmatpush1.xpose.msra.mxu0 0.0
        %2390 = vmatprep.subr.mxu0 0.0
        %2391 = vmatpush1.xpose.msra.mxu0 0.0
        %2392 = vmatprep.subr.mxu0 0.0
        %2393 = vmatpush1.xpose.msra.mxu0 0.0
        %2394 = vmatprep.subr.mxu0 0.0
        %2395 = vmatpush1.xpose.msra.mxu0 0.0
        %2396 = vmatprep.subr.mxu0 0.0
        %2397 = vmatpush1.xpose.msra.mxu0 0.0
        %2398 = vmatprep.subr.mxu0 0.0
        %2399 = vmatpush1.xpose.msra.mxu0 0.0
        %2400 = vmatprep.subr.mxu0 0.0
        %2401 = vmatpush1.xpose.msra.mxu0 0.0
        %2402 = vmatprep.subr.mxu0 0.0
        %2403 = vmatpush1.xpose.msra.mxu0 0.0
        %2404 = vmatprep.subr.mxu0 0.0
        %2405 = vmatpush1.xpose.msra.mxu0 0.0
        %2406 = vmatprep.subr.mxu0 0.0
        %2407 = vmatpush1.xpose.msra.mxu0 0.0
        %2408 = vmatprep.subr.mxu0 0.0
        %2409 = vmatpush1.xpose.msra.mxu0 0.0
        %2410 = vmatprep.subr.mxu0 0.0
        %2411 = vmatpush1.xpose.msra.mxu0 0.0
        %2412 = vmatprep.subr.mxu0 0.0
        %2413 = vmatpush1.xpose.msra.mxu0 0.0
        %2414 = vmatprep.subr.mxu0 0.0
        %2415 = vmatpush1.xpose.msra.mxu0 0.0
        %2416 = vmatprep.subr.mxu0 0.0
        %2417 = vmatpush1.xpose.msra.mxu0 0.0
        %2418 = vmatprep.subr.mxu0 0.0
        %2419 = vmatpush1.xpose.msra.mxu0 0.0
        %2420 = vmatprep.subr.mxu0 0.0
        %2421 = vmatpush1.xpose.msra.mxu0 0.0
        %2422 = vmatprep.subr.mxu0 0.0
        %2423 = vmatpush1.xpose.msra.mxu0 0.0
        %2424 = vmatprep.subr.mxu0 0.0
        %2425 = vmatpush1.xpose.msra.mxu0 0.0
        %2426 = vmatprep.subr.mxu0 0.0
        %2427 = vmatpush1.xpose.msra.mxu0 0.0
        %2428 = vmatprep.subr.mxu0 0.0
        %2429 = vmatpush1.xpose.msra.mxu0 0.0
        %2430 = vmatprep.subr.mxu0 0.0
        %2431 = vmatpush1.xpose.msra.mxu0 0.0
        %2432 = vmatprep.subr.mxu0 0.0
        %2433 = vmatpush1.xpose.msra.mxu0 0.0
        %2434 = vmatprep.subr.mxu0 0.0
        %2435 = vmatpush1.xpose.msra.mxu0 0.0
        %2436 = vmatprep.mubr.f32.mxu0 0.0
        %2437 = vmatmul.mubr.f32.gmra.mrb[0].mxu0 %v2367
        %v2438 = vpop.f32.mrb[0].mxu0
        %v2439 = vadd.f32 0.0, %v2438
        %v2440 = vpop.f32.mrb[0].mxu0
        %2441 = vdwg.mxu0
        %v2443 = vsel %vm1313, %v2363, 0
        %v2446 = vsel %vm1313, %v1647, 0
        %2448 = vmatprep.subr.mxu0 0.0
        %2449 = vmatpush1.xpose.msra.mxu0 %v2446
        %2450 = vmatprep.subr.mxu0 0.0
        %2451 = vmatpush1.xpose.msra.mxu0 0.0
        %2452 = vmatprep.subr.mxu0 0.0
        %2453 = vmatpush1.xpose.msra.mxu0 0.0
        %2454 = vmatprep.subr.mxu0 0.0
        %2455 = vmatpush1.xpose.msra.mxu0 0.0
        %2456 = vmatprep.subr.mxu0 0.0
        %2457 = vmatpush1.xpose.msra.mxu0 0.0
        %2458 = vmatprep.subr.mxu0 0.0
        %2459 = vmatpush1.xpose.msra.mxu0 0.0
        %2460 = vmatprep.subr.mxu0 0.0
        %2461 = vmatpush1.xpose.msra.mxu0 0.0
        %2462 = vmatprep.subr.mxu0 0.0
        %2463 = vmatpush1.xpose.msra.mxu0 0.0
        %2464 = vmatprep.subr.mxu0 0.0
        %2465 = vmatpush1.xpose.msra.mxu0 0.0
        %2466 = vmatprep.subr.mxu0 0.0
        %2467 = vmatpush1.xpose.msra.mxu0 0.0
        %2468 = vmatprep.subr.mxu0 0.0
        %2469 = vmatpush1.xpose.msra.mxu0 0.0
        %2470 = vmatprep.subr.mxu0 0.0
        %2471 = vmatpush1.xpose.msra.mxu0 0.0
        %2472 = vmatprep.subr.mxu0 0.0
        %2473 = vmatpush1.xpose.msra.mxu0 0.0
        %2474 = vmatprep.subr.mxu0 0.0
        %2475 = vmatpush1.xpose.msra.mxu0 0.0
        %2476 = vmatprep.subr.mxu0 0.0
        %2477 = vmatpush1.xpose.msra.mxu0 0.0
        %2478 = vmatprep.subr.mxu0 0.0
        %2479 = vmatpush1.xpose.msra.mxu0 0.0
        %2480 = vmatprep.subr.mxu0 0.0
        %2481 = vmatpush1.xpose.msra.mxu0 0.0
        %2482 = vmatprep.subr.mxu0 0.0
        %2483 = vmatpush1.xpose.msra.mxu0 0.0
        %2484 = vmatprep.subr.mxu0 0.0
        %2485 = vmatpush1.xpose.msra.mxu0 0.0
        %2486 = vmatprep.subr.mxu0 0.0
        %2487 = vmatpush1.xpose.msra.mxu0 0.0
        %2488 = vmatprep.subr.mxu0 0.0
        %2489 = vmatpush1.xpose.msra.mxu0 0.0
        %2490 = vmatprep.subr.mxu0 0.0
        %2491 = vmatpush1.xpose.msra.mxu0 0.0
        %2492 = vmatprep.subr.mxu0 0.0
        %2493 = vmatpush1.xpose.msra.mxu0 0.0
        %2494 = vmatprep.subr.mxu0 0.0
        %2495 = vmatpush1.xpose.msra.mxu0 0.0
        %2496 = vmatprep.subr.mxu0 0.0
        %2497 = vmatpush1.xpose.msra.mxu0 0.0
        %2498 = vmatprep.subr.mxu0 0.0
        %2499 = vmatpush1.xpose.msra.mxu0 0.0
        %2500 = vmatprep.subr.mxu0 0.0
        %2501 = vmatpush1.xpose.msra.mxu0 0.0
        %2502 = vmatprep.subr.mxu0 0.0
        %2503 = vmatpush1.xpose.msra.mxu0 0.0
        %2504 = vmatprep.subr.mxu0 0.0
        %2505 = vmatpush1.xpose.msra.mxu0 0.0
        %2506 = vmatprep.subr.mxu0 0.0
        %2507 = vmatpush1.xpose.msra.mxu0 0.0
        %2508 = vmatprep.subr.mxu0 0.0
        %2509 = vmatpush1.xpose.msra.mxu0 0.0
        %2510 = vmatprep.subr.mxu0 0.0
        %2511 = vmatpush1.xpose.msra.mxu0 0.0
        %2512 = vmatprep.mubr.f32.mxu0 0.0
        %2513 = vmatmul.mubr.f32.gmra.mrb[0].mxu0 %v2443
        %v2514 = vpop.f32.mrb[0].mxu0
        %v2515 = vadd.f32 0.0, %v2514
        %v2516 = vpop.f32.mrb[0].mxu0
        %2517 = vdwg.mxu0
        %v2519 = vsel %vm1313, %v2364, 0
        %v2522 = vsel %vm1313, %v1648, 0
        %2524 = vmatprep.subr.mxu0 0.0
        %2525 = vmatpush1.xpose.msra.mxu0 %v2522
        %2526 = vmatprep.subr.mxu0 0.0
        %2527 = vmatpush1.xpose.msra.mxu0 0.0
        %2528 = vmatprep.subr.mxu0 0.0
        %2529 = vmatpush1.xpose.msra.mxu0 0.0
        %2530 = vmatprep.subr.mxu0 0.0
        %2531 = vmatpush1.xpose.msra.mxu0 0.0
        %2532 = vmatprep.subr.mxu0 0.0
        %2533 = vmatpush1.xpose.msra.mxu0 0.0
        %2534 = vmatprep.subr.mxu0 0.0
        %2535 = vmatpush1.xpose.msra.mxu0 0.0
        %2536 = vmatprep.subr.mxu0 0.0
        %2537 = vmatpush1.xpose.msra.mxu0 0.0
        %2538 = vmatprep.subr.mxu0 0.0
        %2539 = vmatpush1.xpose.msra.mxu0 0.0
        %2540 = vmatprep.subr.mxu0 0.0
        %2541 = vmatpush1.xpose.msra.mxu0 0.0
        %2542 = vmatprep.subr.mxu0 0.0
        %2543 = vmatpush1.xpose.msra.mxu0 0.0
        %2544 = vmatprep.subr.mxu0 0.0
        %2545 = vmatpush1.xpose.msra.mxu0 0.0
        %2546 = vmatprep.subr.mxu0 0.0
        %2547 = vmatpush1.xpose.msra.mxu0 0.0
        %2548 = vmatprep.subr.mxu0 0.0
        %2549 = vmatpush1.xpose.msra.mxu0 0.0
        %2550 = vmatprep.subr.mxu0 0.0
        %2551 = vmatpush1.xpose.msra.mxu0 0.0
        %2552 = vmatprep.subr.mxu0 0.0
        %2553 = vmatpush1.xpose.msra.mxu0 0.0
        %2554 = vmatprep.subr.mxu0 0.0
        %2555 = vmatpush1.xpose.msra.mxu0 0.0
        %2556 = vmatprep.subr.mxu0 0.0
        %2557 = vmatpush1.xpose.msra.mxu0 0.0
        %2558 = vmatprep.subr.mxu0 0.0
        %2559 = vmatpush1.xpose.msra.mxu0 0.0
        %2560 = vmatprep.subr.mxu0 0.0
        %2561 = vmatpush1.xpose.msra.mxu0 0.0
        %2562 = vmatprep.subr.mxu0 0.0
        %2563 = vmatpush1.xpose.msra.mxu0 0.0
        %2564 = vmatprep.subr.mxu0 0.0
        %2565 = vmatpush1.xpose.msra.mxu0 0.0
        %2566 = vmatprep.subr.mxu0 0.0
        %2567 = vmatpush1.xpose.msra.mxu0 0.0
        %2568 = vmatprep.subr.mxu0 0.0
        %2569 = vmatpush1.xpose.msra.mxu0 0.0
        %2570 = vmatprep.subr.mxu0 0.0
        %2571 = vmatpush1.xpose.msra.mxu0 0.0
        %2572 = vmatprep.subr.mxu0 0.0
        %2573 = vmatpush1.xpose.msra.mxu0 0.0
        %2574 = vmatprep.subr.mxu0 0.0
        %2575 = vmatpush1.xpose.msra.mxu0 0.0
        %2576 = vmatprep.subr.mxu0 0.0
        %2577 = vmatpush1.xpose.msra.mxu0 0.0
        %2578 = vmatprep.subr.mxu0 0.0
        %2579 = vmatpush1.xpose.msra.mxu0 0.0
        %2580 = vmatprep.subr.mxu0 0.0
        %2581 = vmatpush1.xpose.msra.mxu0 0.0
        %2582 = vmatprep.subr.mxu0 0.0
        %2583 = vmatpush1.xpose.msra.mxu0 0.0
        %2584 = vmatprep.subr.mxu0 0.0
        %2585 = vmatpush1.xpose.msra.mxu0 0.0
        %2586 = vmatprep.subr.mxu0 0.0
        %2587 = vmatpush1.xpose.msra.mxu0 0.0
        %2588 = vmatprep.mubr.f32.mxu0 0.0
        %2589 = vmatmul.mubr.f32.gmra.mrb[0].mxu0 %v2519
        %v2590 = vpop.f32.mrb[0].mxu0
        %v2591 = vadd.f32 0.0, %v2590
        %v2592 = vpop.f32.mrb[0].mxu0
        %2593 = vdwg.mxu0
        %v2595 = vsel %vm1313, %v2365, 0
        %v2598 = vsel %vm1313, %v1649, 0
        %2600 = vmatprep.subr.mxu0 0.0
        %2601 = vmatpush1.xpose.msra.mxu0 %v2598
        %2602 = vmatprep.subr.mxu0 0.0
        %2603 = vmatpush1.xpose.msra.mxu0 0.0
        %2604 = vmatprep.subr.mxu0 0.0
        %2605 = vmatpush1.xpose.msra.mxu0 0.0
        %2606 = vmatprep.subr.mxu0 0.0
        %2607 = vmatpush1.xpose.msra.mxu0 0.0
        %2608 = vmatprep.subr.mxu0 0.0
        %2609 = vmatpush1.xpose.msra.mxu0 0.0
        %2610 = vmatprep.subr.mxu0 0.0
        %2611 = vmatpush1.xpose.msra.mxu0 0.0
        %2612 = vmatprep.subr.mxu0 0.0
        %2613 = vmatpush1.xpose.msra.mxu0 0.0
        %2614 = vmatprep.subr.mxu0 0.0
        %2615 = vmatpush1.xpose.msra.mxu0 0.0
        %2616 = vmatprep.subr.mxu0 0.0
        %2617 = vmatpush1.xpose.msra.mxu0 0.0
        %2618 = vmatprep.subr.mxu0 0.0
        %2619 = vmatpush1.xpose.msra.mxu0 0.0
        %2620 = vmatprep.subr.mxu0 0.0
        %2621 = vmatpush1.xpose.msra.mxu0 0.0
        %2622 = vmatprep.subr.mxu0 0.0
        %2623 = vmatpush1.xpose.msra.mxu0 0.0
        %2624 = vmatprep.subr.mxu0 0.0
        %2625 = vmatpush1.xpose.msra.mxu0 0.0
        %2626 = vmatprep.subr.mxu0 0.0
        %2627 = vmatpush1.xpose.msra.mxu0 0.0
        %2628 = vmatprep.subr.mxu0 0.0
        %2629 = vmatpush1.xpose.msra.mxu0 0.0
        %2630 = vmatprep.subr.mxu0 0.0
        %2631 = vmatpush1.xpose.msra.mxu0 0.0
        %2632 = vmatprep.subr.mxu0 0.0
        %2633 = vmatpush1.xpose.msra.mxu0 0.0
        %2634 = vmatprep.subr.mxu0 0.0
        %2635 = vmatpush1.xpose.msra.mxu0 0.0
        %2636 = vmatprep.subr.mxu0 0.0
        %2637 = vmatpush1.xpose.msra.mxu0 0.0
        %2638 = vmatprep.subr.mxu0 0.0
        %2639 = vmatpush1.xpose.msra.mxu0 0.0
        %2640 = vmatprep.subr.mxu0 0.0
        %2641 = vmatpush1.xpose.msra.mxu0 0.0
        %2642 = vmatprep.subr.mxu0 0.0
        %2643 = vmatpush1.xpose.msra.mxu0 0.0
        %2644 = vmatprep.subr.mxu0 0.0
        %2645 = vmatpush1.xpose.msra.mxu0 0.0
        %2646 = vmatprep.subr.mxu0 0.0
        %2647 = vmatpush1.xpose.msra.mxu0 0.0
        %2648 = vmatprep.subr.mxu0 0.0
        %2649 = vmatpush1.xpose.msra.mxu0 0.0
        %2650 = vmatprep.subr.mxu0 0.0
        %2651 = vmatpush1.xpose.msra.mxu0 0.0
        %2652 = vmatprep.subr.mxu0 0.0
        %2653 = vmatpush1.xpose.msra.mxu0 0.0
        %2654 = vmatprep.subr.mxu0 0.0
        %2655 = vmatpush1.xpose.msra.mxu0 0.0
        %2656 = vmatprep.subr.mxu0 0.0
        %2657 = vmatpush1.xpose.msra.mxu0 0.0
        %2658 = vmatprep.subr.mxu0 0.0
        %2659 = vmatpush1.xpose.msra.mxu0 0.0
        %2660 = vmatprep.subr.mxu0 0.0
        %2661 = vmatpush1.xpose.msra.mxu0 0.0
        %2662 = vmatprep.subr.mxu0 0.0
        %2663 = vmatpush1.xpose.msra.mxu0 0.0
        %2664 = vmatprep.mubr.f32.mxu0 0.0
        %2665 = vmatmul.mubr.f32.gmra.mrb[0].mxu0 %v2595
        %v2666 = vpop.f32.mrb[0].mxu0
        %v2667 = vadd.f32 0.0, %v2666
        %v2668 = vpop.f32.mrb[0].mxu0
        %2669 = vdwg.mxu0
        %2670 = vxpose.xlu0.b32.start [1/16] %v2439, 128
        %2671 = vxpose.xlu0.b32.cont [2/16] 0.0, 128
        %2672 = vxpose.xlu0.b32.cont [3/16] 0.0, 128
        %2673 = vxpose.xlu0.b32.cont [4/16] 0.0, 128
        %2674 = vxpose.xlu0.b32.cont [5/16] 0.0, 128
        %2675 = vxpose.xlu0.b32.cont [6/16] 0.0, 128
        %2676 = vxpose.xlu0.b32.cont [7/16] 0.0, 128
        %2677 = vxpose.xlu0.b32.cont [8/16] 0.0, 128
        %2678 = vxpose.xlu0.b32.cont [9/16] 0.0, 128
        %2679 = vxpose.xlu0.b32.cont [10/16] 0.0, 128
        %2680 = vxpose.xlu0.b32.cont [11/16] 0.0, 128
        %2681 = vxpose.xlu0.b32.cont [12/16] 0.0, 128
        %2682 = vxpose.xlu0.b32.cont [13/16] 0.0, 128
        %2683 = vxpose.xlu0.b32.cont [14/16] 0.0, 128
        %2684 = vxpose.xlu0.b32.cont [15/16] 0.0, 128
        %2685 = vxpose.xlu0.b32.end [16/16] 0.0, 128
        %v2686 = vpop.trf.xlu0
        %v2687 = vpop.trf.xlu0
        %v2688 = vpop.trf.xlu0
        %v2689 = vpop.trf.xlu0
        %v2690 = vpop.trf.xlu0
        %v2691 = vpop.trf.xlu0
        %v2692 = vpop.trf.xlu0
        %v2693 = vpop.trf.xlu0
        %v2694 = vpop.trf.xlu0
        %v2695 = vpop.trf.xlu0
        %v2696 = vpop.trf.xlu0
        %v2697 = vpop.trf.xlu0
        %v2698 = vpop.trf.xlu0
        %v2699 = vpop.trf.xlu0
        %v2700 = vpop.trf.xlu0
        %v2701 = vpop.trf.xlu0
        %2702 = vxpose.xlu0.b32.start [1/16] %v2515, 128
        %2703 = vxpose.xlu0.b32.cont [2/16] 0.0, 128
        %2704 = vxpose.xlu0.b32.cont [3/16] 0.0, 128
        %2705 = vxpose.xlu0.b32.cont [4/16] 0.0, 128
        %2706 = vxpose.xlu0.b32.cont [5/16] 0.0, 128
        %2707 = vxpose.xlu0.b32.cont [6/16] 0.0, 128
        %2708 = vxpose.xlu0.b32.cont [7/16] 0.0, 128
        %2709 = vxpose.xlu0.b32.cont [8/16] 0.0, 128
        %2710 = vxpose.xlu0.b32.cont [9/16] 0.0, 128
        %2711 = vxpose.xlu0.b32.cont [10/16] 0.0, 128
        %2712 = vxpose.xlu0.b32.cont [11/16] 0.0, 128
        %2713 = vxpose.xlu0.b32.cont [12/16] 0.0, 128
        %2714 = vxpose.xlu0.b32.cont [13/16] 0.0, 128
        %2715 = vxpose.xlu0.b32.cont [14/16] 0.0, 128
        %2716 = vxpose.xlu0.b32.cont [15/16] 0.0, 128
        %2717 = vxpose.xlu0.b32.end [16/16] 0.0, 128
        %v2718 = vpop.trf.xlu0
        %v2719 = vpop.trf.xlu0
        %v2720 = vpop.trf.xlu0
        %v2721 = vpop.trf.xlu0
        %v2722 = vpop.trf.xlu0
        %v2723 = vpop.trf.xlu0
        %v2724 = vpop.trf.xlu0
        %v2725 = vpop.trf.xlu0
        %v2726 = vpop.trf.xlu0
        %v2727 = vpop.trf.xlu0
        %v2728 = vpop.trf.xlu0
        %v2729 = vpop.trf.xlu0
        %v2730 = vpop.trf.xlu0
        %v2731 = vpop.trf.xlu0
        %v2732 = vpop.trf.xlu0
        %v2733 = vpop.trf.xlu0
        %2734 = vxpose.xlu0.b32.start [1/16] %v2591, 128
        %2735 = vxpose.xlu0.b32.cont [2/16] 0.0, 128
        %2736 = vxpose.xlu0.b32.cont [3/16] 0.0, 128
        %2737 = vxpose.xlu0.b32.cont [4/16] 0.0, 128
        %2738 = vxpose.xlu0.b32.cont [5/16] 0.0, 128
        %2739 = vxpose.xlu0.b32.cont [6/16] 0.0, 128
        %2740 = vxpose.xlu0.b32.cont [7/16] 0.0, 128
        %2741 = vxpose.xlu0.b32.cont [8/16] 0.0, 128
        %2742 = vxpose.xlu0.b32.cont [9/16] 0.0, 128
        %2743 = vxpose.xlu0.b32.cont [10/16] 0.0, 128
        %2744 = vxpose.xlu0.b32.cont [11/16] 0.0, 128
        %2745 = vxpose.xlu0.b32.cont [12/16] 0.0, 128
        %2746 = vxpose.xlu0.b32.cont [13/16] 0.0, 128
        %2747 = vxpose.xlu0.b32.cont [14/16] 0.0, 128
        %2748 = vxpose.xlu0.b32.cont [15/16] 0.0, 128
        %2749 = vxpose.xlu0.b32.end [16/16] 0.0, 128
        %v2750 = vpop.trf.xlu0
        %v2751 = vpop.trf.xlu0
        %v2752 = vpop.trf.xlu0
        %v2753 = vpop.trf.xlu0
        %v2754 = vpop.trf.xlu0
        %v2755 = vpop.trf.xlu0
        %v2756 = vpop.trf.xlu0
        %v2757 = vpop.trf.xlu0
        %v2758 = vpop.trf.xlu0
        %v2759 = vpop.trf.xlu0
        %v2760 = vpop.trf.xlu0
        %v2761 = vpop.trf.xlu0
        %v2762 = vpop.trf.xlu0
        %v2763 = vpop.trf.xlu0
        %v2764 = vpop.trf.xlu0
        %v2765 = vpop.trf.xlu0
        %2766 = vxpose.xlu0.b32.start [1/16] %v2667, 128
        %2767 = vxpose.xlu0.b32.cont [2/16] 0.0, 128
        %2768 = vxpose.xlu0.b32.cont [3/16] 0.0, 128
        %2769 = vxpose.xlu0.b32.cont [4/16] 0.0, 128
        %2770 = vxpose.xlu0.b32.cont [5/16] 0.0, 128
        %2771 = vxpose.xlu0.b32.cont [6/16] 0.0, 128
        %2772 = vxpose.xlu0.b32.cont [7/16] 0.0, 128
        %2773 = vxpose.xlu0.b32.cont [8/16] 0.0, 128
        %2774 = vxpose.xlu0.b32.cont [9/16] 0.0, 128
        %2775 = vxpose.xlu0.b32.cont [10/16] 0.0, 128
        %2776 = vxpose.xlu0.b32.cont [11/16] 0.0, 128
        %2777 = vxpose.xlu0.b32.cont [12/16] 0.0, 128
        %2778 = vxpose.xlu0.b32.cont [13/16] 0.0, 128
        %2779 = vxpose.xlu0.b32.cont [14/16] 0.0, 128
        %2780 = vxpose.xlu0.b32.cont [15/16] 0.0, 128
        %2781 = vxpose.xlu0.b32.end [16/16] 0.0, 128
        %v2782 = vpop.trf.xlu0
        %v2783 = vpop.trf.xlu0
        %v2784 = vpop.trf.xlu0
        %v2785 = vpop.trf.xlu0
        %v2786 = vpop.trf.xlu0
        %v2787 = vpop.trf.xlu0
        %v2788 = vpop.trf.xlu0
        %v2789 = vpop.trf.xlu0
        %v2790 = vpop.trf.xlu0
        %v2791 = vpop.trf.xlu0
        %v2792 = vpop.trf.xlu0
        %v2793 = vpop.trf.xlu0
        %v2794 = vpop.trf.xlu0
        %v2795 = vpop.trf.xlu0
        %v2796 = vpop.trf.xlu0
        %v2797 = vpop.trf.xlu0
        %v2798 = vcombine.low %v2686, %v2750
        %v2799 = vcombine.high %v2686, %v2750
        %v2801 = vunpack.c.l.s4 1983009808
        %v2802 = vunpack.c.0.s8 %v2801
        %v2803 = vlaneseq
        %v2804 = vshrl.u32 %v2803, 7
        %v2805 = vsub.s32 %v2802, %v2804
        %v2806 = vrot.slane %v2798, %v2805
        %v2808 = vunpack.c.l.s4 1983009808
        %v2809 = vunpack.c.0.s8 %v2808
        %v2810 = vlaneseq
        %v2811 = vshrl.u32 %v2810, 7
        %v2812 = vsub.s32 %v2809, %v2811
        %v2813 = vrot.slane %v2799, %v2812
        %v2814 = vcombine.low %v2718, %v2782
        %v2815 = vcombine.high %v2718, %v2782
        %v2817 = vunpack.c.l.s4 1983009808
        %v2818 = vunpack.c.0.s8 %v2817
        %v2819 = vlaneseq
        %v2820 = vshrl.u32 %v2819, 7
        %v2821 = vsub.s32 %v2818, %v2820
        %v2822 = vrot.slane %v2814, %v2821
        %v2824 = vunpack.c.l.s4 1983009808
        %v2825 = vunpack.c.0.s8 %v2824
        %v2826 = vlaneseq
        %v2827 = vshrl.u32 %v2826, 7
        %v2828 = vsub.s32 %v2825, %v2827
        %v2829 = vrot.slane %v2815, %v2828
        %v2830 = vcombine.low %v2806, %v2822
        %v2831 = vcombine.high %v2806, %v2822
        %v2833 = vunpack.c.l.s4 1934713408
        %v2834 = vunpack.c.0.s8 %v2833
        %v2835 = vlaneseq
        %v2836 = vshrl.u32 %v2835, 7
        %v2837 = vsub.s32 %v2834, %v2836
        %v2838 = vrot.slane %v2830, %v2837
        %v2840 = vunpack.c.l.s4 1934713408
        %v2841 = vunpack.c.0.s8 %v2840
        %v2842 = vlaneseq
        %v2843 = vshrl.u32 %v2842, 7
        %v2844 = vsub.s32 %v2841, %v2843
        %v2845 = vrot.slane %v2831, %v2844
        %v2846 = vcombine.low %v2813, %v2829
        %v2847 = vcombine.high %v2813, %v2829
        %v2849 = vunpack.c.l.s4 1934713408
        %v2850 = vunpack.c.0.s8 %v2849
        %v2851 = vlaneseq
        %v2852 = vshrl.u32 %v2851, 7
        %v2853 = vsub.s32 %v2850, %v2852
        %v2854 = vrot.slane %v2846, %v2853
        %v2856 = vunpack.c.l.s4 1934713408
        %v2857 = vunpack.c.0.s8 %v2856
        %v2858 = vlaneseq
        %v2859 = vshrl.u32 %v2858, 7
        %v2860 = vsub.s32 %v2857, %v2859
        %v2861 = vrot.slane %v2847, %v2860
        %v2862 = vcombine.high %v2838, 0.0
        %v2863 = vcombine.high %v2845, 0.0
        %v2864 = vcombine.high %v2854, 0.0
        %v2865 = vcombine.high %v2861, 0.0
        %v2866 = vcombine.low %v2838, %v2845
        %v2868 = vunpack.c.l.s4 1983009808
        %v2869 = vunpack.c.0.s8 %v2868
        %v2870 = vlaneseq
        %v2871 = vshrl.u32 %v2870, 7
        %v2872 = vsub.s32 %v2869, %v2871
        %v2873 = vrot.slane %v2866, %v2872
        %v2874 = vcombine.low %v2862, %v2863
        %v2876 = vunpack.c.l.s4 1983009808
        %v2877 = vunpack.c.0.s8 %v2876
        %v2878 = vlaneseq
        %v2879 = vshrl.u32 %v2878, 7
        %v2880 = vsub.s32 %v2877, %v2879
        %v2881 = vrot.slane %v2874, %v2880
        %v2882 = vcombine.low %v2854, %v2861
        %v2884 = vunpack.c.l.s4 1983009808
        %v2885 = vunpack.c.0.s8 %v2884
        %v2886 = vlaneseq
        %v2887 = vshrl.u32 %v2886, 7
        %v2888 = vsub.s32 %v2885, %v2887
        %v2889 = vrot.slane %v2882, %v2888
        %v2890 = vcombine.low %v2864, %v2865
        %v2892 = vunpack.c.l.s4 1983009808
        %v2893 = vunpack.c.0.s8 %v2892
        %v2894 = vlaneseq
        %v2895 = vshrl.u32 %v2894, 7
        %v2896 = vsub.s32 %v2893, %v2895
        %v2897 = vrot.slane %v2890, %v2896
        %v2898 = vcombine.low %v2873, %v2881
        %v2899 = vcombine.high %v2873, %v2881
        %v2901 = vunpack.c.l.s4 1934713408
        %v2902 = vunpack.c.0.s8 %v2901
        %v2903 = vlaneseq
        %v2904 = vshrl.u32 %v2903, 7
        %v2905 = vsub.s32 %v2902, %v2904
        %v2906 = vrot.slane %v2898, %v2905
        %v2908 = vunpack.c.l.s4 1934713408
        %v2909 = vunpack.c.0.s8 %v2908
        %v2910 = vlaneseq
        %v2911 = vshrl.u32 %v2910, 7
        %v2912 = vsub.s32 %v2909, %v2911
        %v2913 = vrot.slane %v2899, %v2912
        %v2914 = vcombine.low %v2889, %v2897
        %v2915 = vcombine.high %v2889, %v2897
        %v2917 = vunpack.c.l.s4 1934713408
        %v2918 = vunpack.c.0.s8 %v2917
        %v2919 = vlaneseq
        %v2920 = vshrl.u32 %v2919, 7
        %v2921 = vsub.s32 %v2918, %v2920
        %v2922 = vrot.slane %v2914, %v2921
        %v2924 = vunpack.c.l.s4 1934713408
        %v2925 = vunpack.c.0.s8 %v2924
        %v2926 = vlaneseq
        %v2927 = vshrl.u32 %v2926, 7
        %v2928 = vsub.s32 %v2925, %v2927
        %v2929 = vrot.slane %v2915, %v2928
        %v2930 = vcombine.low %v2906, %v2922
        %v2931 = vcombine.high %v2906, %v2922
        %v2932 = vcombine.low %v2913, %v2929
        %v2933 = vcombine.high %v2913, %v2929
        %2935 = vrot.lane.b32.xlu0 %v2931, 8
        %v2936 = vpop.permute.xlu0 %2935
        %2939 = vrot.lane.b32.xlu0 %v2932, 16
        %v2940 = vpop.permute.xlu0 %2939
        %2943 = vrot.lane.b32.xlu0 %v2933, 24
        %v2944 = vpop.permute.xlu0 %2943
        %v2946 = vsel %vm1313, %v2930, %v2936
        %vm2947 = vcmask 130048
        %v2948 = vsel %vm2947, %v2946, %v2940
        %vm2949 = vcmask 195584
        %v2950 = vsel %vm2949, %v2948, %v2944
        %vm2951 = vcmask 261120
        %2952 = vst.msk [vmem:[%s291] sm:$0xff] %vm2951, %v2950
        %s2953 = sand.u32 %s140, 1
        %s2954 = scalar_lea.sflag [#allocation4], %s2953
        %s2955 = sand.u32 %s140, 1
        %s2956 = smul.addr %s2955, 8
        %s2957 = scalar_lea.vmem [#allocation8], %s2956
        // Predicated region
        $region45: #{blip3o_attention_block.9} parent=31 // pred_check
          %p2958 = pneg %p150
        $region46: #{blip3o_attention_block.9} parent=31 // pred_check_branch
          %2960 = sbr.rel (%p2958) target = $region48
        $region47: #{blip3o_attention_block.9} parent=31 // pred_region
          %s2962 = ssub.s32 128, 128
          %2963 = vsyncadd %s2954, %s2962
          %s2964 = sadd.s32 %s29, %s30
          %s2965 = sadd.s32 %s2964, %s28
          %s2966 = smul.addr %s2965, 128
          %s2967 = scalar_lea.hbm %s3, %s2966
          %s2969 = sshll.u32 %s2957, 4
          %s2970 = int_to_ptr.vmem [resolvable:$true] %s2969
          %2972 = dma.vmem_to_hbm [thread:$0]  %s2970, 128, %s2967, %s2954
        $region48: #{blip3o_attention_block.9} parent=31 // pred_fallthru
          _
      $region32: #{blip3o_attention_block.9} parent=5 // pred_fallthru
        _
      %p2973 = scmp.le.s32.totalorder 2, %s18
      // Predicated region
      $region49: #{blip3o_attention_block.9} parent=5 // pred_check
        %p2974 = pneg %p2973
      $region50: #{blip3o_attention_block.9} parent=5 // pred_check_branch
        %2976 = sbr.rel (%p2974) target = $region52
      $region51: #{blip3o_attention_block.9} parent=5 // pred_region
        %s2977 = ssub.s32 %s18, 2
        // Predicated region
        $region53: #{blip3o_attention_block.9} parent=51 // pred_check
          %p2978 = pneg %p156
        $region54: #{blip3o_attention_block.9} parent=51 // pred_check_branch
          %2980 = sbr.rel (%p2978) target = $region56
        $region55: #{blip3o_attention_block.9} parent=51 // pred_region
          %s2981 = sand.u32 %s141, 1
          %s2982 = scalar_lea.sflag [#allocation4], %s2981
          %s2983 = sand.u32 %s141, 1
          %s2984 = smul.addr %s2983, 8
          %s2985 = scalar_lea.vmem [#allocation8], %s2984
          %2986 = dma.done %s2982, 128
        $region56: #{blip3o_attention_block.9} parent=51 // pred_fallthru
          _
      $region52: #{blip3o_attention_block.9} parent=5 // pred_fallthru
        _
    $region6: #{blip3o_attention_block.9} parent=1 // loop_footer
      %s22 = sadd.s32 1, %s18
    $region7: #{blip3o_attention_block.9} parent=1 // loop_footer_branch
      %17 = sbr.rel target = $region3
    $region8: #{blip3o_attention_block.9} parent=1 // loop_exit
      _
    %2987 = vsyncpa [#allocation3], 1
    %s2988 = scalar_lea.sflag [#allocation3], 1
    %2989 = vsyncpa %s2988, 1
    %2990 = vsyncpa [#allocation6], 1
    %s2991 = scalar_lea.sflag [#allocation6], 1
    %2992 = vsyncpa %s2991, 1
    %2993 = vsyncpa [#allocation4], 1
    %s2994 = scalar_lea.sflag [#allocation4], 1
    %2995 = vsyncpa %s2994, 1

// kernel: blip3o_attention_block.12
$region0: #{blip3o_attention_block.12}
  #allocation0 [shape = 'u32[]', space=smem, size = 0x4, offset = 0x4, fixed_abs, tag = 'smem constant byte address 0x4 - core index']
  #allocation1 [shape = 'u32[144,128]{1,0:T(1,128)}', space=vmem, size = 0x12000, scoped, tag = 'internal scratch']
  %s0 = inlined_call_operand.hbm [shape: f32[2,8,32], index: 0, kind: input, shape index: {}]
  %s1 = inlined_call_operand.hbm [shape: f32[2,8,32], index: 1, kind: input, shape index: {}]
  %s2 = inlined_call_operand.hbm [shape: f32[2,6,32], index: 2, kind: input, shape index: {}]
  %s3 = inlined_call_operand.hbm [shape: f32[32,32], index: 3, kind: input, shape index: {}]
  %s4 = inlined_call_operand.hbm [shape: f32[1,32], index: 4, kind: input, shape index: {}]
  %s5 = inlined_call_operand.hbm [shape: f32[1,32], index: 5, kind: input, shape index: {}]
  %s6 = inlined_call_operand.hbm [shape: f32[1,32], index: 6, kind: input, shape index: {}]
  %s7 = inlined_call_operand.hbm [shape: f32[2,8,32], index: 7, kind: output, shape index: {0}]
  %s8 = inlined_call_operand.hbm [shape: f32[2,8,32], index: 8, kind: output, shape index: {1}]
  %9 = xla_tuple %s7, %s8
  %s10 = sld [smem:[#allocation0]]
  $region97: #{blip3o_attention_block.12} parent=0
    _
  %s12 = ssub.s32 1, %s10
  %s13 = scalar_select 0, %s12, %s10
  $region1: #{blip3o_attention_block.12} parent=0
    #allocation2 [shape = 'u8[8192]{0}', space=vmem, size = 0x2000, scoped, tag = 'input window, operand 0']
    #allocation3 [shape = 's32[2]{0}', space=sflag, size = 0x8, scoped, tag = 'scoped memory for blip3o_attention_block.12']
    #allocation4 [shape = 's32[2]{0}', space=sflag, size = 0x8, scoped, tag = 'scoped memory for blip3o_attention_block.12']
    #allocation5 [shape = 'u8[8192]{0}', space=vmem, size = 0x2000, scoped, tag = 'input window, operand 1']
    #allocation6 [shape = 's32[2]{0}', space=sflag, size = 0x8, scoped, tag = 'scoped memory for blip3o_attention_block.12']
    #allocation7 [shape = 'u8[8192]{0}', space=vmem, size = 0x2000, scoped, tag = 'input window, operand 2']
    #allocation8 [shape = 'u8[16384]{0}', space=vmem, size = 0x4000, scoped, tag = 'input window, operand 3, single buffered']
    #allocation9 [shape = 's32[1]{0}', space=sflag, size = 0x4, scoped, tag = 'scoped memory for blip3o_attention_block.12']
    #allocation10 [shape = 'u8[512]{0}', space=vmem, size = 0x400, scoped, tag = 'input window, operand 4, single buffered']
    #allocation11 [shape = 'u8[512]{0}', space=vmem, size = 0x400, scoped, tag = 'input window, operand 5, single buffered']
    #allocation12 [shape = 's32[1]{0}', space=sflag, size = 0x4, scoped, tag = 'scoped memory for blip3o_attention_block.12']
    #allocation13 [shape = 'u8[512]{0}', space=vmem, size = 0x400, scoped, tag = 'input window, operand 6, single buffered']
    #allocation14 [shape = 'u8[8192]{0}', space=vmem, size = 0x2000, scoped, tag = 'output window, operand 0']
    #allocation15 [shape = 'u8[8192]{0}', space=vmem, size = 0x2000, scoped, tag = 'output window, operand 1']
    #allocation16 [shape = 's32[2]{0}', space=sflag, size = 0x8, scoped, tag = 'scoped memory for blip3o_attention_block.12']
    %14 = vsyncpa [#allocation3], 0
    %s15 = scalar_lea.sflag [#allocation3], 1
    %16 = vsyncpa %s15, 0
    %17 = vsyncpa [#allocation6], 0
    %s18 = scalar_lea.sflag [#allocation6], 1
    %19 = vsyncpa %s18, 0
    %20 = vsyncpa [#allocation9], 0
    %21 = vsyncpa [#allocation12], 0
    %22 = vsyncpa [#allocation4], 0
    %s23 = scalar_lea.sflag [#allocation4], 1
    %24 = vsyncpa %s23, 0
    %25 = vsyncpa [#allocation16], 0
    %s26 = scalar_lea.sflag [#allocation16], 1
    %27 = vsyncpa %s26, 0
    loop: start=0, step=1, limit=4
    $region2: #{blip3o_attention_block.12} parent=1 // loop_pre_header
      _
    $region3: #{blip3o_attention_block.12} parent=1 // loop_header
      %s29 = sphi 0, %s33
      %p30 = scmp.ge.s32.totalorder %s29, 4
      %s36 = sphi 0, %s48
      %s37 = sphi 0, %s44
      %s38 = sphi 0, %s36
      %s39 = sphi 0, %s37
      %s40 = sphi 0, %s38
      %s41 = sphi 0, %s39
      %s53 = sphi 0, %s55
      %s56 = sphi 0, %s53
      %s57 = sphi 0, %s56
      %s73 = sphi 0, %s57
      %s81 = sphi 0, %s83
      %s84 = sphi 0, %s81
      %s85 = sphi 0, %s84
      %s101 = sphi 0, %s85
      %s107 = sphi 0, %s109
      %s110 = sphi 0, %s107
      %s111 = sphi 0, %s110
      %s127 = sphi 0, %s111
      %s131 = sphi 0, %s131
      %s133 = sphi 0, %s131
      %s134 = sphi 0, %s133
      %s148 = sphi 0, %s134
      %s152 = sphi 0, %s152
      %s154 = sphi 0, %s152
      %s155 = sphi 0, %s154
      %s169 = sphi 0, %s155
      %s173 = sphi 0, %s173
      %s175 = sphi 0, %s173
      %s176 = sphi 0, %s175
      %s190 = sphi 0, %s176
      %s194 = sphi 0, %s194
      %s196 = sphi 0, %s194
      %s197 = sphi 0, %s196
      %s211 = sphi 0, %s197
      %s219 = sphi 0, %s221
      %s222 = sphi 0, %s219
      %s223 = sphi 0, %s222
      %s239 = sphi 0, %s223
      %s247 = sphi 0, %s249
      %s250 = sphi 0, %s247
      %s251 = sphi 0, %s250
      %s267 = sphi 0, %s251
    $region4: #{blip3o_attention_block.12} parent=1 // loop_header_branch
      %32 = sbr.rel (%p30) target = $region8
    $region5: #{blip3o_attention_block.12} parent=1 // loop_body
      %s34 = ssub.s32 %s29, 1
      %s35 = ssub.s32 %s29, 2
      %s42 = sadd.s32 1, %s37
      %p43 = scmp.ge.s32.totalorder %s42, 1
      %s44 = scalar_select %p43, 0, %s42
      %s45 = sadd.s32 1, %s36
      %s46 = scalar_select %p43, %s45, %s36
      %p47 = scmp.ge.s32.totalorder %s46, 2
      %s48 = scalar_select %p47, 0, %s46
      %s49 = ssub.s32 %s36, %s48
      %s50 = ssub.s32 %s37, %s44
      %s51 = sor.u32 %s49, %s50
      %p52 = scmp.eq.s32.totalorder %s51, 0
      %s54 = sadd.s32 %s53, 1
      %s55 = scalar_select %p52, %s53, %s54
      %p58 = pneg %p52
      %p59 = scmp.eq.s32.totalorder %s29, 1
      %p60 = por %p58, %p59
      %p61 = scmp.ne.s32.totalorder %s53, %s56
      %p62 = scmp.eq.s32.totalorder %s29, 0
      %p63 = por %p61, %p62
      %p64 = scmp.ne.s32.totalorder %s53, %s56
      %p65 = scmp.eq.s32.totalorder %s34, 1
      %p66 = por %p64, %p65
      %p67 = scmp.ne.s32.totalorder %s56, %s57
      %p68 = scmp.eq.s32.totalorder %s34, 0
      %p69 = por %p67, %p68
      %p70 = scmp.ne.s32.totalorder %s56, %s57
      %p71 = scmp.eq.s32.totalorder %s35, 1
      %p72 = por %p70, %p71
      %p74 = scmp.ne.s32.totalorder %s57, %s73
      %p75 = scmp.eq.s32.totalorder %s35, 0
      %p76 = por %p74, %p75
      %s77 = ssub.s32 %s36, %s48
      %s78 = ssub.s32 %s37, %s44
      %s79 = sor.u32 %s77, %s78
      %p80 = scmp.eq.s32.totalorder %s79, 0
      %s82 = sadd.s32 %s81, 1
      %s83 = scalar_select %p80, %s81, %s82
      %p86 = pneg %p80
      %p87 = scmp.eq.s32.totalorder %s29, 1
      %p88 = por %p86, %p87
      %p89 = scmp.ne.s32.totalorder %s81, %s84
      %p90 = scmp.eq.s32.totalorder %s29, 0
      %p91 = por %p89, %p90
      %p92 = scmp.ne.s32.totalorder %s81, %s84
      %p93 = scmp.eq.s32.totalorder %s34, 1
      %p94 = por %p92, %p93
      %p95 = scmp.ne.s32.totalorder %s84, %s85
      %p96 = scmp.eq.s32.totalorder %s34, 0
      %p97 = por %p95, %p96
      %p98 = scmp.ne.s32.totalorder %s84, %s85
      %p99 = scmp.eq.s32.totalorder %s35, 1
      %p100 = por %p98, %p99
      %p102 = scmp.ne.s32.totalorder %s85, %s101
      %p103 = scmp.eq.s32.totalorder %s35, 0
      %p104 = por %p102, %p103
      %s105 = ssub.s32 %s36, %s48
      %p106 = scmp.eq.s32.totalorder %s105, 0
      %s108 = sadd.s32 %s107, 1
      %s109 = scalar_select %p106, %s107, %s108
      %p112 = pneg %p106
      %p113 = scmp.eq.s32.totalorder %s29, 1
      %p114 = por %p112, %p113
      %p115 = scmp.ne.s32.totalorder %s107, %s110
      %p116 = scmp.eq.s32.totalorder %s29, 0
      %p117 = por %p115, %p116
      %p118 = scmp.ne.s32.totalorder %s107, %s110
      %p119 = scmp.eq.s32.totalorder %s34, 1
      %p120 = por %p118, %p119
      %p121 = scmp.ne.s32.totalorder %s110, %s111
      %p122 = scmp.eq.s32.totalorder %s34, 0
      %p123 = por %p121, %p122
      %p124 = scmp.ne.s32.totalorder %s110, %s111
      %p125 = scmp.eq.s32.totalorder %s35, 1
      %p126 = por %p124, %p125
      %p128 = scmp.ne.s32.totalorder %s111, %s127
      %p129 = scmp.eq.s32.totalorder %s35, 0
      %p130 = por %p128, %p129
      %s132 = sadd.s32 %s131, 1
      %p135 = scmp.eq.s32.totalorder %s29, 1
      %p136 = scmp.ne.s32.totalorder %s131, %s133
      %p137 = scmp.eq.s32.totalorder %s29, 0
      %p138 = por %p136, %p137
      %p139 = scmp.ne.s32.totalorder %s131, %s133
      %p140 = scmp.eq.s32.totalorder %s34, 1
      %p141 = por %p139, %p140
      %p142 = scmp.ne.s32.totalorder %s133, %s134
      %p143 = scmp.eq.s32.totalorder %s34, 0
      %p144 = por %p142, %p143
      %p145 = scmp.ne.s32.totalorder %s133, %s134
      %p146 = scmp.eq.s32.totalorder %s35, 1
      %p147 = por %p145, %p146
      %p149 = scmp.ne.s32.totalorder %s134, %s148
      %p150 = scmp.eq.s32.totalorder %s35, 0
      %p151 = por %p149, %p150
      %s153 = sadd.s32 %s152, 1
      %p156 = scmp.eq.s32.totalorder %s29, 1
      %p157 = scmp.ne.s32.totalorder %s152, %s154
      %p158 = scmp.eq.s32.totalorder %s29, 0
      %p159 = por %p157, %p158
      %p160 = scmp.ne.s32.totalorder %s152, %s154
      %p161 = scmp.eq.s32.totalorder %s34, 1
      %p162 = por %p160, %p161
      %p163 = scmp.ne.s32.totalorder %s154, %s155
      %p164 = scmp.eq.s32.totalorder %s34, 0
      %p165 = por %p163, %p164
      %p166 = scmp.ne.s32.totalorder %s154, %s155
      %p167 = scmp.eq.s32.totalorder %s35, 1
      %p168 = por %p166, %p167
      %p170 = scmp.ne.s32.totalorder %s155, %s169
      %p171 = scmp.eq.s32.totalorder %s35, 0
      %p172 = por %p170, %p171
      %s174 = sadd.s32 %s173, 1
      %p177 = scmp.eq.s32.totalorder %s29, 1
      %p178 = scmp.ne.s32.totalorder %s173, %s175
      %p179 = scmp.eq.s32.totalorder %s29, 0
      %p180 = por %p178, %p179
      %p181 = scmp.ne.s32.totalorder %s173, %s175
      %p182 = scmp.eq.s32.totalorder %s34, 1
      %p183 = por %p181, %p182
      %p184 = scmp.ne.s32.totalorder %s175, %s176
      %p185 = scmp.eq.s32.totalorder %s34, 0
      %p186 = por %p184, %p185
      %p187 = scmp.ne.s32.totalorder %s175, %s176
      %p188 = scmp.eq.s32.totalorder %s35, 1
      %p189 = por %p187, %p188
      %p191 = scmp.ne.s32.totalorder %s176, %s190
      %p192 = scmp.eq.s32.totalorder %s35, 0
      %p193 = por %p191, %p192
      %s195 = sadd.s32 %s194, 1
      %p198 = scmp.eq.s32.totalorder %s29, 1
      %p199 = scmp.ne.s32.totalorder %s194, %s196
      %p200 = scmp.eq.s32.totalorder %s29, 0
      %p201 = por %p199, %p200
      %p202 = scmp.ne.s32.totalorder %s194, %s196
      %p203 = scmp.eq.s32.totalorder %s34, 1
      %p204 = por %p202, %p203
      %p205 = scmp.ne.s32.totalorder %s196, %s197
      %p206 = scmp.eq.s32.totalorder %s34, 0
      %p207 = por %p205, %p206
      %p208 = scmp.ne.s32.totalorder %s196, %s197
      %p209 = scmp.eq.s32.totalorder %s35, 1
      %p210 = por %p208, %p209
      %p212 = scmp.ne.s32.totalorder %s197, %s211
      %p213 = scmp.eq.s32.totalorder %s35, 0
      %p214 = por %p212, %p213
      %s215 = ssub.s32 %s36, %s48
      %s216 = ssub.s32 %s37, %s44
      %s217 = sor.u32 %s215, %s216
      %p218 = scmp.eq.s32.totalorder %s217, 0
      %s220 = sadd.s32 %s219, 1
      %s221 = scalar_select %p218, %s219, %s220
      %p224 = pneg %p218
      %p225 = scmp.eq.s32.totalorder %s29, 1
      %p226 = por %p224, %p225
      %p227 = scmp.ne.s32.totalorder %s219, %s222
      %p228 = scmp.eq.s32.totalorder %s29, 0
      %p229 = por %p227, %p228
      %p230 = scmp.ne.s32.totalorder %s219, %s222
      %p231 = scmp.eq.s32.totalorder %s34, 1
      %p232 = por %p230, %p231
      %p233 = scmp.ne.s32.totalorder %s222, %s223
      %p234 = scmp.eq.s32.totalorder %s34, 0
      %p235 = por %p233, %p234
      %p236 = scmp.ne.s32.totalorder %s222, %s223
      %p237 = scmp.eq.s32.totalorder %s35, 1
      %p238 = por %p236, %p237
      %p240 = scmp.ne.s32.totalorder %s223, %s239
      %p241 = scmp.eq.s32.totalorder %s35, 0
      %p242 = por %p240, %p241
      %s243 = ssub.s32 %s36, %s48
      %s244 = ssub.s32 %s37, %s44
      %s245 = sor.u32 %s243, %s244
      %p246 = scmp.eq.s32.totalorder %s245, 0
      %s248 = sadd.s32 %s247, 1
      %s249 = scalar_select %p246, %s247, %s248
      %p252 = pneg %p246
      %p253 = scmp.eq.s32.totalorder %s29, 1
      %p254 = por %p252, %p253
      %p255 = scmp.ne.s32.totalorder %s247, %s250
      %p256 = scmp.eq.s32.totalorder %s29, 0
      %p257 = por %p255, %p256
      %p258 = scmp.ne.s32.totalorder %s247, %s250
      %p259 = scmp.eq.s32.totalorder %s34, 1
      %p260 = por %p258, %p259
      %p261 = scmp.ne.s32.totalorder %s250, %s251
      %p262 = scmp.eq.s32.totalorder %s34, 0
      %p263 = por %p261, %p262
      %p264 = scmp.ne.s32.totalorder %s250, %s251
      %p265 = scmp.eq.s32.totalorder %s35, 1
      %p266 = por %p264, %p265
      %p268 = scmp.ne.s32.totalorder %s251, %s267
      %p269 = scmp.eq.s32.totalorder %s35, 0
      %p270 = por %p268, %p269
      %p271 = scmp.le.s32.totalorder 1, %s29
      %p272 = scmp.lt.s32.totalorder %s29, 3
      %p273 = pnand %p271, %p272
      %p274 = pneg %p273
      // Predicated region
      $region9: #{blip3o_attention_block.12} parent=5 // pred_check
        _
      $region10: #{blip3o_attention_block.12} parent=5 // pred_check_branch
        %276 = sbr.rel (%p273) target = $region12
      $region11: #{blip3o_attention_block.12} parent=5 // pred_region
        %s277 = ssub.s32 %s29, 1
        // Predicated region
        $region13: #{blip3o_attention_block.12} parent=11 // pred_check
          %p278 = pneg %p144
        $region14: #{blip3o_attention_block.12} parent=11 // pred_check_branch
          %280 = sbr.rel (%p278) target = $region16
        $region15: #{blip3o_attention_block.12} parent=11 // pred_region
          %s282 = ssub.s32 512, 512
          %283 = vsyncadd [#allocation9], %s282
          %s284 = sshll.u32 [#allocation8], 4
          %s285 = int_to_ptr.vmem [resolvable:$true] %s284
          %290 = dma.hbm_to_vmem [thread:$0]  %s3, 512, %s285, [#allocation9], 128, 128, 8
        $region16: #{blip3o_attention_block.12} parent=11 // pred_fallthru
          _
        // Predicated region
        $region17: #{blip3o_attention_block.12} parent=11 // pred_check
          %p291 = pneg %p165
        $region18: #{blip3o_attention_block.12} parent=11 // pred_check_branch
          %293 = sbr.rel (%p291) target = $region20
        $region19: #{blip3o_attention_block.12} parent=11 // pred_region
          %s295 = ssub.s32 16, 16
          %296 = vsyncadd [#allocation9], %s295
          %s298 = sshll.u32 [#allocation10], 4
          %s299 = int_to_ptr.vmem [resolvable:$true] %s298
          %301 = dma.hbm_to_vmem [thread:$0]  %s4, 16, %s299, [#allocation9]
        $region20: #{blip3o_attention_block.12} parent=11 // pred_fallthru
          _
        // Predicated region
        $region21: #{blip3o_attention_block.12} parent=11 // pred_check
          %p302 = pneg %p186
        $region22: #{blip3o_attention_block.12} parent=11 // pred_check_branch
          %304 = sbr.rel (%p302) target = $region24
        $region23: #{blip3o_attention_block.12} parent=11 // pred_region
          %s306 = ssub.s32 16, 16
          %307 = vsyncadd [#allocation12], %s306
          %s309 = sshll.u32 [#allocation11], 4
          %s310 = int_to_ptr.vmem [resolvable:$true] %s309
          %312 = dma.hbm_to_vmem [thread:$0]  %s5, 16, %s310, [#allocation12]
        $region24: #{blip3o_attention_block.12} parent=11 // pred_fallthru
          _
        // Predicated region
        $region25: #{blip3o_attention_block.12} parent=11 // pred_check
          %p313 = pneg %p207
        $region26: #{blip3o_attention_block.12} parent=11 // pred_check_branch
          %315 = sbr.rel (%p313) target = $region28
        $region27: #{blip3o_attention_block.12} parent=11 // pred_region
          %s317 = ssub.s32 16, 16
          %318 = vsyncadd [#allocation12], %s317
          %s320 = sshll.u32 [#allocation13], 4
          %s321 = int_to_ptr.vmem [resolvable:$true] %s320
          %323 = dma.hbm_to_vmem [thread:$0]  %s6, 16, %s321, [#allocation12]
        $region28: #{blip3o_attention_block.12} parent=11 // pred_fallthru
          _
      $region12: #{blip3o_attention_block.12} parent=5 // pred_fallthru
        _
      %p324 = scmp.lt.s32.totalorder %s29, 2
      // Predicated region
      $region29: #{blip3o_attention_block.12} parent=5 // pred_check
        %p325 = pneg %p324
      $region30: #{blip3o_attention_block.12} parent=5 // pred_check_branch
        %327 = sbr.rel (%p325) target = $region32
      $region31: #{blip3o_attention_block.12} parent=5 // pred_region
        // Predicated region
        $region33: #{blip3o_attention_block.12} parent=31 // pred_check
          %p328 = pneg %p63
        $region34: #{blip3o_attention_block.12} parent=31 // pred_check_branch
          %330 = sbr.rel (%p328) target = $region36
        $region35: #{blip3o_attention_block.12} parent=31 // pred_region
          %s331 = sand.u32 %s53, 1
          %s332 = scalar_lea.sflag [#allocation3], %s331
          %s333 = sand.u32 %s53, 1
          %s334 = smul.addr %s333, 8
          %s335 = scalar_lea.vmem [#allocation2], %s334
          %s337 = ssub.s32 128, 128
          %338 = vsyncadd %s332, %s337
          %s339 = sadd.s32 %s37, %s36
          %s340 = smul.addr %s339, 128
          %s341 = scalar_lea.hbm %s0, %s340
          %s343 = sshll.u32 %s335, 4
          %s344 = int_to_ptr.vmem [resolvable:$true] %s343
          %346 = dma.hbm_to_vmem [thread:$0]  %s341, 128, %s344, %s332
        $region36: #{blip3o_attention_block.12} parent=31 // pred_fallthru
          _
        // Predicated region
        $region37: #{blip3o_attention_block.12} parent=31 // pred_check
          %p347 = pneg %p91
        $region38: #{blip3o_attention_block.12} parent=31 // pred_check_branch
          %349 = sbr.rel (%p347) target = $region40
        $region39: #{blip3o_attention_block.12} parent=31 // pred_region
          %s350 = sand.u32 %s29, 1
          %s351 = scalar_lea.sflag [#allocation6], %s350
          %s352 = sand.u32 %s81, 1
          %s353 = smul.addr %s352, 8
          %s354 = scalar_lea.vmem [#allocation5], %s353
          %s356 = ssub.s32 128, 128
          %357 = vsyncadd %s351, %s356
          %s358 = sadd.s32 %s37, %s36
          %s359 = smul.addr %s358, 128
          %s360 = scalar_lea.hbm %s1, %s359
          %s362 = sshll.u32 %s354, 4
          %s363 = int_to_ptr.vmem [resolvable:$true] %s362
          %365 = dma.hbm_to_vmem [thread:$0]  %s360, 128, %s363, %s351
        $region40: #{blip3o_attention_block.12} parent=31 // pred_fallthru
          _
        // Predicated region
        $region41: #{blip3o_attention_block.12} parent=31 // pred_check
          %p366 = pneg %p117
        $region42: #{blip3o_attention_block.12} parent=31 // pred_check_branch
          %368 = sbr.rel (%p366) target = $region44
        $region43: #{blip3o_attention_block.12} parent=31 // pred_region
          %s369 = sand.u32 %s29, 1
          %s370 = scalar_lea.sflag [#allocation6], %s369
          %s371 = sand.u32 %s107, 1
          %s372 = smul.addr %s371, 8
          %s373 = scalar_lea.vmem [#allocation7], %s372
          %s375 = ssub.s32 128, 128
          %376 = vsyncadd %s370, %s375
          %s377 = smul.addr %s36, 128
          %s378 = scalar_lea.hbm %s2, %s377
          %s380 = sshll.u32 %s373, 4
          %s381 = int_to_ptr.vmem [resolvable:$true] %s380
          %383 = dma.hbm_to_vmem [thread:$0]  %s378, 128, %s381, %s370
        $region44: #{blip3o_attention_block.12} parent=31 // pred_fallthru
          _
      $region32: #{blip3o_attention_block.12} parent=5 // pred_fallthru
        _
      %p384 = scmp.le.s32.totalorder 1, %s29
      %p385 = scmp.lt.s32.totalorder %s29, 3
      %p386 = pnand %p384, %p385
      %p387 = pneg %p386
      // Predicated region
      $region45: #{blip3o_attention_block.12} parent=5 // pred_check
        _
      $region46: #{blip3o_attention_block.12} parent=5 // pred_check_branch
        %389 = sbr.rel (%p386) target = $region48
      $region47: #{blip3o_attention_block.12} parent=5 // pred_region
        %s390 = ssub.s32 %s29, 1
        %s391 = sand.u32 %s56, 1
        %s392 = scalar_lea.sflag [#allocation3], %s391
        %s393 = sand.u32 %s56, 1
        %s394 = smul.addr %s393, 8
        %s395 = scalar_lea.vmem [#allocation2], %s394
        // Predicated region
        $region49: #{blip3o_attention_block.12} parent=47 // pred_check
          %p396 = pneg %p69
        $region50: #{blip3o_attention_block.12} parent=47 // pred_check_branch
          %398 = sbr.rel (%p396) target = $region52
        $region51: #{blip3o_attention_block.12} parent=47 // pred_region
          %399 = dma.done %s392, 128
        $region52: #{blip3o_attention_block.12} parent=47 // pred_fallthru
          _
        %s400 = sand.u32 %s34, 1
        %s401 = scalar_lea.sflag [#allocation6], %s400
        %s402 = sand.u32 %s84, 1
        %s403 = smul.addr %s402, 8
        %s404 = scalar_lea.vmem [#allocation5], %s403
        // Predicated region
        $region53: #{blip3o_attention_block.12} parent=47 // pred_check
          %p405 = pneg %p97
        $region54: #{blip3o_attention_block.12} parent=47 // pred_check_branch
          %407 = sbr.rel (%p405) target = $region56
        $region55: #{blip3o_attention_block.12} parent=47 // pred_region
          %408 = dma.done %s401, 128
        $region56: #{blip3o_attention_block.12} parent=47 // pred_fallthru
          _
        %s409 = sand.u32 %s34, 1
        %s410 = scalar_lea.sflag [#allocation6], %s409
        %s411 = sand.u32 %s110, 1
        %s412 = smul.addr %s411, 8
        %s413 = scalar_lea.vmem [#allocation7], %s412
        // Predicated region
        $region57: #{blip3o_attention_block.12} parent=47 // pred_check
          %p414 = pneg %p123
        $region58: #{blip3o_attention_block.12} parent=47 // pred_check_branch
          %416 = sbr.rel (%p414) target = $region60
        $region59: #{blip3o_attention_block.12} parent=47 // pred_region
          %417 = dma.done %s410, 128
        $region60: #{blip3o_attention_block.12} parent=47 // pred_fallthru
          _
        // Predicated region
        $region61: #{blip3o_attention_block.12} parent=47 // pred_check
          %p418 = pneg %p144
        $region62: #{blip3o_attention_block.12} parent=47 // pred_check_branch
          %420 = sbr.rel (%p418) target = $region64
        $region63: #{blip3o_attention_block.12} parent=47 // pred_region
          %421 = dma.done [#allocation9], 512
        $region64: #{blip3o_attention_block.12} parent=47 // pred_fallthru
          _
        // Predicated region
        $region65: #{blip3o_attention_block.12} parent=47 // pred_check
          %p422 = pneg %p165
        $region66: #{blip3o_attention_block.12} parent=47 // pred_check_branch
          %424 = sbr.rel (%p422) target = $region68
        $region67: #{blip3o_attention_block.12} parent=47 // pred_region
          %425 = dma.done [#allocation9], 16
        $region68: #{blip3o_attention_block.12} parent=47 // pred_fallthru
          _
        // Predicated region
        $region69: #{blip3o_attention_block.12} parent=47 // pred_check
          %p426 = pneg %p186
        $region70: #{blip3o_attention_block.12} parent=47 // pred_check_branch
          %428 = sbr.rel (%p426) target = $region72
        $region71: #{blip3o_attention_block.12} parent=47 // pred_region
          %429 = dma.done [#allocation12], 16
        $region72: #{blip3o_attention_block.12} parent=47 // pred_fallthru
          _
        // Predicated region
        $region73: #{blip3o_attention_block.12} parent=47 // pred_check
          %p430 = pneg %p207
        $region74: #{blip3o_attention_block.12} parent=47 // pred_check_branch
          %432 = sbr.rel (%p430) target = $region76
        $region75: #{blip3o_attention_block.12} parent=47 // pred_region
          %433 = dma.done [#allocation12], 16
        $region76: #{blip3o_attention_block.12} parent=47 // pred_fallthru
          _
        %s434 = sand.u32 %s56, 1
        %s435 = scalar_lea.sflag [#allocation3], %s434
        %s436 = sand.u32 %s56, 1
        %s437 = smul.addr %s436, 8
        %s438 = scalar_lea.vmem [#allocation2], %s437
        %p439 = pneg %p69
        %p440 = pneg %p66
        %s441 = sand.u32 %s34, 1
        %s442 = scalar_lea.sflag [#allocation6], %s441
        %s443 = sand.u32 %s84, 1
        %s444 = smul.addr %s443, 8
        %s445 = scalar_lea.vmem [#allocation5], %s444
        %p446 = pneg %p97
        %p447 = pneg %p94
        %s448 = sand.u32 %s34, 1
        %s449 = scalar_lea.sflag [#allocation6], %s448
        %s450 = sand.u32 %s110, 1
        %s451 = smul.addr %s450, 8
        %s452 = scalar_lea.vmem [#allocation7], %s451
        %p453 = pneg %p123
        %p454 = pneg %p120
        %p455 = pneg %p144
        %p456 = pneg %p141
        %p457 = pneg %p165
        %p458 = pneg %p162
        %p459 = pneg %p186
        %p460 = pneg %p183
        %p461 = pneg %p207
        %p462 = pneg %p204
        %p463 = pneg %p235
        %p464 = pneg %p232
        %s465 = sand.u32 %s222, 1
        %s466 = scalar_lea.sflag [#allocation4], %s465
        %s467 = sand.u32 %s222, 1
        %s468 = smul.addr %s467, 8
        %s469 = scalar_lea.vmem [#allocation14], %s468
        %p470 = pneg %p263
        %p471 = pneg %p260
        %s472 = sand.u32 %s250, 1
        %s473 = scalar_lea.sflag [#allocation16], %s472
        %s474 = sand.u32 %s250, 1
        %s475 = smul.addr %s474, 8
        %s476 = scalar_lea.vmem [#allocation15], %s475
        %v477 = vld [vmem:[%s395] sm:$0xff]
        %v478 = vld [vmem:[%s413] sm:$0x3f]
        %v479 = vld [vmem:[%s404] sm:$0xff]
        %v480 = vld [vmem:[#allocation8] sm:$0xff]
        %v481 = vld [vmem:[#allocation8 + $0x8] sm:$0xff]
        %v482 = vld [vmem:[#allocation8 + $0x10] sm:$0xff]
        %v483 = vld [vmem:[#allocation8 + $0x18] sm:$0xff]
        %v484 = vld [vmem:[#allocation10] sm:$0x1]
        %v486 = vlaneseq
        %v487 = vshrl.u32 %v486, 7
        %v488 = vsub.s32 0, %v487
        %v489 = vrot.slane %v484, %v488
        %vm491 = vcmask 261120
        %v493 = vsel %vm491, %v479, 0
        %495 = vmatprep.subr.mxu0 0.0
        %496 = vmatpush1.msra.mxu0 %v480
        %497 = vmatprep.subr.mxu0 0.0
        %498 = vmatpush1.msra.mxu0 %v481
        %499 = vmatprep.subr.mxu0 0.0
        %500 = vmatpush1.msra.mxu0 %v482
        %501 = vmatprep.subr.mxu0 0.0
        %502 = vmatpush1.msra.mxu0 %v483
        %503 = vmatprep.subr.mxu0 0.0
        %504 = vmatpush1.msra.mxu0 0.0
        %505 = vmatprep.subr.mxu0 0.0
        %506 = vmatpush1.msra.mxu0 0.0
        %507 = vmatprep.subr.mxu0 0.0
        %508 = vmatpush1.msra.mxu0 0.0
        %509 = vmatprep.subr.mxu0 0.0
        %510 = vmatpush1.msra.mxu0 0.0
        %511 = vmatprep.subr.mxu0 0.0
        %512 = vmatpush1.msra.mxu0 0.0
        %513 = vmatprep.subr.mxu0 0.0
        %514 = vmatpush1.msra.mxu0 0.0
        %515 = vmatprep.subr.mxu0 0.0
        %516 = vmatpush1.msra.mxu0 0.0
        %517 = vmatprep.subr.mxu0 0.0
        %518 = vmatpush1.msra.mxu0 0.0
        %519 = vmatprep.subr.mxu0 0.0
        %520 = vmatpush1.msra.mxu0 0.0
        %521 = vmatprep.subr.mxu0 0.0
        %522 = vmatpush1.msra.mxu0 0.0
        %523 = vmatprep.subr.mxu0 0.0
        %524 = vmatpush1.msra.mxu0 0.0
        %525 = vmatprep.subr.mxu0 0.0
        %526 = vmatpush1.msra.mxu0 0.0
        %527 = vmatprep.subr.mxu0 0.0
        %528 = vmatpush1.msra.mxu0 0.0
        %529 = vmatprep.subr.mxu0 0.0
        %530 = vmatpush1.msra.mxu0 0.0
        %531 = vmatprep.subr.mxu0 0.0
        %532 = vmatpush1.msra.mxu0 0.0
        %533 = vmatprep.subr.mxu0 0.0
        %534 = vmatpush1.msra.mxu0 0.0
        %535 = vmatprep.subr.mxu0 0.0
        %536 = vmatpush1.msra.mxu0 0.0
        %537 = vmatprep.subr.mxu0 0.0
        %538 = vmatpush1.msra.mxu0 0.0
        %539 = vmatprep.subr.mxu0 0.0
        %540 = vmatpush1.msra.mxu0 0.0
        %541 = vmatprep.subr.mxu0 0.0
        %542 = vmatpush1.msra.mxu0 0.0
        %543 = vmatprep.subr.mxu0 0.0
        %544 = vmatpush1.msra.mxu0 0.0
        %545 = vmatprep.subr.mxu0 0.0
        %546 = vmatpush1.msra.mxu0 0.0
        %547 = vmatprep.subr.mxu0 0.0
        %548 = vmatpush1.msra.mxu0 0.0
        %549 = vmatprep.subr.mxu0 0.0
        %550 = vmatpush1.msra.mxu0 0.0
        %551 = vmatprep.subr.mxu0 0.0
        %552 = vmatpush1.msra.mxu0 0.0
        %553 = vmatprep.subr.mxu0 0.0
        %554 = vmatpush1.msra.mxu0 0.0
        %555 = vmatprep.subr.mxu0 0.0
        %556 = vmatpush1.msra.mxu0 0.0
        %557 = vmatprep.subr.mxu0 0.0
        %558 = vmatpush1.msra.mxu0 0.0
        %559 = vmatprep.mubr.f32.mxu0 0.0
        %560 = vmatmul.mubr.f32.gmra.mrb[0].mxu0 %v493
        %v561 = vpop.f32.mrb[0].mxu0
        %v562 = vadd.f32 %v489, %v561
        %v563 = vpop.f32.mrb[0].mxu0
        %564 = vdwg.mxu0
        %v565 = vlaneseq
        %v566 = vshrl.u32 %v565, 7
        %v567 = vsub.s32 5, %v566
        %v568 = vrot.slane %v478, %v567
        %v569 = vmul.f32 %v568, %v562
        %v570 = vadd.f32 %v477, %v569
        %571 = vst.msk [vmem:[%s469] sm:$0xff] %vm491, %v570
        %v572 = vld [vmem:[#allocation11] sm:$0x1]
        %v573 = vld [vmem:[#allocation13] sm:$0x1]
        %v574 = vsel %vm491, %v570, 0.0
        %575 = vadd.xlane.f32.xlu0 %v574
        %v576 = vpop.xlane.xlu0 %575
        %v577 = vrcp.pop 32.0
        %v578 = vmul.f32 %v576, %v577
        %v579 = vsub.f32 %v570, %v578
        %v580 = vmul.f32 %v579, %v579
        %v581 = vsel %vm491, %v580, 0.0
        %582 = vadd.xlane.f32.xlu0 %v581
        %v583 = vpop.xlane.xlu0 %582
        %v584 = vmul.f32 %v583, %v577
        %v585 = vadd.f32 %v584, 1e-05
        %v586 = vrsqrt.pop %v585
        %v587 = vmul.f32 %v579, %v586
        %v589 = vlaneseq
        %v590 = vshrl.u32 %v589, 7
        %v591 = vsub.s32 0, %v590
        %v592 = vrot.slane %v572, %v591
        %v594 = vmul.f32 %v587, %v592
        %v596 = vlaneseq
        %v597 = vshrl.u32 %v596, 7
        %v598 = vsub.s32 0, %v597
        %v599 = vrot.slane %v573, %v598
        %v601 = vadd.f32 %v594, %v599
        %v602 = vlaneseq
        %v603 = vshrl.u32 %v602, 7
        %v604 = vsub.s32 2, %v603
        %v605 = vrot.slane %v478, %v604
        %v606 = vmul.f32 %v601, %v605
        %607 = vst.msk [vmem:[%s476] sm:$0xff] %vm491, %v606
        %s608 = sand.u32 %s222, 1
        %s609 = scalar_lea.sflag [#allocation4], %s608
        %s610 = sand.u32 %s222, 1
        %s611 = smul.addr %s610, 8
        %s612 = scalar_lea.vmem [#allocation14], %s611
        %s613 = sand.u32 %s250, 1
        %s614 = scalar_lea.sflag [#allocation16], %s613
        %s615 = sand.u32 %s250, 1
        %s616 = smul.addr %s615, 8
        %s617 = scalar_lea.vmem [#allocation15], %s616
        // Predicated region
        $region77: #{blip3o_attention_block.12} parent=47 // pred_check
          %p618 = pneg %p232
        $region78: #{blip3o_attention_block.12} parent=47 // pred_check_branch
          %620 = sbr.rel (%p618) target = $region80
        $region79: #{blip3o_attention_block.12} parent=47 // pred_region
          %s622 = ssub.s32 128, 128
          %623 = vsyncadd %s609, %s622
          %s624 = sadd.s32 %s39, %s38
          %s625 = smul.addr %s624, 128
          %s626 = scalar_lea.hbm %s7, %s625
          %s628 = sshll.u32 %s612, 4
          %s629 = int_to_ptr.vmem [resolvable:$true] %s628
          %631 = dma.vmem_to_hbm [thread:$0]  %s629, 128, %s626, %s609
        $region80: #{blip3o_attention_block.12} parent=47 // pred_fallthru
          _
        // Predicated region
        $region81: #{blip3o_attention_block.12} parent=47 // pred_check
          %p632 = pneg %p260
        $region82: #{blip3o_attention_block.12} parent=47 // pred_check_branch
          %634 = sbr.rel (%p632) target = $region84
        $region83: #{blip3o_attention_block.12} parent=47 // pred_region
          %s636 = ssub.s32 128, 128
          %637 = vsyncadd %s614, %s636
          %s638 = sadd.s32 %s39, %s38
          %s639 = smul.addr %s638, 128
          %s640 = scalar_lea.hbm %s8, %s639
          %s642 = sshll.u32 %s617, 4
          %s643 = int_to_ptr.vmem [resolvable:$true] %s642
          %645 = dma.vmem_to_hbm [thread:$0]  %s643, 128, %s640, %s614
        $region84: #{blip3o_attention_block.12} parent=47 // pred_fallthru
          _
      $region48: #{blip3o_attention_block.12} parent=5 // pred_fallthru
        _
      %p646 = scmp.le.s32.totalorder 2, %s29
      // Predicated region
      $region85: #{blip3o_attention_block.12} parent=5 // pred_check
        %p647 = pneg %p646
      $region86: #{blip3o_attention_block.12} parent=5 // pred_check_branch
        %649 = sbr.rel (%p647) target = $region88
      $region87: #{blip3o_attention_block.12} parent=5 // pred_region
        %s650 = ssub.s32 %s29, 2
        // Predicated region
        $region89: #{blip3o_attention_block.12} parent=87 // pred_check
          %p651 = pneg %p238
        $region90: #{blip3o_attention_block.12} parent=87 // pred_check_branch
          %653 = sbr.rel (%p651) target = $region92
        $region91: #{blip3o_attention_block.12} parent=87 // pred_region
          %s654 = sand.u32 %s223, 1
          %s655 = scalar_lea.sflag [#allocation4], %s654
          %s656 = sand.u32 %s223, 1
          %s657 = smul.addr %s656, 8
          %s658 = scalar_lea.vmem [#allocation14], %s657
          %659 = dma.done %s655, 128
        $region92: #{blip3o_attention_block.12} parent=87 // pred_fallthru
          _
        // Predicated region
        $region93: #{blip3o_attention_block.12} parent=87 // pred_check
          %p660 = pneg %p266
        $region94: #{blip3o_attention_block.12} parent=87 // pred_check_branch
          %662 = sbr.rel (%p660) target = $region96
        $region95: #{blip3o_attention_block.12} parent=87 // pred_region
          %s663 = sand.u32 %s251, 1
          %s664 = scalar_lea.sflag [#allocation16], %s663
          %s665 = sand.u32 %s251, 1
          %s666 = smul.addr %s665, 8
          %s667 = scalar_lea.vmem [#allocation15], %s666
          %668 = dma.done %s664, 128
        $region96: #{blip3o_attention_block.12} parent=87 // pred_fallthru
          _
      $region88: #{blip3o_attention_block.12} parent=5 // pred_fallthru
        _
    $region6: #{blip3o_attention_block.12} parent=1 // loop_footer
      %s33 = sadd.s32 1, %s29
    $region7: #{blip3o_attention_block.12} parent=1 // loop_footer_branch
      %28 = sbr.rel target = $region3
    $region8: #{blip3o_attention_block.12} parent=1 // loop_exit
      _
    %669 = vsyncpa [#allocation3], 1
    %s670 = scalar_lea.sflag [#allocation3], 1
    %671 = vsyncpa %s670, 1
    %672 = vsyncpa [#allocation6], 1
    %s673 = scalar_lea.sflag [#allocation6], 1
    %674 = vsyncpa %s673, 1
    %675 = vsyncpa [#allocation9], 1
    %676 = vsyncpa [#allocation12], 1
    %677 = vsyncpa [#allocation4], 1
    %s678 = scalar_lea.sflag [#allocation4], 1
    %679 = vsyncpa %s678, 1
    %680 = vsyncpa [#allocation16], 1
    %s681 = scalar_lea.sflag [#allocation16], 1
    %682 = vsyncpa %s681, 1

// kernel: blip3o_attention_block.13
$region0: #{blip3o_attention_block.13}
  #allocation0 [shape = 'u32[]', space=smem, size = 0x4, offset = 0x4, fixed_abs, tag = 'smem constant byte address 0x4 - core index']
  #allocation1 [shape = 'u32[144,128]{1,0:T(1,128)}', space=vmem, size = 0x12000, scoped, tag = 'internal scratch']
  #allocation2 [shape = 'f32[8,32]{1,0:T(8,128)}', space=vmem, size = 0x1000, scoped, tag = 'scratch operand']
  %s0 = inlined_call_operand.hbm [shape: f32[2,8,32], index: 0, kind: input, shape index: {}]
  %s1 = inlined_call_operand.hbm [shape: f32[2,8,32], index: 1, kind: input, shape index: {}]
  %s2 = inlined_call_operand.hbm [shape: f32[2,6,32], index: 2, kind: input, shape index: {}]
  %s3 = inlined_call_operand.hbm [shape: f32[32,128], index: 3, kind: input, shape index: {}]
  %s4 = inlined_call_operand.hbm [shape: f32[1,128], index: 4, kind: input, shape index: {}]
  %s5 = inlined_call_operand.hbm [shape: f32[128,32], index: 5, kind: input, shape index: {}]
  %s6 = inlined_call_operand.hbm [shape: f32[1,32], index: 6, kind: input, shape index: {}]
  %s7 = inlined_call_operand.hbm [shape: f32[2,8,32], index: 7, kind: output, shape index: {}]
  %s8 = sld [smem:[#allocation0]]
  $region97: #{blip3o_attention_block.13} parent=0
    _
  %s10 = ssub.s32 1, %s8
  %s11 = scalar_select 0, %s10, %s8
  $region1: #{blip3o_attention_block.13} parent=0
    #allocation3 [shape = 'u8[8192]{0}', space=vmem, size = 0x2000, scoped, tag = 'input window, operand 0']
    #allocation4 [shape = 's32[2]{0}', space=sflag, size = 0x8, scoped, tag = 'scoped memory for blip3o_attention_block.13']
    #allocation5 [shape = 's32[2]{0}', space=sflag, size = 0x8, scoped, tag = 'scoped memory for blip3o_attention_block.13']
    #allocation6 [shape = 'u8[8192]{0}', space=vmem, size = 0x2000, scoped, tag = 'input window, operand 1']
    #allocation7 [shape = 's32[2]{0}', space=sflag, size = 0x8, scoped, tag = 'scoped memory for blip3o_attention_block.13']
    #allocation8 [shape = 'u8[8192]{0}', space=vmem, size = 0x2000, scoped, tag = 'input window, operand 2']
    #allocation9 [shape = 'u8[16384]{0}', space=vmem, size = 0x4000, scoped, tag = 'input window, operand 3, single buffered']
    #allocation10 [shape = 's32[1]{0}', space=sflag, size = 0x4, scoped, tag = 'scoped memory for blip3o_attention_block.13']
    #allocation11 [shape = 'u8[512]{0}', space=vmem, size = 0x400, scoped, tag = 'input window, operand 4, single buffered']
    #allocation12 [shape = 'u8[65536]{0}', space=vmem, size = 0x10000, scoped, tag = 'input window, operand 5, single buffered']
    #allocation13 [shape = 's32[1]{0}', space=sflag, size = 0x4, scoped, tag = 'scoped memory for blip3o_attention_block.13']
    #allocation14 [shape = 'u8[512]{0}', space=vmem, size = 0x400, scoped, tag = 'input window, operand 6, single buffered']
    #allocation15 [shape = 'u8[8192]{0}', space=vmem, size = 0x2000, scoped, tag = 'output window, operand 0']
    %12 = vsyncpa [#allocation4], 0
    %s13 = scalar_lea.sflag [#allocation4], 1
    %14 = vsyncpa %s13, 0
    %15 = vsyncpa [#allocation7], 0
    %s16 = scalar_lea.sflag [#allocation7], 1
    %17 = vsyncpa %s16, 0
    %18 = vsyncpa [#allocation10], 0
    %19 = vsyncpa [#allocation13], 0
    %20 = vsyncpa [#allocation5], 0
    %s21 = scalar_lea.sflag [#allocation5], 1
    %22 = vsyncpa %s21, 0
    loop: start=0, step=1, limit=4
    $region2: #{blip3o_attention_block.13} parent=1 // loop_pre_header
      _
    $region3: #{blip3o_attention_block.13} parent=1 // loop_header
      %s24 = sphi 0, %s28
      %p25 = scmp.ge.s32.totalorder %s24, 4
      %s31 = sphi 0, %s50
      %s32 = sphi 0, %s46
      %s33 = sphi 0, %s42
      %s34 = sphi 0, %s31
      %s35 = sphi 0, %s32
      %s36 = sphi 0, %s33
      %s37 = sphi 0, %s34
      %s38 = sphi 0, %s35
      %s39 = sphi 0, %s36
      %s55 = sphi 0, %s57
      %s58 = sphi 0, %s55
      %s59 = sphi 0, %s58
      %s75 = sphi 0, %s59
      %s83 = sphi 0, %s85
      %s86 = sphi 0, %s83
      %s87 = sphi 0, %s86
      %s103 = sphi 0, %s87
      %s109 = sphi 0, %s111
      %s112 = sphi 0, %s109
      %s113 = sphi 0, %s112
      %s129 = sphi 0, %s113
      %s135 = sphi 0, %s137
      %s138 = sphi 0, %s135
      %s139 = sphi 0, %s138
      %s155 = sphi 0, %s139
      %s161 = sphi 0, %s163
      %s164 = sphi 0, %s161
      %s165 = sphi 0, %s164
      %s181 = sphi 0, %s165
      %s187 = sphi 0, %s189
      %s190 = sphi 0, %s187
      %s191 = sphi 0, %s190
      %s207 = sphi 0, %s191
      %s211 = sphi 0, %s211
      %s213 = sphi 0, %s211
      %s214 = sphi 0, %s213
      %s228 = sphi 0, %s214
      %s236 = sphi 0, %s238
      %s239 = sphi 0, %s236
      %s240 = sphi 0, %s239
      %s256 = sphi 0, %s240
    $region4: #{blip3o_attention_block.13} parent=1 // loop_header_branch
      %27 = sbr.rel (%p25) target = $region8
    $region5: #{blip3o_attention_block.13} parent=1 // loop_body
      %s29 = ssub.s32 %s24, 1
      %s30 = ssub.s32 %s24, 2
      %s40 = sadd.s32 1, %s33
      %p41 = scmp.ge.s32.totalorder %s40, 1
      %s42 = scalar_select %p41, 0, %s40
      %s43 = sadd.s32 1, %s32
      %s44 = scalar_select %p41, %s43, %s32
      %p45 = scmp.ge.s32.totalorder %s44, 1
      %s46 = scalar_select %p45, 0, %s44
      %s47 = sadd.s32 1, %s31
      %s48 = scalar_select %p45, %s47, %s31
      %p49 = scmp.ge.s32.totalorder %s48, 2
      %s50 = scalar_select %p49, 0, %s48
      %s51 = ssub.s32 %s31, %s50
      %s52 = ssub.s32 %s32, %s46
      %s53 = sor.u32 %s51, %s52
      %p54 = scmp.eq.s32.totalorder %s53, 0
      %s56 = sadd.s32 %s55, 1
      %s57 = scalar_select %p54, %s55, %s56
      %p60 = pneg %p54
      %p61 = scmp.eq.s32.totalorder %s24, 1
      %p62 = por %p60, %p61
      %p63 = scmp.ne.s32.totalorder %s55, %s58
      %p64 = scmp.eq.s32.totalorder %s24, 0
      %p65 = por %p63, %p64
      %p66 = scmp.ne.s32.totalorder %s55, %s58
      %p67 = scmp.eq.s32.totalorder %s29, 1
      %p68 = por %p66, %p67
      %p69 = scmp.ne.s32.totalorder %s58, %s59
      %p70 = scmp.eq.s32.totalorder %s29, 0
      %p71 = por %p69, %p70
      %p72 = scmp.ne.s32.totalorder %s58, %s59
      %p73 = scmp.eq.s32.totalorder %s30, 1
      %p74 = por %p72, %p73
      %p76 = scmp.ne.s32.totalorder %s59, %s75
      %p77 = scmp.eq.s32.totalorder %s30, 0
      %p78 = por %p76, %p77
      %s79 = ssub.s32 %s31, %s50
      %s80 = ssub.s32 %s32, %s46
      %s81 = sor.u32 %s79, %s80
      %p82 = scmp.eq.s32.totalorder %s81, 0
      %s84 = sadd.s32 %s83, 1
      %s85 = scalar_select %p82, %s83, %s84
      %p88 = pneg %p82
      %p89 = scmp.eq.s32.totalorder %s24, 1
      %p90 = por %p88, %p89
      %p91 = scmp.ne.s32.totalorder %s83, %s86
      %p92 = scmp.eq.s32.totalorder %s24, 0
      %p93 = por %p91, %p92
      %p94 = scmp.ne.s32.totalorder %s83, %s86
      %p95 = scmp.eq.s32.totalorder %s29, 1
      %p96 = por %p94, %p95
      %p97 = scmp.ne.s32.totalorder %s86, %s87
      %p98 = scmp.eq.s32.totalorder %s29, 0
      %p99 = por %p97, %p98
      %p100 = scmp.ne.s32.totalorder %s86, %s87
      %p101 = scmp.eq.s32.totalorder %s30, 1
      %p102 = por %p100, %p101
      %p104 = scmp.ne.s32.totalorder %s87, %s103
      %p105 = scmp.eq.s32.totalorder %s30, 0
      %p106 = por %p104, %p105
      %s107 = ssub.s32 %s31, %s50
      %p108 = scmp.eq.s32.totalorder %s107, 0
      %s110 = sadd.s32 %s109, 1
      %s111 = scalar_select %p108, %s109, %s110
      %p114 = pneg %p108
      %p115 = scmp.eq.s32.totalorder %s24, 1
      %p116 = por %p114, %p115
      %p117 = scmp.ne.s32.totalorder %s109, %s112
      %p118 = scmp.eq.s32.totalorder %s24, 0
      %p119 = por %p117, %p118
      %p120 = scmp.ne.s32.totalorder %s109, %s112
      %p121 = scmp.eq.s32.totalorder %s29, 1
      %p122 = por %p120, %p121
      %p123 = scmp.ne.s32.totalorder %s112, %s113
      %p124 = scmp.eq.s32.totalorder %s29, 0
      %p125 = por %p123, %p124
      %p126 = scmp.ne.s32.totalorder %s112, %s113
      %p127 = scmp.eq.s32.totalorder %s30, 1
      %p128 = por %p126, %p127
      %p130 = scmp.ne.s32.totalorder %s113, %s129
      %p131 = scmp.eq.s32.totalorder %s30, 0
      %p132 = por %p130, %p131
      %s133 = ssub.s32 %s33, %s42
      %p134 = scmp.eq.s32.totalorder %s133, 0
      %s136 = sadd.s32 %s135, 1
      %s137 = scalar_select %p134, %s135, %s136
      %p140 = pneg %p134
      %p141 = scmp.eq.s32.totalorder %s24, 1
      %p142 = por %p140, %p141
      %p143 = scmp.ne.s32.totalorder %s135, %s138
      %p144 = scmp.eq.s32.totalorder %s24, 0
      %p145 = por %p143, %p144
      %p146 = scmp.ne.s32.totalorder %s135, %s138
      %p147 = scmp.eq.s32.totalorder %s29, 1
      %p148 = por %p146, %p147
      %p149 = scmp.ne.s32.totalorder %s138, %s139
      %p150 = scmp.eq.s32.totalorder %s29, 0
      %p151 = por %p149, %p150
      %p152 = scmp.ne.s32.totalorder %s138, %s139
      %p153 = scmp.eq.s32.totalorder %s30, 1
      %p154 = por %p152, %p153
      %p156 = scmp.ne.s32.totalorder %s139, %s155
      %p157 = scmp.eq.s32.totalorder %s30, 0
      %p158 = por %p156, %p157
      %s159 = ssub.s32 %s33, %s42
      %p160 = scmp.eq.s32.totalorder %s159, 0
      %s162 = sadd.s32 %s161, 1
      %s163 = scalar_select %p160, %s161, %s162
      %p166 = pneg %p160
      %p167 = scmp.eq.s32.totalorder %s24, 1
      %p168 = por %p166, %p167
      %p169 = scmp.ne.s32.totalorder %s161, %s164
      %p170 = scmp.eq.s32.totalorder %s24, 0
      %p171 = por %p169, %p170
      %p172 = scmp.ne.s32.totalorder %s161, %s164
      %p173 = scmp.eq.s32.totalorder %s29, 1
      %p174 = por %p172, %p173
      %p175 = scmp.ne.s32.totalorder %s164, %s165
      %p176 = scmp.eq.s32.totalorder %s29, 0
      %p177 = por %p175, %p176
      %p178 = scmp.ne.s32.totalorder %s164, %s165
      %p179 = scmp.eq.s32.totalorder %s30, 1
      %p180 = por %p178, %p179
      %p182 = scmp.ne.s32.totalorder %s165, %s181
      %p183 = scmp.eq.s32.totalorder %s30, 0
      %p184 = por %p182, %p183
      %s185 = ssub.s32 %s33, %s42
      %p186 = scmp.eq.s32.totalorder %s185, 0
      %s188 = sadd.s32 %s187, 1
      %s189 = scalar_select %p186, %s187, %s188
      %p192 = pneg %p186
      %p193 = scmp.eq.s32.totalorder %s24, 1
      %p194 = por %p192, %p193
      %p195 = scmp.ne.s32.totalorder %s187, %s190
      %p196 = scmp.eq.s32.totalorder %s24, 0
      %p197 = por %p195, %p196
      %p198 = scmp.ne.s32.totalorder %s187, %s190
      %p199 = scmp.eq.s32.totalorder %s29, 1
      %p200 = por %p198, %p199
      %p201 = scmp.ne.s32.totalorder %s190, %s191
      %p202 = scmp.eq.s32.totalorder %s29, 0
      %p203 = por %p201, %p202
      %p204 = scmp.ne.s32.totalorder %s190, %s191
      %p205 = scmp.eq.s32.totalorder %s30, 1
      %p206 = por %p204, %p205
      %p208 = scmp.ne.s32.totalorder %s191, %s207
      %p209 = scmp.eq.s32.totalorder %s30, 0
      %p210 = por %p208, %p209
      %s212 = sadd.s32 %s211, 1
      %p215 = scmp.eq.s32.totalorder %s24, 1
      %p216 = scmp.ne.s32.totalorder %s211, %s213
      %p217 = scmp.eq.s32.totalorder %s24, 0
      %p218 = por %p216, %p217
      %p219 = scmp.ne.s32.totalorder %s211, %s213
      %p220 = scmp.eq.s32.totalorder %s29, 1
      %p221 = por %p219, %p220
      %p222 = scmp.ne.s32.totalorder %s213, %s214
      %p223 = scmp.eq.s32.totalorder %s29, 0
      %p224 = por %p222, %p223
      %p225 = scmp.ne.s32.totalorder %s213, %s214
      %p226 = scmp.eq.s32.totalorder %s30, 1
      %p227 = por %p225, %p226
      %p229 = scmp.ne.s32.totalorder %s214, %s228
      %p230 = scmp.eq.s32.totalorder %s30, 0
      %p231 = por %p229, %p230
      %s232 = ssub.s32 %s31, %s50
      %s233 = ssub.s32 %s32, %s46
      %s234 = sor.u32 %s232, %s233
      %p235 = scmp.eq.s32.totalorder %s234, 0
      %s237 = sadd.s32 %s236, 1
      %s238 = scalar_select %p235, %s236, %s237
      %p241 = pneg %p235
      %p242 = scmp.eq.s32.totalorder %s24, 1
      %p243 = por %p241, %p242
      %p244 = scmp.ne.s32.totalorder %s236, %s239
      %p245 = scmp.eq.s32.totalorder %s24, 0
      %p246 = por %p244, %p245
      %p247 = scmp.ne.s32.totalorder %s236, %s239
      %p248 = scmp.eq.s32.totalorder %s29, 1
      %p249 = por %p247, %p248
      %p250 = scmp.ne.s32.totalorder %s239, %s240
      %p251 = scmp.eq.s32.totalorder %s29, 0
      %p252 = por %p250, %p251
      %p253 = scmp.ne.s32.totalorder %s239, %s240
      %p254 = scmp.eq.s32.totalorder %s30, 1
      %p255 = por %p253, %p254
      %p257 = scmp.ne.s32.totalorder %s240, %s256
      %p258 = scmp.eq.s32.totalorder %s30, 0
      %p259 = por %p257, %p258
      %p260 = scmp.le.s32.totalorder 1, %s24
      %p261 = scmp.lt.s32.totalorder %s24, 3
      %p262 = pnand %p260, %p261
      %p263 = pneg %p262
      // Predicated region
      $region9: #{blip3o_attention_block.13} parent=5 // pred_check
        _
      $region10: #{blip3o_attention_block.13} parent=5 // pred_check_branch
        %265 = sbr.rel (%p262) target = $region12
      $region11: #{blip3o_attention_block.13} parent=5 // pred_region
        %s266 = ssub.s32 %s24, 1
        // Predicated region
        $region13: #{blip3o_attention_block.13} parent=11 // pred_check
          %p267 = pneg %p151
        $region14: #{blip3o_attention_block.13} parent=11 // pred_check_branch
          %269 = sbr.rel (%p267) target = $region16
        $region15: #{blip3o_attention_block.13} parent=11 // pred_region
          %s271 = ssub.s32 512, 512
          %272 = vsyncadd [#allocation10], %s271
          %s273 = smul.addr %s36, 128
          %s274 = scalar_lea.hbm %s3, %s273
          %s275 = sshll.u32 [#allocation9], 4
          %s276 = int_to_ptr.vmem [resolvable:$true] %s275
          %281 = dma.hbm_to_vmem [thread:$0]  %s274, 512, %s276, [#allocation10], 128, 128, 8
        $region16: #{blip3o_attention_block.13} parent=11 // pred_fallthru
          _
        // Predicated region
        $region17: #{blip3o_attention_block.13} parent=11 // pred_check
          %p282 = pneg %p177
        $region18: #{blip3o_attention_block.13} parent=11 // pred_check_branch
          %284 = sbr.rel (%p282) target = $region20
        $region19: #{blip3o_attention_block.13} parent=11 // pred_region
          %s286 = ssub.s32 16, 16
          %287 = vsyncadd [#allocation10], %s286
          %s288 = smul.addr %s36, 16
          %s289 = scalar_lea.hbm %s4, %s288
          %s291 = sshll.u32 [#allocation11], 4
          %s292 = int_to_ptr.vmem [resolvable:$true] %s291
          %294 = dma.hbm_to_vmem [thread:$0]  %s289, 16, %s292, [#allocation10]
        $region20: #{blip3o_attention_block.13} parent=11 // pred_fallthru
          _
        // Predicated region
        $region21: #{blip3o_attention_block.13} parent=11 // pred_check
          %p295 = pneg %p203
        $region22: #{blip3o_attention_block.13} parent=11 // pred_check_branch
          %297 = sbr.rel (%p295) target = $region24
        $region23: #{blip3o_attention_block.13} parent=11 // pred_region
          %s298 = smul.u32 16, %s36
          %s300 = ssub.s32 2048, 2048
          %301 = vsyncadd [#allocation13], %s300
          %s302 = smul.addr %s298, 128
          %s303 = scalar_lea.hbm %s5, %s302
          %s304 = sshll.u32 [#allocation12], 4
          %s305 = int_to_ptr.vmem [resolvable:$true] %s304
          %310 = dma.hbm_to_vmem [thread:$0]  %s303, 2048, %s305, [#allocation13], 128, 128, 8
        $region24: #{blip3o_attention_block.13} parent=11 // pred_fallthru
          _
        // Predicated region
        $region25: #{blip3o_attention_block.13} parent=11 // pred_check
          %p311 = pneg %p224
        $region26: #{blip3o_attention_block.13} parent=11 // pred_check_branch
          %313 = sbr.rel (%p311) target = $region28
        $region27: #{blip3o_attention_block.13} parent=11 // pred_region
          %s315 = ssub.s32 16, 16
          %316 = vsyncadd [#allocation13], %s315
          %s318 = sshll.u32 [#allocation14], 4
          %s319 = int_to_ptr.vmem [resolvable:$true] %s318
          %321 = dma.hbm_to_vmem [thread:$0]  %s6, 16, %s319, [#allocation13]
        $region28: #{blip3o_attention_block.13} parent=11 // pred_fallthru
          _
      $region12: #{blip3o_attention_block.13} parent=5 // pred_fallthru
        _
      %p322 = scmp.lt.s32.totalorder %s24, 2
      // Predicated region
      $region29: #{blip3o_attention_block.13} parent=5 // pred_check
        %p323 = pneg %p322
      $region30: #{blip3o_attention_block.13} parent=5 // pred_check_branch
        %325 = sbr.rel (%p323) target = $region32
      $region31: #{blip3o_attention_block.13} parent=5 // pred_region
        // Predicated region
        $region33: #{blip3o_attention_block.13} parent=31 // pred_check
          %p326 = pneg %p65
        $region34: #{blip3o_attention_block.13} parent=31 // pred_check_branch
          %328 = sbr.rel (%p326) target = $region36
        $region35: #{blip3o_attention_block.13} parent=31 // pred_region
          %s329 = sand.u32 %s55, 1
          %s330 = scalar_lea.sflag [#allocation4], %s329
          %s331 = sand.u32 %s55, 1
          %s332 = smul.addr %s331, 8
          %s333 = scalar_lea.vmem [#allocation3], %s332
          %s335 = ssub.s32 128, 128
          %336 = vsyncadd %s330, %s335
          %s337 = sadd.s32 %s32, %s31
          %s338 = smul.addr %s337, 128
          %s339 = scalar_lea.hbm %s0, %s338
          %s341 = sshll.u32 %s333, 4
          %s342 = int_to_ptr.vmem [resolvable:$true] %s341
          %344 = dma.hbm_to_vmem [thread:$0]  %s339, 128, %s342, %s330
        $region36: #{blip3o_attention_block.13} parent=31 // pred_fallthru
          _
        // Predicated region
        $region37: #{blip3o_attention_block.13} parent=31 // pred_check
          %p345 = pneg %p93
        $region38: #{blip3o_attention_block.13} parent=31 // pred_check_branch
          %347 = sbr.rel (%p345) target = $region40
        $region39: #{blip3o_attention_block.13} parent=31 // pred_region
          %s348 = sand.u32 %s24, 1
          %s349 = scalar_lea.sflag [#allocation7], %s348
          %s350 = sand.u32 %s83, 1
          %s351 = smul.addr %s350, 8
          %s352 = scalar_lea.vmem [#allocation6], %s351
          %s354 = ssub.s32 128, 128
          %355 = vsyncadd %s349, %s354
          %s356 = sadd.s32 %s32, %s31
          %s357 = smul.addr %s356, 128
          %s358 = scalar_lea.hbm %s1, %s357
          %s360 = sshll.u32 %s352, 4
          %s361 = int_to_ptr.vmem [resolvable:$true] %s360
          %363 = dma.hbm_to_vmem [thread:$0]  %s358, 128, %s361, %s349
        $region40: #{blip3o_attention_block.13} parent=31 // pred_fallthru
          _
        // Predicated region
        $region41: #{blip3o_attention_block.13} parent=31 // pred_check
          %p364 = pneg %p119
        $region42: #{blip3o_attention_block.13} parent=31 // pred_check_branch
          %366 = sbr.rel (%p364) target = $region44
        $region43: #{blip3o_attention_block.13} parent=31 // pred_region
          %s367 = sand.u32 %s24, 1
          %s368 = scalar_lea.sflag [#allocation7], %s367
          %s369 = sand.u32 %s109, 1
          %s370 = smul.addr %s369, 8
          %s371 = scalar_lea.vmem [#allocation8], %s370
          %s373 = ssub.s32 128, 128
          %374 = vsyncadd %s368, %s373
          %s375 = smul.addr %s31, 128
          %s376 = scalar_lea.hbm %s2, %s375
          %s378 = sshll.u32 %s371, 4
          %s379 = int_to_ptr.vmem [resolvable:$true] %s378
          %381 = dma.hbm_to_vmem [thread:$0]  %s376, 128, %s379, %s368
        $region44: #{blip3o_attention_block.13} parent=31 // pred_fallthru
          _
      $region32: #{blip3o_attention_block.13} parent=5 // pred_fallthru
        _
      %p382 = scmp.le.s32.totalorder 1, %s24
      %p383 = scmp.lt.s32.totalorder %s24, 3
      %p384 = pnand %p382, %p383
      %p385 = pneg %p384
      // Predicated region
      $region45: #{blip3o_attention_block.13} parent=5 // pred_check
        _
      $region46: #{blip3o_attention_block.13} parent=5 // pred_check_branch
        %387 = sbr.rel (%p384) target = $region48
      $region47: #{blip3o_attention_block.13} parent=5 // pred_region
        %s388 = ssub.s32 %s24, 1
        %s389 = sand.u32 %s58, 1
        %s390 = scalar_lea.sflag [#allocation4], %s389
        %s391 = sand.u32 %s58, 1
        %s392 = smul.addr %s391, 8
        %s393 = scalar_lea.vmem [#allocation3], %s392
        // Predicated region
        $region49: #{blip3o_attention_block.13} parent=47 // pred_check
          %p394 = pneg %p71
        $region50: #{blip3o_attention_block.13} parent=47 // pred_check_branch
          %396 = sbr.rel (%p394) target = $region52
        $region51: #{blip3o_attention_block.13} parent=47 // pred_region
          %397 = dma.done %s390, 128
        $region52: #{blip3o_attention_block.13} parent=47 // pred_fallthru
          _
        %s398 = sand.u32 %s29, 1
        %s399 = scalar_lea.sflag [#allocation7], %s398
        %s400 = sand.u32 %s86, 1
        %s401 = smul.addr %s400, 8
        %s402 = scalar_lea.vmem [#allocation6], %s401
        // Predicated region
        $region53: #{blip3o_attention_block.13} parent=47 // pred_check
          %p403 = pneg %p99
        $region54: #{blip3o_attention_block.13} parent=47 // pred_check_branch
          %405 = sbr.rel (%p403) target = $region56
        $region55: #{blip3o_attention_block.13} parent=47 // pred_region
          %406 = dma.done %s399, 128
        $region56: #{blip3o_attention_block.13} parent=47 // pred_fallthru
          _
        %s407 = sand.u32 %s29, 1
        %s408 = scalar_lea.sflag [#allocation7], %s407
        %s409 = sand.u32 %s112, 1
        %s410 = smul.addr %s409, 8
        %s411 = scalar_lea.vmem [#allocation8], %s410
        // Predicated region
        $region57: #{blip3o_attention_block.13} parent=47 // pred_check
          %p412 = pneg %p125
        $region58: #{blip3o_attention_block.13} parent=47 // pred_check_branch
          %414 = sbr.rel (%p412) target = $region60
        $region59: #{blip3o_attention_block.13} parent=47 // pred_region
          %415 = dma.done %s408, 128
        $region60: #{blip3o_attention_block.13} parent=47 // pred_fallthru
          _
        // Predicated region
        $region61: #{blip3o_attention_block.13} parent=47 // pred_check
          %p416 = pneg %p151
        $region62: #{blip3o_attention_block.13} parent=47 // pred_check_branch
          %418 = sbr.rel (%p416) target = $region64
        $region63: #{blip3o_attention_block.13} parent=47 // pred_region
          %419 = dma.done [#allocation10], 512
        $region64: #{blip3o_attention_block.13} parent=47 // pred_fallthru
          _
        // Predicated region
        $region65: #{blip3o_attention_block.13} parent=47 // pred_check
          %p420 = pneg %p177
        $region66: #{blip3o_attention_block.13} parent=47 // pred_check_branch
          %422 = sbr.rel (%p420) target = $region68
        $region67: #{blip3o_attention_block.13} parent=47 // pred_region
          %423 = dma.done [#allocation10], 16
        $region68: #{blip3o_attention_block.13} parent=47 // pred_fallthru
          _
        // Predicated region
        $region69: #{blip3o_attention_block.13} parent=47 // pred_check
          %p424 = pneg %p203
        $region70: #{blip3o_attention_block.13} parent=47 // pred_check_branch
          %426 = sbr.rel (%p424) target = $region72
        $region71: #{blip3o_attention_block.13} parent=47 // pred_region
          %427 = dma.done [#allocation13], 2048
        $region72: #{blip3o_attention_block.13} parent=47 // pred_fallthru
          _
        // Predicated region
        $region73: #{blip3o_attention_block.13} parent=47 // pred_check
          %p428 = pneg %p224
        $region74: #{blip3o_attention_block.13} parent=47 // pred_check_branch
          %430 = sbr.rel (%p428) target = $region76
        $region75: #{blip3o_attention_block.13} parent=47 // pred_region
          %431 = dma.done [#allocation13], 16
        $region76: #{blip3o_attention_block.13} parent=47 // pred_fallthru
          _
        %s432 = sand.u32 %s58, 1
        %s433 = scalar_lea.sflag [#allocation4], %s432
        %s434 = sand.u32 %s58, 1
        %s435 = smul.addr %s434, 8
        %s436 = scalar_lea.vmem [#allocation3], %s435
        %p437 = pneg %p71
        %p438 = pneg %p68
        %s439 = sand.u32 %s29, 1
        %s440 = scalar_lea.sflag [#allocation7], %s439
        %s441 = sand.u32 %s86, 1
        %s442 = smul.addr %s441, 8
        %s443 = scalar_lea.vmem [#allocation6], %s442
        %p444 = pneg %p99
        %p445 = pneg %p96
        %s446 = sand.u32 %s29, 1
        %s447 = scalar_lea.sflag [#allocation7], %s446
        %s448 = sand.u32 %s112, 1
        %s449 = smul.addr %s448, 8
        %s450 = scalar_lea.vmem [#allocation8], %s449
        %p451 = pneg %p125
        %p452 = pneg %p122
        %p453 = pneg %p151
        %p454 = pneg %p148
        %p455 = pneg %p177
        %p456 = pneg %p174
        %p457 = pneg %p203
        %p458 = pneg %p200
        %p459 = pneg %p224
        %p460 = pneg %p221
        %p461 = pneg %p252
        %p462 = pneg %p249
        %s463 = sand.u32 %s239, 1
        %s464 = scalar_lea.sflag [#allocation5], %s463
        %s465 = sand.u32 %s239, 1
        %s466 = smul.addr %s465, 8
        %s467 = scalar_lea.vmem [#allocation15], %s466
        %s468 = smul.u32 16, %s36
        %p469 = scmp.eq.s32.totalorder %s36, 0
        // Predicated region
        $region77: #{blip3o_attention_block.13} parent=47 // pred_check
          %p470 = pneg %p469
        $region78: #{blip3o_attention_block.13} parent=47 // pred_check_branch
          %472 = sbr.rel (%p470) target = $region80
        $region79: #{blip3o_attention_block.13} parent=47 // pred_region
          %vm473 = vcmask 261120
          %474 = vst.msk [vmem:[#allocation2] sm:$0xff] %vm473, 0.0
        $region80: #{blip3o_attention_block.13} parent=47 // pred_fallthru
          _
        %v475 = vld [vmem:[%s402] sm:$0xff]
        %v476 = vld [vmem:[#allocation9] sm:$0xff]
        %v477 = vld [vmem:[#allocation9 + $0x8] sm:$0xff]
        %v478 = vld [vmem:[#allocation9 + $0x10] sm:$0xff]
        %v479 = vld [vmem:[#allocation9 + $0x18] sm:$0xff]
        %v480 = vld [vmem:[#allocation11] sm:$0x1]
        %v482 = vlaneseq
        %v483 = vshrl.u32 %v482, 7
        %v484 = vsub.s32 0, %v483
        %v485 = vrot.slane %v480, %v484
        %vm487 = vcmask 261120
        %v489 = vsel %vm487, %v475, 0
        %491 = vmatprep.subr.mxu0 0.0
        %492 = vmatpush1.msra.mxu0 %v476
        %493 = vmatprep.subr.mxu0 0.0
        %494 = vmatpush1.msra.mxu0 %v477
        %495 = vmatprep.subr.mxu0 0.0
        %496 = vmatpush1.msra.mxu0 %v478
        %497 = vmatprep.subr.mxu0 0.0
        %498 = vmatpush1.msra.mxu0 %v479
        %499 = vmatprep.subr.mxu0 0.0
        %500 = vmatpush1.msra.mxu0 0.0
        %501 = vmatprep.subr.mxu0 0.0
        %502 = vmatpush1.msra.mxu0 0.0
        %503 = vmatprep.subr.mxu0 0.0
        %504 = vmatpush1.msra.mxu0 0.0
        %505 = vmatprep.subr.mxu0 0.0
        %506 = vmatpush1.msra.mxu0 0.0
        %507 = vmatprep.subr.mxu0 0.0
        %508 = vmatpush1.msra.mxu0 0.0
        %509 = vmatprep.subr.mxu0 0.0
        %510 = vmatpush1.msra.mxu0 0.0
        %511 = vmatprep.subr.mxu0 0.0
        %512 = vmatpush1.msra.mxu0 0.0
        %513 = vmatprep.subr.mxu0 0.0
        %514 = vmatpush1.msra.mxu0 0.0
        %515 = vmatprep.subr.mxu0 0.0
        %516 = vmatpush1.msra.mxu0 0.0
        %517 = vmatprep.subr.mxu0 0.0
        %518 = vmatpush1.msra.mxu0 0.0
        %519 = vmatprep.subr.mxu0 0.0
        %520 = vmatpush1.msra.mxu0 0.0
        %521 = vmatprep.subr.mxu0 0.0
        %522 = vmatpush1.msra.mxu0 0.0
        %523 = vmatprep.subr.mxu0 0.0
        %524 = vmatpush1.msra.mxu0 0.0
        %525 = vmatprep.subr.mxu0 0.0
        %526 = vmatpush1.msra.mxu0 0.0
        %527 = vmatprep.subr.mxu0 0.0
        %528 = vmatpush1.msra.mxu0 0.0
        %529 = vmatprep.subr.mxu0 0.0
        %530 = vmatpush1.msra.mxu0 0.0
        %531 = vmatprep.subr.mxu0 0.0
        %532 = vmatpush1.msra.mxu0 0.0
        %533 = vmatprep.subr.mxu0 0.0
        %534 = vmatpush1.msra.mxu0 0.0
        %535 = vmatprep.subr.mxu0 0.0
        %536 = vmatpush1.msra.mxu0 0.0
        %537 = vmatprep.subr.mxu0 0.0
        %538 = vmatpush1.msra.mxu0 0.0
        %539 = vmatprep.subr.mxu0 0.0
        %540 = vmatpush1.msra.mxu0 0.0
        %541 = vmatprep.subr.mxu0 0.0
        %542 = vmatpush1.msra.mxu0 0.0
        %543 = vmatprep.subr.mxu0 0.0
        %544 = vmatpush1.msra.mxu0 0.0
        %545 = vmatprep.subr.mxu0 0.0
        %546 = vmatpush1.msra.mxu0 0.0
        %547 = vmatprep.subr.mxu0 0.0
        %548 = vmatpush1.msra.mxu0 0.0
        %549 = vmatprep.subr.mxu0 0.0
        %550 = vmatpush1.msra.mxu0 0.0
        %551 = vmatprep.subr.mxu0 0.0
        %552 = vmatpush1.msra.mxu0 0.0
        %553 = vmatprep.subr.mxu0 0.0
        %554 = vmatpush1.msra.mxu0 0.0
        %555 = vmatprep.mubr.f32.mxu0 0.0
        %556 = vmatmul.mubr.f32.gmra.mrb[0].mxu0 %v489
        %v557 = vpop.f32.mrb[0].mxu0
        %v558 = vadd.f32 %v485, %v557
        %v559 = vpop.f32.mrb[0].mxu0
        %560 = vdwg.mxu0
        %v561 = vmul.f32 %v558, 0.5
        %v562 = vmul.f32 %v558, 0.70710677
        %v563 = verf.f32.pop %v562
        %v564 = vadd.f32 %v563, 1.0
        %v565 = vmul.f32 %v561, %v564
        %v566 = vld [vmem:[#allocation2] sm:$0xff]
        %v567 = vld [vmem:[#allocation12] sm:$0xff]
        %v568 = vld [vmem:[#allocation12 + $0x8] sm:$0xff]
        %v569 = vld [vmem:[#allocation12 + $0x10] sm:$0xff]
        %v570 = vld [vmem:[#allocation12 + $0x18] sm:$0xff]
        %v571 = vld [vmem:[#allocation12 + $0x20] sm:$0xff]
        %v572 = vld [vmem:[#allocation12 + $0x28] sm:$0xff]
        %v573 = vld [vmem:[#allocation12 + $0x30] sm:$0xff]
        %v574 = vld [vmem:[#allocation12 + $0x38] sm:$0xff]
        %v575 = vld [vmem:[#allocation12 + $0x40] sm:$0xff]
        %v576 = vld [vmem:[#allocation12 + $0x48] sm:$0xff]
        %v577 = vld [vmem:[#allocation12 + $0x50] sm:$0xff]
        %v578 = vld [vmem:[#allocation12 + $0x58] sm:$0xff]
        %v579 = vld [vmem:[#allocation12 + $0x60] sm:$0xff]
        %v580 = vld [vmem:[#allocation12 + $0x68] sm:$0xff]
        %v581 = vld [vmem:[#allocation12 + $0x70] sm:$0xff]
        %v582 = vld [vmem:[#allocation12 + $0x78] sm:$0xff]
        %583 = vmatprep.subr.mxu0 0.0
        %584 = vmatpush1.msra.mxu0 %v567
        %585 = vmatprep.subr.mxu0 0.0
        %586 = vmatpush1.msra.mxu0 %v568
        %587 = vmatprep.subr.mxu0 0.0
        %588 = vmatpush1.msra.mxu0 %v569
        %589 = vmatprep.subr.mxu0 0.0
        %590 = vmatpush1.msra.mxu0 %v570
        %591 = vmatprep.subr.mxu0 0.0
        %592 = vmatpush1.msra.mxu0 %v571
        %593 = vmatprep.subr.mxu0 0.0
        %594 = vmatpush1.msra.mxu0 %v572
        %595 = vmatprep.subr.mxu0 0.0
        %596 = vmatpush1.msra.mxu0 %v573
        %597 = vmatprep.subr.mxu0 0.0
        %598 = vmatpush1.msra.mxu0 %v574
        %599 = vmatprep.subr.mxu0 0.0
        %600 = vmatpush1.msra.mxu0 %v575
        %601 = vmatprep.subr.mxu0 0.0
        %602 = vmatpush1.msra.mxu0 %v576
        %603 = vmatprep.subr.mxu0 0.0
        %604 = vmatpush1.msra.mxu0 %v577
        %605 = vmatprep.subr.mxu0 0.0
        %606 = vmatpush1.msra.mxu0 %v578
        %607 = vmatprep.subr.mxu0 0.0
        %608 = vmatpush1.msra.mxu0 %v579
        %609 = vmatprep.subr.mxu0 0.0
        %610 = vmatpush1.msra.mxu0 %v580
        %611 = vmatprep.subr.mxu0 0.0
        %612 = vmatpush1.msra.mxu0 %v581
        %613 = vmatprep.subr.mxu0 0.0
        %614 = vmatpush1.msra.mxu0 %v582
        %615 = vmatprep.subr.mxu0 0.0
        %616 = vmatpush1.msra.mxu0 0.0
        %617 = vmatprep.subr.mxu0 0.0
        %618 = vmatpush1.msra.mxu0 0.0
        %619 = vmatprep.subr.mxu0 0.0
        %620 = vmatpush1.msra.mxu0 0.0
        %621 = vmatprep.subr.mxu0 0.0
        %622 = vmatpush1.msra.mxu0 0.0
        %623 = vmatprep.subr.mxu0 0.0
        %624 = vmatpush1.msra.mxu0 0.0
        %625 = vmatprep.subr.mxu0 0.0
        %626 = vmatpush1.msra.mxu0 0.0
        %627 = vmatprep.subr.mxu0 0.0
        %628 = vmatpush1.msra.mxu0 0.0
        %629 = vmatprep.subr.mxu0 0.0
        %630 = vmatpush1.msra.mxu0 0.0
        %631 = vmatprep.subr.mxu0 0.0
        %632 = vmatpush1.msra.mxu0 0.0
        %633 = vmatprep.subr.mxu0 0.0
        %634 = vmatpush1.msra.mxu0 0.0
        %635 = vmatprep.subr.mxu0 0.0
        %636 = vmatpush1.msra.mxu0 0.0
        %637 = vmatprep.subr.mxu0 0.0
        %638 = vmatpush1.msra.mxu0 0.0
        %639 = vmatprep.subr.mxu0 0.0
        %640 = vmatpush1.msra.mxu0 0.0
        %641 = vmatprep.subr.mxu0 0.0
        %642 = vmatpush1.msra.mxu0 0.0
        %643 = vmatprep.subr.mxu0 0.0
        %644 = vmatpush1.msra.mxu0 0.0
        %645 = vmatprep.subr.mxu0 0.0
        %646 = vmatpush1.msra.mxu0 0.0
        %647 = vmatprep.mubr.f32.mxu0 0.0
        %648 = vmatmul.mubr.f32.gmra.mrb[0].mxu0 %v565
        %v649 = vpop.f32.mrb[0].mxu0
        %v650 = vadd.f32 0.0, %v649
        %v651 = vpop.f32.mrb[0].mxu0
        %652 = vdwg.mxu0
        %v653 = vadd.f32 %v566, %v650
        %654 = vst.msk [vmem:[#allocation2] sm:$0xff] %vm487, %v653
        // Predicated region
        $region81: #{blip3o_attention_block.13} parent=47 // pred_check
          %p655 = pneg %p469
        $region82: #{blip3o_attention_block.13} parent=47 // pred_check_branch
          %657 = sbr.rel (%p655) target = $region84
        $region83: #{blip3o_attention_block.13} parent=47 // pred_region
          %v658 = vld [vmem:[%s411] sm:$0x3f]
          %v659 = vld [vmem:[#allocation2] sm:$0xff]
          %v660 = vld [vmem:[#allocation14] sm:$0x1]
          %v662 = vlaneseq
          %v663 = vshrl.u32 %v662, 7
          %v664 = vsub.s32 0, %v663
          %v665 = vrot.slane %v660, %v664
          %v667 = vadd.f32 %v659, %v665
          %v668 = vld [vmem:[%s393] sm:$0xff]
          %v669 = vlaneseq
          %v670 = vshrl.u32 %v669, 7
          %v671 = vsub.s32 3, %v670
          %v672 = vrot.slane %v658, %v671
          %v673 = vmul.f32 %v672, %v667
          %v674 = vadd.f32 %v668, %v673
          %675 = vst.msk [vmem:[%s467] sm:$0xff] %vm487, %v674
        $region84: #{blip3o_attention_block.13} parent=47 // pred_fallthru
          _
        %s676 = sand.u32 %s239, 1
        %s677 = scalar_lea.sflag [#allocation5], %s676
        %s678 = sand.u32 %s239, 1
        %s679 = smul.addr %s678, 8
        %s680 = scalar_lea.vmem [#allocation15], %s679
        // Predicated region
        $region85: #{blip3o_attention_block.13} parent=47 // pred_check
          %p681 = pneg %p249
        $region86: #{blip3o_attention_block.13} parent=47 // pred_check_branch
          %683 = sbr.rel (%p681) target = $region88
        $region87: #{blip3o_attention_block.13} parent=47 // pred_region
          %s685 = ssub.s32 128, 128
          %686 = vsyncadd %s677, %s685
          %s687 = sadd.s32 %s35, %s34
          %s688 = smul.addr %s687, 128
          %s689 = scalar_lea.hbm %s7, %s688
          %s691 = sshll.u32 %s680, 4
          %s692 = int_to_ptr.vmem [resolvable:$true] %s691
          %694 = dma.vmem_to_hbm [thread:$0]  %s692, 128, %s689, %s677
        $region88: #{blip3o_attention_block.13} parent=47 // pred_fallthru
          _
      $region48: #{blip3o_attention_block.13} parent=5 // pred_fallthru
        _
      %p695 = scmp.le.s32.totalorder 2, %s24
      // Predicated region
      $region89: #{blip3o_attention_block.13} parent=5 // pred_check
        %p696 = pneg %p695
      $region90: #{blip3o_attention_block.13} parent=5 // pred_check_branch
        %698 = sbr.rel (%p696) target = $region92
      $region91: #{blip3o_attention_block.13} parent=5 // pred_region
        %s699 = ssub.s32 %s24, 2
        // Predicated region
        $region93: #{blip3o_attention_block.13} parent=91 // pred_check
          %p700 = pneg %p255
        $region94: #{blip3o_attention_block.13} parent=91 // pred_check_branch
          %702 = sbr.rel (%p700) target = $region96
        $region95: #{blip3o_attention_block.13} parent=91 // pred_region
          %s703 = sand.u32 %s240, 1
          %s704 = scalar_lea.sflag [#allocation5], %s703
          %s705 = sand.u32 %s240, 1
          %s706 = smul.addr %s705, 8
          %s707 = scalar_lea.vmem [#allocation15], %s706
          %708 = dma.done %s704, 128
        $region96: #{blip3o_attention_block.13} parent=91 // pred_fallthru
          _
      $region92: #{blip3o_attention_block.13} parent=5 // pred_fallthru
        _
    $region6: #{blip3o_attention_block.13} parent=1 // loop_footer
      %s28 = sadd.s32 1, %s24
    $region7: #{blip3o_attention_block.13} parent=1 // loop_footer_branch
      %23 = sbr.rel target = $region3
    $region8: #{blip3o_attention_block.13} parent=1 // loop_exit
      _
    %709 = vsyncpa [#allocation4], 1
    %s710 = scalar_lea.sflag [#allocation4], 1
    %711 = vsyncpa %s710, 1
    %712 = vsyncpa [#allocation7], 1
    %s713 = scalar_lea.sflag [#allocation7], 1
    %714 = vsyncpa %s713, 1
    %715 = vsyncpa [#allocation10], 1
    %716 = vsyncpa [#allocation13], 1
    %717 = vsyncpa [#allocation5], 1
    %s718 = scalar_lea.sflag [#allocation5], 1
    %719 = vsyncpa %s718, 1

</llo_original>
